<compile_context>
chip_gen: v5e
topology: v5e:2x2
jax: 0.10.0
libtpu: 0.0.40
codegen_flags: <defaults>
</compile_context>

<pallas_src>
import functools

import jax
import jax.numpy as jnp
from jax.experimental import pallas as pl
from jax.experimental.pallas import tpu as pltpu

STEPS = 8          # MONet(steps=8)
HID_A = 32         # attention MLP hidden
HID_V = 32         # vqvae conv hidden
EMB_D = 16         # vqvae embedding dim
N_CODE = 64        # vqvae codebook size
N_PAD = 128        # codebook padded to a full 128-row tile


# ----------------------------------------------------------------------------
# Fused kernel: attention recursion + per-step VQ-VAE on one pixel tile.
# Layout: channels on sublanes, pixels on lanes.
# ----------------------------------------------------------------------------
def _monet_kernel(img_ref, scope_ref,
                  attp_ref, enc1_ref, enc2_ref,
                  cb_ref, cbt_ref, dec1_ref, dec2_ref,
                  att_ref, dec_ref, diff_ref):
    f32 = jnp.float32
    img = img_ref[...]                        # (3, T)
    scope = scope_ref[...]                    # (1, T)
    T = img.shape[1]

    # ---- unpack parameter slabs (static lane slices, once per tile) --------
    attp = attp_ref[...]                      # (HID_A, 7)
    a_wimg0, a_wimg1, a_wimg2 = attp[:, 0:1], attp[:, 1:2], attp[:, 2:3]
    a_wscope = attp[:, 3:4]                   # (HID_A, 1)
    a_b1 = attp[:, 4:5]
    a_w2 = attp[:, 5:6]
    a_b2 = attp[0:1, 6:7]                     # (1, 1)

    enc1 = enc1_ref[...]                      # (HID_V, 5): col0 mask, 1..3 img, 4 b1
    e_wmask = enc1[:, 0:1]
    e_wimg0, e_wimg1, e_wimg2 = enc1[:, 1:2], enc1[:, 2:3], enc1[:, 3:4]
    e_b1 = enc1[:, 4:5]

    enc2 = enc2_ref[...]                      # (EMB_D, HID_V+1)
    ew2 = enc2[:, 0:HID_V]                    # (EMB_D, HID_V)
    eb2 = enc2[:, HID_V:HID_V + 1]            # (EMB_D, 1)

    cbp = cb_ref[...]                         # (N_PAD, EMB_D+1)
    cb = cbp[:, 0:EMB_D]                      # (N_PAD, EMB_D)
    cbsq = cbp[:, EMB_D:EMB_D + 1]            # ||e||^2 + idx*1e-6 bias; 1e30 pad rows
    cbt = cbt_ref[...]                        # (EMB_D, N_PAD)

    dec1 = dec1_ref[...]                      # (HID_V, EMB_D+1)
    dw1 = dec1[:, 0:EMB_D]
    db1 = dec1[:, EMB_D:EMB_D + 1]
    dec2 = dec2_ref[...]                      # (4, HID_V+1)
    dw2 = dec2[:, 0:HID_V]
    db2 = dec2[:, HID_V:HID_V + 1]

    # ---- loop-invariant image projections (K=3 as VPU broadcast-FMAs) ------
    h_att_img = (a_wimg0 * img[0:1, :] + a_wimg1 * img[1:2, :]
                 + a_wimg2 * img[2:3, :] + a_b1)          # (HID_A, T)
    h_enc_img = (e_wimg0 * img[0:1, :] + e_wimg1 * img[1:2, :]
                 + e_wimg2 * img[2:3, :] + e_b1)          # (HID_V, T)

    diff_acc = jnp.zeros((1, T), f32)

    # ---- single fused per-step loop; outputs stored incrementally ----------
    for s in range(STEPS):
        if s < STEPS - 1:
            h = jnp.maximum(h_att_img + a_wscope * scope, 0.0)          # (HID_A, T)
            logit = jnp.sum(a_w2 * h, axis=0, keepdims=True) + a_b2     # (1, T)
            alpha = jax.nn.sigmoid(logit)
            mask = scope * alpha
            scope = scope * (1.0 - alpha)
        else:
            mask = scope                      # last step keeps remaining scope
        att_ref[s:s + 1, :] = mask            # lane-dense single-row store

        # VQ-VAE: pointwise encoder -> nearest codebook row -> pointwise decoder
        h1 = jnp.maximum(h_enc_img + e_wmask * mask, 0.0)               # (HID_V, T)
        z = jnp.dot(ew2, h1, preferred_element_type=f32) + eb2          # (EMB_D, T)

        # nearest codebook row: argmin_e ||e||^2 - 2 e.z (||z||^2 is a per-pixel
        # constant, irrelevant for the argmin).  The index bias in cbsq makes
        # `d == dmin` a clean one-hot; padded rows (1e30) never win.
        ze = jnp.dot(cb, z, preferred_element_type=f32)                 # (N_PAD, T)
        d = cbsq - 2.0 * ze
        dmin = jnp.min(d, axis=0, keepdims=True)                        # (1, T)
        onehot = (d == dmin).astype(f32)                                # (N_PAD, T)
        quant = jnp.dot(cbt, onehot, preferred_element_type=f32)        # (EMB_D, T)

        dq = quant - z                                                  # commitment
        diff_acc = diff_acc + jnp.sum(dq * dq, axis=0, keepdims=True)

        h2 = jnp.maximum(jnp.dot(dw1, quant, preferred_element_type=f32) + db1,
                         0.0)                                           # (HID_V, T)
        dec_ref[4 * s:4 * (s + 1), :] = (
            jnp.dot(dw2, h2, preferred_element_type=f32) + db2)         # (4, T)

    diff_ref[...] = diff_acc                                            # (1, T)


# ----------------------------------------------------------------------------
# Wrapper
# ----------------------------------------------------------------------------
def _pick_tile(n, max_tile=1024, min_grid=2):
    """Lane-aligned pixel tile: as large as possible (kernel is compute-bound),
    keeping >=2 grid steps so both v7x TensorCores can be fed; costs ~0.35us of
    per-step overhead on single-TC v5e/v6e, i.e. nothing."""
    tile = max_tile
    while tile > 128 and -(-n // tile) < min_grid:
        tile //= 2
    return tile


def monet_forward(imgs, scopes, params):
    B, C, H, W = imgs.shape
    assert C == 3
    n = B * H * W
    tile = _pick_tile(n)
    num_tiles = -(-n // tile)                 # ceil-div: no dropped pixels
    n_pad = num_tiles * tile

    # channels-on-sublane, pixels-on-lane layout (lane-dense everywhere)
    img_flat = jnp.transpose(imgs, (1, 0, 2, 3)).reshape(3, n)
    scope_flat = jnp.transpose(scopes, (1, 0, 2, 3)).reshape(1, n)
    if n_pad != n:
        img_flat = jnp.pad(img_flat, ((0, 0), (0, n_pad - n)))
        scope_flat = jnp.pad(scope_flat, ((0, 0), (0, n_pad - n)))

    pspec = lambda shape: pl.BlockSpec(shape, lambda i: (0, 0))
    att_flat, dec_flat, diff_flat = pl.pallas_call(
        _monet_kernel,
        out_shape=(
            jax.ShapeDtypeStruct((STEPS, n_pad), jnp.float32),
            jax.ShapeDtypeStruct((STEPS * 4, n_pad), jnp.float32),
            jax.ShapeDtypeStruct((1, n_pad), jnp.float32),
        ),
        grid_spec=pltpu.PrefetchScalarGridSpec(
            num_scalar_prefetch=0,
            grid=(num_tiles,),
            in_specs=[
                pl.BlockSpec((3, tile), lambda i: (0, i)),      # img
                pl.BlockSpec((1, tile), lambda i: (0, i)),      # scope
                pspec((HID_A, 7)),                              # attention pack
                pspec((HID_V, 5)),                              # encoder l1 pack
                pspec((EMB_D, HID_V + 1)),                      # encoder l2 pack
                pspec((N_PAD, EMB_D + 1)),                      # codebook + norms
                pspec((EMB_D, N_PAD)),                          # codebook^T
                pspec((HID_V, EMB_D + 1)),                      # decoder l1 pack
                pspec((4, HID_V + 1)),                          # decoder l2 pack
            ],
            out_specs=(
                pl.BlockSpec((STEPS, tile), lambda i: (0, i)),
                pl.BlockSpec((STEPS * 4, tile), lambda i: (0, i)),
                pl.BlockSpec((1, tile), lambda i: (0, i)),
            ),
        ),
        compiler_params=pltpu.CompilerParams(
            dimension_semantics=("parallel",)),
    )(img_flat, scope_flat,
      params["att_pack"], params["enc1_pack"], params["enc2_pack"],
      params["cb_pack"], params["cbt_pad"],
      params["dec1_pack"], params["dec2_pack"])

    att_flat = att_flat[:, :n]
    dec_flat = dec_flat[:, :n]
    latent_loss = jnp.sum(diff_flat[:, :n]) / (n * STEPS * EMB_D)

    attention_seq = att_flat.reshape(STEPS, B, H, W)
    attention_seq = jnp.transpose(attention_seq, (1, 0, 2, 3))[:, :, None, :, :]
    dec5 = jnp.transpose(dec_flat.reshape(STEPS, 4, B, H, W), (2, 0, 1, 3, 4))
    mask_seq = dec5[:, :, 0:1, :, :]                     # (B, STEPS, 1, H, W)
    recon_imgs_seq = dec5[:, :, 1:4, :, :]               # (B, STEPS, 3, H, W)
    return attention_seq, mask_seq, recon_imgs_seq, latent_loss


def init_params(key):
    ks = jax.random.split(key, 9)
    f = lambda k, shape, s=0.2: (s * jax.random.normal(k, shape)).astype(jnp.float32)

    # attention MLP pack (HID_A, 7): [w_img(3) | w_scope | b1 | w2 | b2]
    att_w1t = f(ks[0], (HID_A, 4))
    att_b1 = f(ks[1], (HID_A, 1), 0.05)
    att_w2 = f(ks[2], (HID_A, 1))
    att_b2 = f(ks[3], (1, 1), 0.05)
    att_pack = jnp.concatenate(
        [att_w1t, att_b1, att_w2, jnp.broadcast_to(att_b2, (HID_A, 1))], axis=1)

    # codebook: padded to 128 rows; norm column gets a tiny per-row index bias
    # so `d == dmin` in-kernel is a deterministic one-hot; padded rows = 1e30.
    codebook = f(ks[4], (N_CODE, EMB_D), 0.5)
    cb_pad = jnp.zeros((N_PAD, EMB_D), jnp.float32).at[:N_CODE].set(codebook)
    cbsq = (jnp.sum(codebook * codebook, axis=-1, keepdims=True)
            + 1e-6 * jnp.arange(N_CODE, dtype=jnp.float32)[:, None])
    cbsq_pad = jnp.full((N_PAD, 1), 1e30, jnp.float32).at[:N_CODE].set(cbsq)
    cb_pack = jnp.concatenate([cb_pad, cbsq_pad], axis=1)

    # vqvae encoder / decoder packs (weight columns || bias column)
    enc_w1t = f(ks[5], (HID_V, 4))            # col 0 mask, cols 1..3 img
    enc1_pack = jnp.concatenate([enc_w1t, jnp.zeros((HID_V, 1), jnp.float32)], axis=1)
    enc_w2t = f(ks[6], (EMB_D, HID_V))
    enc2_pack = jnp.concatenate([enc_w2t, jnp.zeros((EMB_D, 1), jnp.float32)], axis=1)
    dec_w1t = f(ks[7], (HID_V, EMB_D))
    dec1_pack = jnp.concatenate([dec_w1t, jnp.zeros((HID_V, 1), jnp.float32)], axis=1)
    dec_w2t = f(ks[8], (4, HID_V))
    dec2_pack = jnp.concatenate([dec_w2t, jnp.zeros((4, 1), jnp.float32)], axis=1)

    return {
        "att_pack": att_pack,
        "enc1_pack": enc1_pack,
        "enc2_pack": enc2_pack,
        "cb_pack": cb_pack,
        "cbt_pad": cb_pad.T,
        "dec1_pack": dec1_pack,
        "dec2_pack": dec2_pack,
    }


if __name__ == "__main__":
    key = jax.random.PRNGKey(0)
    k_img, k_param = jax.random.split(key)

    B, C, H, W = 2, 3, 16, 16
    imgs = jax.random.uniform(k_img, (B, C, H, W), dtype=jnp.float32)
    scopes = jnp.ones((B, 1, H, W), jnp.float32)   # initial full scope
    params = init_params(k_param)

    fwd = jax.jit(functools.partial(monet_forward, params=params))
    attention_seq, mask_seq, recon_imgs_seq, latent_loss = fwd(imgs, scopes)
    jax.block_until_ready((attention_seq, mask_seq, recon_imgs_seq, latent_loss))

    assert attention_seq.shape == (B, STEPS, 1, H, W)
    assert mask_seq.shape == (B, STEPS, 1, H, W)
    assert recon_imgs_seq.shape == (B, STEPS, 3, H, W)
    assert latent_loss.shape == ()
    # scope recursion partitions the initial scope: masks sum to the scope (=1)
    att_sum = jnp.sum(attention_seq, axis=1)[:, 0]          # (B, H, W)
    assert jnp.allclose(att_sum, jnp.ones((B, H, W)), atol=1e-4)
    assert bool(jnp.isfinite(latent_loss))
    print("KERNEL_OK")
</pallas_src>

<mosaic_0001>
module attributes {stable_mosaic.version = 11 : i64} {
  func.func @_monet_kernel(%arg0: i32, %arg1: memref<3x256xf32, #tpu.memory_space<vmem>>, %arg2: memref<1x256xf32, #tpu.memory_space<vmem>>, %arg3: memref<32x7xf32, #tpu.memory_space<vmem>>, %arg4: memref<32x5xf32, #tpu.memory_space<vmem>>, %arg5: memref<16x33xf32, #tpu.memory_space<vmem>>, %arg6: memref<128x17xf32, #tpu.memory_space<vmem>>, %arg7: memref<16x128xf32, #tpu.memory_space<vmem>>, %arg8: memref<32x17xf32, #tpu.memory_space<vmem>>, %arg9: memref<4x33xf32, #tpu.memory_space<vmem>>, %arg10: memref<8x256xf32, #tpu.memory_space<vmem>>, %arg11: memref<32x256xf32, #tpu.memory_space<vmem>>, %arg12: memref<1x256xf32, #tpu.memory_space<vmem>>) attributes {dimension_semantics = [#tpu.dimension_semantics<parallel>], iteration_bounds = array<i64: 2>, scalar_prefetch = 0 : i64, scratch_operands = 0 : i64, tpu.core_type = #tpu.core_type<tc>, window_params = [{transform_indices = @transform_0, window_bounds = array<i64: 3, 256>}, {transform_indices = @transform_1, window_bounds = array<i64: 1, 256>}, {pipeline_mode = #tpu.pipeline_mode<synchronous>, transform_indices = @transform_2, window_bounds = array<i64: 32, 7>}, {pipeline_mode = #tpu.pipeline_mode<synchronous>, transform_indices = @transform_3, window_bounds = array<i64: 32, 5>}, {pipeline_mode = #tpu.pipeline_mode<synchronous>, transform_indices = @transform_4, window_bounds = array<i64: 16, 33>}, {pipeline_mode = #tpu.pipeline_mode<synchronous>, transform_indices = @transform_5, window_bounds = array<i64: 128, 17>}, {pipeline_mode = #tpu.pipeline_mode<synchronous>, transform_indices = @transform_6, window_bounds = array<i64: 16, 128>}, {pipeline_mode = #tpu.pipeline_mode<synchronous>, transform_indices = @transform_7, window_bounds = array<i64: 32, 17>}, {pipeline_mode = #tpu.pipeline_mode<synchronous>, transform_indices = @transform_8, window_bounds = array<i64: 4, 33>}, {transform_indices = @transform_9, window_bounds = array<i64: 8, 256>}, {transform_indices = @transform_10, window_bounds = array<i64: 32, 256>}, {transform_indices = @transform_11, window_bounds = array<i64: 1, 256>}]} {
    %c0 = arith.constant 0 : index
    %c0_0 = arith.constant 0 : index
    %0 = vector.load %arg1[%c0, %c0_0] : memref<3x256xf32, #tpu.memory_space<vmem>>, vector<3x256xf32>
    %c0_1 = arith.constant 0 : index
    %c0_2 = arith.constant 0 : index
    %1 = vector.load %arg2[%c0_1, %c0_2] : memref<1x256xf32, #tpu.memory_space<vmem>>, vector<1x256xf32>
    %c0_3 = arith.constant 0 : index
    %c0_4 = arith.constant 0 : index
    %2 = vector.load %arg3[%c0_3, %c0_4] : memref<32x7xf32, #tpu.memory_space<vmem>>, vector<32x7xf32>
    %3 = vector.extract_strided_slice %2 {offsets = [0, 0], sizes = [32, 1], strides = [1, 1]} : vector<32x7xf32> to vector<32x1xf32>
    %4 = vector.extract_strided_slice %2 {offsets = [0, 1], sizes = [32, 1], strides = [1, 1]} : vector<32x7xf32> to vector<32x1xf32>
    %5 = vector.extract_strided_slice %2 {offsets = [0, 2], sizes = [32, 1], strides = [1, 1]} : vector<32x7xf32> to vector<32x1xf32>
    %6 = vector.extract_strided_slice %2 {offsets = [0, 3], sizes = [32, 1], strides = [1, 1]} : vector<32x7xf32> to vector<32x1xf32>
    %7 = vector.extract_strided_slice %2 {offsets = [0, 4], sizes = [32, 1], strides = [1, 1]} : vector<32x7xf32> to vector<32x1xf32>
    %8 = vector.extract_strided_slice %2 {offsets = [0, 5], sizes = [32, 1], strides = [1, 1]} : vector<32x7xf32> to vector<32x1xf32>
    %9 = vector.extract_strided_slice %2 {offsets = [0, 6], sizes = [1, 1], strides = [1, 1]} : vector<32x7xf32> to vector<1x1xf32>
    %c0_5 = arith.constant 0 : index
    %c0_6 = arith.constant 0 : index
    %10 = vector.load %arg4[%c0_5, %c0_6] : memref<32x5xf32, #tpu.memory_space<vmem>>, vector<32x5xf32>
    %11 = vector.extract_strided_slice %10 {offsets = [0, 0], sizes = [32, 1], strides = [1, 1]} : vector<32x5xf32> to vector<32x1xf32>
    %12 = vector.extract_strided_slice %10 {offsets = [0, 1], sizes = [32, 1], strides = [1, 1]} : vector<32x5xf32> to vector<32x1xf32>
    %13 = vector.extract_strided_slice %10 {offsets = [0, 2], sizes = [32, 1], strides = [1, 1]} : vector<32x5xf32> to vector<32x1xf32>
    %14 = vector.extract_strided_slice %10 {offsets = [0, 3], sizes = [32, 1], strides = [1, 1]} : vector<32x5xf32> to vector<32x1xf32>
    %15 = vector.extract_strided_slice %10 {offsets = [0, 4], sizes = [32, 1], strides = [1, 1]} : vector<32x5xf32> to vector<32x1xf32>
    %c0_7 = arith.constant 0 : index
    %c0_8 = arith.constant 0 : index
    %16 = vector.load %arg5[%c0_7, %c0_8] : memref<16x33xf32, #tpu.memory_space<vmem>>, vector<16x33xf32>
    %17 = vector.extract_strided_slice %16 {offsets = [0, 0], sizes = [16, 32], strides = [1, 1]} : vector<16x33xf32> to vector<16x32xf32>
    %18 = vector.extract_strided_slice %16 {offsets = [0, 32], sizes = [16, 1], strides = [1, 1]} : vector<16x33xf32> to vector<16x1xf32>
    %c0_9 = arith.constant 0 : index
    %c0_10 = arith.constant 0 : index
    %19 = vector.load %arg6[%c0_9, %c0_10] : memref<128x17xf32, #tpu.memory_space<vmem>>, vector<128x17xf32>
    %20 = vector.extract_strided_slice %19 {offsets = [0, 0], sizes = [128, 16], strides = [1, 1]} : vector<128x17xf32> to vector<128x16xf32>
    %21 = vector.extract_strided_slice %19 {offsets = [0, 16], sizes = [128, 1], strides = [1, 1]} : vector<128x17xf32> to vector<128x1xf32>
    %c0_11 = arith.constant 0 : index
    %c0_12 = arith.constant 0 : index
    %22 = vector.load %arg7[%c0_11, %c0_12] : memref<16x128xf32, #tpu.memory_space<vmem>>, vector<16x128xf32>
    %c0_13 = arith.constant 0 : index
    %c0_14 = arith.constant 0 : index
    %23 = vector.load %arg8[%c0_13, %c0_14] : memref<32x17xf32, #tpu.memory_space<vmem>>, vector<32x17xf32>
    %24 = vector.extract_strided_slice %23 {offsets = [0, 0], sizes = [32, 16], strides = [1, 1]} : vector<32x17xf32> to vector<32x16xf32>
    %25 = vector.extract_strided_slice %23 {offsets = [0, 16], sizes = [32, 1], strides = [1, 1]} : vector<32x17xf32> to vector<32x1xf32>
    %c0_15 = arith.constant 0 : index
    %c0_16 = arith.constant 0 : index
    %26 = vector.load %arg9[%c0_15, %c0_16] : memref<4x33xf32, #tpu.memory_space<vmem>>, vector<4x33xf32>
    %27 = vector.extract_strided_slice %26 {offsets = [0, 0], sizes = [4, 32], strides = [1, 1]} : vector<4x33xf32> to vector<4x32xf32>
    %28 = vector.extract_strided_slice %26 {offsets = [0, 32], sizes = [4, 1], strides = [1, 1]} : vector<4x33xf32> to vector<4x1xf32>
    %29 = vector.extract_strided_slice %0 {offsets = [0, 0], sizes = [1, 256], strides = [1, 1]} : vector<3x256xf32> to vector<1x256xf32>
    %30 = vector.broadcast %3 : vector<32x1xf32> to vector<32x256xf32>
    %31 = vector.broadcast %29 : vector<1x256xf32> to vector<32x256xf32>
    %32 = arith.mulf %30, %31 : vector<32x256xf32>
    %33 = vector.extract_strided_slice %0 {offsets = [1, 0], sizes = [1, 256], strides = [1, 1]} : vector<3x256xf32> to vector<1x256xf32>
    %34 = vector.broadcast %4 : vector<32x1xf32> to vector<32x256xf32>
    %35 = vector.broadcast %33 : vector<1x256xf32> to vector<32x256xf32>
    %36 = arith.mulf %34, %35 : vector<32x256xf32>
    %37 = arith.addf %32, %36 : vector<32x256xf32>
    %38 = vector.extract_strided_slice %0 {offsets = [2, 0], sizes = [1, 256], strides = [1, 1]} : vector<3x256xf32> to vector<1x256xf32>
    %39 = vector.broadcast %5 : vector<32x1xf32> to vector<32x256xf32>
    %40 = vector.broadcast %38 : vector<1x256xf32> to vector<32x256xf32>
    %41 = arith.mulf %39, %40 : vector<32x256xf32>
    %42 = arith.addf %37, %41 : vector<32x256xf32>
    %43 = vector.broadcast %7 : vector<32x1xf32> to vector<32x256xf32>
    %44 = arith.addf %42, %43 : vector<32x256xf32>
    %45 = vector.extract_strided_slice %0 {offsets = [0, 0], sizes = [1, 256], strides = [1, 1]} : vector<3x256xf32> to vector<1x256xf32>
    %46 = vector.broadcast %12 : vector<32x1xf32> to vector<32x256xf32>
    %47 = vector.broadcast %45 : vector<1x256xf32> to vector<32x256xf32>
    %48 = arith.mulf %46, %47 : vector<32x256xf32>
    %49 = vector.extract_strided_slice %0 {offsets = [1, 0], sizes = [1, 256], strides = [1, 1]} : vector<3x256xf32> to vector<1x256xf32>
    %50 = vector.broadcast %13 : vector<32x1xf32> to vector<32x256xf32>
    %51 = vector.broadcast %49 : vector<1x256xf32> to vector<32x256xf32>
    %52 = arith.mulf %50, %51 : vector<32x256xf32>
    %53 = arith.addf %48, %52 : vector<32x256xf32>
    %54 = vector.extract_strided_slice %0 {offsets = [2, 0], sizes = [1, 256], strides = [1, 1]} : vector<3x256xf32> to vector<1x256xf32>
    %55 = vector.broadcast %14 : vector<32x1xf32> to vector<32x256xf32>
    %56 = vector.broadcast %54 : vector<1x256xf32> to vector<32x256xf32>
    %57 = arith.mulf %55, %56 : vector<32x256xf32>
    %58 = arith.addf %53, %57 : vector<32x256xf32>
    %59 = vector.broadcast %15 : vector<32x1xf32> to vector<32x256xf32>
    %60 = arith.addf %58, %59 : vector<32x256xf32>
    %cst = arith.constant 0.000000e+00 : f32
    %61 = vector.broadcast %cst : f32 to vector<1x256xf32>
    %62 = vector.broadcast %6 : vector<32x1xf32> to vector<32x256xf32>
    %63 = vector.broadcast %1 : vector<1x256xf32> to vector<32x256xf32>
    %64 = arith.mulf %62, %63 : vector<32x256xf32>
    %65 = arith.addf %44, %64 : vector<32x256xf32>
    %cst_17 = arith.constant 0.000000e+00 : f32
    %66 = vector.broadcast %cst_17 : f32 to vector<32x256xf32>
    %67 = arith.maximumf %65, %66 : vector<32x256xf32>
    %68 = vector.broadcast %8 : vector<32x1xf32> to vector<32x256xf32>
    %69 = arith.mulf %68, %67 : vector<32x256xf32>
    %cst_18 = arith.constant dense<0.000000e+00> : vector<256xf32>
    %70 = vector.multi_reduction <add>, %69, %cst_18 [0] : vector<32x256xf32> to vector<256xf32>
    %71 = vector.shape_cast %70 : vector<256xf32> to vector<1x256xf32>
    %72 = vector.broadcast %9 : vector<1x1xf32> to vector<1x256xf32>
    %73 = arith.addf %71, %72 : vector<1x256xf32>
    %74 = arith.negf %73 : vector<1x256xf32>
    %75 = math.exp %74 : vector<1x256xf32>
    %cst_19 = arith.constant 1.000000e+00 : f32
    %76 = vector.broadcast %cst_19 : f32 to vector<1x256xf32>
    %77 = arith.addf %76, %75 : vector<1x256xf32>
    %78 = arith.divf %76, %77 : vector<1x256xf32>
    %79 = arith.mulf %1, %78 : vector<1x256xf32>
    %cst_20 = arith.constant 1.000000e+00 : f32
    %80 = vector.broadcast %cst_20 : f32 to vector<1x256xf32>
    %81 = arith.subf %80, %78 : vector<1x256xf32>
    %82 = arith.mulf %1, %81 : vector<1x256xf32>
    %c0_21 = arith.constant 0 : index
    %c0_22 = arith.constant 0 : index
    %83 = vector.load %arg10[%c0_21, %c0_22] : memref<8x256xf32, #tpu.memory_space<vmem>>, vector<1x256xf32>
    tpu.vector_store %arg10[%c0_21, %c0_22], %79 {strides = array<i32>} : memref<8x256xf32, #tpu.memory_space<vmem>>, vector<1x256xf32>,
    %84 = vector.broadcast %11 : vector<32x1xf32> to vector<32x256xf32>
    %85 = vector.broadcast %79 : vector<1x256xf32> to vector<32x256xf32>
    %86 = arith.mulf %84, %85 : vector<32x256xf32>
    %87 = arith.addf %60, %86 : vector<32x256xf32>
    %cst_23 = arith.constant 0.000000e+00 : f32
    %88 = vector.broadcast %cst_23 : f32 to vector<32x256xf32>
    %89 = arith.maximumf %87, %88 : vector<32x256xf32>
    %cst_24 = arith.constant dense<0.000000e+00> : vector<16x256xf32>
    %90 = tpu.matmul %17, %89, %cst_24 {dimension_numbers = #tpu.dot_dimension_numbers<[1], [0], [0], [1], [0, 0, 1, 1], [], []>} : vector<16x32xf32>, vector<32x256xf32>, vector<16x256xf32> -> vector<16x256xf32>
    %91 = vector.broadcast %18 : vector<16x1xf32> to vector<16x256xf32>
    %92 = arith.addf %90, %91 : vector<16x256xf32>
    %cst_25 = arith.constant dense<0.000000e+00> : vector<128x256xf32>
    %93 = tpu.matmul %20, %92, %cst_25 {dimension_numbers = #tpu.dot_dimension_numbers<[1], [0], [0], [1], [0, 0, 1, 1], [], []>} : vector<128x16xf32>, vector<16x256xf32>, vector<128x256xf32> -> vector<128x256xf32>
    %cst_26 = arith.constant 2.000000e+00 : f32
    %94 = vector.broadcast %cst_26 : f32 to vector<128x256xf32>
    %95 = arith.mulf %94, %93 : vector<128x256xf32>
    %96 = vector.broadcast %21 : vector<128x1xf32> to vector<128x256xf32>
    %97 = arith.subf %96, %95 : vector<128x256xf32>
    %cst_27 = arith.constant dense<0x7F800000> : vector<256xf32>
    %98 = vector.multi_reduction <minimumf>, %97, %cst_27 [0] : vector<128x256xf32> to vector<256xf32>
    %99 = vector.shape_cast %98 : vector<256xf32> to vector<1x256xf32>
    %100 = vector.broadcast %99 : vector<1x256xf32> to vector<128x256xf32>
    %101 = arith.cmpf oeq, %97, %100 : vector<128x256xf32>
    %102 = arith.extui %101 : vector<128x256xi1> to vector<128x256xi32>
    %103 = arith.sitofp %102 : vector<128x256xi32> to vector<128x256xf32>
    %cst_28 = arith.constant dense<0.000000e+00> : vector<16x256xf32>
    %104 = tpu.matmul %22, %103, %cst_28 {dimension_numbers = #tpu.dot_dimension_numbers<[1], [0], [0], [1], [0, 0, 1, 1], [], []>} : vector<16x128xf32>, vector<128x256xf32>, vector<16x256xf32> -> vector<16x256xf32>
    %105 = arith.subf %104, %92 : vector<16x256xf32>
    %106 = arith.mulf %105, %105 : vector<16x256xf32>
    %cst_29 = arith.constant dense<0.000000e+00> : vector<256xf32>
    %107 = vector.multi_reduction <add>, %106, %cst_29 [0] : vector<16x256xf32> to vector<256xf32>
    %108 = vector.shape_cast %107 : vector<256xf32> to vector<1x256xf32>
    %109 = arith.addf %61, %108 : vector<1x256xf32>
    %cst_30 = arith.constant dense<0.000000e+00> : vector<32x256xf32>
    %110 = tpu.matmul %24, %104, %cst_30 {dimension_numbers = #tpu.dot_dimension_numbers<[1], [0], [0], [1], [0, 0, 1, 1], [], []>} : vector<32x16xf32>, vector<16x256xf32>, vector<32x256xf32> -> vector<32x256xf32>
    %111 = vector.broadcast %25 : vector<32x1xf32> to vector<32x256xf32>
    %112 = arith.addf %110, %111 : vector<32x256xf32>
    %cst_31 = arith.constant 0.000000e+00 : f32
    %113 = vector.broadcast %cst_31 : f32 to vector<32x256xf32>
    %114 = arith.maximumf %112, %113 : vector<32x256xf32>
    %cst_32 = arith.constant dense<0.000000e+00> : vector<4x256xf32>
    %115 = tpu.matmul %27, %114, %cst_32 {dimension_numbers = #tpu.dot_dimension_numbers<[1], [0], [0], [1], [0, 0, 1, 1], [], []>} : vector<4x32xf32>, vector<32x256xf32>, vector<4x256xf32> -> vector<4x256xf32>
    %116 = vector.broadcast %28 : vector<4x1xf32> to vector<4x256xf32>
    %117 = arith.addf %115, %116 : vector<4x256xf32>
    %c0_33 = arith.constant 0 : index
    %c0_34 = arith.constant 0 : index
    %118 = vector.load %arg11[%c0_33, %c0_34] : memref<32x256xf32, #tpu.memory_space<vmem>>, vector<4x256xf32>
    tpu.vector_store %arg11[%c0_33, %c0_34], %117 {strides = array<i32>} : memref<32x256xf32, #tpu.memory_space<vmem>>, vector<4x256xf32>,
    %119 = vector.broadcast %6 : vector<32x1xf32> to vector<32x256xf32>
    %120 = vector.broadcast %82 : vector<1x256xf32> to vector<32x256xf32>
    %121 = arith.mulf %119, %120 : vector<32x256xf32>
    %122 = arith.addf %44, %121 : vector<32x256xf32>
    %cst_35 = arith.constant 0.000000e+00 : f32
    %123 = vector.broadcast %cst_35 : f32 to vector<32x256xf32>
    %124 = arith.maximumf %122, %123 : vector<32x256xf32>
    %125 = vector.broadcast %8 : vector<32x1xf32> to vector<32x256xf32>
    %126 = arith.mulf %125, %124 : vector<32x256xf32>
    %cst_36 = arith.constant dense<0.000000e+00> : vector<256xf32>
    %127 = vector.multi_reduction <add>, %126, %cst_36 [0] : vector<32x256xf32> to vector<256xf32>
    %128 = vector.shape_cast %127 : vector<256xf32> to vector<1x256xf32>
    %129 = vector.broadcast %9 : vector<1x1xf32> to vector<1x256xf32>
    %130 = arith.addf %128, %129 : vector<1x256xf32>
    %131 = arith.negf %130 : vector<1x256xf32>
    %132 = math.exp %131 : vector<1x256xf32>
    %cst_37 = arith.constant 1.000000e+00 : f32
    %133 = vector.broadcast %cst_37 : f32 to vector<1x256xf32>
    %134 = arith.addf %133, %132 : vector<1x256xf32>
    %135 = arith.divf %133, %134 : vector<1x256xf32>
    %136 = arith.mulf %82, %135 : vector<1x256xf32>
    %cst_38 = arith.constant 1.000000e+00 : f32
    %137 = vector.broadcast %cst_38 : f32 to vector<1x256xf32>
    %138 = arith.subf %137, %135 : vector<1x256xf32>
    %139 = arith.mulf %82, %138 : vector<1x256xf32>
    %c1 = arith.constant 1 : index
    %c0_39 = arith.constant 0 : index
    %140 = vector.load %arg10[%c1, %c0_39] : memref<8x256xf32, #tpu.memory_space<vmem>>, vector<1x256xf32>
    tpu.vector_store %arg10[%c1, %c0_39], %136 {strides = array<i32>} : memref<8x256xf32, #tpu.memory_space<vmem>>, vector<1x256xf32>,
    %141 = vector.broadcast %11 : vector<32x1xf32> to vector<32x256xf32>
    %142 = vector.broadcast %136 : vector<1x256xf32> to vector<32x256xf32>
    %143 = arith.mulf %141, %142 : vector<32x256xf32>
    %144 = arith.addf %60, %143 : vector<32x256xf32>
    %cst_40 = arith.constant 0.000000e+00 : f32
    %145 = vector.broadcast %cst_40 : f32 to vector<32x256xf32>
    %146 = arith.maximumf %144, %145 : vector<32x256xf32>
    %cst_41 = arith.constant dense<0.000000e+00> : vector<16x256xf32>
    %147 = tpu.matmul %17, %146, %cst_41 {dimension_numbers = #tpu.dot_dimension_numbers<[1], [0], [0], [1], [0, 0, 1, 1], [], []>} : vector<16x32xf32>, vector<32x256xf32>, vector<16x256xf32> -> vector<16x256xf32>
    %148 = vector.broadcast %18 : vector<16x1xf32> to vector<16x256xf32>
    %149 = arith.addf %147, %148 : vector<16x256xf32>
    %cst_42 = arith.constant dense<0.000000e+00> : vector<128x256xf32>
    %150 = tpu.matmul %20, %149, %cst_42 {dimension_numbers = #tpu.dot_dimension_numbers<[1], [0], [0], [1], [0, 0, 1, 1], [], []>} : vector<128x16xf32>, vector<16x256xf32>, vector<128x256xf32> -> vector<128x256xf32>
    %cst_43 = arith.constant 2.000000e+00 : f32
    %151 = vector.broadcast %cst_43 : f32 to vector<128x256xf32>
    %152 = arith.mulf %151, %150 : vector<128x256xf32>
    %153 = vector.broadcast %21 : vector<128x1xf32> to vector<128x256xf32>
    %154 = arith.subf %153, %152 : vector<128x256xf32>
    %cst_44 = arith.constant dense<0x7F800000> : vector<256xf32>
    %155 = vector.multi_reduction <minimumf>, %154, %cst_44 [0] : vector<128x256xf32> to vector<256xf32>
    %156 = vector.shape_cast %155 : vector<256xf32> to vector<1x256xf32>
    %157 = vector.broadcast %156 : vector<1x256xf32> to vector<128x256xf32>
    %158 = arith.cmpf oeq, %154, %157 : vector<128x256xf32>
    %159 = arith.extui %158 : vector<128x256xi1> to vector<128x256xi32>
    %160 = arith.sitofp %159 : vector<128x256xi32> to vector<128x256xf32>
    %cst_45 = arith.constant dense<0.000000e+00> : vector<16x256xf32>
    %161 = tpu.matmul %22, %160, %cst_45 {dimension_numbers = #tpu.dot_dimension_numbers<[1], [0], [0], [1], [0, 0, 1, 1], [], []>} : vector<16x128xf32>, vector<128x256xf32>, vector<16x256xf32> -> vector<16x256xf32>
    %162 = arith.subf %161, %149 : vector<16x256xf32>
    %163 = arith.mulf %162, %162 : vector<16x256xf32>
    %cst_46 = arith.constant dense<0.000000e+00> : vector<256xf32>
    %164 = vector.multi_reduction <add>, %163, %cst_46 [0] : vector<16x256xf32> to vector<256xf32>
    %165 = vector.shape_cast %164 : vector<256xf32> to vector<1x256xf32>
    %166 = arith.addf %109, %165 : vector<1x256xf32>
    %cst_47 = arith.constant dense<0.000000e+00> : vector<32x256xf32>
    %167 = tpu.matmul %24, %161, %cst_47 {dimension_numbers = #tpu.dot_dimension_numbers<[1], [0], [0], [1], [0, 0, 1, 1], [], []>} : vector<32x16xf32>, vector<16x256xf32>, vector<32x256xf32> -> vector<32x256xf32>
    %168 = vector.broadcast %25 : vector<32x1xf32> to vector<32x256xf32>
    %169 = arith.addf %167, %168 : vector<32x256xf32>
    %cst_48 = arith.constant 0.000000e+00 : f32
    %170 = vector.broadcast %cst_48 : f32 to vector<32x256xf32>
    %171 = arith.maximumf %169, %170 : vector<32x256xf32>
    %cst_49 = arith.constant dense<0.000000e+00> : vector<4x256xf32>
    %172 = tpu.matmul %27, %171, %cst_49 {dimension_numbers = #tpu.dot_dimension_numbers<[1], [0], [0], [1], [0, 0, 1, 1], [], []>} : vector<4x32xf32>, vector<32x256xf32>, vector<4x256xf32> -> vector<4x256xf32>
    %173 = vector.broadcast %28 : vector<4x1xf32> to vector<4x256xf32>
    %174 = arith.addf %172, %173 : vector<4x256xf32>
    %c4 = arith.constant 4 : index
    %c0_50 = arith.constant 0 : index
    %175 = vector.load %arg11[%c4, %c0_50] : memref<32x256xf32, #tpu.memory_space<vmem>>, vector<4x256xf32>
    tpu.vector_store %arg11[%c4, %c0_50], %174 {strides = array<i32>} : memref<32x256xf32, #tpu.memory_space<vmem>>, vector<4x256xf32>,
    %176 = vector.broadcast %6 : vector<32x1xf32> to vector<32x256xf32>
    %177 = vector.broadcast %139 : vector<1x256xf32> to vector<32x256xf32>
    %178 = arith.mulf %176, %177 : vector<32x256xf32>
    %179 = arith.addf %44, %178 : vector<32x256xf32>
    %cst_51 = arith.constant 0.000000e+00 : f32
    %180 = vector.broadcast %cst_51 : f32 to vector<32x256xf32>
    %181 = arith.maximumf %179, %180 : vector<32x256xf32>
    %182 = vector.broadcast %8 : vector<32x1xf32> to vector<32x256xf32>
    %183 = arith.mulf %182, %181 : vector<32x256xf32>
    %cst_52 = arith.constant dense<0.000000e+00> : vector<256xf32>
    %184 = vector.multi_reduction <add>, %183, %cst_52 [0] : vector<32x256xf32> to vector<256xf32>
    %185 = vector.shape_cast %184 : vector<256xf32> to vector<1x256xf32>
    %186 = vector.broadcast %9 : vector<1x1xf32> to vector<1x256xf32>
    %187 = arith.addf %185, %186 : vector<1x256xf32>
    %188 = arith.negf %187 : vector<1x256xf32>
    %189 = math.exp %188 : vector<1x256xf32>
    %cst_53 = arith.constant 1.000000e+00 : f32
    %190 = vector.broadcast %cst_53 : f32 to vector<1x256xf32>
    %191 = arith.addf %190, %189 : vector<1x256xf32>
    %192 = arith.divf %190, %191 : vector<1x256xf32>
    %193 = arith.mulf %139, %192 : vector<1x256xf32>
    %cst_54 = arith.constant 1.000000e+00 : f32
    %194 = vector.broadcast %cst_54 : f32 to vector<1x256xf32>
    %195 = arith.subf %194, %192 : vector<1x256xf32>
    %196 = arith.mulf %139, %195 : vector<1x256xf32>
    %c2 = arith.constant 2 : index
    %c0_55 = arith.constant 0 : index
    %197 = vector.load %arg10[%c2, %c0_55] : memref<8x256xf32, #tpu.memory_space<vmem>>, vector<1x256xf32>
    tpu.vector_store %arg10[%c2, %c0_55], %193 {strides = array<i32>} : memref<8x256xf32, #tpu.memory_space<vmem>>, vector<1x256xf32>,
    %198 = vector.broadcast %11 : vector<32x1xf32> to vector<32x256xf32>
    %199 = vector.broadcast %193 : vector<1x256xf32> to vector<32x256xf32>
    %200 = arith.mulf %198, %199 : vector<32x256xf32>
    %201 = arith.addf %60, %200 : vector<32x256xf32>
    %cst_56 = arith.constant 0.000000e+00 : f32
    %202 = vector.broadcast %cst_56 : f32 to vector<32x256xf32>
    %203 = arith.maximumf %201, %202 : vector<32x256xf32>
    %cst_57 = arith.constant dense<0.000000e+00> : vector<16x256xf32>
    %204 = tpu.matmul %17, %203, %cst_57 {dimension_numbers = #tpu.dot_dimension_numbers<[1], [0], [0], [1], [0, 0, 1, 1], [], []>} : vector<16x32xf32>, vector<32x256xf32>, vector<16x256xf32> -> vector<16x256xf32>
    %205 = vector.broadcast %18 : vector<16x1xf32> to vector<16x256xf32>
    %206 = arith.addf %204, %205 : vector<16x256xf32>
    %cst_58 = arith.constant dense<0.000000e+00> : vector<128x256xf32>
    %207 = tpu.matmul %20, %206, %cst_58 {dimension_numbers = #tpu.dot_dimension_numbers<[1], [0], [0], [1], [0, 0, 1, 1], [], []>} : vector<128x16xf32>, vector<16x256xf32>, vector<128x256xf32> -> vector<128x256xf32>
    %cst_59 = arith.constant 2.000000e+00 : f32
    %208 = vector.broadcast %cst_59 : f32 to vector<128x256xf32>
    %209 = arith.mulf %208, %207 : vector<128x256xf32>
    %210 = vector.broadcast %21 : vector<128x1xf32> to vector<128x256xf32>
    %211 = arith.subf %210, %209 : vector<128x256xf32>
    %cst_60 = arith.constant dense<0x7F800000> : vector<256xf32>
    %212 = vector.multi_reduction <minimumf>, %211, %cst_60 [0] : vector<128x256xf32> to vector<256xf32>
    %213 = vector.shape_cast %212 : vector<256xf32> to vector<1x256xf32>
    %214 = vector.broadcast %213 : vector<1x256xf32> to vector<128x256xf32>
    %215 = arith.cmpf oeq, %211, %214 : vector<128x256xf32>
    %216 = arith.extui %215 : vector<128x256xi1> to vector<128x256xi32>
    %217 = arith.sitofp %216 : vector<128x256xi32> to vector<128x256xf32>
    %cst_61 = arith.constant dense<0.000000e+00> : vector<16x256xf32>
    %218 = tpu.matmul %22, %217, %cst_61 {dimension_numbers = #tpu.dot_dimension_numbers<[1], [0], [0], [1], [0, 0, 1, 1], [], []>} : vector<16x128xf32>, vector<128x256xf32>, vector<16x256xf32> -> vector<16x256xf32>
    %219 = arith.subf %218, %206 : vector<16x256xf32>
    %220 = arith.mulf %219, %219 : vector<16x256xf32>
    %cst_62 = arith.constant dense<0.000000e+00> : vector<256xf32>
    %221 = vector.multi_reduction <add>, %220, %cst_62 [0] : vector<16x256xf32> to vector<256xf32>
    %222 = vector.shape_cast %221 : vector<256xf32> to vector<1x256xf32>
    %223 = arith.addf %166, %222 : vector<1x256xf32>
    %cst_63 = arith.constant dense<0.000000e+00> : vector<32x256xf32>
    %224 = tpu.matmul %24, %218, %cst_63 {dimension_numbers = #tpu.dot_dimension_numbers<[1], [0], [0], [1], [0, 0, 1, 1], [], []>} : vector<32x16xf32>, vector<16x256xf32>, vector<32x256xf32> -> vector<32x256xf32>
    %225 = vector.broadcast %25 : vector<32x1xf32> to vector<32x256xf32>
    %226 = arith.addf %224, %225 : vector<32x256xf32>
    %cst_64 = arith.constant 0.000000e+00 : f32
    %227 = vector.broadcast %cst_64 : f32 to vector<32x256xf32>
    %228 = arith.maximumf %226, %227 : vector<32x256xf32>
    %cst_65 = arith.constant dense<0.000000e+00> : vector<4x256xf32>
    %229 = tpu.matmul %27, %228, %cst_65 {dimension_numbers = #tpu.dot_dimension_numbers<[1], [0], [0], [1], [0, 0, 1, 1], [], []>} : vector<4x32xf32>, vector<32x256xf32>, vector<4x256xf32> -> vector<4x256xf32>
    %230 = vector.broadcast %28 : vector<4x1xf32> to vector<4x256xf32>
    %231 = arith.addf %229, %230 : vector<4x256xf32>
    %c8 = arith.constant 8 : index
    %c0_66 = arith.constant 0 : index
    %232 = vector.load %arg11[%c8, %c0_66] : memref<32x256xf32, #tpu.memory_space<vmem>>, vector<4x256xf32>
    tpu.vector_store %arg11[%c8, %c0_66], %231 {strides = array<i32>} : memref<32x256xf32, #tpu.memory_space<vmem>>, vector<4x256xf32>,
    %233 = vector.broadcast %6 : vector<32x1xf32> to vector<32x256xf32>
    %234 = vector.broadcast %196 : vector<1x256xf32> to vector<32x256xf32>
    %235 = arith.mulf %233, %234 : vector<32x256xf32>
    %236 = arith.addf %44, %235 : vector<32x256xf32>
    %cst_67 = arith.constant 0.000000e+00 : f32
    %237 = vector.broadcast %cst_67 : f32 to vector<32x256xf32>
    %238 = arith.maximumf %236, %237 : vector<32x256xf32>
    %239 = vector.broadcast %8 : vector<32x1xf32> to vector<32x256xf32>
    %240 = arith.mulf %239, %238 : vector<32x256xf32>
    %cst_68 = arith.constant dense<0.000000e+00> : vector<256xf32>
    %241 = vector.multi_reduction <add>, %240, %cst_68 [0] : vector<32x256xf32> to vector<256xf32>
    %242 = vector.shape_cast %241 : vector<256xf32> to vector<1x256xf32>
    %243 = vector.broadcast %9 : vector<1x1xf32> to vector<1x256xf32>
    %244 = arith.addf %242, %243 : vector<1x256xf32>
    %245 = arith.negf %244 : vector<1x256xf32>
    %246 = math.exp %245 : vector<1x256xf32>
    %cst_69 = arith.constant 1.000000e+00 : f32
    %247 = vector.broadcast %cst_69 : f32 to vector<1x256xf32>
    %248 = arith.addf %247, %246 : vector<1x256xf32>
    %249 = arith.divf %247, %248 : vector<1x256xf32>
    %250 = arith.mulf %196, %249 : vector<1x256xf32>
    %cst_70 = arith.constant 1.000000e+00 : f32
    %251 = vector.broadcast %cst_70 : f32 to vector<1x256xf32>
    %252 = arith.subf %251, %249 : vector<1x256xf32>
    %253 = arith.mulf %196, %252 : vector<1x256xf32>
    %c3 = arith.constant 3 : index
    %c0_71 = arith.constant 0 : index
    %254 = vector.load %arg10[%c3, %c0_71] : memref<8x256xf32, #tpu.memory_space<vmem>>, vector<1x256xf32>
    tpu.vector_store %arg10[%c3, %c0_71], %250 {strides = array<i32>} : memref<8x256xf32, #tpu.memory_space<vmem>>, vector<1x256xf32>,
    %255 = vector.broadcast %11 : vector<32x1xf32> to vector<32x256xf32>
    %256 = vector.broadcast %250 : vector<1x256xf32> to vector<32x256xf32>
    %257 = arith.mulf %255, %256 : vector<32x256xf32>
    %258 = arith.addf %60, %257 : vector<32x256xf32>
    %cst_72 = arith.constant 0.000000e+00 : f32
    %259 = vector.broadcast %cst_72 : f32 to vector<32x256xf32>
    %260 = arith.maximumf %258, %259 : vector<32x256xf32>
    %cst_73 = arith.constant dense<0.000000e+00> : vector<16x256xf32>
    %261 = tpu.matmul %17, %260, %cst_73 {dimension_numbers = #tpu.dot_dimension_numbers<[1], [0], [0], [1], [0, 0, 1, 1], [], []>} : vector<16x32xf32>, vector<32x256xf32>, vector<16x256xf32> -> vector<16x256xf32>
    %262 = vector.broadcast %18 : vector<16x1xf32> to vector<16x256xf32>
    %263 = arith.addf %261, %262 : vector<16x256xf32>
    %cst_74 = arith.constant dense<0.000000e+00> : vector<128x256xf32>
    %264 = tpu.matmul %20, %263, %cst_74 {dimension_numbers = #tpu.dot_dimension_numbers<[1], [0], [0], [1], [0, 0, 1, 1], [], []>} : vector<128x16xf32>, vector<16x256xf32>, vector<128x256xf32> -> vector<128x256xf32>
    %cst_75 = arith.constant 2.000000e+00 : f32
    %265 = vector.broadcast %cst_75 : f32 to vector<128x256xf32>
    %266 = arith.mulf %265, %264 : vector<128x256xf32>
    %267 = vector.broadcast %21 : vector<128x1xf32> to vector<128x256xf32>
    %268 = arith.subf %267, %266 : vector<128x256xf32>
    %cst_76 = arith.constant dense<0x7F800000> : vector<256xf32>
    %269 = vector.multi_reduction <minimumf>, %268, %cst_76 [0] : vector<128x256xf32> to vector<256xf32>
    %270 = vector.shape_cast %269 : vector<256xf32> to vector<1x256xf32>
    %271 = vector.broadcast %270 : vector<1x256xf32> to vector<128x256xf32>
    %272 = arith.cmpf oeq, %268, %271 : vector<128x256xf32>
    %273 = arith.extui %272 : vector<128x256xi1> to vector<128x256xi32>
    %274 = arith.sitofp %273 : vector<128x256xi32> to vector<128x256xf32>
    %cst_77 = arith.constant dense<0.000000e+00> : vector<16x256xf32>
    %275 = tpu.matmul %22, %274, %cst_77 {dimension_numbers = #tpu.dot_dimension_numbers<[1], [0], [0], [1], [0, 0, 1, 1], [], []>} : vector<16x128xf32>, vector<128x256xf32>, vector<16x256xf32> -> vector<16x256xf32>
    %276 = arith.subf %275, %263 : vector<16x256xf32>
    %277 = arith.mulf %276, %276 : vector<16x256xf32>
    %cst_78 = arith.constant dense<0.000000e+00> : vector<256xf32>
    %278 = vector.multi_reduction <add>, %277, %cst_78 [0] : vector<16x256xf32> to vector<256xf32>
    %279 = vector.shape_cast %278 : vector<256xf32> to vector<1x256xf32>
    %280 = arith.addf %223, %279 : vector<1x256xf32>
    %cst_79 = arith.constant dense<0.000000e+00> : vector<32x256xf32>
    %281 = tpu.matmul %24, %275, %cst_79 {dimension_numbers = #tpu.dot_dimension_numbers<[1], [0], [0], [1], [0, 0, 1, 1], [], []>} : vector<32x16xf32>, vector<16x256xf32>, vector<32x256xf32> -> vector<32x256xf32>
    %282 = vector.broadcast %25 : vector<32x1xf32> to vector<32x256xf32>
    %283 = arith.addf %281, %282 : vector<32x256xf32>
    %cst_80 = arith.constant 0.000000e+00 : f32
    %284 = vector.broadcast %cst_80 : f32 to vector<32x256xf32>
    %285 = arith.maximumf %283, %284 : vector<32x256xf32>
    %cst_81 = arith.constant dense<0.000000e+00> : vector<4x256xf32>
    %286 = tpu.matmul %27, %285, %cst_81 {dimension_numbers = #tpu.dot_dimension_numbers<[1], [0], [0], [1], [0, 0, 1, 1], [], []>} : vector<4x32xf32>, vector<32x256xf32>, vector<4x256xf32> -> vector<4x256xf32>
    %287 = vector.broadcast %28 : vector<4x1xf32> to vector<4x256xf32>
    %288 = arith.addf %286, %287 : vector<4x256xf32>
    %c12 = arith.constant 12 : index
    %c0_82 = arith.constant 0 : index
    %289 = vector.load %arg11[%c12, %c0_82] : memref<32x256xf32, #tpu.memory_space<vmem>>, vector<4x256xf32>
    tpu.vector_store %arg11[%c12, %c0_82], %288 {strides = array<i32>} : memref<32x256xf32, #tpu.memory_space<vmem>>, vector<4x256xf32>,
    %290 = vector.broadcast %6 : vector<32x1xf32> to vector<32x256xf32>
    %291 = vector.broadcast %253 : vector<1x256xf32> to vector<32x256xf32>
    %292 = arith.mulf %290, %291 : vector<32x256xf32>
    %293 = arith.addf %44, %292 : vector<32x256xf32>
    %cst_83 = arith.constant 0.000000e+00 : f32
    %294 = vector.broadcast %cst_83 : f32 to vector<32x256xf32>
    %295 = arith.maximumf %293, %294 : vector<32x256xf32>
    %296 = vector.broadcast %8 : vector<32x1xf32> to vector<32x256xf32>
    %297 = arith.mulf %296, %295 : vector<32x256xf32>
    %cst_84 = arith.constant dense<0.000000e+00> : vector<256xf32>
    %298 = vector.multi_reduction <add>, %297, %cst_84 [0] : vector<32x256xf32> to vector<256xf32>
    %299 = vector.shape_cast %298 : vector<256xf32> to vector<1x256xf32>
    %300 = vector.broadcast %9 : vector<1x1xf32> to vector<1x256xf32>
    %301 = arith.addf %299, %300 : vector<1x256xf32>
    %302 = arith.negf %301 : vector<1x256xf32>
    %303 = math.exp %302 : vector<1x256xf32>
    %cst_85 = arith.constant 1.000000e+00 : f32
    %304 = vector.broadcast %cst_85 : f32 to vector<1x256xf32>
    %305 = arith.addf %304, %303 : vector<1x256xf32>
    %306 = arith.divf %304, %305 : vector<1x256xf32>
    %307 = arith.mulf %253, %306 : vector<1x256xf32>
    %cst_86 = arith.constant 1.000000e+00 : f32
    %308 = vector.broadcast %cst_86 : f32 to vector<1x256xf32>
    %309 = arith.subf %308, %306 : vector<1x256xf32>
    %310 = arith.mulf %253, %309 : vector<1x256xf32>
    %c4_87 = arith.constant 4 : index
    %c0_88 = arith.constant 0 : index
    %311 = vector.load %arg10[%c4_87, %c0_88] : memref<8x256xf32, #tpu.memory_space<vmem>>, vector<1x256xf32>
    tpu.vector_store %arg10[%c4_87, %c0_88], %307 {strides = array<i32>} : memref<8x256xf32, #tpu.memory_space<vmem>>, vector<1x256xf32>,
    %312 = vector.broadcast %11 : vector<32x1xf32> to vector<32x256xf32>
    %313 = vector.broadcast %307 : vector<1x256xf32> to vector<32x256xf32>
    %314 = arith.mulf %312, %313 : vector<32x256xf32>
    %315 = arith.addf %60, %314 : vector<32x256xf32>
    %cst_89 = arith.constant 0.000000e+00 : f32
    %316 = vector.broadcast %cst_89 : f32 to vector<32x256xf32>
    %317 = arith.maximumf %315, %316 : vector<32x256xf32>
    %cst_90 = arith.constant dense<0.000000e+00> : vector<16x256xf32>
    %318 = tpu.matmul %17, %317, %cst_90 {dimension_numbers = #tpu.dot_dimension_numbers<[1], [0], [0], [1], [0, 0, 1, 1], [], []>} : vector<16x32xf32>, vector<32x256xf32>, vector<16x256xf32> -> vector<16x256xf32>
    %319 = vector.broadcast %18 : vector<16x1xf32> to vector<16x256xf32>
    %320 = arith.addf %318, %319 : vector<16x256xf32>
    %cst_91 = arith.constant dense<0.000000e+00> : vector<128x256xf32>
    %321 = tpu.matmul %20, %320, %cst_91 {dimension_numbers = #tpu.dot_dimension_numbers<[1], [0], [0], [1], [0, 0, 1, 1], [], []>} : vector<128x16xf32>, vector<16x256xf32>, vector<128x256xf32> -> vector<128x256xf32>
    %cst_92 = arith.constant 2.000000e+00 : f32
    %322 = vector.broadcast %cst_92 : f32 to vector<128x256xf32>
    %323 = arith.mulf %322, %321 : vector<128x256xf32>
    %324 = vector.broadcast %21 : vector<128x1xf32> to vector<128x256xf32>
    %325 = arith.subf %324, %323 : vector<128x256xf32>
    %cst_93 = arith.constant dense<0x7F800000> : vector<256xf32>
    %326 = vector.multi_reduction <minimumf>, %325, %cst_93 [0] : vector<128x256xf32> to vector<256xf32>
    %327 = vector.shape_cast %326 : vector<256xf32> to vector<1x256xf32>
    %328 = vector.broadcast %327 : vector<1x256xf32> to vector<128x256xf32>
    %329 = arith.cmpf oeq, %325, %328 : vector<128x256xf32>
    %330 = arith.extui %329 : vector<128x256xi1> to vector<128x256xi32>
    %331 = arith.sitofp %330 : vector<128x256xi32> to vector<128x256xf32>
    %cst_94 = arith.constant dense<0.000000e+00> : vector<16x256xf32>
    %332 = tpu.matmul %22, %331, %cst_94 {dimension_numbers = #tpu.dot_dimension_numbers<[1], [0], [0], [1], [0, 0, 1, 1], [], []>} : vector<16x128xf32>, vector<128x256xf32>, vector<16x256xf32> -> vector<16x256xf32>
    %333 = arith.subf %332, %320 : vector<16x256xf32>
    %334 = arith.mulf %333, %333 : vector<16x256xf32>
    %cst_95 = arith.constant dense<0.000000e+00> : vector<256xf32>
    %335 = vector.multi_reduction <add>, %334, %cst_95 [0] : vector<16x256xf32> to vector<256xf32>
    %336 = vector.shape_cast %335 : vector<256xf32> to vector<1x256xf32>
    %337 = arith.addf %280, %336 : vector<1x256xf32>
    %cst_96 = arith.constant dense<0.000000e+00> : vector<32x256xf32>
    %338 = tpu.matmul %24, %332, %cst_96 {dimension_numbers = #tpu.dot_dimension_numbers<[1], [0], [0], [1], [0, 0, 1, 1], [], []>} : vector<32x16xf32>, vector<16x256xf32>, vector<32x256xf32> -> vector<32x256xf32>
    %339 = vector.broadcast %25 : vector<32x1xf32> to vector<32x256xf32>
    %340 = arith.addf %338, %339 : vector<32x256xf32>
    %cst_97 = arith.constant 0.000000e+00 : f32
    %341 = vector.broadcast %cst_97 : f32 to vector<32x256xf32>
    %342 = arith.maximumf %340, %341 : vector<32x256xf32>
    %cst_98 = arith.constant dense<0.000000e+00> : vector<4x256xf32>
    %343 = tpu.matmul %27, %342, %cst_98 {dimension_numbers = #tpu.dot_dimension_numbers<[1], [0], [0], [1], [0, 0, 1, 1], [], []>} : vector<4x32xf32>, vector<32x256xf32>, vector<4x256xf32> -> vector<4x256xf32>
    %344 = vector.broadcast %28 : vector<4x1xf32> to vector<4x256xf32>
    %345 = arith.addf %343, %344 : vector<4x256xf32>
    %c16 = arith.constant 16 : index
    %c0_99 = arith.constant 0 : index
    %346 = vector.load %arg11[%c16, %c0_99] : memref<32x256xf32, #tpu.memory_space<vmem>>, vector<4x256xf32>
    tpu.vector_store %arg11[%c16, %c0_99], %345 {strides = array<i32>} : memref<32x256xf32, #tpu.memory_space<vmem>>, vector<4x256xf32>,
    %347 = vector.broadcast %6 : vector<32x1xf32> to vector<32x256xf32>
    %348 = vector.broadcast %310 : vector<1x256xf32> to vector<32x256xf32>
    %349 = arith.mulf %347, %348 : vector<32x256xf32>
    %350 = arith.addf %44, %349 : vector<32x256xf32>
    %cst_100 = arith.constant 0.000000e+00 : f32
    %351 = vector.broadcast %cst_100 : f32 to vector<32x256xf32>
    %352 = arith.maximumf %350, %351 : vector<32x256xf32>
    %353 = vector.broadcast %8 : vector<32x1xf32> to vector<32x256xf32>
    %354 = arith.mulf %353, %352 : vector<32x256xf32>
    %cst_101 = arith.constant dense<0.000000e+00> : vector<256xf32>
    %355 = vector.multi_reduction <add>, %354, %cst_101 [0] : vector<32x256xf32> to vector<256xf32>
    %356 = vector.shape_cast %355 : vector<256xf32> to vector<1x256xf32>
    %357 = vector.broadcast %9 : vector<1x1xf32> to vector<1x256xf32>
    %358 = arith.addf %356, %357 : vector<1x256xf32>
    %359 = arith.negf %358 : vector<1x256xf32>
    %360 = math.exp %359 : vector<1x256xf32>
    %cst_102 = arith.constant 1.000000e+00 : f32
    %361 = vector.broadcast %cst_102 : f32 to vector<1x256xf32>
    %362 = arith.addf %361, %360 : vector<1x256xf32>
    %363 = arith.divf %361, %362 : vector<1x256xf32>
    %364 = arith.mulf %310, %363 : vector<1x256xf32>
    %cst_103 = arith.constant 1.000000e+00 : f32
    %365 = vector.broadcast %cst_103 : f32 to vector<1x256xf32>
    %366 = arith.subf %365, %363 : vector<1x256xf32>
    %367 = arith.mulf %310, %366 : vector<1x256xf32>
    %c5 = arith.constant 5 : index
    %c0_104 = arith.constant 0 : index
    %368 = vector.load %arg10[%c5, %c0_104] : memref<8x256xf32, #tpu.memory_space<vmem>>, vector<1x256xf32>
    tpu.vector_store %arg10[%c5, %c0_104], %364 {strides = array<i32>} : memref<8x256xf32, #tpu.memory_space<vmem>>, vector<1x256xf32>,
    %369 = vector.broadcast %11 : vector<32x1xf32> to vector<32x256xf32>
    %370 = vector.broadcast %364 : vector<1x256xf32> to vector<32x256xf32>
    %371 = arith.mulf %369, %370 : vector<32x256xf32>
    %372 = arith.addf %60, %371 : vector<32x256xf32>
    %cst_105 = arith.constant 0.000000e+00 : f32
    %373 = vector.broadcast %cst_105 : f32 to vector<32x256xf32>
    %374 = arith.maximumf %372, %373 : vector<32x256xf32>
    %cst_106 = arith.constant dense<0.000000e+00> : vector<16x256xf32>
    %375 = tpu.matmul %17, %374, %cst_106 {dimension_numbers = #tpu.dot_dimension_numbers<[1], [0], [0], [1], [0, 0, 1, 1], [], []>} : vector<16x32xf32>, vector<32x256xf32>, vector<16x256xf32> -> vector<16x256xf32>
    %376 = vector.broadcast %18 : vector<16x1xf32> to vector<16x256xf32>
    %377 = arith.addf %375, %376 : vector<16x256xf32>
    %cst_107 = arith.constant dense<0.000000e+00> : vector<128x256xf32>
    %378 = tpu.matmul %20, %377, %cst_107 {dimension_numbers = #tpu.dot_dimension_numbers<[1], [0], [0], [1], [0, 0, 1, 1], [], []>} : vector<128x16xf32>, vector<16x256xf32>, vector<128x256xf32> -> vector<128x256xf32>
    %cst_108 = arith.constant 2.000000e+00 : f32
    %379 = vector.broadcast %cst_108 : f32 to vector<128x256xf32>
    %380 = arith.mulf %379, %378 : vector<128x256xf32>
    %381 = vector.broadcast %21 : vector<128x1xf32> to vector<128x256xf32>
    %382 = arith.subf %381, %380 : vector<128x256xf32>
    %cst_109 = arith.constant dense<0x7F800000> : vector<256xf32>
    %383 = vector.multi_reduction <minimumf>, %382, %cst_109 [0] : vector<128x256xf32> to vector<256xf32>
    %384 = vector.shape_cast %383 : vector<256xf32> to vector<1x256xf32>
    %385 = vector.broadcast %384 : vector<1x256xf32> to vector<128x256xf32>
    %386 = arith.cmpf oeq, %382, %385 : vector<128x256xf32>
    %387 = arith.extui %386 : vector<128x256xi1> to vector<128x256xi32>
    %388 = arith.sitofp %387 : vector<128x256xi32> to vector<128x256xf32>
    %cst_110 = arith.constant dense<0.000000e+00> : vector<16x256xf32>
    %389 = tpu.matmul %22, %388, %cst_110 {dimension_numbers = #tpu.dot_dimension_numbers<[1], [0], [0], [1], [0, 0, 1, 1], [], []>} : vector<16x128xf32>, vector<128x256xf32>, vector<16x256xf32> -> vector<16x256xf32>
    %390 = arith.subf %389, %377 : vector<16x256xf32>
    %391 = arith.mulf %390, %390 : vector<16x256xf32>
    %cst_111 = arith.constant dense<0.000000e+00> : vector<256xf32>
    %392 = vector.multi_reduction <add>, %391, %cst_111 [0] : vector<16x256xf32> to vector<256xf32>
    %393 = vector.shape_cast %392 : vector<256xf32> to vector<1x256xf32>
    %394 = arith.addf %337, %393 : vector<1x256xf32>
    %cst_112 = arith.constant dense<0.000000e+00> : vector<32x256xf32>
    %395 = tpu.matmul %24, %389, %cst_112 {dimension_numbers = #tpu.dot_dimension_numbers<[1], [0], [0], [1], [0, 0, 1, 1], [], []>} : vector<32x16xf32>, vector<16x256xf32>, vector<32x256xf32> -> vector<32x256xf32>
    %396 = vector.broadcast %25 : vector<32x1xf32> to vector<32x256xf32>
    %397 = arith.addf %395, %396 : vector<32x256xf32>
    %cst_113 = arith.constant 0.000000e+00 : f32
    %398 = vector.broadcast %cst_113 : f32 to vector<32x256xf32>
    %399 = arith.maximumf %397, %398 : vector<32x256xf32>
    %cst_114 = arith.constant dense<0.000000e+00> : vector<4x256xf32>
    %400 = tpu.matmul %27, %399, %cst_114 {dimension_numbers = #tpu.dot_dimension_numbers<[1], [0], [0], [1], [0, 0, 1, 1], [], []>} : vector<4x32xf32>, vector<32x256xf32>, vector<4x256xf32> -> vector<4x256xf32>
    %401 = vector.broadcast %28 : vector<4x1xf32> to vector<4x256xf32>
    %402 = arith.addf %400, %401 : vector<4x256xf32>
    %c20 = arith.constant 20 : index
    %c0_115 = arith.constant 0 : index
    %403 = vector.load %arg11[%c20, %c0_115] : memref<32x256xf32, #tpu.memory_space<vmem>>, vector<4x256xf32>
    tpu.vector_store %arg11[%c20, %c0_115], %402 {strides = array<i32>} : memref<32x256xf32, #tpu.memory_space<vmem>>, vector<4x256xf32>,
    %404 = vector.broadcast %6 : vector<32x1xf32> to vector<32x256xf32>
    %405 = vector.broadcast %367 : vector<1x256xf32> to vector<32x256xf32>
    %406 = arith.mulf %404, %405 : vector<32x256xf32>
    %407 = arith.addf %44, %406 : vector<32x256xf32>
    %cst_116 = arith.constant 0.000000e+00 : f32
    %408 = vector.broadcast %cst_116 : f32 to vector<32x256xf32>
    %409 = arith.maximumf %407, %408 : vector<32x256xf32>
    %410 = vector.broadcast %8 : vector<32x1xf32> to vector<32x256xf32>
    %411 = arith.mulf %410, %409 : vector<32x256xf32>
    %cst_117 = arith.constant dense<0.000000e+00> : vector<256xf32>
    %412 = vector.multi_reduction <add>, %411, %cst_117 [0] : vector<32x256xf32> to vector<256xf32>
    %413 = vector.shape_cast %412 : vector<256xf32> to vector<1x256xf32>
    %414 = vector.broadcast %9 : vector<1x1xf32> to vector<1x256xf32>
    %415 = arith.addf %413, %414 : vector<1x256xf32>
    %416 = arith.negf %415 : vector<1x256xf32>
    %417 = math.exp %416 : vector<1x256xf32>
    %cst_118 = arith.constant 1.000000e+00 : f32
    %418 = vector.broadcast %cst_118 : f32 to vector<1x256xf32>
    %419 = arith.addf %418, %417 : vector<1x256xf32>
    %420 = arith.divf %418, %419 : vector<1x256xf32>
    %421 = arith.mulf %367, %420 : vector<1x256xf32>
    %cst_119 = arith.constant 1.000000e+00 : f32
    %422 = vector.broadcast %cst_119 : f32 to vector<1x256xf32>
    %423 = arith.subf %422, %420 : vector<1x256xf32>
    %424 = arith.mulf %367, %423 : vector<1x256xf32>
    %c6 = arith.constant 6 : index
    %c0_120 = arith.constant 0 : index
    %425 = vector.load %arg10[%c6, %c0_120] : memref<8x256xf32, #tpu.memory_space<vmem>>, vector<1x256xf32>
    tpu.vector_store %arg10[%c6, %c0_120], %421 {strides = array<i32>} : memref<8x256xf32, #tpu.memory_space<vmem>>, vector<1x256xf32>,
    %426 = vector.broadcast %11 : vector<32x1xf32> to vector<32x256xf32>
    %427 = vector.broadcast %421 : vector<1x256xf32> to vector<32x256xf32>
    %428 = arith.mulf %426, %427 : vector<32x256xf32>
    %429 = arith.addf %60, %428 : vector<32x256xf32>
    %cst_121 = arith.constant 0.000000e+00 : f32
    %430 = vector.broadcast %cst_121 : f32 to vector<32x256xf32>
    %431 = arith.maximumf %429, %430 : vector<32x256xf32>
    %cst_122 = arith.constant dense<0.000000e+00> : vector<16x256xf32>
    %432 = tpu.matmul %17, %431, %cst_122 {dimension_numbers = #tpu.dot_dimension_numbers<[1], [0], [0], [1], [0, 0, 1, 1], [], []>} : vector<16x32xf32>, vector<32x256xf32>, vector<16x256xf32> -> vector<16x256xf32>
    %433 = vector.broadcast %18 : vector<16x1xf32> to vector<16x256xf32>
    %434 = arith.addf %432, %433 : vector<16x256xf32>
    %cst_123 = arith.constant dense<0.000000e+00> : vector<128x256xf32>
    %435 = tpu.matmul %20, %434, %cst_123 {dimension_numbers = #tpu.dot_dimension_numbers<[1], [0], [0], [1], [0, 0, 1, 1], [], []>} : vector<128x16xf32>, vector<16x256xf32>, vector<128x256xf32> -> vector<128x256xf32>
    %cst_124 = arith.constant 2.000000e+00 : f32
    %436 = vector.broadcast %cst_124 : f32 to vector<128x256xf32>
    %437 = arith.mulf %436, %435 : vector<128x256xf32>
    %438 = vector.broadcast %21 : vector<128x1xf32> to vector<128x256xf32>
    %439 = arith.subf %438, %437 : vector<128x256xf32>
    %cst_125 = arith.constant dense<0x7F800000> : vector<256xf32>
    %440 = vector.multi_reduction <minimumf>, %439, %cst_125 [0] : vector<128x256xf32> to vector<256xf32>
    %441 = vector.shape_cast %440 : vector<256xf32> to vector<1x256xf32>
    %442 = vector.broadcast %441 : vector<1x256xf32> to vector<128x256xf32>
    %443 = arith.cmpf oeq, %439, %442 : vector<128x256xf32>
    %444 = arith.extui %443 : vector<128x256xi1> to vector<128x256xi32>
    %445 = arith.sitofp %444 : vector<128x256xi32> to vector<128x256xf32>
    %cst_126 = arith.constant dense<0.000000e+00> : vector<16x256xf32>
    %446 = tpu.matmul %22, %445, %cst_126 {dimension_numbers = #tpu.dot_dimension_numbers<[1], [0], [0], [1], [0, 0, 1, 1], [], []>} : vector<16x128xf32>, vector<128x256xf32>, vector<16x256xf32> -> vector<16x256xf32>
    %447 = arith.subf %446, %434 : vector<16x256xf32>
    %448 = arith.mulf %447, %447 : vector<16x256xf32>
    %cst_127 = arith.constant dense<0.000000e+00> : vector<256xf32>
    %449 = vector.multi_reduction <add>, %448, %cst_127 [0] : vector<16x256xf32> to vector<256xf32>
    %450 = vector.shape_cast %449 : vector<256xf32> to vector<1x256xf32>
    %451 = arith.addf %394, %450 : vector<1x256xf32>
    %cst_128 = arith.constant dense<0.000000e+00> : vector<32x256xf32>
    %452 = tpu.matmul %24, %446, %cst_128 {dimension_numbers = #tpu.dot_dimension_numbers<[1], [0], [0], [1], [0, 0, 1, 1], [], []>} : vector<32x16xf32>, vector<16x256xf32>, vector<32x256xf32> -> vector<32x256xf32>
    %453 = vector.broadcast %25 : vector<32x1xf32> to vector<32x256xf32>
    %454 = arith.addf %452, %453 : vector<32x256xf32>
    %cst_129 = arith.constant 0.000000e+00 : f32
    %455 = vector.broadcast %cst_129 : f32 to vector<32x256xf32>
    %456 = arith.maximumf %454, %455 : vector<32x256xf32>
    %cst_130 = arith.constant dense<0.000000e+00> : vector<4x256xf32>
    %457 = tpu.matmul %27, %456, %cst_130 {dimension_numbers = #tpu.dot_dimension_numbers<[1], [0], [0], [1], [0, 0, 1, 1], [], []>} : vector<4x32xf32>, vector<32x256xf32>, vector<4x256xf32> -> vector<4x256xf32>
    %458 = vector.broadcast %28 : vector<4x1xf32> to vector<4x256xf32>
    %459 = arith.addf %457, %458 : vector<4x256xf32>
    %c24 = arith.constant 24 : index
    %c0_131 = arith.constant 0 : index
    %460 = vector.load %arg11[%c24, %c0_131] : memref<32x256xf32, #tpu.memory_space<vmem>>, vector<4x256xf32>
    tpu.vector_store %arg11[%c24, %c0_131], %459 {strides = array<i32>} : memref<32x256xf32, #tpu.memory_space<vmem>>, vector<4x256xf32>,
    %c7 = arith.constant 7 : index
    %c0_132 = arith.constant 0 : index
    %461 = vector.load %arg10[%c7, %c0_132] : memref<8x256xf32, #tpu.memory_space<vmem>>, vector<1x256xf32>
    tpu.vector_store %arg10[%c7, %c0_132], %424 {strides = array<i32>} : memref<8x256xf32, #tpu.memory_space<vmem>>, vector<1x256xf32>,
    %462 = vector.broadcast %11 : vector<32x1xf32> to vector<32x256xf32>
    %463 = vector.broadcast %424 : vector<1x256xf32> to vector<32x256xf32>
    %464 = arith.mulf %462, %463 : vector<32x256xf32>
    %465 = arith.addf %60, %464 : vector<32x256xf32>
    %cst_133 = arith.constant 0.000000e+00 : f32
    %466 = vector.broadcast %cst_133 : f32 to vector<32x256xf32>
    %467 = arith.maximumf %465, %466 : vector<32x256xf32>
    %cst_134 = arith.constant dense<0.000000e+00> : vector<16x256xf32>
    %468 = tpu.matmul %17, %467, %cst_134 {dimension_numbers = #tpu.dot_dimension_numbers<[1], [0], [0], [1], [0, 0, 1, 1], [], []>} : vector<16x32xf32>, vector<32x256xf32>, vector<16x256xf32> -> vector<16x256xf32>
    %469 = vector.broadcast %18 : vector<16x1xf32> to vector<16x256xf32>
    %470 = arith.addf %468, %469 : vector<16x256xf32>
    %cst_135 = arith.constant dense<0.000000e+00> : vector<128x256xf32>
    %471 = tpu.matmul %20, %470, %cst_135 {dimension_numbers = #tpu.dot_dimension_numbers<[1], [0], [0], [1], [0, 0, 1, 1], [], []>} : vector<128x16xf32>, vector<16x256xf32>, vector<128x256xf32> -> vector<128x256xf32>
    %cst_136 = arith.constant 2.000000e+00 : f32
    %472 = vector.broadcast %cst_136 : f32 to vector<128x256xf32>
    %473 = arith.mulf %472, %471 : vector<128x256xf32>
    %474 = vector.broadcast %21 : vector<128x1xf32> to vector<128x256xf32>
    %475 = arith.subf %474, %473 : vector<128x256xf32>
    %cst_137 = arith.constant dense<0x7F800000> : vector<256xf32>
    %476 = vector.multi_reduction <minimumf>, %475, %cst_137 [0] : vector<128x256xf32> to vector<256xf32>
    %477 = vector.shape_cast %476 : vector<256xf32> to vector<1x256xf32>
    %478 = vector.broadcast %477 : vector<1x256xf32> to vector<128x256xf32>
    %479 = arith.cmpf oeq, %475, %478 : vector<128x256xf32>
    %480 = arith.extui %479 : vector<128x256xi1> to vector<128x256xi32>
    %481 = arith.sitofp %480 : vector<128x256xi32> to vector<128x256xf32>
    %cst_138 = arith.constant dense<0.000000e+00> : vector<16x256xf32>
    %482 = tpu.matmul %22, %481, %cst_138 {dimension_numbers = #tpu.dot_dimension_numbers<[1], [0], [0], [1], [0, 0, 1, 1], [], []>} : vector<16x128xf32>, vector<128x256xf32>, vector<16x256xf32> -> vector<16x256xf32>
    %483 = arith.subf %482, %470 : vector<16x256xf32>
    %484 = arith.mulf %483, %483 : vector<16x256xf32>
    %cst_139 = arith.constant dense<0.000000e+00> : vector<256xf32>
    %485 = vector.multi_reduction <add>, %484, %cst_139 [0] : vector<16x256xf32> to vector<256xf32>
    %486 = vector.shape_cast %485 : vector<256xf32> to vector<1x256xf32>
    %487 = arith.addf %451, %486 : vector<1x256xf32>
    %cst_140 = arith.constant dense<0.000000e+00> : vector<32x256xf32>
    %488 = tpu.matmul %24, %482, %cst_140 {dimension_numbers = #tpu.dot_dimension_numbers<[1], [0], [0], [1], [0, 0, 1, 1], [], []>} : vector<32x16xf32>, vector<16x256xf32>, vector<32x256xf32> -> vector<32x256xf32>
    %489 = vector.broadcast %25 : vector<32x1xf32> to vector<32x256xf32>
    %490 = arith.addf %488, %489 : vector<32x256xf32>
    %cst_141 = arith.constant 0.000000e+00 : f32
    %491 = vector.broadcast %cst_141 : f32 to vector<32x256xf32>
    %492 = arith.maximumf %490, %491 : vector<32x256xf32>
    %cst_142 = arith.constant dense<0.000000e+00> : vector<4x256xf32>
    %493 = tpu.matmul %27, %492, %cst_142 {dimension_numbers = #tpu.dot_dimension_numbers<[1], [0], [0], [1], [0, 0, 1, 1], [], []>} : vector<4x32xf32>, vector<32x256xf32>, vector<4x256xf32> -> vector<4x256xf32>
    %494 = vector.broadcast %28 : vector<4x1xf32> to vector<4x256xf32>
    %495 = arith.addf %493, %494 : vector<4x256xf32>
    %c28 = arith.constant 28 : index
    %c0_143 = arith.constant 0 : index
    %496 = vector.load %arg11[%c28, %c0_143] : memref<32x256xf32, #tpu.memory_space<vmem>>, vector<4x256xf32>
    tpu.vector_store %arg11[%c28, %c0_143], %495 {strides = array<i32>} : memref<32x256xf32, #tpu.memory_space<vmem>>, vector<4x256xf32>,
    %c0_144 = arith.constant 0 : index
    %c0_145 = arith.constant 0 : index
    %497 = vector.load %arg12[%c0_144, %c0_145] : memref<1x256xf32, #tpu.memory_space<vmem>>, vector<1x256xf32>
    tpu.vector_store %arg12[%c0_144, %c0_145], %487 {strides = array<i32>} : memref<1x256xf32, #tpu.memory_space<vmem>>, vector<1x256xf32>,
    return
  }
  func.func @transform_0(%arg0: i32) -> (i32, i32) {
    %c0_i32 = arith.constant 0 : i32
    %c0_i32_0 = arith.constant 0 : i32
    return %c0_i32, %arg0 : i32, i32
  }
  func.func @transform_1(%arg0: i32) -> (i32, i32) {
    %c0_i32 = arith.constant 0 : i32
    %c0_i32_0 = arith.constant 0 : i32
    return %c0_i32, %arg0 : i32, i32
  }
  func.func @transform_2(%arg0: i32) -> (i32, i32) {
    %c0_i32 = arith.constant 0 : i32
    %c0_i32_0 = arith.constant 0 : i32
    %c0_i32_1 = arith.constant 0 : i32
    return %c0_i32, %c0_i32_0 : i32, i32
  }
  func.func @transform_3(%arg0: i32) -> (i32, i32) {
    %c0_i32 = arith.constant 0 : i32
    %c0_i32_0 = arith.constant 0 : i32
    %c0_i32_1 = arith.constant 0 : i32
    return %c0_i32, %c0_i32_0 : i32, i32
  }
  func.func @transform_4(%arg0: i32) -> (i32, i32) {
    %c0_i32 = arith.constant 0 : i32
    %c0_i32_0 = arith.constant 0 : i32
    %c0_i32_1 = arith.constant 0 : i32
    return %c0_i32, %c0_i32_0 : i32, i32
  }
  func.func @transform_5(%arg0: i32) -> (i32, i32) {
    %c0_i32 = arith.constant 0 : i32
    %c0_i32_0 = arith.constant 0 : i32
    %c0_i32_1 = arith.constant 0 : i32
    return %c0_i32, %c0_i32_0 : i32, i32
  }
  func.func @transform_6(%arg0: i32) -> (i32, i32) {
    %c0_i32 = arith.constant 0 : i32
    %c0_i32_0 = arith.constant 0 : i32
    %c0_i32_1 = arith.constant 0 : i32
    return %c0_i32, %c0_i32_0 : i32, i32
  }
  func.func @transform_7(%arg0: i32) -> (i32, i32) {
    %c0_i32 = arith.constant 0 : i32
    %c0_i32_0 = arith.constant 0 : i32
    %c0_i32_1 = arith.constant 0 : i32
    return %c0_i32, %c0_i32_0 : i32, i32
  }
  func.func @transform_8(%arg0: i32) -> (i32, i32) {
    %c0_i32 = arith.constant 0 : i32
    %c0_i32_0 = arith.constant 0 : i32
    %c0_i32_1 = arith.constant 0 : i32
    return %c0_i32, %c0_i32_0 : i32, i32
  }
  func.func @transform_9(%arg0: i32) -> (i32, i32) {
    %c0_i32 = arith.constant 0 : i32
    %c0_i32_0 = arith.constant 0 : i32
    return %c0_i32, %arg0 : i32, i32
  }
  func.func @transform_10(%arg0: i32) -> (i32, i32) {
    %c0_i32 = arith.constant 0 : i32
    %c0_i32_0 = arith.constant 0 : i32
    return %c0_i32, %arg0 : i32, i32
  }
  func.func @transform_11(%arg0: i32) -> (i32, i32) {
    %c0_i32 = arith.constant 0 : i32
    %c0_i32_0 = arith.constant 0 : i32
    return %c0_i32, %arg0 : i32, i32
  }
}

</mosaic_0001>

<llo_original>
// kernel: monet_forward.1
$region0: #{monet_forward.1}
  #allocation0 [shape = 'u32[]', space=smem, size = 0x4, offset = 0x4, fixed_abs, tag = 'smem constant byte address 0x4 - core index']
  #allocation1 [shape = 'u32[72,128]{1,0:T(1,128)}', space=vmem, size = 0x9000, scoped, tag = 'internal scratch']
  %s0 = inlined_call_operand.vmem [shape: f32[3,512], index: 0, kind: input, shape index: {}]
  %s1 = inlined_call_operand.vmem [shape: f32[1,512], index: 1, kind: input, shape index: {}]
  %s2 = inlined_call_operand.vmem [shape: f32[32,7], index: 2, kind: input, shape index: {}]
  %s3 = inlined_call_operand.vmem [shape: f32[32,5], index: 3, kind: input, shape index: {}]
  %s4 = inlined_call_operand.vmem [shape: f32[16,33], index: 4, kind: input, shape index: {}]
  %s5 = inlined_call_operand.vmem [shape: f32[128,17], index: 5, kind: input, shape index: {}]
  %s6 = inlined_call_operand.vmem [shape: f32[16,128], index: 6, kind: input, shape index: {}]
  %s7 = inlined_call_operand.vmem [shape: f32[32,17], index: 7, kind: input, shape index: {}]
  %s8 = inlined_call_operand.vmem [shape: f32[4,33], index: 8, kind: input, shape index: {}]
  %s9 = inlined_call_operand.vmem [shape: f32[8,512], index: 9, kind: output, shape index: {0}]
  %s10 = inlined_call_operand.vmem [shape: f32[32,512], index: 10, kind: output, shape index: {1}]
  %s11 = inlined_call_operand.vmem [shape: f32[1,512], index: 11, kind: output, shape index: {2}]
  %12 = xla_tuple %s9, %s10, %s11
  %s13 = sld [smem:[#allocation0]]
  $region104: #{monet_forward.1} parent=0
    _
  %s15 = ssub.s32 1, %s13
  %s16 = scalar_select 0, %s15, %s13
  $region1: #{monet_forward.1} parent=0
    #allocation2 [shape = 'u8[65536]{0}', space=vmem, size = 0x10000, scoped, tag = 'output window, operand 1']
    loop: start=0, step=1, limit=4
    $region2: #{monet_forward.1} parent=1 // loop_pre_header
      _
    $region3: #{monet_forward.1} parent=1 // loop_header
      %s18 = sphi 0, %s22
      %p19 = scmp.ge.s32.totalorder %s18, 4
      %s28 = sphi 0, %s30
      %s31 = sphi 0, %s28
      %s32 = sphi 0, %s31
      %s48 = sphi 0, %s32
      %s54 = sphi 0, %s56
      %s57 = sphi 0, %s54
      %s58 = sphi 0, %s57
      %s74 = sphi 0, %s58
      %s78 = sphi 0, %s78
      %s80 = sphi 0, %s78
      %s81 = sphi 0, %s80
      %s95 = sphi 0, %s81
      %s99 = sphi 0, %s99
      %s101 = sphi 0, %s99
      %s102 = sphi 0, %s101
      %s116 = sphi 0, %s102
      %s120 = sphi 0, %s120
      %s122 = sphi 0, %s120
      %s123 = sphi 0, %s122
      %s137 = sphi 0, %s123
      %s141 = sphi 0, %s141
      %s143 = sphi 0, %s141
      %s144 = sphi 0, %s143
      %s158 = sphi 0, %s144
      %s162 = sphi 0, %s162
      %s164 = sphi 0, %s162
      %s165 = sphi 0, %s164
      %s179 = sphi 0, %s165
      %s183 = sphi 0, %s183
      %s185 = sphi 0, %s183
      %s186 = sphi 0, %s185
      %s200 = sphi 0, %s186
      %s204 = sphi 0, %s204
      %s206 = sphi 0, %s204
      %s207 = sphi 0, %s206
      %s221 = sphi 0, %s207
      %s227 = sphi 0, %s229
      %s230 = sphi 0, %s227
      %s231 = sphi 0, %s230
      %s247 = sphi 0, %s231
      %s253 = sphi 0, %s255
      %s256 = sphi 0, %s253
      %s257 = sphi 0, %s256
      %s273 = sphi 0, %s257
      %s279 = sphi 0, %s281
      %s282 = sphi 0, %s279
      %s283 = sphi 0, %s282
      %s299 = sphi 0, %s283
    $region4: #{monet_forward.1} parent=1 // loop_header_branch
      %21 = sbr.rel (%p19) target = $region8
    $region5: #{monet_forward.1} parent=1 // loop_body
      %s23 = ssub.s32 %s18, 1
      %s24 = ssub.s32 %s18, 2
      %s25 = sadd.s32 %s18, 1
      %s26 = ssub.s32 %s18, %s25
      %p27 = scmp.eq.s32.totalorder %s26, 0
      %s29 = sadd.s32 %s28, 1
      %s30 = scalar_select %p27, %s28, %s29
      %p33 = pneg %p27
      %p34 = scmp.eq.s32.totalorder %s18, 1
      %p35 = por %p33, %p34
      %p36 = scmp.ne.s32.totalorder %s28, %s31
      %p37 = scmp.eq.s32.totalorder %s18, 0
      %p38 = por %p36, %p37
      %p39 = scmp.ne.s32.totalorder %s28, %s31
      %p40 = scmp.eq.s32.totalorder %s23, 1
      %p41 = por %p39, %p40
      %p42 = scmp.ne.s32.totalorder %s31, %s32
      %p43 = scmp.eq.s32.totalorder %s23, 0
      %p44 = por %p42, %p43
      %p45 = scmp.ne.s32.totalorder %s31, %s32
      %p46 = scmp.eq.s32.totalorder %s24, 1
      %p47 = por %p45, %p46
      %p49 = scmp.ne.s32.totalorder %s32, %s48
      %p50 = scmp.eq.s32.totalorder %s24, 0
      %p51 = por %p49, %p50
      %s52 = ssub.s32 %s18, %s25
      %p53 = scmp.eq.s32.totalorder %s52, 0
      %s55 = sadd.s32 %s54, 1
      %s56 = scalar_select %p53, %s54, %s55
      %p59 = pneg %p53
      %p60 = scmp.eq.s32.totalorder %s18, 1
      %p61 = por %p59, %p60
      %p62 = scmp.ne.s32.totalorder %s54, %s57
      %p63 = scmp.eq.s32.totalorder %s18, 0
      %p64 = por %p62, %p63
      %p65 = scmp.ne.s32.totalorder %s54, %s57
      %p66 = scmp.eq.s32.totalorder %s23, 1
      %p67 = por %p65, %p66
      %p68 = scmp.ne.s32.totalorder %s57, %s58
      %p69 = scmp.eq.s32.totalorder %s23, 0
      %p70 = por %p68, %p69
      %p71 = scmp.ne.s32.totalorder %s57, %s58
      %p72 = scmp.eq.s32.totalorder %s24, 1
      %p73 = por %p71, %p72
      %p75 = scmp.ne.s32.totalorder %s58, %s74
      %p76 = scmp.eq.s32.totalorder %s24, 0
      %p77 = por %p75, %p76
      %s79 = sadd.s32 %s78, 1
      %p82 = scmp.eq.s32.totalorder %s18, 1
      %p83 = scmp.ne.s32.totalorder %s78, %s80
      %p84 = scmp.eq.s32.totalorder %s18, 0
      %p85 = por %p83, %p84
      %p86 = scmp.ne.s32.totalorder %s78, %s80
      %p87 = scmp.eq.s32.totalorder %s23, 1
      %p88 = por %p86, %p87
      %p89 = scmp.ne.s32.totalorder %s80, %s81
      %p90 = scmp.eq.s32.totalorder %s23, 0
      %p91 = por %p89, %p90
      %p92 = scmp.ne.s32.totalorder %s80, %s81
      %p93 = scmp.eq.s32.totalorder %s24, 1
      %p94 = por %p92, %p93
      %p96 = scmp.ne.s32.totalorder %s81, %s95
      %p97 = scmp.eq.s32.totalorder %s24, 0
      %p98 = por %p96, %p97
      %s100 = sadd.s32 %s99, 1
      %p103 = scmp.eq.s32.totalorder %s18, 1
      %p104 = scmp.ne.s32.totalorder %s99, %s101
      %p105 = scmp.eq.s32.totalorder %s18, 0
      %p106 = por %p104, %p105
      %p107 = scmp.ne.s32.totalorder %s99, %s101
      %p108 = scmp.eq.s32.totalorder %s23, 1
      %p109 = por %p107, %p108
      %p110 = scmp.ne.s32.totalorder %s101, %s102
      %p111 = scmp.eq.s32.totalorder %s23, 0
      %p112 = por %p110, %p111
      %p113 = scmp.ne.s32.totalorder %s101, %s102
      %p114 = scmp.eq.s32.totalorder %s24, 1
      %p115 = por %p113, %p114
      %p117 = scmp.ne.s32.totalorder %s102, %s116
      %p118 = scmp.eq.s32.totalorder %s24, 0
      %p119 = por %p117, %p118
      %s121 = sadd.s32 %s120, 1
      %p124 = scmp.eq.s32.totalorder %s18, 1
      %p125 = scmp.ne.s32.totalorder %s120, %s122
      %p126 = scmp.eq.s32.totalorder %s18, 0
      %p127 = por %p125, %p126
      %p128 = scmp.ne.s32.totalorder %s120, %s122
      %p129 = scmp.eq.s32.totalorder %s23, 1
      %p130 = por %p128, %p129
      %p131 = scmp.ne.s32.totalorder %s122, %s123
      %p132 = scmp.eq.s32.totalorder %s23, 0
      %p133 = por %p131, %p132
      %p134 = scmp.ne.s32.totalorder %s122, %s123
      %p135 = scmp.eq.s32.totalorder %s24, 1
      %p136 = por %p134, %p135
      %p138 = scmp.ne.s32.totalorder %s123, %s137
      %p139 = scmp.eq.s32.totalorder %s24, 0
      %p140 = por %p138, %p139
      %s142 = sadd.s32 %s141, 1
      %p145 = scmp.eq.s32.totalorder %s18, 1
      %p146 = scmp.ne.s32.totalorder %s141, %s143
      %p147 = scmp.eq.s32.totalorder %s18, 0
      %p148 = por %p146, %p147
      %p149 = scmp.ne.s32.totalorder %s141, %s143
      %p150 = scmp.eq.s32.totalorder %s23, 1
      %p151 = por %p149, %p150
      %p152 = scmp.ne.s32.totalorder %s143, %s144
      %p153 = scmp.eq.s32.totalorder %s23, 0
      %p154 = por %p152, %p153
      %p155 = scmp.ne.s32.totalorder %s143, %s144
      %p156 = scmp.eq.s32.totalorder %s24, 1
      %p157 = por %p155, %p156
      %p159 = scmp.ne.s32.totalorder %s144, %s158
      %p160 = scmp.eq.s32.totalorder %s24, 0
      %p161 = por %p159, %p160
      %s163 = sadd.s32 %s162, 1
      %p166 = scmp.eq.s32.totalorder %s18, 1
      %p167 = scmp.ne.s32.totalorder %s162, %s164
      %p168 = scmp.eq.s32.totalorder %s18, 0
      %p169 = por %p167, %p168
      %p170 = scmp.ne.s32.totalorder %s162, %s164
      %p171 = scmp.eq.s32.totalorder %s23, 1
      %p172 = por %p170, %p171
      %p173 = scmp.ne.s32.totalorder %s164, %s165
      %p174 = scmp.eq.s32.totalorder %s23, 0
      %p175 = por %p173, %p174
      %p176 = scmp.ne.s32.totalorder %s164, %s165
      %p177 = scmp.eq.s32.totalorder %s24, 1
      %p178 = por %p176, %p177
      %p180 = scmp.ne.s32.totalorder %s165, %s179
      %p181 = scmp.eq.s32.totalorder %s24, 0
      %p182 = por %p180, %p181
      %s184 = sadd.s32 %s183, 1
      %p187 = scmp.eq.s32.totalorder %s18, 1
      %p188 = scmp.ne.s32.totalorder %s183, %s185
      %p189 = scmp.eq.s32.totalorder %s18, 0
      %p190 = por %p188, %p189
      %p191 = scmp.ne.s32.totalorder %s183, %s185
      %p192 = scmp.eq.s32.totalorder %s23, 1
      %p193 = por %p191, %p192
      %p194 = scmp.ne.s32.totalorder %s185, %s186
      %p195 = scmp.eq.s32.totalorder %s23, 0
      %p196 = por %p194, %p195
      %p197 = scmp.ne.s32.totalorder %s185, %s186
      %p198 = scmp.eq.s32.totalorder %s24, 1
      %p199 = por %p197, %p198
      %p201 = scmp.ne.s32.totalorder %s186, %s200
      %p202 = scmp.eq.s32.totalorder %s24, 0
      %p203 = por %p201, %p202
      %s205 = sadd.s32 %s204, 1
      %p208 = scmp.eq.s32.totalorder %s18, 1
      %p209 = scmp.ne.s32.totalorder %s204, %s206
      %p210 = scmp.eq.s32.totalorder %s18, 0
      %p211 = por %p209, %p210
      %p212 = scmp.ne.s32.totalorder %s204, %s206
      %p213 = scmp.eq.s32.totalorder %s23, 1
      %p214 = por %p212, %p213
      %p215 = scmp.ne.s32.totalorder %s206, %s207
      %p216 = scmp.eq.s32.totalorder %s23, 0
      %p217 = por %p215, %p216
      %p218 = scmp.ne.s32.totalorder %s206, %s207
      %p219 = scmp.eq.s32.totalorder %s24, 1
      %p220 = por %p218, %p219
      %p222 = scmp.ne.s32.totalorder %s207, %s221
      %p223 = scmp.eq.s32.totalorder %s24, 0
      %p224 = por %p222, %p223
      %s225 = ssub.s32 %s18, %s25
      %p226 = scmp.eq.s32.totalorder %s225, 0
      %s228 = sadd.s32 %s227, 1
      %s229 = scalar_select %p226, %s227, %s228
      %p232 = pneg %p226
      %p233 = scmp.eq.s32.totalorder %s18, 1
      %p234 = por %p232, %p233
      %p235 = scmp.ne.s32.totalorder %s227, %s230
      %p236 = scmp.eq.s32.totalorder %s18, 0
      %p237 = por %p235, %p236
      %p238 = scmp.ne.s32.totalorder %s227, %s230
      %p239 = scmp.eq.s32.totalorder %s23, 1
      %p240 = por %p238, %p239
      %p241 = scmp.ne.s32.totalorder %s230, %s231
      %p242 = scmp.eq.s32.totalorder %s23, 0
      %p243 = por %p241, %p242
      %p244 = scmp.ne.s32.totalorder %s230, %s231
      %p245 = scmp.eq.s32.totalorder %s24, 1
      %p246 = por %p244, %p245
      %p248 = scmp.ne.s32.totalorder %s231, %s247
      %p249 = scmp.eq.s32.totalorder %s24, 0
      %p250 = por %p248, %p249
      %s251 = ssub.s32 %s18, %s25
      %p252 = scmp.eq.s32.totalorder %s251, 0
      %s254 = sadd.s32 %s253, 1
      %s255 = scalar_select %p252, %s253, %s254
      %p258 = pneg %p252
      %p259 = scmp.eq.s32.totalorder %s18, 1
      %p260 = por %p258, %p259
      %p261 = scmp.ne.s32.totalorder %s253, %s256
      %p262 = scmp.eq.s32.totalorder %s18, 0
      %p263 = por %p261, %p262
      %p264 = scmp.ne.s32.totalorder %s253, %s256
      %p265 = scmp.eq.s32.totalorder %s23, 1
      %p266 = por %p264, %p265
      %p267 = scmp.ne.s32.totalorder %s256, %s257
      %p268 = scmp.eq.s32.totalorder %s23, 0
      %p269 = por %p267, %p268
      %p270 = scmp.ne.s32.totalorder %s256, %s257
      %p271 = scmp.eq.s32.totalorder %s24, 1
      %p272 = por %p270, %p271
      %p274 = scmp.ne.s32.totalorder %s257, %s273
      %p275 = scmp.eq.s32.totalorder %s24, 0
      %p276 = por %p274, %p275
      %s277 = ssub.s32 %s18, %s25
      %p278 = scmp.eq.s32.totalorder %s277, 0
      %s280 = sadd.s32 %s279, 1
      %s281 = scalar_select %p278, %s279, %s280
      %p284 = pneg %p278
      %p285 = scmp.eq.s32.totalorder %s18, 1
      %p286 = por %p284, %p285
      %p287 = scmp.ne.s32.totalorder %s279, %s282
      %p288 = scmp.eq.s32.totalorder %s18, 0
      %p289 = por %p287, %p288
      %p290 = scmp.ne.s32.totalorder %s279, %s282
      %p291 = scmp.eq.s32.totalorder %s23, 1
      %p292 = por %p290, %p291
      %p293 = scmp.ne.s32.totalorder %s282, %s283
      %p294 = scmp.eq.s32.totalorder %s23, 0
      %p295 = por %p293, %p294
      %p296 = scmp.ne.s32.totalorder %s282, %s283
      %p297 = scmp.eq.s32.totalorder %s24, 1
      %p298 = por %p296, %p297
      %p300 = scmp.ne.s32.totalorder %s283, %s299
      %p301 = scmp.eq.s32.totalorder %s24, 0
      %p302 = por %p300, %p301
      %p303 = scmp.le.s32.totalorder 1, %s18
      %p304 = scmp.lt.s32.totalorder %s18, 3
      %p305 = pnand %p303, %p304
      %p306 = pneg %p305
      // Predicated region
      $region9: #{monet_forward.1} parent=5 // pred_check
        _
      $region10: #{monet_forward.1} parent=5 // pred_check_branch
        %308 = sbr.rel (%p305) target = $region12
      $region11: #{monet_forward.1} parent=5 // pred_region
        %s309 = ssub.s32 %s18, 1
        // Predicated region
        $region13: #{monet_forward.1} parent=11 // pred_check
          %p310 = pneg %p91
        $region14: #{monet_forward.1} parent=11 // pred_check_branch
          %312 = sbr.rel (%p310) target = $region16
        $region15: #{monet_forward.1} parent=11 // pred_region
          _
        $region16: #{monet_forward.1} parent=11 // pred_fallthru
          _
        // Predicated region
        $region17: #{monet_forward.1} parent=11 // pred_check
          %p313 = pneg %p112
        $region18: #{monet_forward.1} parent=11 // pred_check_branch
          %315 = sbr.rel (%p313) target = $region20
        $region19: #{monet_forward.1} parent=11 // pred_region
          _
        $region20: #{monet_forward.1} parent=11 // pred_fallthru
          _
        // Predicated region
        $region21: #{monet_forward.1} parent=11 // pred_check
          %p316 = pneg %p133
        $region22: #{monet_forward.1} parent=11 // pred_check_branch
          %318 = sbr.rel (%p316) target = $region24
        $region23: #{monet_forward.1} parent=11 // pred_region
          _
        $region24: #{monet_forward.1} parent=11 // pred_fallthru
          _
        // Predicated region
        $region25: #{monet_forward.1} parent=11 // pred_check
          %p319 = pneg %p154
        $region26: #{monet_forward.1} parent=11 // pred_check_branch
          %321 = sbr.rel (%p319) target = $region28
        $region27: #{monet_forward.1} parent=11 // pred_region
          _
        $region28: #{monet_forward.1} parent=11 // pred_fallthru
          _
        // Predicated region
        $region29: #{monet_forward.1} parent=11 // pred_check
          %p322 = pneg %p175
        $region30: #{monet_forward.1} parent=11 // pred_check_branch
          %324 = sbr.rel (%p322) target = $region32
        $region31: #{monet_forward.1} parent=11 // pred_region
          _
        $region32: #{monet_forward.1} parent=11 // pred_fallthru
          _
        // Predicated region
        $region33: #{monet_forward.1} parent=11 // pred_check
          %p325 = pneg %p196
        $region34: #{monet_forward.1} parent=11 // pred_check_branch
          %327 = sbr.rel (%p325) target = $region36
        $region35: #{monet_forward.1} parent=11 // pred_region
          _
        $region36: #{monet_forward.1} parent=11 // pred_fallthru
          _
        // Predicated region
        $region37: #{monet_forward.1} parent=11 // pred_check
          %p328 = pneg %p217
        $region38: #{monet_forward.1} parent=11 // pred_check_branch
          %330 = sbr.rel (%p328) target = $region40
        $region39: #{monet_forward.1} parent=11 // pred_region
          _
        $region40: #{monet_forward.1} parent=11 // pred_fallthru
          _
      $region12: #{monet_forward.1} parent=5 // pred_fallthru
        _
      %p331 = scmp.lt.s32.totalorder %s18, 2
      // Predicated region
      $region41: #{monet_forward.1} parent=5 // pred_check
        %p332 = pneg %p331
      $region42: #{monet_forward.1} parent=5 // pred_check_branch
        %334 = sbr.rel (%p332) target = $region44
      $region43: #{monet_forward.1} parent=5 // pred_region
        // Predicated region
        $region45: #{monet_forward.1} parent=43 // pred_check
          %p335 = pneg %p38
        $region46: #{monet_forward.1} parent=43 // pred_check_branch
          %337 = sbr.rel (%p335) target = $region48
        $region47: #{monet_forward.1} parent=43 // pred_region
          %s338 = smul.u32 2, %s18
          %p339 = scmp.lt.s32.totalorder %s338, 3
          %s340 = scalar_select %p339, %s338, 3
          %s341 = smul.addr %s340, 4
          %s342 = scalar_lea.vmem %s0, %s341
          %s343 = smul.u32 2, %s18
        $region48: #{monet_forward.1} parent=43 // pred_fallthru
          _
        // Predicated region
        $region49: #{monet_forward.1} parent=43 // pred_check
          %p344 = pneg %p64
        $region50: #{monet_forward.1} parent=43 // pred_check_branch
          %346 = sbr.rel (%p344) target = $region52
        $region51: #{monet_forward.1} parent=43 // pred_region
          %s347 = smul.u32 2, %s18
          %p348 = scmp.lt.s32.totalorder %s347, 3
          %s349 = scalar_select %p348, %s347, 3
          %s350 = scalar_lea.vmem %s1, %s349
          %s351 = smul.u32 2, %s18
        $region52: #{monet_forward.1} parent=43 // pred_fallthru
          _
      $region44: #{monet_forward.1} parent=5 // pred_fallthru
        _
      %p352 = scmp.le.s32.totalorder 1, %s18
      %p353 = scmp.lt.s32.totalorder %s18, 3
      %p354 = pnand %p352, %p353
      %p355 = pneg %p354
      // Predicated region
      $region53: #{monet_forward.1} parent=5 // pred_check
        _
      $region54: #{monet_forward.1} parent=5 // pred_check_branch
        %357 = sbr.rel (%p354) target = $region56
      $region55: #{monet_forward.1} parent=5 // pred_region
        %s358 = ssub.s32 %s18, 1
        %s359 = smul.u32 2, %s23
        %p360 = scmp.lt.s32.totalorder %s359, 3
        %s361 = scalar_select %p360, %s359, 3
        %s362 = smul.addr %s361, 4
        %s363 = scalar_lea.vmem %s0, %s362
        %p364 = pneg %p44
        %p365 = pneg %p41
        %s366 = smul.u32 2, %s23
        %p367 = scmp.lt.s32.totalorder %s366, 3
        %s368 = scalar_select %p367, %s366, 3
        %s369 = scalar_lea.vmem %s1, %s368
        %p370 = pneg %p70
        %p371 = pneg %p67
        %p372 = pneg %p91
        %p373 = pneg %p88
        %p374 = pneg %p112
        %p375 = pneg %p109
        %p376 = pneg %p133
        %p377 = pneg %p130
        %p378 = pneg %p154
        %p379 = pneg %p151
        %p380 = pneg %p175
        %p381 = pneg %p172
        %p382 = pneg %p196
        %p383 = pneg %p193
        %p384 = pneg %p217
        %p385 = pneg %p214
        %p386 = pneg %p243
        %p387 = pneg %p240
        %s388 = smul.u32 2, %s23
        %p389 = scmp.lt.s32.totalorder %s388, 3
        %s390 = scalar_select %p389, %s388, 3
        %s391 = smul.addr %s390, 8
        %s392 = scalar_lea.vmem %s9, %s391
        %p393 = pneg %p269
        %p394 = pneg %p266
        %s395 = sand.u32 %s256, 1
        %s396 = sand.u32 %s256, 1
        %s397 = smul.addr %s396, 64
        %s398 = scalar_lea.vmem [#allocation2], %s397
        %p399 = pneg %p295
        %p400 = pneg %p292
        %s401 = smul.u32 2, %s23
        %p402 = scmp.lt.s32.totalorder %s401, 3
        %s403 = scalar_select %p402, %s401, 3
        %s404 = scalar_lea.vmem %s11, %s403
        %s405 = smul.u32 2, %s23
        %p406 = scmp.lt.s32.totalorder %s405, 3
        %s407 = scalar_select %p406, %s405, 3
        %s408 = smul.addr %s407, 4
        %s409 = scalar_lea.vmem %s0, %s408
        %s410 = smul.u32 2, %s23
        %s411 = smul.u32 2, %s23
        %p412 = scmp.lt.s32.totalorder %s411, 3
        %s413 = scalar_select %p412, %s411, 3
        %s414 = scalar_lea.vmem %s1, %s413
        %s415 = smul.u32 2, %s23
        %s416 = smul.u32 2, %s23
        %p417 = scmp.lt.s32.totalorder %s416, 3
        %s418 = scalar_select %p417, %s416, 3
        %s419 = smul.addr %s418, 8
        %s420 = scalar_lea.vmem %s9, %s419
        %s421 = smul.u32 2, %s23
        %s422 = smul.u32 2, %s23
        %s423 = smul.u32 2, %s23
        %p424 = scmp.lt.s32.totalorder %s423, 3
        %s425 = scalar_select %p424, %s423, 3
        %s426 = scalar_lea.vmem %s11, %s425
        %s427 = smul.u32 2, %s23
        %v428 = vld [vmem:[%s409] sm:$0x77]
        %v429 = vld [vmem:[%s414] sm:$0x3]
        %v430 = vld [vmem:[%s2] sm:$0xff]
        %v431 = vld [vmem:[%s2 + $0x8] sm:$0xff]
        %v432 = vld [vmem:[%s2 + $0x10] sm:$0xff]
        %v433 = vld [vmem:[%s2 + $0x18] sm:$0xff]
        %v434 = vld [vmem:[%s3] sm:$0xff]
        %v435 = vld [vmem:[%s3 + $0x8] sm:$0xff]
        %v436 = vld [vmem:[%s3 + $0x10] sm:$0xff]
        %v437 = vld [vmem:[%s3 + $0x18] sm:$0xff]
        %v438 = vld [vmem:[%s4] sm:$0xff]
        %v439 = vld [vmem:[%s4 + $0x8] sm:$0xff]
        %v440 = vld [vmem:[%s5] sm:$0xff]
        %v441 = vld [vmem:[%s5 + $0x8] sm:$0xff]
        %v442 = vld [vmem:[%s5 + $0x10] sm:$0xff]
        %v443 = vld [vmem:[%s5 + $0x18] sm:$0xff]
        %v444 = vld [vmem:[%s5 + $0x20] sm:$0xff]
        %v445 = vld [vmem:[%s5 + $0x28] sm:$0xff]
        %v446 = vld [vmem:[%s5 + $0x30] sm:$0xff]
        %v447 = vld [vmem:[%s5 + $0x38] sm:$0xff]
        %v448 = vld [vmem:[%s5 + $0x40] sm:$0xff]
        %v449 = vld [vmem:[%s5 + $0x48] sm:$0xff]
        %v450 = vld [vmem:[%s5 + $0x50] sm:$0xff]
        %v451 = vld [vmem:[%s5 + $0x58] sm:$0xff]
        %v452 = vld [vmem:[%s5 + $0x60] sm:$0xff]
        %v453 = vld [vmem:[%s5 + $0x68] sm:$0xff]
        %v454 = vld [vmem:[%s5 + $0x70] sm:$0xff]
        %v455 = vld [vmem:[%s5 + $0x78] sm:$0xff]
        %v456 = vld [vmem:[%s6] sm:$0xff]
        %v457 = vld [vmem:[%s6 + $0x8] sm:$0xff]
        %v458 = vld [vmem:[%s7] sm:$0xff]
        %v459 = vld [vmem:[%s7 + $0x8] sm:$0xff]
        %v460 = vld [vmem:[%s7 + $0x10] sm:$0xff]
        %v461 = vld [vmem:[%s7 + $0x18] sm:$0xff]
        %v462 = vld [vmem:[%s8] sm:$0xf]
        %464 = vset.pattern.permute.xlu0 0
        %465 = vperm.xlu0 %464, %v430
        %v466 = vpop.permute.xlu0 %465
        %469 = vset.pattern.permute.xlu0 0
        %470 = vperm.xlu0 %469, %v431
        %v471 = vpop.permute.xlu0 %470
        %474 = vset.pattern.permute.xlu0 0
        %475 = vperm.xlu0 %474, %v432
        %v476 = vpop.permute.xlu0 %475
        %479 = vset.pattern.permute.xlu0 0
        %480 = vperm.xlu0 %479, %v433
        %v481 = vpop.permute.xlu0 %480
        %v484 = vperm.slane %v428, 0
        %v485 = vperm.slane %v428, 4
        %v488 = vperm.slane %v484, 0
        %v489 = vperm.slane %v485, 0
        %v490 = vmul.f32 %v466, %v488
        %v491 = vmul.f32 %v466, %v489
        %v492 = vmul.f32 %v471, %v488
        %v493 = vmul.f32 %v471, %v489
        %v494 = vmul.f32 %v476, %v488
        %v495 = vmul.f32 %v476, %v489
        %v496 = vmul.f32 %v481, %v488
        %v497 = vmul.f32 %v481, %v489
        %498 = vset.pattern.permute.xlu0 1
        %499 = vperm.xlu0 %498, %v430
        %v500 = vpop.permute.xlu0 %499
        %502 = vset.pattern.permute.xlu0 1
        %503 = vperm.xlu0 %502, %v431
        %v504 = vpop.permute.xlu0 %503
        %506 = vset.pattern.permute.xlu0 1
        %507 = vperm.xlu0 %506, %v432
        %v508 = vpop.permute.xlu0 %507
        %510 = vset.pattern.permute.xlu0 1
        %511 = vperm.xlu0 %510, %v433
        %v512 = vpop.permute.xlu0 %511
        %v514 = vperm.slane %v428, 1
        %v515 = vperm.slane %v428, 5
        %v518 = vperm.slane %v514, 1
        %v519 = vperm.slane %v515, 1
        %v520 = vmul.f32 %v500, %v518
        %v521 = vmul.f32 %v500, %v519
        %v522 = vmul.f32 %v504, %v518
        %v523 = vmul.f32 %v504, %v519
        %v524 = vmul.f32 %v508, %v518
        %v525 = vmul.f32 %v508, %v519
        %v526 = vmul.f32 %v512, %v518
        %v527 = vmul.f32 %v512, %v519
        %v528 = vadd.f32 %v490, %v520
        %v529 = vadd.f32 %v491, %v521
        %v530 = vadd.f32 %v492, %v522
        %v531 = vadd.f32 %v493, %v523
        %v532 = vadd.f32 %v494, %v524
        %v533 = vadd.f32 %v495, %v525
        %v534 = vadd.f32 %v496, %v526
        %v535 = vadd.f32 %v497, %v527
        %536 = vset.pattern.permute.xlu0 2
        %537 = vperm.xlu0 %536, %v430
        %v538 = vpop.permute.xlu0 %537
        %540 = vset.pattern.permute.xlu0 2
        %541 = vperm.xlu0 %540, %v431
        %v542 = vpop.permute.xlu0 %541
        %544 = vset.pattern.permute.xlu0 2
        %545 = vperm.xlu0 %544, %v432
        %v546 = vpop.permute.xlu0 %545
        %548 = vset.pattern.permute.xlu0 2
        %549 = vperm.xlu0 %548, %v433
        %v550 = vpop.permute.xlu0 %549
        %v552 = vperm.slane %v428, 2
        %v553 = vperm.slane %v428, 6
        %v556 = vperm.slane %v552, 2
        %v557 = vperm.slane %v553, 2
        %v558 = vmul.f32 %v538, %v556
        %v559 = vmul.f32 %v538, %v557
        %v560 = vmul.f32 %v542, %v556
        %v561 = vmul.f32 %v542, %v557
        %v562 = vmul.f32 %v546, %v556
        %v563 = vmul.f32 %v546, %v557
        %v564 = vmul.f32 %v550, %v556
        %v565 = vmul.f32 %v550, %v557
        %v566 = vadd.f32 %v528, %v558
        %v567 = vadd.f32 %v529, %v559
        %v568 = vadd.f32 %v530, %v560
        %v569 = vadd.f32 %v531, %v561
        %v570 = vadd.f32 %v532, %v562
        %v571 = vadd.f32 %v533, %v563
        %v572 = vadd.f32 %v534, %v564
        %v573 = vadd.f32 %v535, %v565
        %574 = vset.pattern.permute.xlu0 4
        %575 = vperm.xlu0 %574, %v430
        %v576 = vpop.permute.xlu0 %575
        %578 = vset.pattern.permute.xlu0 4
        %579 = vperm.xlu0 %578, %v431
        %v580 = vpop.permute.xlu0 %579
        %582 = vset.pattern.permute.xlu0 4
        %583 = vperm.xlu0 %582, %v432
        %v584 = vpop.permute.xlu0 %583
        %586 = vset.pattern.permute.xlu0 4
        %587 = vperm.xlu0 %586, %v433
        %v588 = vpop.permute.xlu0 %587
        %v590 = vadd.f32 %v566, %v576
        %v591 = vadd.f32 %v567, %v576
        %v592 = vadd.f32 %v568, %v580
        %v593 = vadd.f32 %v569, %v580
        %v594 = vadd.f32 %v570, %v584
        %v595 = vadd.f32 %v571, %v584
        %v596 = vadd.f32 %v572, %v588
        %v597 = vadd.f32 %v573, %v588
        %599 = vset.pattern.permute.xlu0 1
        %600 = vperm.xlu0 %599, %v434
        %v601 = vpop.permute.xlu0 %600
        %604 = vset.pattern.permute.xlu0 1
        %605 = vperm.xlu0 %604, %v435
        %v606 = vpop.permute.xlu0 %605
        %609 = vset.pattern.permute.xlu0 1
        %610 = vperm.xlu0 %609, %v436
        %v611 = vpop.permute.xlu0 %610
        %614 = vset.pattern.permute.xlu0 1
        %615 = vperm.xlu0 %614, %v437
        %v616 = vpop.permute.xlu0 %615
        %v618 = vmul.f32 %v601, %v488
        %v619 = vmul.f32 %v601, %v489
        %v620 = vmul.f32 %v606, %v488
        %v621 = vmul.f32 %v606, %v489
        %v622 = vmul.f32 %v611, %v488
        %v623 = vmul.f32 %v611, %v489
        %v624 = vmul.f32 %v616, %v488
        %v625 = vmul.f32 %v616, %v489
        %626 = vset.pattern.permute.xlu0 2
        %627 = vperm.xlu0 %626, %v434
        %v628 = vpop.permute.xlu0 %627
        %630 = vset.pattern.permute.xlu0 2
        %631 = vperm.xlu0 %630, %v435
        %v632 = vpop.permute.xlu0 %631
        %634 = vset.pattern.permute.xlu0 2
        %635 = vperm.xlu0 %634, %v436
        %v636 = vpop.permute.xlu0 %635
        %638 = vset.pattern.permute.xlu0 2
        %639 = vperm.xlu0 %638, %v437
        %v640 = vpop.permute.xlu0 %639
        %v642 = vmul.f32 %v628, %v518
        %v643 = vmul.f32 %v628, %v519
        %v644 = vmul.f32 %v632, %v518
        %v645 = vmul.f32 %v632, %v519
        %v646 = vmul.f32 %v636, %v518
        %v647 = vmul.f32 %v636, %v519
        %v648 = vmul.f32 %v640, %v518
        %v649 = vmul.f32 %v640, %v519
        %v650 = vadd.f32 %v618, %v642
        %v651 = vadd.f32 %v619, %v643
        %v652 = vadd.f32 %v620, %v644
        %v653 = vadd.f32 %v621, %v645
        %v654 = vadd.f32 %v622, %v646
        %v655 = vadd.f32 %v623, %v647
        %v656 = vadd.f32 %v624, %v648
        %v657 = vadd.f32 %v625, %v649
        %658 = vset.pattern.permute.xlu0 3
        %659 = vperm.xlu0 %658, %v434
        %v660 = vpop.permute.xlu0 %659
        %662 = vset.pattern.permute.xlu0 3
        %663 = vperm.xlu0 %662, %v435
        %v664 = vpop.permute.xlu0 %663
        %666 = vset.pattern.permute.xlu0 3
        %667 = vperm.xlu0 %666, %v436
        %v668 = vpop.permute.xlu0 %667
        %670 = vset.pattern.permute.xlu0 3
        %671 = vperm.xlu0 %670, %v437
        %v672 = vpop.permute.xlu0 %671
        %v674 = vmul.f32 %v660, %v556
        %v675 = vmul.f32 %v660, %v557
        %v676 = vmul.f32 %v664, %v556
        %v677 = vmul.f32 %v664, %v557
        %v678 = vmul.f32 %v668, %v556
        %v679 = vmul.f32 %v668, %v557
        %v680 = vmul.f32 %v672, %v556
        %v681 = vmul.f32 %v672, %v557
        %v682 = vadd.f32 %v650, %v674
        %v683 = vadd.f32 %v651, %v675
        %v684 = vadd.f32 %v652, %v676
        %v685 = vadd.f32 %v653, %v677
        %v686 = vadd.f32 %v654, %v678
        %v687 = vadd.f32 %v655, %v679
        %v688 = vadd.f32 %v656, %v680
        %v689 = vadd.f32 %v657, %v681
        %690 = vset.pattern.permute.xlu0 4
        %691 = vperm.xlu0 %690, %v434
        %v692 = vpop.permute.xlu0 %691
        %694 = vset.pattern.permute.xlu0 4
        %695 = vperm.xlu0 %694, %v435
        %v696 = vpop.permute.xlu0 %695
        %698 = vset.pattern.permute.xlu0 4
        %699 = vperm.xlu0 %698, %v436
        %v700 = vpop.permute.xlu0 %699
        %702 = vset.pattern.permute.xlu0 4
        %703 = vperm.xlu0 %702, %v437
        %v704 = vpop.permute.xlu0 %703
        %v706 = vadd.f32 %v682, %v692
        %v707 = vadd.f32 %v683, %v692
        %v708 = vadd.f32 %v684, %v696
        %v709 = vadd.f32 %v685, %v696
        %v710 = vadd.f32 %v686, %v700
        %v711 = vadd.f32 %v687, %v700
        %v712 = vadd.f32 %v688, %v704
        %v713 = vadd.f32 %v689, %v704
        %714 = vset.pattern.permute.xlu0 3
        %715 = vperm.xlu0 %714, %v430
        %v716 = vpop.permute.xlu0 %715
        %718 = vset.pattern.permute.xlu0 3
        %719 = vperm.xlu0 %718, %v431
        %v720 = vpop.permute.xlu0 %719
        %722 = vset.pattern.permute.xlu0 3
        %723 = vperm.xlu0 %722, %v432
        %v724 = vpop.permute.xlu0 %723
        %726 = vset.pattern.permute.xlu0 3
        %727 = vperm.xlu0 %726, %v433
        %v728 = vpop.permute.xlu0 %727
        %v731 = vperm.slane %v429, 0
        %v732 = vperm.slane %v429, 1
        %v735 = vmul.f32 %v716, %v731
        %v736 = vmul.f32 %v716, %v732
        %v737 = vmul.f32 %v720, %v731
        %v738 = vmul.f32 %v720, %v732
        %v739 = vmul.f32 %v724, %v731
        %v740 = vmul.f32 %v724, %v732
        %v741 = vmul.f32 %v728, %v731
        %v742 = vmul.f32 %v728, %v732
        %v743 = vadd.f32 %v590, %v735
        %v744 = vadd.f32 %v591, %v736
        %v745 = vadd.f32 %v592, %v737
        %v746 = vadd.f32 %v593, %v738
        %v747 = vadd.f32 %v594, %v739
        %v748 = vadd.f32 %v595, %v740
        %v749 = vadd.f32 %v596, %v741
        %v750 = vadd.f32 %v597, %v742
        %v751 = vmax.f32 %v743, 0.0
        %v752 = vmax.f32 %v744, 0.0
        %v753 = vmax.f32 %v745, 0.0
        %v754 = vmax.f32 %v746, 0.0
        %v755 = vmax.f32 %v747, 0.0
        %v756 = vmax.f32 %v748, 0.0
        %v757 = vmax.f32 %v749, 0.0
        %v758 = vmax.f32 %v750, 0.0
        %759 = vset.pattern.permute.xlu0 5
        %760 = vperm.xlu0 %759, %v430
        %v761 = vpop.permute.xlu0 %760
        %763 = vset.pattern.permute.xlu0 5
        %764 = vperm.xlu0 %763, %v431
        %v765 = vpop.permute.xlu0 %764
        %767 = vset.pattern.permute.xlu0 5
        %768 = vperm.xlu0 %767, %v432
        %v769 = vpop.permute.xlu0 %768
        %771 = vset.pattern.permute.xlu0 5
        %772 = vperm.xlu0 %771, %v433
        %v773 = vpop.permute.xlu0 %772
        %v775 = vmul.f32 %v761, %v751
        %v776 = vmul.f32 %v761, %v752
        %v777 = vmul.f32 %v765, %v753
        %v778 = vmul.f32 %v765, %v754
        %v779 = vmul.f32 %v769, %v755
        %v780 = vmul.f32 %v769, %v756
        %v781 = vmul.f32 %v773, %v757
        %v782 = vmul.f32 %v773, %v758
        %v783 = vadd.f32 %v775, %v777
        %v784 = vadd.f32 %v783, %v779
        %v785 = vadd.f32 %v784, %v781
        %v786 = vrot.slane %v785, 4
        %v787 = vadd.f32 %v785, %v786
        %v788 = vrot.slane %v787, 2
        %v789 = vadd.f32 %v787, %v788
        %v790 = vrot.slane %v789, 1
        %v791 = vadd.f32 %v789, %v790
        %v792 = vadd.f32 %v776, %v778
        %v793 = vadd.f32 %v792, %v780
        %v794 = vadd.f32 %v793, %v782
        %v795 = vrot.slane %v794, 4
        %v796 = vadd.f32 %v794, %v795
        %v797 = vrot.slane %v796, 2
        %v798 = vadd.f32 %v796, %v797
        %v799 = vrot.slane %v798, 1
        %v800 = vadd.f32 %v798, %v799
        %801 = vset.pattern.permute.xlu0 6
        %802 = vperm.xlu0 %801, %v430
        %v803 = vpop.permute.xlu0 %802
        %v805 = vadd.f32 %v791, %v803
        %v806 = vadd.f32 %v800, %v803
        %v807 = vxor.u32 %v805, 2147483648
        %v808 = vxor.u32 %v806, 2147483648
        %v809 = vmul.f32 %v807, 1.442695
        %v810 = vpow.pop %v809
        %v811 = vmul.f32 %v808, 1.442695
        %v812 = vpow.pop %v811
        %v813 = vadd.f32 %v810, 1.0
        %v814 = vadd.f32 %v812, 1.0
        %v815 = vrcp.pop %v813
        %v816 = vmul.f32 %v813, %v815
        %v817 = vsub.f32 1.0, %v816
        %v818 = vmul.f32 %v815, %v817
        %v819 = vadd.f32 %v815, %v818
        %vm820 = vweird.f32 %v813
        %vm821 = vweird.f32 %v815
        %vm822 = vmor %vm820, %vm821
        %v823 = vsel %vm822, %v815, %v819
        %v824 = vand.u32 2147483647, %v813
        %vm825 = vcmp.eq.f32.partialorder %v824, 8.507059e+37
        %v826 = vand.u32 %v813, 2147483648
        %v827 = vor.u32 1.1754944e-38, %v826
        %v828 = vsel %vm825, %v827, %v823
        %v829 = vmul.f32 1.0, %v828
        %v830 = vrcp.pop %v814
        %v831 = vmul.f32 %v814, %v830
        %v832 = vsub.f32 1.0, %v831
        %v833 = vmul.f32 %v830, %v832
        %v834 = vadd.f32 %v830, %v833
        %vm835 = vweird.f32 %v814
        %vm836 = vweird.f32 %v830
        %vm837 = vmor %vm835, %vm836
        %v838 = vsel %vm837, %v830, %v834
        %v839 = vand.u32 2147483647, %v814
        %vm840 = vcmp.eq.f32.partialorder %v839, 8.507059e+37
        %v841 = vand.u32 %v814, 2147483648
        %v842 = vor.u32 1.1754944e-38, %v841
        %v843 = vsel %vm840, %v842, %v838
        %v844 = vmul.f32 1.0, %v843
        %v847 = vrot.slane %v844, 7
        %vm848 = vcmask 1040384
        %v849 = vsel %vm848, %v829, %v847
        %v851 = vmul.f32 %v429, %v849
        %v852 = vsub.f32 1.0, %v829
        %v853 = vsub.f32 1.0, %v844
        %v856 = vrot.slane %v853, 7
        %v857 = vsel %vm848, %v852, %v856
        %v859 = vmul.f32 %v429, %v857
        %v860 = vlaneseq
        %vm861 = vcmp.ge.s32.totalorder %v860, 0
        %vm862 = vcmp.lt.s32.totalorder %v860, 256
        %vm863 = vmand %vm861, %vm862
        %864 = vst.msk [vmem:[%s420] ss:$8 sm:$0x3] %vm863, %v851
        %865 = vst.msk [vmem:[%s420] ss:$8 sm:$0x0] %vm863, %v851
        %866 = vset.pattern.permute.xlu0 0
        %867 = vperm.xlu0 %866, %v434
        %v868 = vpop.permute.xlu0 %867
        %870 = vset.pattern.permute.xlu0 0
        %871 = vperm.xlu0 %870, %v435
        %v872 = vpop.permute.xlu0 %871
        %874 = vset.pattern.permute.xlu0 0
        %875 = vperm.xlu0 %874, %v436
        %v876 = vpop.permute.xlu0 %875
        %878 = vset.pattern.permute.xlu0 0
        %879 = vperm.xlu0 %878, %v437
        %v880 = vpop.permute.xlu0 %879
        %v883 = vperm.slane %v851, 0
        %v884 = vperm.slane %v851, 1
        %v887 = vmul.f32 %v868, %v883
        %v888 = vmul.f32 %v868, %v884
        %v889 = vmul.f32 %v872, %v883
        %v890 = vmul.f32 %v872, %v884
        %v891 = vmul.f32 %v876, %v883
        %v892 = vmul.f32 %v876, %v884
        %v893 = vmul.f32 %v880, %v883
        %v894 = vmul.f32 %v880, %v884
        %v895 = vadd.f32 %v706, %v887
        %v896 = vadd.f32 %v707, %v888
        %v897 = vadd.f32 %v708, %v889
        %v898 = vadd.f32 %v709, %v890
        %v899 = vadd.f32 %v710, %v891
        %v900 = vadd.f32 %v711, %v892
        %v901 = vadd.f32 %v712, %v893
        %v902 = vadd.f32 %v713, %v894
        %v903 = vmax.f32 %v895, 0.0
        %v904 = vmax.f32 %v896, 0.0
        %v905 = vmax.f32 %v897, 0.0
        %v906 = vmax.f32 %v898, 0.0
        %v907 = vmax.f32 %v899, 0.0
        %v908 = vmax.f32 %v900, 0.0
        %v909 = vmax.f32 %v901, 0.0
        %v910 = vmax.f32 %v902, 0.0
        %912 = vset.pattern.permute.xlu0 32
        %913 = vperm.xlu0 %912, %v438
        %v914 = vpop.permute.xlu0 %913
        %917 = vset.pattern.permute.xlu0 32
        %918 = vperm.xlu0 %917, %v439
        %v919 = vpop.permute.xlu0 %918
        %vm921 = vcmask 261120
        %v922 = vsel %vm921, %v438, 0
        %v924 = vsel %vm921, %v439, 0
        %926 = vmatpush.msra.mxu0 0.0
        %927 = vmatpush.msra.mxu0 0.0
        %928 = vmatpush.msra.mxu0 0.0
        %929 = vmatpush.msra.mxu0 0.0
        %930 = vmatpush.msra.mxu0 0.0
        %931 = vmatpush.msra.mxu0 0.0
        %932 = vmatpush.msra.mxu0 0.0
        %933 = vmatpush.msra.mxu0 0.0
        %934 = vmatpush.msra.mxu0 0.0
        %935 = vmatpush.msra.mxu0 0.0
        %936 = vmatpush.msra.mxu0 0.0
        %937 = vmatpush.msra.mxu0 0.0
        %938 = vmatpush.msra.mxu0 %v909
        %939 = vmatpush.msra.mxu0 %v907
        %940 = vmatpush.msra.mxu0 %v905
        %941 = vmatpush.msra.mxu0 %v903
        %942 = vmatmul.f32.gmra.mxu0 %v922
        %v943 = vpop.f32.mrf.mxu0
        %v944 = vadd.f32 %v914, %v943
        %945 = vmatmul.f32.gmra.mxu0 %v924
        %v946 = vpop.f32.mrf.mxu0
        %v947 = vadd.f32 %v919, %v946
        %948 = vdwg.mxu0
        %949 = vmatpush.msra.mxu0 0.0
        %950 = vmatpush.msra.mxu0 0.0
        %951 = vmatpush.msra.mxu0 0.0
        %952 = vmatpush.msra.mxu0 0.0
        %953 = vmatpush.msra.mxu0 0.0
        %954 = vmatpush.msra.mxu0 0.0
        %955 = vmatpush.msra.mxu0 0.0
        %956 = vmatpush.msra.mxu0 0.0
        %957 = vmatpush.msra.mxu0 0.0
        %958 = vmatpush.msra.mxu0 0.0
        %959 = vmatpush.msra.mxu0 0.0
        %960 = vmatpush.msra.mxu0 0.0
        %961 = vmatpush.msra.mxu0 %v910
        %962 = vmatpush.msra.mxu0 %v908
        %963 = vmatpush.msra.mxu0 %v906
        %964 = vmatpush.msra.mxu0 %v904
        %965 = vmatmul.f32.gmra.mxu0 %v922
        %v966 = vpop.f32.mrf.mxu0
        %v967 = vadd.f32 %v914, %v966
        %968 = vmatmul.f32.gmra.mxu0 %v924
        %v969 = vpop.f32.mrf.mxu0
        %v970 = vadd.f32 %v919, %v969
        %971 = vdwg.mxu0
        %vm972 = vcmask 130048
        %v974 = vsel %vm972, %v440, 0
        %v977 = vsel %vm972, %v441, 0
        %v980 = vsel %vm972, %v442, 0
        %v983 = vsel %vm972, %v443, 0
        %v986 = vsel %vm972, %v444, 0
        %v989 = vsel %vm972, %v445, 0
        %v992 = vsel %vm972, %v446, 0
        %v995 = vsel %vm972, %v447, 0
        %v998 = vsel %vm972, %v448, 0
        %v1001 = vsel %vm972, %v449, 0
        %v1004 = vsel %vm972, %v450, 0
        %v1007 = vsel %vm972, %v451, 0
        %v1010 = vsel %vm972, %v452, 0
        %v1013 = vsel %vm972, %v453, 0
        %v1016 = vsel %vm972, %v454, 0
        %v1019 = vsel %vm972, %v455, 0
        %1021 = vmatpush.msra.mxu0 0.0
        %1022 = vmatpush.msra.mxu0 0.0
        %1023 = vmatpush.msra.mxu0 0.0
        %1024 = vmatpush.msra.mxu0 0.0
        %1025 = vmatpush.msra.mxu0 0.0
        %1026 = vmatpush.msra.mxu0 0.0
        %1027 = vmatpush.msra.mxu0 0.0
        %1028 = vmatpush.msra.mxu0 0.0
        %1029 = vmatpush.msra.mxu0 0.0
        %1030 = vmatpush.msra.mxu0 0.0
        %1031 = vmatpush.msra.mxu0 0.0
        %1032 = vmatpush.msra.mxu0 0.0
        %1033 = vmatpush.msra.mxu0 0.0
        %1034 = vmatpush.msra.mxu0 0.0
        %1035 = vmatpush.msra.mxu0 %v947
        %1036 = vmatpush.msra.mxu0 %v944
        %1037 = vmatmul.f32.gmra.mxu0 %v974
        %v1038 = vpop.f32.mrf.mxu0
        %v1039 = vadd.f32 0.0, %v1038
        %1040 = vmatmul.f32.gmra.mxu0 %v977
        %v1041 = vpop.f32.mrf.mxu0
        %v1042 = vadd.f32 0.0, %v1041
        %1043 = vmatmul.f32.gmra.mxu0 %v980
        %v1044 = vpop.f32.mrf.mxu0
        %v1045 = vadd.f32 0.0, %v1044
        %1046 = vmatmul.f32.gmra.mxu0 %v983
        %v1047 = vpop.f32.mrf.mxu0
        %v1048 = vadd.f32 0.0, %v1047
        %1049 = vmatmul.f32.gmra.mxu0 %v986
        %v1050 = vpop.f32.mrf.mxu0
        %v1051 = vadd.f32 0.0, %v1050
        %1052 = vmatmul.f32.gmra.mxu0 %v989
        %v1053 = vpop.f32.mrf.mxu0
        %v1054 = vadd.f32 0.0, %v1053
        %1055 = vmatmul.f32.gmra.mxu0 %v992
        %v1056 = vpop.f32.mrf.mxu0
        %v1057 = vadd.f32 0.0, %v1056
        %1058 = vmatmul.f32.gmra.mxu0 %v995
        %v1059 = vpop.f32.mrf.mxu0
        %v1060 = vadd.f32 0.0, %v1059
        %1061 = vmatmul.f32.gmra.mxu0 %v998
        %v1062 = vpop.f32.mrf.mxu0
        %v1063 = vadd.f32 0.0, %v1062
        %1064 = vmatmul.f32.gmra.mxu0 %v1001
        %v1065 = vpop.f32.mrf.mxu0
        %v1066 = vadd.f32 0.0, %v1065
        %1067 = vmatmul.f32.gmra.mxu0 %v1004
        %v1068 = vpop.f32.mrf.mxu0
        %v1069 = vadd.f32 0.0, %v1068
        %1070 = vmatmul.f32.gmra.mxu0 %v1007
        %v1071 = vpop.f32.mrf.mxu0
        %v1072 = vadd.f32 0.0, %v1071
        %1073 = vmatmul.f32.gmra.mxu0 %v1010
        %v1074 = vpop.f32.mrf.mxu0
        %v1075 = vadd.f32 0.0, %v1074
        %1076 = vmatmul.f32.gmra.mxu0 %v1013
        %v1077 = vpop.f32.mrf.mxu0
        %v1078 = vadd.f32 0.0, %v1077
        %1079 = vmatmul.f32.gmra.mxu0 %v1016
        %v1080 = vpop.f32.mrf.mxu0
        %v1081 = vadd.f32 0.0, %v1080
        %1082 = vmatmul.f32.gmra.mxu0 %v1019
        %v1083 = vpop.f32.mrf.mxu0
        %v1084 = vadd.f32 0.0, %v1083
        %1085 = vdwg.mxu0
        %1086 = vmatpush.msra.mxu0 0.0
        %1087 = vmatpush.msra.mxu0 0.0
        %1088 = vmatpush.msra.mxu0 0.0
        %1089 = vmatpush.msra.mxu0 0.0
        %1090 = vmatpush.msra.mxu0 0.0
        %1091 = vmatpush.msra.mxu0 0.0
        %1092 = vmatpush.msra.mxu0 0.0
        %1093 = vmatpush.msra.mxu0 0.0
        %1094 = vmatpush.msra.mxu0 0.0
        %1095 = vmatpush.msra.mxu0 0.0
        %1096 = vmatpush.msra.mxu0 0.0
        %1097 = vmatpush.msra.mxu0 0.0
        %1098 = vmatpush.msra.mxu0 0.0
        %1099 = vmatpush.msra.mxu0 0.0
        %1100 = vmatpush.msra.mxu0 %v970
        %1101 = vmatpush.msra.mxu0 %v967
        %1102 = vmatmul.f32.gmra.mxu0 %v974
        %v1103 = vpop.f32.mrf.mxu0
        %v1104 = vadd.f32 0.0, %v1103
        %1105 = vmatmul.f32.gmra.mxu0 %v977
        %v1106 = vpop.f32.mrf.mxu0
        %v1107 = vadd.f32 0.0, %v1106
        %1108 = vmatmul.f32.gmra.mxu0 %v980
        %v1109 = vpop.f32.mrf.mxu0
        %v1110 = vadd.f32 0.0, %v1109
        %1111 = vmatmul.f32.gmra.mxu0 %v983
        %v1112 = vpop.f32.mrf.mxu0
        %v1113 = vadd.f32 0.0, %v1112
        %1114 = vmatmul.f32.gmra.mxu0 %v986
        %v1115 = vpop.f32.mrf.mxu0
        %v1116 = vadd.f32 0.0, %v1115
        %1117 = vmatmul.f32.gmra.mxu0 %v989
        %v1118 = vpop.f32.mrf.mxu0
        %v1119 = vadd.f32 0.0, %v1118
        %1120 = vmatmul.f32.gmra.mxu0 %v992
        %v1121 = vpop.f32.mrf.mxu0
        %v1122 = vadd.f32 0.0, %v1121
        %1123 = vmatmul.f32.gmra.mxu0 %v995
        %v1124 = vpop.f32.mrf.mxu0
        %v1125 = vadd.f32 0.0, %v1124
        %1126 = vmatmul.f32.gmra.mxu0 %v998
        %v1127 = vpop.f32.mrf.mxu0
        %v1128 = vadd.f32 0.0, %v1127
        %1129 = vmatmul.f32.gmra.mxu0 %v1001
        %v1130 = vpop.f32.mrf.mxu0
        %v1131 = vadd.f32 0.0, %v1130
        %1132 = vmatmul.f32.gmra.mxu0 %v1004
        %v1133 = vpop.f32.mrf.mxu0
        %v1134 = vadd.f32 0.0, %v1133
        %1135 = vmatmul.f32.gmra.mxu0 %v1007
        %v1136 = vpop.f32.mrf.mxu0
        %v1137 = vadd.f32 0.0, %v1136
        %1138 = vmatmul.f32.gmra.mxu0 %v1010
        %v1139 = vpop.f32.mrf.mxu0
        %v1140 = vadd.f32 0.0, %v1139
        %1141 = vmatmul.f32.gmra.mxu0 %v1013
        %v1142 = vpop.f32.mrf.mxu0
        %v1143 = vadd.f32 0.0, %v1142
        %1144 = vmatmul.f32.gmra.mxu0 %v1016
        %v1145 = vpop.f32.mrf.mxu0
        %v1146 = vadd.f32 0.0, %v1145
        %1147 = vmatmul.f32.gmra.mxu0 %v1019
        %v1148 = vpop.f32.mrf.mxu0
        %v1149 = vadd.f32 0.0, %v1148
        %1150 = vdwg.mxu0
        %v1151 = vmul.f32 %v1039, 2.0
        %v1152 = vmul.f32 %v1104, 2.0
        %v1153 = vmul.f32 %v1042, 2.0
        %v1154 = vmul.f32 %v1107, 2.0
        %v1155 = vmul.f32 %v1045, 2.0
        %v1156 = vmul.f32 %v1110, 2.0
        %v1157 = vmul.f32 %v1048, 2.0
        %v1158 = vmul.f32 %v1113, 2.0
        %v1159 = vmul.f32 %v1051, 2.0
        %v1160 = vmul.f32 %v1116, 2.0
        %v1161 = vmul.f32 %v1054, 2.0
        %v1162 = vmul.f32 %v1119, 2.0
        %v1163 = vmul.f32 %v1057, 2.0
        %v1164 = vmul.f32 %v1122, 2.0
        %v1165 = vmul.f32 %v1060, 2.0
        %v1166 = vmul.f32 %v1125, 2.0
        %v1167 = vmul.f32 %v1063, 2.0
        %v1168 = vmul.f32 %v1128, 2.0
        %v1169 = vmul.f32 %v1066, 2.0
        %v1170 = vmul.f32 %v1131, 2.0
        %v1171 = vmul.f32 %v1069, 2.0
        %v1172 = vmul.f32 %v1134, 2.0
        %v1173 = vmul.f32 %v1072, 2.0
        %v1174 = vmul.f32 %v1137, 2.0
        %v1175 = vmul.f32 %v1075, 2.0
        %v1176 = vmul.f32 %v1140, 2.0
        %v1177 = vmul.f32 %v1078, 2.0
        %v1178 = vmul.f32 %v1143, 2.0
        %v1179 = vmul.f32 %v1081, 2.0
        %v1180 = vmul.f32 %v1146, 2.0
        %v1181 = vmul.f32 %v1084, 2.0
        %v1182 = vmul.f32 %v1149, 2.0
        %1183 = vset.pattern.permute.xlu0 16
        %1184 = vperm.xlu0 %1183, %v440
        %v1185 = vpop.permute.xlu0 %1184
        %1187 = vset.pattern.permute.xlu0 16
        %1188 = vperm.xlu0 %1187, %v441
        %v1189 = vpop.permute.xlu0 %1188
        %1191 = vset.pattern.permute.xlu0 16
        %1192 = vperm.xlu0 %1191, %v442
        %v1193 = vpop.permute.xlu0 %1192
        %1195 = vset.pattern.permute.xlu0 16
        %1196 = vperm.xlu0 %1195, %v443
        %v1197 = vpop.permute.xlu0 %1196
        %1199 = vset.pattern.permute.xlu0 16
        %1200 = vperm.xlu0 %1199, %v444
        %v1201 = vpop.permute.xlu0 %1200
        %1203 = vset.pattern.permute.xlu0 16
        %1204 = vperm.xlu0 %1203, %v445
        %v1205 = vpop.permute.xlu0 %1204
        %1207 = vset.pattern.permute.xlu0 16
        %1208 = vperm.xlu0 %1207, %v446
        %v1209 = vpop.permute.xlu0 %1208
        %1211 = vset.pattern.permute.xlu0 16
        %1212 = vperm.xlu0 %1211, %v447
        %v1213 = vpop.permute.xlu0 %1212
        %1215 = vset.pattern.permute.xlu0 16
        %1216 = vperm.xlu0 %1215, %v448
        %v1217 = vpop.permute.xlu0 %1216
        %1219 = vset.pattern.permute.xlu0 16
        %1220 = vperm.xlu0 %1219, %v449
        %v1221 = vpop.permute.xlu0 %1220
        %1223 = vset.pattern.permute.xlu0 16
        %1224 = vperm.xlu0 %1223, %v450
        %v1225 = vpop.permute.xlu0 %1224
        %1227 = vset.pattern.permute.xlu0 16
        %1228 = vperm.xlu0 %1227, %v451
        %v1229 = vpop.permute.xlu0 %1228
        %1231 = vset.pattern.permute.xlu0 16
        %1232 = vperm.xlu0 %1231, %v452
        %v1233 = vpop.permute.xlu0 %1232
        %1235 = vset.pattern.permute.xlu0 16
        %1236 = vperm.xlu0 %1235, %v453
        %v1237 = vpop.permute.xlu0 %1236
        %1239 = vset.pattern.permute.xlu0 16
        %1240 = vperm.xlu0 %1239, %v454
        %v1241 = vpop.permute.xlu0 %1240
        %1243 = vset.pattern.permute.xlu0 16
        %1244 = vperm.xlu0 %1243, %v455
        %v1245 = vpop.permute.xlu0 %1244
        %v1247 = vsub.f32 %v1185, %v1151
        %v1248 = vsub.f32 %v1185, %v1152
        %v1249 = vsub.f32 %v1189, %v1153
        %v1250 = vsub.f32 %v1189, %v1154
        %v1251 = vsub.f32 %v1193, %v1155
        %v1252 = vsub.f32 %v1193, %v1156
        %v1253 = vsub.f32 %v1197, %v1157
        %v1254 = vsub.f32 %v1197, %v1158
        %v1255 = vsub.f32 %v1201, %v1159
        %v1256 = vsub.f32 %v1201, %v1160
        %v1257 = vsub.f32 %v1205, %v1161
        %v1258 = vsub.f32 %v1205, %v1162
        %v1259 = vsub.f32 %v1209, %v1163
        %v1260 = vsub.f32 %v1209, %v1164
        %v1261 = vsub.f32 %v1213, %v1165
        %v1262 = vsub.f32 %v1213, %v1166
        %v1263 = vsub.f32 %v1217, %v1167
        %v1264 = vsub.f32 %v1217, %v1168
        %v1265 = vsub.f32 %v1221, %v1169
        %v1266 = vsub.f32 %v1221, %v1170
        %v1267 = vsub.f32 %v1225, %v1171
        %v1268 = vsub.f32 %v1225, %v1172
        %v1269 = vsub.f32 %v1229, %v1173
        %v1270 = vsub.f32 %v1229, %v1174
        %v1271 = vsub.f32 %v1233, %v1175
        %v1272 = vsub.f32 %v1233, %v1176
        %v1273 = vsub.f32 %v1237, %v1177
        %v1274 = vsub.f32 %v1237, %v1178
        %v1275 = vsub.f32 %v1241, %v1179
        %v1276 = vsub.f32 %v1241, %v1180
        %v1277 = vsub.f32 %v1245, %v1181
        %v1278 = vsub.f32 %v1245, %v1182
        %v1279 = vmin.f32 %v1247, %v1251
        %v1280 = vmin.f32 %v1249, %v1253
        %v1281 = vmin.f32 %v1279, %v1255
        %v1282 = vmin.f32 %v1280, %v1257
        %v1283 = vmin.f32 %v1281, %v1259
        %v1284 = vmin.f32 %v1282, %v1261
        %v1285 = vmin.f32 %v1283, %v1263
        %v1286 = vmin.f32 %v1284, %v1265
        %v1287 = vmin.f32 %v1285, %v1267
        %v1288 = vmin.f32 %v1286, %v1269
        %v1289 = vmin.f32 %v1287, %v1271
        %v1290 = vmin.f32 %v1288, %v1273
        %v1291 = vmin.f32 %v1289, %v1275
        %v1292 = vmin.f32 %v1290, %v1277
        %v1293 = vmin.f32 %v1291, %v1292
        %v1294 = vrot.slane %v1293, 4
        %v1295 = vmin.f32 %v1293, %v1294
        %v1296 = vrot.slane %v1295, 2
        %v1297 = vmin.f32 %v1295, %v1296
        %v1298 = vrot.slane %v1297, 1
        %v1299 = vmin.f32 %v1297, %v1298
        %v1300 = vmin.f32 %v1248, %v1252
        %v1301 = vmin.f32 %v1250, %v1254
        %v1302 = vmin.f32 %v1300, %v1256
        %v1303 = vmin.f32 %v1301, %v1258
        %v1304 = vmin.f32 %v1302, %v1260
        %v1305 = vmin.f32 %v1303, %v1262
        %v1306 = vmin.f32 %v1304, %v1264
        %v1307 = vmin.f32 %v1305, %v1266
        %v1308 = vmin.f32 %v1306, %v1268
        %v1309 = vmin.f32 %v1307, %v1270
        %v1310 = vmin.f32 %v1308, %v1272
        %v1311 = vmin.f32 %v1309, %v1274
        %v1312 = vmin.f32 %v1310, %v1276
        %v1313 = vmin.f32 %v1311, %v1278
        %v1314 = vmin.f32 %v1312, %v1313
        %v1315 = vrot.slane %v1314, 4
        %v1316 = vmin.f32 %v1314, %v1315
        %v1317 = vrot.slane %v1316, 2
        %v1318 = vmin.f32 %v1316, %v1317
        %v1319 = vrot.slane %v1318, 1
        %v1320 = vmin.f32 %v1318, %v1319
        %vm1321 = vcmp.eq.f32.partialorder %v1247, %v1299
        %vm1322 = vcmp.eq.f32.partialorder %v1248, %v1320
        %vm1323 = vcmp.eq.f32.partialorder %v1249, %v1299
        %vm1324 = vcmp.eq.f32.partialorder %v1250, %v1320
        %vm1325 = vcmp.eq.f32.partialorder %v1251, %v1299
        %vm1326 = vcmp.eq.f32.partialorder %v1252, %v1320
        %vm1327 = vcmp.eq.f32.partialorder %v1253, %v1299
        %vm1328 = vcmp.eq.f32.partialorder %v1254, %v1320
        %vm1329 = vcmp.eq.f32.partialorder %v1255, %v1299
        %vm1330 = vcmp.eq.f32.partialorder %v1256, %v1320
        %vm1331 = vcmp.eq.f32.partialorder %v1257, %v1299
        %vm1332 = vcmp.eq.f32.partialorder %v1258, %v1320
        %vm1333 = vcmp.eq.f32.partialorder %v1259, %v1299
        %vm1334 = vcmp.eq.f32.partialorder %v1260, %v1320
        %vm1335 = vcmp.eq.f32.partialorder %v1261, %v1299
        %vm1336 = vcmp.eq.f32.partialorder %v1262, %v1320
        %vm1337 = vcmp.eq.f32.partialorder %v1263, %v1299
        %vm1338 = vcmp.eq.f32.partialorder %v1264, %v1320
        %vm1339 = vcmp.eq.f32.partialorder %v1265, %v1299
        %vm1340 = vcmp.eq.f32.partialorder %v1266, %v1320
        %vm1341 = vcmp.eq.f32.partialorder %v1267, %v1299
        %vm1342 = vcmp.eq.f32.partialorder %v1268, %v1320
        %vm1343 = vcmp.eq.f32.partialorder %v1269, %v1299
        %vm1344 = vcmp.eq.f32.partialorder %v1270, %v1320
        %vm1345 = vcmp.eq.f32.partialorder %v1271, %v1299
        %vm1346 = vcmp.eq.f32.partialorder %v1272, %v1320
        %vm1347 = vcmp.eq.f32.partialorder %v1273, %v1299
        %vm1348 = vcmp.eq.f32.partialorder %v1274, %v1320
        %vm1349 = vcmp.eq.f32.partialorder %v1275, %v1299
        %vm1350 = vcmp.eq.f32.partialorder %v1276, %v1320
        %vm1351 = vcmp.eq.f32.partialorder %v1277, %v1299
        %vm1352 = vcmp.eq.f32.partialorder %v1278, %v1320
        %v1353 = vsel %vm1321, 1, 0
        %v1354 = vsel %vm1322, 1, 0
        %v1355 = vsel %vm1323, 1, 0
        %v1356 = vsel %vm1324, 1, 0
        %v1357 = vsel %vm1325, 1, 0
        %v1358 = vsel %vm1326, 1, 0
        %v1359 = vsel %vm1327, 1, 0
        %v1360 = vsel %vm1328, 1, 0
        %v1361 = vsel %vm1329, 1, 0
        %v1362 = vsel %vm1330, 1, 0
        %v1363 = vsel %vm1331, 1, 0
        %v1364 = vsel %vm1332, 1, 0
        %v1365 = vsel %vm1333, 1, 0
        %v1366 = vsel %vm1334, 1, 0
        %v1367 = vsel %vm1335, 1, 0
        %v1368 = vsel %vm1336, 1, 0
        %v1369 = vsel %vm1337, 1, 0
        %v1370 = vsel %vm1338, 1, 0
        %v1371 = vsel %vm1339, 1, 0
        %v1372 = vsel %vm1340, 1, 0
        %v1373 = vsel %vm1341, 1, 0
        %v1374 = vsel %vm1342, 1, 0
        %v1375 = vsel %vm1343, 1, 0
        %v1376 = vsel %vm1344, 1, 0
        %v1377 = vsel %vm1345, 1, 0
        %v1378 = vsel %vm1346, 1, 0
        %v1379 = vsel %vm1347, 1, 0
        %v1380 = vsel %vm1348, 1, 0
        %v1381 = vsel %vm1349, 1, 0
        %v1382 = vsel %vm1350, 1, 0
        %v1383 = vsel %vm1351, 1, 0
        %v1384 = vsel %vm1352, 1, 0
        %v1385 = vcvt.s32.f32 %v1353
        %v1386 = vcvt.s32.f32 %v1354
        %v1387 = vcvt.s32.f32 %v1355
        %v1388 = vcvt.s32.f32 %v1356
        %v1389 = vcvt.s32.f32 %v1357
        %v1390 = vcvt.s32.f32 %v1358
        %v1391 = vcvt.s32.f32 %v1359
        %v1392 = vcvt.s32.f32 %v1360
        %v1393 = vcvt.s32.f32 %v1361
        %v1394 = vcvt.s32.f32 %v1362
        %v1395 = vcvt.s32.f32 %v1363
        %v1396 = vcvt.s32.f32 %v1364
        %v1397 = vcvt.s32.f32 %v1365
        %v1398 = vcvt.s32.f32 %v1366
        %v1399 = vcvt.s32.f32 %v1367
        %v1400 = vcvt.s32.f32 %v1368
        %v1401 = vcvt.s32.f32 %v1369
        %v1402 = vcvt.s32.f32 %v1370
        %v1403 = vcvt.s32.f32 %v1371
        %v1404 = vcvt.s32.f32 %v1372
        %v1405 = vcvt.s32.f32 %v1373
        %v1406 = vcvt.s32.f32 %v1374
        %v1407 = vcvt.s32.f32 %v1375
        %v1408 = vcvt.s32.f32 %v1376
        %v1409 = vcvt.s32.f32 %v1377
        %v1410 = vcvt.s32.f32 %v1378
        %v1411 = vcvt.s32.f32 %v1379
        %v1412 = vcvt.s32.f32 %v1380
        %v1413 = vcvt.s32.f32 %v1381
        %v1414 = vcvt.s32.f32 %v1382
        %v1415 = vcvt.s32.f32 %v1383
        %v1416 = vcvt.s32.f32 %v1384
        %1417 = vmatpush.msra.mxu0 %v1415
        %1418 = vmatpush.msra.mxu0 %v1413
        %1419 = vmatpush.msra.mxu0 %v1411
        %1420 = vmatpush.msra.mxu0 %v1409
        %1421 = vmatpush.msra.mxu0 %v1407
        %1422 = vmatpush.msra.mxu0 %v1405
        %1423 = vmatpush.msra.mxu0 %v1403
        %1424 = vmatpush.msra.mxu0 %v1401
        %1425 = vmatpush.msra.mxu0 %v1399
        %1426 = vmatpush.msra.mxu0 %v1397
        %1427 = vmatpush.msra.mxu0 %v1395
        %1428 = vmatpush.msra.mxu0 %v1393
        %1429 = vmatpush.msra.mxu0 %v1391
        %1430 = vmatpush.msra.mxu0 %v1389
        %1431 = vmatpush.msra.mxu0 %v1387
        %1432 = vmatpush.msra.mxu0 %v1385
        %1433 = vmatmul.f32.gmra.mxu0 %v456
        %v1434 = vpop.f32.mrf.mxu0
        %v1435 = vadd.f32 0.0, %v1434
        %1436 = vmatmul.f32.gmra.mxu0 %v457
        %v1437 = vpop.f32.mrf.mxu0
        %v1438 = vadd.f32 0.0, %v1437
        %1439 = vdwg.mxu0
        %1440 = vmatpush.msra.mxu0 %v1416
        %1441 = vmatpush.msra.mxu0 %v1414
        %1442 = vmatpush.msra.mxu0 %v1412
        %1443 = vmatpush.msra.mxu0 %v1410
        %1444 = vmatpush.msra.mxu0 %v1408
        %1445 = vmatpush.msra.mxu0 %v1406
        %1446 = vmatpush.msra.mxu0 %v1404
        %1447 = vmatpush.msra.mxu0 %v1402
        %1448 = vmatpush.msra.mxu0 %v1400
        %1449 = vmatpush.msra.mxu0 %v1398
        %1450 = vmatpush.msra.mxu0 %v1396
        %1451 = vmatpush.msra.mxu0 %v1394
        %1452 = vmatpush.msra.mxu0 %v1392
        %1453 = vmatpush.msra.mxu0 %v1390
        %1454 = vmatpush.msra.mxu0 %v1388
        %1455 = vmatpush.msra.mxu0 %v1386
        %1456 = vmatmul.f32.gmra.mxu0 %v456
        %v1457 = vpop.f32.mrf.mxu0
        %v1458 = vadd.f32 0.0, %v1457
        %1459 = vmatmul.f32.gmra.mxu0 %v457
        %v1460 = vpop.f32.mrf.mxu0
        %v1461 = vadd.f32 0.0, %v1460
        %1462 = vdwg.mxu0
        %v1463 = vsub.f32 %v1435, %v944
        %v1464 = vsub.f32 %v1458, %v967
        %v1465 = vsub.f32 %v1438, %v947
        %v1466 = vsub.f32 %v1461, %v970
        %v1467 = vmul.f32 %v1463, %v1463
        %v1468 = vmul.f32 %v1464, %v1464
        %v1469 = vmul.f32 %v1465, %v1465
        %v1470 = vmul.f32 %v1466, %v1466
        %v1471 = vadd.f32 %v1467, %v1469
        %v1472 = vrot.slane %v1471, 4
        %v1473 = vadd.f32 %v1471, %v1472
        %v1474 = vrot.slane %v1473, 2
        %v1475 = vadd.f32 %v1473, %v1474
        %v1476 = vrot.slane %v1475, 1
        %v1477 = vadd.f32 %v1475, %v1476
        %v1478 = vadd.f32 %v1468, %v1470
        %v1479 = vrot.slane %v1478, 4
        %v1480 = vadd.f32 %v1478, %v1479
        %v1481 = vrot.slane %v1480, 2
        %v1482 = vadd.f32 %v1480, %v1481
        %v1483 = vrot.slane %v1482, 1
        %v1484 = vadd.f32 %v1482, %v1483
        %v1485 = vadd.f32 %v1477, 0.0
        %v1486 = vadd.f32 %v1484, 0.0
        %1488 = vset.pattern.permute.xlu0 16
        %1489 = vperm.xlu0 %1488, %v458
        %v1490 = vpop.permute.xlu0 %1489
        %1493 = vset.pattern.permute.xlu0 16
        %1494 = vperm.xlu0 %1493, %v459
        %v1495 = vpop.permute.xlu0 %1494
        %1498 = vset.pattern.permute.xlu0 16
        %1499 = vperm.xlu0 %1498, %v460
        %v1500 = vpop.permute.xlu0 %1499
        %1503 = vset.pattern.permute.xlu0 16
        %1504 = vperm.xlu0 %1503, %v461
        %v1505 = vpop.permute.xlu0 %1504
        %v1507 = vsel %vm972, %v458, 0
        %v1509 = vsel %vm972, %v459, 0
        %v1511 = vsel %vm972, %v460, 0
        %v1513 = vsel %vm972, %v461, 0
        %1515 = vmatpush.msra.mxu0 0.0
        %1516 = vmatpush.msra.mxu0 0.0
        %1517 = vmatpush.msra.mxu0 0.0
        %1518 = vmatpush.msra.mxu0 0.0
        %1519 = vmatpush.msra.mxu0 0.0
        %1520 = vmatpush.msra.mxu0 0.0
        %1521 = vmatpush.msra.mxu0 0.0
        %1522 = vmatpush.msra.mxu0 0.0
        %1523 = vmatpush.msra.mxu0 0.0
        %1524 = vmatpush.msra.mxu0 0.0
        %1525 = vmatpush.msra.mxu0 0.0
        %1526 = vmatpush.msra.mxu0 0.0
        %1527 = vmatpush.msra.mxu0 0.0
        %1528 = vmatpush.msra.mxu0 0.0
        %1529 = vmatpush.msra.mxu0 %v1438
        %1530 = vmatpush.msra.mxu0 %v1435
        %1531 = vmatmul.f32.gmra.mxu0 %v1507
        %v1532 = vpop.f32.mrf.mxu0
        %v1533 = vadd.f32 %v1490, %v1532
        %1534 = vmatmul.f32.gmra.mxu0 %v1509
        %v1535 = vpop.f32.mrf.mxu0
        %v1536 = vadd.f32 %v1495, %v1535
        %1537 = vmatmul.f32.gmra.mxu0 %v1511
        %v1538 = vpop.f32.mrf.mxu0
        %v1539 = vadd.f32 %v1500, %v1538
        %1540 = vmatmul.f32.gmra.mxu0 %v1513
        %v1541 = vpop.f32.mrf.mxu0
        %v1542 = vadd.f32 %v1505, %v1541
        %1543 = vdwg.mxu0
        %1544 = vmatpush.msra.mxu0 0.0
        %1545 = vmatpush.msra.mxu0 0.0
        %1546 = vmatpush.msra.mxu0 0.0
        %1547 = vmatpush.msra.mxu0 0.0
        %1548 = vmatpush.msra.mxu0 0.0
        %1549 = vmatpush.msra.mxu0 0.0
        %1550 = vmatpush.msra.mxu0 0.0
        %1551 = vmatpush.msra.mxu0 0.0
        %1552 = vmatpush.msra.mxu0 0.0
        %1553 = vmatpush.msra.mxu0 0.0
        %1554 = vmatpush.msra.mxu0 0.0
        %1555 = vmatpush.msra.mxu0 0.0
        %1556 = vmatpush.msra.mxu0 0.0
        %1557 = vmatpush.msra.mxu0 0.0
        %1558 = vmatpush.msra.mxu0 %v1461
        %1559 = vmatpush.msra.mxu0 %v1458
        %1560 = vmatmul.f32.gmra.mxu0 %v1507
        %v1561 = vpop.f32.mrf.mxu0
        %v1562 = vadd.f32 %v1490, %v1561
        %1563 = vmatmul.f32.gmra.mxu0 %v1509
        %v1564 = vpop.f32.mrf.mxu0
        %v1565 = vadd.f32 %v1495, %v1564
        %1566 = vmatmul.f32.gmra.mxu0 %v1511
        %v1567 = vpop.f32.mrf.mxu0
        %v1568 = vadd.f32 %v1500, %v1567
        %1569 = vmatmul.f32.gmra.mxu0 %v1513
        %v1570 = vpop.f32.mrf.mxu0
        %v1571 = vadd.f32 %v1505, %v1570
        %1572 = vdwg.mxu0
        %v1573 = vmax.f32 %v1533, 0.0
        %v1574 = vmax.f32 %v1562, 0.0
        %v1575 = vmax.f32 %v1536, 0.0
        %v1576 = vmax.f32 %v1565, 0.0
        %v1577 = vmax.f32 %v1539, 0.0
        %v1578 = vmax.f32 %v1568, 0.0
        %v1579 = vmax.f32 %v1542, 0.0
        %v1580 = vmax.f32 %v1571, 0.0
        %1582 = vset.pattern.permute.xlu0 32
        %1583 = vperm.xlu0 %1582, %v462
        %v1584 = vpop.permute.xlu0 %1583
        %v1586 = vsel %vm921, %v462, 0
        %1588 = vmatpush.msra.mxu0 0.0
        %1589 = vmatpush.msra.mxu0 0.0
        %1590 = vmatpush.msra.mxu0 0.0
        %1591 = vmatpush.msra.mxu0 0.0
        %1592 = vmatpush.msra.mxu0 0.0
        %1593 = vmatpush.msra.mxu0 0.0
        %1594 = vmatpush.msra.mxu0 0.0
        %1595 = vmatpush.msra.mxu0 0.0
        %1596 = vmatpush.msra.mxu0 0.0
        %1597 = vmatpush.msra.mxu0 0.0
        %1598 = vmatpush.msra.mxu0 0.0
        %1599 = vmatpush.msra.mxu0 0.0
        %1600 = vmatpush.msra.mxu0 %v1579
        %1601 = vmatpush.msra.mxu0 %v1577
        %1602 = vmatpush.msra.mxu0 %v1575
        %1603 = vmatpush.msra.mxu0 %v1573
        %1604 = vmatmul.f32.gmra.mxu0 %v1586
        %v1605 = vpop.f32.mrf.mxu0
        %v1606 = vadd.f32 %v1584, %v1605
        %1607 = vdwg.mxu0
        %1608 = vmatpush.msra.mxu0 0.0
        %1609 = vmatpush.msra.mxu0 0.0
        %1610 = vmatpush.msra.mxu0 0.0
        %1611 = vmatpush.msra.mxu0 0.0
        %1612 = vmatpush.msra.mxu0 0.0
        %1613 = vmatpush.msra.mxu0 0.0
        %1614 = vmatpush.msra.mxu0 0.0
        %1615 = vmatpush.msra.mxu0 0.0
        %1616 = vmatpush.msra.mxu0 0.0
        %1617 = vmatpush.msra.mxu0 0.0
        %1618 = vmatpush.msra.mxu0 0.0
        %1619 = vmatpush.msra.mxu0 0.0
        %1620 = vmatpush.msra.mxu0 %v1580
        %1621 = vmatpush.msra.mxu0 %v1578
        %1622 = vmatpush.msra.mxu0 %v1576
        %1623 = vmatpush.msra.mxu0 %v1574
        %1624 = vmatmul.f32.gmra.mxu0 %v1586
        %v1625 = vpop.f32.mrf.mxu0
        %v1626 = vadd.f32 %v1584, %v1625
        %1627 = vdwg.mxu0
        %1628 = vst [vmem:[%s398] sm:$0xf] %v1606
        %1629 = vst [vmem:[%s398 + $0x8] sm:$0xf] %v1626
        %v1631 = vperm.slane %v859, 0
        %v1632 = vperm.slane %v859, 1
        %v1635 = vmul.f32 %v716, %v1631
        %v1636 = vmul.f32 %v716, %v1632
        %v1637 = vmul.f32 %v720, %v1631
        %v1638 = vmul.f32 %v720, %v1632
        %v1639 = vmul.f32 %v724, %v1631
        %v1640 = vmul.f32 %v724, %v1632
        %v1641 = vmul.f32 %v728, %v1631
        %v1642 = vmul.f32 %v728, %v1632
        %v1643 = vadd.f32 %v590, %v1635
        %v1644 = vadd.f32 %v591, %v1636
        %v1645 = vadd.f32 %v592, %v1637
        %v1646 = vadd.f32 %v593, %v1638
        %v1647 = vadd.f32 %v594, %v1639
        %v1648 = vadd.f32 %v595, %v1640
        %v1649 = vadd.f32 %v596, %v1641
        %v1650 = vadd.f32 %v597, %v1642
        %v1651 = vmax.f32 %v1643, 0.0
        %v1652 = vmax.f32 %v1644, 0.0
        %v1653 = vmax.f32 %v1645, 0.0
        %v1654 = vmax.f32 %v1646, 0.0
        %v1655 = vmax.f32 %v1647, 0.0
        %v1656 = vmax.f32 %v1648, 0.0
        %v1657 = vmax.f32 %v1649, 0.0
        %v1658 = vmax.f32 %v1650, 0.0
        %v1659 = vmul.f32 %v761, %v1651
        %v1660 = vmul.f32 %v761, %v1652
        %v1661 = vmul.f32 %v765, %v1653
        %v1662 = vmul.f32 %v765, %v1654
        %v1663 = vmul.f32 %v769, %v1655
        %v1664 = vmul.f32 %v769, %v1656
        %v1665 = vmul.f32 %v773, %v1657
        %v1666 = vmul.f32 %v773, %v1658
        %v1667 = vadd.f32 %v1659, %v1661
        %v1668 = vadd.f32 %v1667, %v1663
        %v1669 = vadd.f32 %v1668, %v1665
        %v1670 = vrot.slane %v1669, 4
        %v1671 = vadd.f32 %v1669, %v1670
        %v1672 = vrot.slane %v1671, 2
        %v1673 = vadd.f32 %v1671, %v1672
        %v1674 = vrot.slane %v1673, 1
        %v1675 = vadd.f32 %v1673, %v1674
        %v1676 = vadd.f32 %v1660, %v1662
        %v1677 = vadd.f32 %v1676, %v1664
        %v1678 = vadd.f32 %v1677, %v1666
        %v1679 = vrot.slane %v1678, 4
        %v1680 = vadd.f32 %v1678, %v1679
        %v1681 = vrot.slane %v1680, 2
        %v1682 = vadd.f32 %v1680, %v1681
        %v1683 = vrot.slane %v1682, 1
        %v1684 = vadd.f32 %v1682, %v1683
        %v1685 = vadd.f32 %v1675, %v803
        %v1686 = vadd.f32 %v1684, %v803
        %v1687 = vxor.u32 %v1685, 2147483648
        %v1688 = vxor.u32 %v1686, 2147483648
        %v1689 = vmul.f32 %v1687, 1.442695
        %v1690 = vpow.pop %v1689
        %v1691 = vmul.f32 %v1688, 1.442695
        %v1692 = vpow.pop %v1691
        %v1693 = vadd.f32 %v1690, 1.0
        %v1694 = vadd.f32 %v1692, 1.0
        %v1695 = vrcp.pop %v1693
        %v1696 = vmul.f32 %v1693, %v1695
        %v1697 = vsub.f32 1.0, %v1696
        %v1698 = vmul.f32 %v1695, %v1697
        %v1699 = vadd.f32 %v1695, %v1698
        %vm1700 = vweird.f32 %v1693
        %vm1701 = vweird.f32 %v1695
        %vm1702 = vmor %vm1700, %vm1701
        %v1703 = vsel %vm1702, %v1695, %v1699
        %v1704 = vand.u32 2147483647, %v1693
        %vm1705 = vcmp.eq.f32.partialorder %v1704, 8.507059e+37
        %v1706 = vand.u32 %v1693, 2147483648
        %v1707 = vor.u32 1.1754944e-38, %v1706
        %v1708 = vsel %vm1705, %v1707, %v1703
        %v1709 = vmul.f32 1.0, %v1708
        %v1710 = vrcp.pop %v1694
        %v1711 = vmul.f32 %v1694, %v1710
        %v1712 = vsub.f32 1.0, %v1711
        %v1713 = vmul.f32 %v1710, %v1712
        %v1714 = vadd.f32 %v1710, %v1713
        %vm1715 = vweird.f32 %v1694
        %vm1716 = vweird.f32 %v1710
        %vm1717 = vmor %vm1715, %vm1716
        %v1718 = vsel %vm1717, %v1710, %v1714
        %v1719 = vand.u32 2147483647, %v1694
        %vm1720 = vcmp.eq.f32.partialorder %v1719, 8.507059e+37
        %v1721 = vand.u32 %v1694, 2147483648
        %v1722 = vor.u32 1.1754944e-38, %v1721
        %v1723 = vsel %vm1720, %v1722, %v1718
        %v1724 = vmul.f32 1.0, %v1723
        %v1727 = vrot.slane %v1724, 7
        %v1728 = vsel %vm848, %v1709, %v1727
        %v1730 = vmul.f32 %v859, %v1728
        %v1731 = vsub.f32 1.0, %v1709
        %v1732 = vsub.f32 1.0, %v1724
        %v1735 = vrot.slane %v1732, 7
        %v1736 = vsel %vm848, %v1731, %v1735
        %v1738 = vmul.f32 %v859, %v1736
        %s1739 = scalar_lea.vmem %s420, 1
        %1740 = vst.msk [vmem:[%s1739] ss:$8 sm:$0x3] %vm863, %v1730
        %1741 = vst.msk [vmem:[%s1739] ss:$8 sm:$0x0] %vm863, %v1730
        %v1743 = vperm.slane %v1730, 0
        %v1744 = vperm.slane %v1730, 1
        %v1747 = vmul.f32 %v868, %v1743
        %v1748 = vmul.f32 %v868, %v1744
        %v1749 = vmul.f32 %v872, %v1743
        %v1750 = vmul.f32 %v872, %v1744
        %v1751 = vmul.f32 %v876, %v1743
        %v1752 = vmul.f32 %v876, %v1744
        %v1753 = vmul.f32 %v880, %v1743
        %v1754 = vmul.f32 %v880, %v1744
        %v1755 = vadd.f32 %v706, %v1747
        %v1756 = vadd.f32 %v707, %v1748
        %v1757 = vadd.f32 %v708, %v1749
        %v1758 = vadd.f32 %v709, %v1750
        %v1759 = vadd.f32 %v710, %v1751
        %v1760 = vadd.f32 %v711, %v1752
        %v1761 = vadd.f32 %v712, %v1753
        %v1762 = vadd.f32 %v713, %v1754
        %v1763 = vmax.f32 %v1755, 0.0
        %v1764 = vmax.f32 %v1756, 0.0
        %v1765 = vmax.f32 %v1757, 0.0
        %v1766 = vmax.f32 %v1758, 0.0
        %v1767 = vmax.f32 %v1759, 0.0
        %v1768 = vmax.f32 %v1760, 0.0
        %v1769 = vmax.f32 %v1761, 0.0
        %v1770 = vmax.f32 %v1762, 0.0
        %1771 = vmatpush.msra.mxu0 0.0
        %1772 = vmatpush.msra.mxu0 0.0
        %1773 = vmatpush.msra.mxu0 0.0
        %1774 = vmatpush.msra.mxu0 0.0
        %1775 = vmatpush.msra.mxu0 0.0
        %1776 = vmatpush.msra.mxu0 0.0
        %1777 = vmatpush.msra.mxu0 0.0
        %1778 = vmatpush.msra.mxu0 0.0
        %1779 = vmatpush.msra.mxu0 0.0
        %1780 = vmatpush.msra.mxu0 0.0
        %1781 = vmatpush.msra.mxu0 0.0
        %1782 = vmatpush.msra.mxu0 0.0
        %1783 = vmatpush.msra.mxu0 %v1769
        %1784 = vmatpush.msra.mxu0 %v1767
        %1785 = vmatpush.msra.mxu0 %v1765
        %1786 = vmatpush.msra.mxu0 %v1763
        %1787 = vmatmul.f32.gmra.mxu0 %v922
        %v1788 = vpop.f32.mrf.mxu0
        %v1789 = vadd.f32 %v914, %v1788
        %1790 = vmatmul.f32.gmra.mxu0 %v924
        %v1791 = vpop.f32.mrf.mxu0
        %v1792 = vadd.f32 %v919, %v1791
        %1793 = vdwg.mxu0
        %1794 = vmatpush.msra.mxu0 0.0
        %1795 = vmatpush.msra.mxu0 0.0
        %1796 = vmatpush.msra.mxu0 0.0
        %1797 = vmatpush.msra.mxu0 0.0
        %1798 = vmatpush.msra.mxu0 0.0
        %1799 = vmatpush.msra.mxu0 0.0
        %1800 = vmatpush.msra.mxu0 0.0
        %1801 = vmatpush.msra.mxu0 0.0
        %1802 = vmatpush.msra.mxu0 0.0
        %1803 = vmatpush.msra.mxu0 0.0
        %1804 = vmatpush.msra.mxu0 0.0
        %1805 = vmatpush.msra.mxu0 0.0
        %1806 = vmatpush.msra.mxu0 %v1770
        %1807 = vmatpush.msra.mxu0 %v1768
        %1808 = vmatpush.msra.mxu0 %v1766
        %1809 = vmatpush.msra.mxu0 %v1764
        %1810 = vmatmul.f32.gmra.mxu0 %v922
        %v1811 = vpop.f32.mrf.mxu0
        %v1812 = vadd.f32 %v914, %v1811
        %1813 = vmatmul.f32.gmra.mxu0 %v924
        %v1814 = vpop.f32.mrf.mxu0
        %v1815 = vadd.f32 %v919, %v1814
        %1816 = vdwg.mxu0
        %1817 = vmatpush.msra.mxu0 0.0
        %1818 = vmatpush.msra.mxu0 0.0
        %1819 = vmatpush.msra.mxu0 0.0
        %1820 = vmatpush.msra.mxu0 0.0
        %1821 = vmatpush.msra.mxu0 0.0
        %1822 = vmatpush.msra.mxu0 0.0
        %1823 = vmatpush.msra.mxu0 0.0
        %1824 = vmatpush.msra.mxu0 0.0
        %1825 = vmatpush.msra.mxu0 0.0
        %1826 = vmatpush.msra.mxu0 0.0
        %1827 = vmatpush.msra.mxu0 0.0
        %1828 = vmatpush.msra.mxu0 0.0
        %1829 = vmatpush.msra.mxu0 0.0
        %1830 = vmatpush.msra.mxu0 0.0
        %1831 = vmatpush.msra.mxu0 %v1792
        %1832 = vmatpush.msra.mxu0 %v1789
        %1833 = vmatmul.f32.gmra.mxu0 %v974
        %v1834 = vpop.f32.mrf.mxu0
        %v1835 = vadd.f32 0.0, %v1834
        %1836 = vmatmul.f32.gmra.mxu0 %v977
        %v1837 = vpop.f32.mrf.mxu0
        %v1838 = vadd.f32 0.0, %v1837
        %1839 = vmatmul.f32.gmra.mxu0 %v980
        %v1840 = vpop.f32.mrf.mxu0
        %v1841 = vadd.f32 0.0, %v1840
        %1842 = vmatmul.f32.gmra.mxu0 %v983
        %v1843 = vpop.f32.mrf.mxu0
        %v1844 = vadd.f32 0.0, %v1843
        %1845 = vmatmul.f32.gmra.mxu0 %v986
        %v1846 = vpop.f32.mrf.mxu0
        %v1847 = vadd.f32 0.0, %v1846
        %1848 = vmatmul.f32.gmra.mxu0 %v989
        %v1849 = vpop.f32.mrf.mxu0
        %v1850 = vadd.f32 0.0, %v1849
        %1851 = vmatmul.f32.gmra.mxu0 %v992
        %v1852 = vpop.f32.mrf.mxu0
        %v1853 = vadd.f32 0.0, %v1852
        %1854 = vmatmul.f32.gmra.mxu0 %v995
        %v1855 = vpop.f32.mrf.mxu0
        %v1856 = vadd.f32 0.0, %v1855
        %1857 = vmatmul.f32.gmra.mxu0 %v998
        %v1858 = vpop.f32.mrf.mxu0
        %v1859 = vadd.f32 0.0, %v1858
        %1860 = vmatmul.f32.gmra.mxu0 %v1001
        %v1861 = vpop.f32.mrf.mxu0
        %v1862 = vadd.f32 0.0, %v1861
        %1863 = vmatmul.f32.gmra.mxu0 %v1004
        %v1864 = vpop.f32.mrf.mxu0
        %v1865 = vadd.f32 0.0, %v1864
        %1866 = vmatmul.f32.gmra.mxu0 %v1007
        %v1867 = vpop.f32.mrf.mxu0
        %v1868 = vadd.f32 0.0, %v1867
        %1869 = vmatmul.f32.gmra.mxu0 %v1010
        %v1870 = vpop.f32.mrf.mxu0
        %v1871 = vadd.f32 0.0, %v1870
        %1872 = vmatmul.f32.gmra.mxu0 %v1013
        %v1873 = vpop.f32.mrf.mxu0
        %v1874 = vadd.f32 0.0, %v1873
        %1875 = vmatmul.f32.gmra.mxu0 %v1016
        %v1876 = vpop.f32.mrf.mxu0
        %v1877 = vadd.f32 0.0, %v1876
        %1878 = vmatmul.f32.gmra.mxu0 %v1019
        %v1879 = vpop.f32.mrf.mxu0
        %v1880 = vadd.f32 0.0, %v1879
        %1881 = vdwg.mxu0
        %1882 = vmatpush.msra.mxu0 0.0
        %1883 = vmatpush.msra.mxu0 0.0
        %1884 = vmatpush.msra.mxu0 0.0
        %1885 = vmatpush.msra.mxu0 0.0
        %1886 = vmatpush.msra.mxu0 0.0
        %1887 = vmatpush.msra.mxu0 0.0
        %1888 = vmatpush.msra.mxu0 0.0
        %1889 = vmatpush.msra.mxu0 0.0
        %1890 = vmatpush.msra.mxu0 0.0
        %1891 = vmatpush.msra.mxu0 0.0
        %1892 = vmatpush.msra.mxu0 0.0
        %1893 = vmatpush.msra.mxu0 0.0
        %1894 = vmatpush.msra.mxu0 0.0
        %1895 = vmatpush.msra.mxu0 0.0
        %1896 = vmatpush.msra.mxu0 %v1815
        %1897 = vmatpush.msra.mxu0 %v1812
        %1898 = vmatmul.f32.gmra.mxu0 %v974
        %v1899 = vpop.f32.mrf.mxu0
        %v1900 = vadd.f32 0.0, %v1899
        %1901 = vmatmul.f32.gmra.mxu0 %v977
        %v1902 = vpop.f32.mrf.mxu0
        %v1903 = vadd.f32 0.0, %v1902
        %1904 = vmatmul.f32.gmra.mxu0 %v980
        %v1905 = vpop.f32.mrf.mxu0
        %v1906 = vadd.f32 0.0, %v1905
        %1907 = vmatmul.f32.gmra.mxu0 %v983
        %v1908 = vpop.f32.mrf.mxu0
        %v1909 = vadd.f32 0.0, %v1908
        %1910 = vmatmul.f32.gmra.mxu0 %v986
        %v1911 = vpop.f32.mrf.mxu0
        %v1912 = vadd.f32 0.0, %v1911
        %1913 = vmatmul.f32.gmra.mxu0 %v989
        %v1914 = vpop.f32.mrf.mxu0
        %v1915 = vadd.f32 0.0, %v1914
        %1916 = vmatmul.f32.gmra.mxu0 %v992
        %v1917 = vpop.f32.mrf.mxu0
        %v1918 = vadd.f32 0.0, %v1917
        %1919 = vmatmul.f32.gmra.mxu0 %v995
        %v1920 = vpop.f32.mrf.mxu0
        %v1921 = vadd.f32 0.0, %v1920
        %1922 = vmatmul.f32.gmra.mxu0 %v998
        %v1923 = vpop.f32.mrf.mxu0
        %v1924 = vadd.f32 0.0, %v1923
        %1925 = vmatmul.f32.gmra.mxu0 %v1001
        %v1926 = vpop.f32.mrf.mxu0
        %v1927 = vadd.f32 0.0, %v1926
        %1928 = vmatmul.f32.gmra.mxu0 %v1004
        %v1929 = vpop.f32.mrf.mxu0
        %v1930 = vadd.f32 0.0, %v1929
        %1931 = vmatmul.f32.gmra.mxu0 %v1007
        %v1932 = vpop.f32.mrf.mxu0
        %v1933 = vadd.f32 0.0, %v1932
        %1934 = vmatmul.f32.gmra.mxu0 %v1010
        %v1935 = vpop.f32.mrf.mxu0
        %v1936 = vadd.f32 0.0, %v1935
        %1937 = vmatmul.f32.gmra.mxu0 %v1013
        %v1938 = vpop.f32.mrf.mxu0
        %v1939 = vadd.f32 0.0, %v1938
        %1940 = vmatmul.f32.gmra.mxu0 %v1016
        %v1941 = vpop.f32.mrf.mxu0
        %v1942 = vadd.f32 0.0, %v1941
        %1943 = vmatmul.f32.gmra.mxu0 %v1019
        %v1944 = vpop.f32.mrf.mxu0
        %v1945 = vadd.f32 0.0, %v1944
        %1946 = vdwg.mxu0
        %v1947 = vmul.f32 %v1835, 2.0
        %v1948 = vmul.f32 %v1900, 2.0
        %v1949 = vmul.f32 %v1838, 2.0
        %v1950 = vmul.f32 %v1903, 2.0
        %v1951 = vmul.f32 %v1841, 2.0
        %v1952 = vmul.f32 %v1906, 2.0
        %v1953 = vmul.f32 %v1844, 2.0
        %v1954 = vmul.f32 %v1909, 2.0
        %v1955 = vmul.f32 %v1847, 2.0
        %v1956 = vmul.f32 %v1912, 2.0
        %v1957 = vmul.f32 %v1850, 2.0
        %v1958 = vmul.f32 %v1915, 2.0
        %v1959 = vmul.f32 %v1853, 2.0
        %v1960 = vmul.f32 %v1918, 2.0
        %v1961 = vmul.f32 %v1856, 2.0
        %v1962 = vmul.f32 %v1921, 2.0
        %v1963 = vmul.f32 %v1859, 2.0
        %v1964 = vmul.f32 %v1924, 2.0
        %v1965 = vmul.f32 %v1862, 2.0
        %v1966 = vmul.f32 %v1927, 2.0
        %v1967 = vmul.f32 %v1865, 2.0
        %v1968 = vmul.f32 %v1930, 2.0
        %v1969 = vmul.f32 %v1868, 2.0
        %v1970 = vmul.f32 %v1933, 2.0
        %v1971 = vmul.f32 %v1871, 2.0
        %v1972 = vmul.f32 %v1936, 2.0
        %v1973 = vmul.f32 %v1874, 2.0
        %v1974 = vmul.f32 %v1939, 2.0
        %v1975 = vmul.f32 %v1877, 2.0
        %v1976 = vmul.f32 %v1942, 2.0
        %v1977 = vmul.f32 %v1880, 2.0
        %v1978 = vmul.f32 %v1945, 2.0
        %v1979 = vsub.f32 %v1185, %v1947
        %v1980 = vsub.f32 %v1185, %v1948
        %v1981 = vsub.f32 %v1189, %v1949
        %v1982 = vsub.f32 %v1189, %v1950
        %v1983 = vsub.f32 %v1193, %v1951
        %v1984 = vsub.f32 %v1193, %v1952
        %v1985 = vsub.f32 %v1197, %v1953
        %v1986 = vsub.f32 %v1197, %v1954
        %v1987 = vsub.f32 %v1201, %v1955
        %v1988 = vsub.f32 %v1201, %v1956
        %v1989 = vsub.f32 %v1205, %v1957
        %v1990 = vsub.f32 %v1205, %v1958
        %v1991 = vsub.f32 %v1209, %v1959
        %v1992 = vsub.f32 %v1209, %v1960
        %v1993 = vsub.f32 %v1213, %v1961
        %v1994 = vsub.f32 %v1213, %v1962
        %v1995 = vsub.f32 %v1217, %v1963
        %v1996 = vsub.f32 %v1217, %v1964
        %v1997 = vsub.f32 %v1221, %v1965
        %v1998 = vsub.f32 %v1221, %v1966
        %v1999 = vsub.f32 %v1225, %v1967
        %v2000 = vsub.f32 %v1225, %v1968
        %v2001 = vsub.f32 %v1229, %v1969
        %v2002 = vsub.f32 %v1229, %v1970
        %v2003 = vsub.f32 %v1233, %v1971
        %v2004 = vsub.f32 %v1233, %v1972
        %v2005 = vsub.f32 %v1237, %v1973
        %v2006 = vsub.f32 %v1237, %v1974
        %v2007 = vsub.f32 %v1241, %v1975
        %v2008 = vsub.f32 %v1241, %v1976
        %v2009 = vsub.f32 %v1245, %v1977
        %v2010 = vsub.f32 %v1245, %v1978
        %v2011 = vmin.f32 %v1979, %v1983
        %v2012 = vmin.f32 %v1981, %v1985
        %v2013 = vmin.f32 %v2011, %v1987
        %v2014 = vmin.f32 %v2012, %v1989
        %v2015 = vmin.f32 %v2013, %v1991
        %v2016 = vmin.f32 %v2014, %v1993
        %v2017 = vmin.f32 %v2015, %v1995
        %v2018 = vmin.f32 %v2016, %v1997
        %v2019 = vmin.f32 %v2017, %v1999
        %v2020 = vmin.f32 %v2018, %v2001
        %v2021 = vmin.f32 %v2019, %v2003
        %v2022 = vmin.f32 %v2020, %v2005
        %v2023 = vmin.f32 %v2021, %v2007
        %v2024 = vmin.f32 %v2022, %v2009
        %v2025 = vmin.f32 %v2023, %v2024
        %v2026 = vrot.slane %v2025, 4
        %v2027 = vmin.f32 %v2025, %v2026
        %v2028 = vrot.slane %v2027, 2
        %v2029 = vmin.f32 %v2027, %v2028
        %v2030 = vrot.slane %v2029, 1
        %v2031 = vmin.f32 %v2029, %v2030
        %v2032 = vmin.f32 %v1980, %v1984
        %v2033 = vmin.f32 %v1982, %v1986
        %v2034 = vmin.f32 %v2032, %v1988
        %v2035 = vmin.f32 %v2033, %v1990
        %v2036 = vmin.f32 %v2034, %v1992
        %v2037 = vmin.f32 %v2035, %v1994
        %v2038 = vmin.f32 %v2036, %v1996
        %v2039 = vmin.f32 %v2037, %v1998
        %v2040 = vmin.f32 %v2038, %v2000
        %v2041 = vmin.f32 %v2039, %v2002
        %v2042 = vmin.f32 %v2040, %v2004
        %v2043 = vmin.f32 %v2041, %v2006
        %v2044 = vmin.f32 %v2042, %v2008
        %v2045 = vmin.f32 %v2043, %v2010
        %v2046 = vmin.f32 %v2044, %v2045
        %v2047 = vrot.slane %v2046, 4
        %v2048 = vmin.f32 %v2046, %v2047
        %v2049 = vrot.slane %v2048, 2
        %v2050 = vmin.f32 %v2048, %v2049
        %v2051 = vrot.slane %v2050, 1
        %v2052 = vmin.f32 %v2050, %v2051
        %vm2053 = vcmp.eq.f32.partialorder %v1979, %v2031
        %vm2054 = vcmp.eq.f32.partialorder %v1980, %v2052
        %vm2055 = vcmp.eq.f32.partialorder %v1981, %v2031
        %vm2056 = vcmp.eq.f32.partialorder %v1982, %v2052
        %vm2057 = vcmp.eq.f32.partialorder %v1983, %v2031
        %vm2058 = vcmp.eq.f32.partialorder %v1984, %v2052
        %vm2059 = vcmp.eq.f32.partialorder %v1985, %v2031
        %vm2060 = vcmp.eq.f32.partialorder %v1986, %v2052
        %vm2061 = vcmp.eq.f32.partialorder %v1987, %v2031
        %vm2062 = vcmp.eq.f32.partialorder %v1988, %v2052
        %vm2063 = vcmp.eq.f32.partialorder %v1989, %v2031
        %vm2064 = vcmp.eq.f32.partialorder %v1990, %v2052
        %vm2065 = vcmp.eq.f32.partialorder %v1991, %v2031
        %vm2066 = vcmp.eq.f32.partialorder %v1992, %v2052
        %vm2067 = vcmp.eq.f32.partialorder %v1993, %v2031
        %vm2068 = vcmp.eq.f32.partialorder %v1994, %v2052
        %vm2069 = vcmp.eq.f32.partialorder %v1995, %v2031
        %vm2070 = vcmp.eq.f32.partialorder %v1996, %v2052
        %vm2071 = vcmp.eq.f32.partialorder %v1997, %v2031
        %vm2072 = vcmp.eq.f32.partialorder %v1998, %v2052
        %vm2073 = vcmp.eq.f32.partialorder %v1999, %v2031
        %vm2074 = vcmp.eq.f32.partialorder %v2000, %v2052
        %vm2075 = vcmp.eq.f32.partialorder %v2001, %v2031
        %vm2076 = vcmp.eq.f32.partialorder %v2002, %v2052
        %vm2077 = vcmp.eq.f32.partialorder %v2003, %v2031
        %vm2078 = vcmp.eq.f32.partialorder %v2004, %v2052
        %vm2079 = vcmp.eq.f32.partialorder %v2005, %v2031
        %vm2080 = vcmp.eq.f32.partialorder %v2006, %v2052
        %vm2081 = vcmp.eq.f32.partialorder %v2007, %v2031
        %vm2082 = vcmp.eq.f32.partialorder %v2008, %v2052
        %vm2083 = vcmp.eq.f32.partialorder %v2009, %v2031
        %vm2084 = vcmp.eq.f32.partialorder %v2010, %v2052
        %v2085 = vsel %vm2053, 1, 0
        %v2086 = vsel %vm2054, 1, 0
        %v2087 = vsel %vm2055, 1, 0
        %v2088 = vsel %vm2056, 1, 0
        %v2089 = vsel %vm2057, 1, 0
        %v2090 = vsel %vm2058, 1, 0
        %v2091 = vsel %vm2059, 1, 0
        %v2092 = vsel %vm2060, 1, 0
        %v2093 = vsel %vm2061, 1, 0
        %v2094 = vsel %vm2062, 1, 0
        %v2095 = vsel %vm2063, 1, 0
        %v2096 = vsel %vm2064, 1, 0
        %v2097 = vsel %vm2065, 1, 0
        %v2098 = vsel %vm2066, 1, 0
        %v2099 = vsel %vm2067, 1, 0
        %v2100 = vsel %vm2068, 1, 0
        %v2101 = vsel %vm2069, 1, 0
        %v2102 = vsel %vm2070, 1, 0
        %v2103 = vsel %vm2071, 1, 0
        %v2104 = vsel %vm2072, 1, 0
        %v2105 = vsel %vm2073, 1, 0
        %v2106 = vsel %vm2074, 1, 0
        %v2107 = vsel %vm2075, 1, 0
        %v2108 = vsel %vm2076, 1, 0
        %v2109 = vsel %vm2077, 1, 0
        %v2110 = vsel %vm2078, 1, 0
        %v2111 = vsel %vm2079, 1, 0
        %v2112 = vsel %vm2080, 1, 0
        %v2113 = vsel %vm2081, 1, 0
        %v2114 = vsel %vm2082, 1, 0
        %v2115 = vsel %vm2083, 1, 0
        %v2116 = vsel %vm2084, 1, 0
        %v2117 = vcvt.s32.f32 %v2085
        %v2118 = vcvt.s32.f32 %v2086
        %v2119 = vcvt.s32.f32 %v2087
        %v2120 = vcvt.s32.f32 %v2088
        %v2121 = vcvt.s32.f32 %v2089
        %v2122 = vcvt.s32.f32 %v2090
        %v2123 = vcvt.s32.f32 %v2091
        %v2124 = vcvt.s32.f32 %v2092
        %v2125 = vcvt.s32.f32 %v2093
        %v2126 = vcvt.s32.f32 %v2094
        %v2127 = vcvt.s32.f32 %v2095
        %v2128 = vcvt.s32.f32 %v2096
        %v2129 = vcvt.s32.f32 %v2097
        %v2130 = vcvt.s32.f32 %v2098
        %v2131 = vcvt.s32.f32 %v2099
        %v2132 = vcvt.s32.f32 %v2100
        %v2133 = vcvt.s32.f32 %v2101
        %v2134 = vcvt.s32.f32 %v2102
        %v2135 = vcvt.s32.f32 %v2103
        %v2136 = vcvt.s32.f32 %v2104
        %v2137 = vcvt.s32.f32 %v2105
        %v2138 = vcvt.s32.f32 %v2106
        %v2139 = vcvt.s32.f32 %v2107
        %v2140 = vcvt.s32.f32 %v2108
        %v2141 = vcvt.s32.f32 %v2109
        %v2142 = vcvt.s32.f32 %v2110
        %v2143 = vcvt.s32.f32 %v2111
        %v2144 = vcvt.s32.f32 %v2112
        %v2145 = vcvt.s32.f32 %v2113
        %v2146 = vcvt.s32.f32 %v2114
        %v2147 = vcvt.s32.f32 %v2115
        %v2148 = vcvt.s32.f32 %v2116
        %2149 = vmatpush.msra.mxu0 %v2147
        %2150 = vmatpush.msra.mxu0 %v2145
        %2151 = vmatpush.msra.mxu0 %v2143
        %2152 = vmatpush.msra.mxu0 %v2141
        %2153 = vmatpush.msra.mxu0 %v2139
        %2154 = vmatpush.msra.mxu0 %v2137
        %2155 = vmatpush.msra.mxu0 %v2135
        %2156 = vmatpush.msra.mxu0 %v2133
        %2157 = vmatpush.msra.mxu0 %v2131
        %2158 = vmatpush.msra.mxu0 %v2129
        %2159 = vmatpush.msra.mxu0 %v2127
        %2160 = vmatpush.msra.mxu0 %v2125
        %2161 = vmatpush.msra.mxu0 %v2123
        %2162 = vmatpush.msra.mxu0 %v2121
        %2163 = vmatpush.msra.mxu0 %v2119
        %2164 = vmatpush.msra.mxu0 %v2117
        %2165 = vmatmul.f32.gmra.mxu0 %v456
        %v2166 = vpop.f32.mrf.mxu0
        %v2167 = vadd.f32 0.0, %v2166
        %2168 = vmatmul.f32.gmra.mxu0 %v457
        %v2169 = vpop.f32.mrf.mxu0
        %v2170 = vadd.f32 0.0, %v2169
        %2171 = vdwg.mxu0
        %2172 = vmatpush.msra.mxu0 %v2148
        %2173 = vmatpush.msra.mxu0 %v2146
        %2174 = vmatpush.msra.mxu0 %v2144
        %2175 = vmatpush.msra.mxu0 %v2142
        %2176 = vmatpush.msra.mxu0 %v2140
        %2177 = vmatpush.msra.mxu0 %v2138
        %2178 = vmatpush.msra.mxu0 %v2136
        %2179 = vmatpush.msra.mxu0 %v2134
        %2180 = vmatpush.msra.mxu0 %v2132
        %2181 = vmatpush.msra.mxu0 %v2130
        %2182 = vmatpush.msra.mxu0 %v2128
        %2183 = vmatpush.msra.mxu0 %v2126
        %2184 = vmatpush.msra.mxu0 %v2124
        %2185 = vmatpush.msra.mxu0 %v2122
        %2186 = vmatpush.msra.mxu0 %v2120
        %2187 = vmatpush.msra.mxu0 %v2118
        %2188 = vmatmul.f32.gmra.mxu0 %v456
        %v2189 = vpop.f32.mrf.mxu0
        %v2190 = vadd.f32 0.0, %v2189
        %2191 = vmatmul.f32.gmra.mxu0 %v457
        %v2192 = vpop.f32.mrf.mxu0
        %v2193 = vadd.f32 0.0, %v2192
        %2194 = vdwg.mxu0
        %v2195 = vsub.f32 %v2167, %v1789
        %v2196 = vsub.f32 %v2190, %v1812
        %v2197 = vsub.f32 %v2170, %v1792
        %v2198 = vsub.f32 %v2193, %v1815
        %v2199 = vmul.f32 %v2195, %v2195
        %v2200 = vmul.f32 %v2196, %v2196
        %v2201 = vmul.f32 %v2197, %v2197
        %v2202 = vmul.f32 %v2198, %v2198
        %v2203 = vadd.f32 %v2199, %v2201
        %v2204 = vrot.slane %v2203, 4
        %v2205 = vadd.f32 %v2203, %v2204
        %v2206 = vrot.slane %v2205, 2
        %v2207 = vadd.f32 %v2205, %v2206
        %v2208 = vrot.slane %v2207, 1
        %v2209 = vadd.f32 %v2207, %v2208
        %v2210 = vadd.f32 %v2200, %v2202
        %v2211 = vrot.slane %v2210, 4
        %v2212 = vadd.f32 %v2210, %v2211
        %v2213 = vrot.slane %v2212, 2
        %v2214 = vadd.f32 %v2212, %v2213
        %v2215 = vrot.slane %v2214, 1
        %v2216 = vadd.f32 %v2214, %v2215
        %v2217 = vadd.f32 %v1485, %v2209
        %v2218 = vadd.f32 %v1486, %v2216
        %2219 = vmatpush.msra.mxu0 0.0
        %2220 = vmatpush.msra.mxu0 0.0
        %2221 = vmatpush.msra.mxu0 0.0
        %2222 = vmatpush.msra.mxu0 0.0
        %2223 = vmatpush.msra.mxu0 0.0
        %2224 = vmatpush.msra.mxu0 0.0
        %2225 = vmatpush.msra.mxu0 0.0
        %2226 = vmatpush.msra.mxu0 0.0
        %2227 = vmatpush.msra.mxu0 0.0
        %2228 = vmatpush.msra.mxu0 0.0
        %2229 = vmatpush.msra.mxu0 0.0
        %2230 = vmatpush.msra.mxu0 0.0
        %2231 = vmatpush.msra.mxu0 0.0
        %2232 = vmatpush.msra.mxu0 0.0
        %2233 = vmatpush.msra.mxu0 %v2170
        %2234 = vmatpush.msra.mxu0 %v2167
        %2235 = vmatmul.f32.gmra.mxu0 %v1507
        %v2236 = vpop.f32.mrf.mxu0
        %v2237 = vadd.f32 %v1490, %v2236
        %2238 = vmatmul.f32.gmra.mxu0 %v1509
        %v2239 = vpop.f32.mrf.mxu0
        %v2240 = vadd.f32 %v1495, %v2239
        %2241 = vmatmul.f32.gmra.mxu0 %v1511
        %v2242 = vpop.f32.mrf.mxu0
        %v2243 = vadd.f32 %v1500, %v2242
        %2244 = vmatmul.f32.gmra.mxu0 %v1513
        %v2245 = vpop.f32.mrf.mxu0
        %v2246 = vadd.f32 %v1505, %v2245
        %2247 = vdwg.mxu0
        %2248 = vmatpush.msra.mxu0 0.0
        %2249 = vmatpush.msra.mxu0 0.0
        %2250 = vmatpush.msra.mxu0 0.0
        %2251 = vmatpush.msra.mxu0 0.0
        %2252 = vmatpush.msra.mxu0 0.0
        %2253 = vmatpush.msra.mxu0 0.0
        %2254 = vmatpush.msra.mxu0 0.0
        %2255 = vmatpush.msra.mxu0 0.0
        %2256 = vmatpush.msra.mxu0 0.0
        %2257 = vmatpush.msra.mxu0 0.0
        %2258 = vmatpush.msra.mxu0 0.0
        %2259 = vmatpush.msra.mxu0 0.0
        %2260 = vmatpush.msra.mxu0 0.0
        %2261 = vmatpush.msra.mxu0 0.0
        %2262 = vmatpush.msra.mxu0 %v2193
        %2263 = vmatpush.msra.mxu0 %v2190
        %2264 = vmatmul.f32.gmra.mxu0 %v1507
        %v2265 = vpop.f32.mrf.mxu0
        %v2266 = vadd.f32 %v1490, %v2265
        %2267 = vmatmul.f32.gmra.mxu0 %v1509
        %v2268 = vpop.f32.mrf.mxu0
        %v2269 = vadd.f32 %v1495, %v2268
        %2270 = vmatmul.f32.gmra.mxu0 %v1511
        %v2271 = vpop.f32.mrf.mxu0
        %v2272 = vadd.f32 %v1500, %v2271
        %2273 = vmatmul.f32.gmra.mxu0 %v1513
        %v2274 = vpop.f32.mrf.mxu0
        %v2275 = vadd.f32 %v1505, %v2274
        %2276 = vdwg.mxu0
        %v2277 = vmax.f32 %v2237, 0.0
        %v2278 = vmax.f32 %v2266, 0.0
        %v2279 = vmax.f32 %v2240, 0.0
        %v2280 = vmax.f32 %v2269, 0.0
        %v2281 = vmax.f32 %v2243, 0.0
        %v2282 = vmax.f32 %v2272, 0.0
        %v2283 = vmax.f32 %v2246, 0.0
        %v2284 = vmax.f32 %v2275, 0.0
        %2285 = vmatpush.msra.mxu0 0.0
        %2286 = vmatpush.msra.mxu0 0.0
        %2287 = vmatpush.msra.mxu0 0.0
        %2288 = vmatpush.msra.mxu0 0.0
        %2289 = vmatpush.msra.mxu0 0.0
        %2290 = vmatpush.msra.mxu0 0.0
        %2291 = vmatpush.msra.mxu0 0.0
        %2292 = vmatpush.msra.mxu0 0.0
        %2293 = vmatpush.msra.mxu0 0.0
        %2294 = vmatpush.msra.mxu0 0.0
        %2295 = vmatpush.msra.mxu0 0.0
        %2296 = vmatpush.msra.mxu0 0.0
        %2297 = vmatpush.msra.mxu0 %v2283
        %2298 = vmatpush.msra.mxu0 %v2281
        %2299 = vmatpush.msra.mxu0 %v2279
        %2300 = vmatpush.msra.mxu0 %v2277
        %2301 = vmatmul.f32.gmra.mxu0 %v1586
        %v2302 = vpop.f32.mrf.mxu0
        %v2303 = vadd.f32 %v1584, %v2302
        %2304 = vdwg.mxu0
        %2305 = vmatpush.msra.mxu0 0.0
        %2306 = vmatpush.msra.mxu0 0.0
        %2307 = vmatpush.msra.mxu0 0.0
        %2308 = vmatpush.msra.mxu0 0.0
        %2309 = vmatpush.msra.mxu0 0.0
        %2310 = vmatpush.msra.mxu0 0.0
        %2311 = vmatpush.msra.mxu0 0.0
        %2312 = vmatpush.msra.mxu0 0.0
        %2313 = vmatpush.msra.mxu0 0.0
        %2314 = vmatpush.msra.mxu0 0.0
        %2315 = vmatpush.msra.mxu0 0.0
        %2316 = vmatpush.msra.mxu0 0.0
        %2317 = vmatpush.msra.mxu0 %v2284
        %2318 = vmatpush.msra.mxu0 %v2282
        %2319 = vmatpush.msra.mxu0 %v2280
        %2320 = vmatpush.msra.mxu0 %v2278
        %2321 = vmatmul.f32.gmra.mxu0 %v1586
        %v2322 = vpop.f32.mrf.mxu0
        %v2323 = vadd.f32 %v1584, %v2322
        %2324 = vdwg.mxu0
        %v2327 = vrot.slane %v2303, 4
        %v2328 = vrot.slane %v2323, 4
        %2331 = vst [vmem:[%s398] sm:$0xf0] %v2327
        %2332 = vst [vmem:[%s398 + $0x8] sm:$0xf0] %v2328
        %v2334 = vperm.slane %v1738, 0
        %v2335 = vperm.slane %v1738, 1
        %v2338 = vmul.f32 %v716, %v2334
        %v2339 = vmul.f32 %v716, %v2335
        %v2340 = vmul.f32 %v720, %v2334
        %v2341 = vmul.f32 %v720, %v2335
        %v2342 = vmul.f32 %v724, %v2334
        %v2343 = vmul.f32 %v724, %v2335
        %v2344 = vmul.f32 %v728, %v2334
        %v2345 = vmul.f32 %v728, %v2335
        %v2346 = vadd.f32 %v590, %v2338
        %v2347 = vadd.f32 %v591, %v2339
        %v2348 = vadd.f32 %v592, %v2340
        %v2349 = vadd.f32 %v593, %v2341
        %v2350 = vadd.f32 %v594, %v2342
        %v2351 = vadd.f32 %v595, %v2343
        %v2352 = vadd.f32 %v596, %v2344
        %v2353 = vadd.f32 %v597, %v2345
        %v2354 = vmax.f32 %v2346, 0.0
        %v2355 = vmax.f32 %v2347, 0.0
        %v2356 = vmax.f32 %v2348, 0.0
        %v2357 = vmax.f32 %v2349, 0.0
        %v2358 = vmax.f32 %v2350, 0.0
        %v2359 = vmax.f32 %v2351, 0.0
        %v2360 = vmax.f32 %v2352, 0.0
        %v2361 = vmax.f32 %v2353, 0.0
        %v2362 = vmul.f32 %v761, %v2354
        %v2363 = vmul.f32 %v761, %v2355
        %v2364 = vmul.f32 %v765, %v2356
        %v2365 = vmul.f32 %v765, %v2357
        %v2366 = vmul.f32 %v769, %v2358
        %v2367 = vmul.f32 %v769, %v2359
        %v2368 = vmul.f32 %v773, %v2360
        %v2369 = vmul.f32 %v773, %v2361
        %v2370 = vadd.f32 %v2362, %v2364
        %v2371 = vadd.f32 %v2370, %v2366
        %v2372 = vadd.f32 %v2371, %v2368
        %v2373 = vrot.slane %v2372, 4
        %v2374 = vadd.f32 %v2372, %v2373
        %v2375 = vrot.slane %v2374, 2
        %v2376 = vadd.f32 %v2374, %v2375
        %v2377 = vrot.slane %v2376, 1
        %v2378 = vadd.f32 %v2376, %v2377
        %v2379 = vadd.f32 %v2363, %v2365
        %v2380 = vadd.f32 %v2379, %v2367
        %v2381 = vadd.f32 %v2380, %v2369
        %v2382 = vrot.slane %v2381, 4
        %v2383 = vadd.f32 %v2381, %v2382
        %v2384 = vrot.slane %v2383, 2
        %v2385 = vadd.f32 %v2383, %v2384
        %v2386 = vrot.slane %v2385, 1
        %v2387 = vadd.f32 %v2385, %v2386
        %v2388 = vadd.f32 %v2378, %v803
        %v2389 = vadd.f32 %v2387, %v803
        %v2390 = vxor.u32 %v2388, 2147483648
        %v2391 = vxor.u32 %v2389, 2147483648
        %v2392 = vmul.f32 %v2390, 1.442695
        %v2393 = vpow.pop %v2392
        %v2394 = vmul.f32 %v2391, 1.442695
        %v2395 = vpow.pop %v2394
        %v2396 = vadd.f32 %v2393, 1.0
        %v2397 = vadd.f32 %v2395, 1.0
        %v2398 = vrcp.pop %v2396
        %v2399 = vmul.f32 %v2396, %v2398
        %v2400 = vsub.f32 1.0, %v2399
        %v2401 = vmul.f32 %v2398, %v2400
        %v2402 = vadd.f32 %v2398, %v2401
        %vm2403 = vweird.f32 %v2396
        %vm2404 = vweird.f32 %v2398
        %vm2405 = vmor %vm2403, %vm2404
        %v2406 = vsel %vm2405, %v2398, %v2402
        %v2407 = vand.u32 2147483647, %v2396
        %vm2408 = vcmp.eq.f32.partialorder %v2407, 8.507059e+37
        %v2409 = vand.u32 %v2396, 2147483648
        %v2410 = vor.u32 1.1754944e-38, %v2409
        %v2411 = vsel %vm2408, %v2410, %v2406
        %v2412 = vmul.f32 1.0, %v2411
        %v2413 = vrcp.pop %v2397
        %v2414 = vmul.f32 %v2397, %v2413
        %v2415 = vsub.f32 1.0, %v2414
        %v2416 = vmul.f32 %v2413, %v2415
        %v2417 = vadd.f32 %v2413, %v2416
        %vm2418 = vweird.f32 %v2397
        %vm2419 = vweird.f32 %v2413
        %vm2420 = vmor %vm2418, %vm2419
        %v2421 = vsel %vm2420, %v2413, %v2417
        %v2422 = vand.u32 2147483647, %v2397
        %vm2423 = vcmp.eq.f32.partialorder %v2422, 8.507059e+37
        %v2424 = vand.u32 %v2397, 2147483648
        %v2425 = vor.u32 1.1754944e-38, %v2424
        %v2426 = vsel %vm2423, %v2425, %v2421
        %v2427 = vmul.f32 1.0, %v2426
        %v2430 = vrot.slane %v2427, 7
        %v2431 = vsel %vm848, %v2412, %v2430
        %v2433 = vmul.f32 %v1738, %v2431
        %v2434 = vsub.f32 1.0, %v2412
        %v2435 = vsub.f32 1.0, %v2427
        %v2438 = vrot.slane %v2435, 7
        %v2439 = vsel %vm848, %v2434, %v2438
        %v2441 = vmul.f32 %v1738, %v2439
        %s2442 = scalar_lea.vmem %s420, 2
        %2443 = vst.msk [vmem:[%s2442] ss:$8 sm:$0x3] %vm863, %v2433
        %2444 = vst.msk [vmem:[%s2442] ss:$8 sm:$0x0] %vm863, %v2433
        %v2446 = vperm.slane %v2433, 0
        %v2447 = vperm.slane %v2433, 1
        %v2450 = vmul.f32 %v868, %v2446
        %v2451 = vmul.f32 %v868, %v2447
        %v2452 = vmul.f32 %v872, %v2446
        %v2453 = vmul.f32 %v872, %v2447
        %v2454 = vmul.f32 %v876, %v2446
        %v2455 = vmul.f32 %v876, %v2447
        %v2456 = vmul.f32 %v880, %v2446
        %v2457 = vmul.f32 %v880, %v2447
        %v2458 = vadd.f32 %v706, %v2450
        %v2459 = vadd.f32 %v707, %v2451
        %v2460 = vadd.f32 %v708, %v2452
        %v2461 = vadd.f32 %v709, %v2453
        %v2462 = vadd.f32 %v710, %v2454
        %v2463 = vadd.f32 %v711, %v2455
        %v2464 = vadd.f32 %v712, %v2456
        %v2465 = vadd.f32 %v713, %v2457
        %v2466 = vmax.f32 %v2458, 0.0
        %v2467 = vmax.f32 %v2459, 0.0
        %v2468 = vmax.f32 %v2460, 0.0
        %v2469 = vmax.f32 %v2461, 0.0
        %v2470 = vmax.f32 %v2462, 0.0
        %v2471 = vmax.f32 %v2463, 0.0
        %v2472 = vmax.f32 %v2464, 0.0
        %v2473 = vmax.f32 %v2465, 0.0
        %2474 = vmatpush.msra.mxu0 0.0
        %2475 = vmatpush.msra.mxu0 0.0
        %2476 = vmatpush.msra.mxu0 0.0
        %2477 = vmatpush.msra.mxu0 0.0
        %2478 = vmatpush.msra.mxu0 0.0
        %2479 = vmatpush.msra.mxu0 0.0
        %2480 = vmatpush.msra.mxu0 0.0
        %2481 = vmatpush.msra.mxu0 0.0
        %2482 = vmatpush.msra.mxu0 0.0
        %2483 = vmatpush.msra.mxu0 0.0
        %2484 = vmatpush.msra.mxu0 0.0
        %2485 = vmatpush.msra.mxu0 0.0
        %2486 = vmatpush.msra.mxu0 %v2472
        %2487 = vmatpush.msra.mxu0 %v2470
        %2488 = vmatpush.msra.mxu0 %v2468
        %2489 = vmatpush.msra.mxu0 %v2466
        %2490 = vmatmul.f32.gmra.mxu0 %v922
        %v2491 = vpop.f32.mrf.mxu0
        %v2492 = vadd.f32 %v914, %v2491
        %2493 = vmatmul.f32.gmra.mxu0 %v924
        %v2494 = vpop.f32.mrf.mxu0
        %v2495 = vadd.f32 %v919, %v2494
        %2496 = vdwg.mxu0
        %2497 = vmatpush.msra.mxu0 0.0
        %2498 = vmatpush.msra.mxu0 0.0
        %2499 = vmatpush.msra.mxu0 0.0
        %2500 = vmatpush.msra.mxu0 0.0
        %2501 = vmatpush.msra.mxu0 0.0
        %2502 = vmatpush.msra.mxu0 0.0
        %2503 = vmatpush.msra.mxu0 0.0
        %2504 = vmatpush.msra.mxu0 0.0
        %2505 = vmatpush.msra.mxu0 0.0
        %2506 = vmatpush.msra.mxu0 0.0
        %2507 = vmatpush.msra.mxu0 0.0
        %2508 = vmatpush.msra.mxu0 0.0
        %2509 = vmatpush.msra.mxu0 %v2473
        %2510 = vmatpush.msra.mxu0 %v2471
        %2511 = vmatpush.msra.mxu0 %v2469
        %2512 = vmatpush.msra.mxu0 %v2467
        %2513 = vmatmul.f32.gmra.mxu0 %v922
        %v2514 = vpop.f32.mrf.mxu0
        %v2515 = vadd.f32 %v914, %v2514
        %2516 = vmatmul.f32.gmra.mxu0 %v924
        %v2517 = vpop.f32.mrf.mxu0
        %v2518 = vadd.f32 %v919, %v2517
        %2519 = vdwg.mxu0
        %2520 = vmatpush.msra.mxu0 0.0
        %2521 = vmatpush.msra.mxu0 0.0
        %2522 = vmatpush.msra.mxu0 0.0
        %2523 = vmatpush.msra.mxu0 0.0
        %2524 = vmatpush.msra.mxu0 0.0
        %2525 = vmatpush.msra.mxu0 0.0
        %2526 = vmatpush.msra.mxu0 0.0
        %2527 = vmatpush.msra.mxu0 0.0
        %2528 = vmatpush.msra.mxu0 0.0
        %2529 = vmatpush.msra.mxu0 0.0
        %2530 = vmatpush.msra.mxu0 0.0
        %2531 = vmatpush.msra.mxu0 0.0
        %2532 = vmatpush.msra.mxu0 0.0
        %2533 = vmatpush.msra.mxu0 0.0
        %2534 = vmatpush.msra.mxu0 %v2495
        %2535 = vmatpush.msra.mxu0 %v2492
        %2536 = vmatmul.f32.gmra.mxu0 %v974
        %v2537 = vpop.f32.mrf.mxu0
        %v2538 = vadd.f32 0.0, %v2537
        %2539 = vmatmul.f32.gmra.mxu0 %v977
        %v2540 = vpop.f32.mrf.mxu0
        %v2541 = vadd.f32 0.0, %v2540
        %2542 = vmatmul.f32.gmra.mxu0 %v980
        %v2543 = vpop.f32.mrf.mxu0
        %v2544 = vadd.f32 0.0, %v2543
        %2545 = vmatmul.f32.gmra.mxu0 %v983
        %v2546 = vpop.f32.mrf.mxu0
        %v2547 = vadd.f32 0.0, %v2546
        %2548 = vmatmul.f32.gmra.mxu0 %v986
        %v2549 = vpop.f32.mrf.mxu0
        %v2550 = vadd.f32 0.0, %v2549
        %2551 = vmatmul.f32.gmra.mxu0 %v989
        %v2552 = vpop.f32.mrf.mxu0
        %v2553 = vadd.f32 0.0, %v2552
        %2554 = vmatmul.f32.gmra.mxu0 %v992
        %v2555 = vpop.f32.mrf.mxu0
        %v2556 = vadd.f32 0.0, %v2555
        %2557 = vmatmul.f32.gmra.mxu0 %v995
        %v2558 = vpop.f32.mrf.mxu0
        %v2559 = vadd.f32 0.0, %v2558
        %2560 = vmatmul.f32.gmra.mxu0 %v998
        %v2561 = vpop.f32.mrf.mxu0
        %v2562 = vadd.f32 0.0, %v2561
        %2563 = vmatmul.f32.gmra.mxu0 %v1001
        %v2564 = vpop.f32.mrf.mxu0
        %v2565 = vadd.f32 0.0, %v2564
        %2566 = vmatmul.f32.gmra.mxu0 %v1004
        %v2567 = vpop.f32.mrf.mxu0
        %v2568 = vadd.f32 0.0, %v2567
        %2569 = vmatmul.f32.gmra.mxu0 %v1007
        %v2570 = vpop.f32.mrf.mxu0
        %v2571 = vadd.f32 0.0, %v2570
        %2572 = vmatmul.f32.gmra.mxu0 %v1010
        %v2573 = vpop.f32.mrf.mxu0
        %v2574 = vadd.f32 0.0, %v2573
        %2575 = vmatmul.f32.gmra.mxu0 %v1013
        %v2576 = vpop.f32.mrf.mxu0
        %v2577 = vadd.f32 0.0, %v2576
        %2578 = vmatmul.f32.gmra.mxu0 %v1016
        %v2579 = vpop.f32.mrf.mxu0
        %v2580 = vadd.f32 0.0, %v2579
        %2581 = vmatmul.f32.gmra.mxu0 %v1019
        %v2582 = vpop.f32.mrf.mxu0
        %v2583 = vadd.f32 0.0, %v2582
        %2584 = vdwg.mxu0
        %2585 = vmatpush.msra.mxu0 0.0
        %2586 = vmatpush.msra.mxu0 0.0
        %2587 = vmatpush.msra.mxu0 0.0
        %2588 = vmatpush.msra.mxu0 0.0
        %2589 = vmatpush.msra.mxu0 0.0
        %2590 = vmatpush.msra.mxu0 0.0
        %2591 = vmatpush.msra.mxu0 0.0
        %2592 = vmatpush.msra.mxu0 0.0
        %2593 = vmatpush.msra.mxu0 0.0
        %2594 = vmatpush.msra.mxu0 0.0
        %2595 = vmatpush.msra.mxu0 0.0
        %2596 = vmatpush.msra.mxu0 0.0
        %2597 = vmatpush.msra.mxu0 0.0
        %2598 = vmatpush.msra.mxu0 0.0
        %2599 = vmatpush.msra.mxu0 %v2518
        %2600 = vmatpush.msra.mxu0 %v2515
        %2601 = vmatmul.f32.gmra.mxu0 %v974
        %v2602 = vpop.f32.mrf.mxu0
        %v2603 = vadd.f32 0.0, %v2602
        %2604 = vmatmul.f32.gmra.mxu0 %v977
        %v2605 = vpop.f32.mrf.mxu0
        %v2606 = vadd.f32 0.0, %v2605
        %2607 = vmatmul.f32.gmra.mxu0 %v980
        %v2608 = vpop.f32.mrf.mxu0
        %v2609 = vadd.f32 0.0, %v2608
        %2610 = vmatmul.f32.gmra.mxu0 %v983
        %v2611 = vpop.f32.mrf.mxu0
        %v2612 = vadd.f32 0.0, %v2611
        %2613 = vmatmul.f32.gmra.mxu0 %v986
        %v2614 = vpop.f32.mrf.mxu0
        %v2615 = vadd.f32 0.0, %v2614
        %2616 = vmatmul.f32.gmra.mxu0 %v989
        %v2617 = vpop.f32.mrf.mxu0
        %v2618 = vadd.f32 0.0, %v2617
        %2619 = vmatmul.f32.gmra.mxu0 %v992
        %v2620 = vpop.f32.mrf.mxu0
        %v2621 = vadd.f32 0.0, %v2620
        %2622 = vmatmul.f32.gmra.mxu0 %v995
        %v2623 = vpop.f32.mrf.mxu0
        %v2624 = vadd.f32 0.0, %v2623
        %2625 = vmatmul.f32.gmra.mxu0 %v998
        %v2626 = vpop.f32.mrf.mxu0
        %v2627 = vadd.f32 0.0, %v2626
        %2628 = vmatmul.f32.gmra.mxu0 %v1001
        %v2629 = vpop.f32.mrf.mxu0
        %v2630 = vadd.f32 0.0, %v2629
        %2631 = vmatmul.f32.gmra.mxu0 %v1004
        %v2632 = vpop.f32.mrf.mxu0
        %v2633 = vadd.f32 0.0, %v2632
        %2634 = vmatmul.f32.gmra.mxu0 %v1007
        %v2635 = vpop.f32.mrf.mxu0
        %v2636 = vadd.f32 0.0, %v2635
        %2637 = vmatmul.f32.gmra.mxu0 %v1010
        %v2638 = vpop.f32.mrf.mxu0
        %v2639 = vadd.f32 0.0, %v2638
        %2640 = vmatmul.f32.gmra.mxu0 %v1013
        %v2641 = vpop.f32.mrf.mxu0
        %v2642 = vadd.f32 0.0, %v2641
        %2643 = vmatmul.f32.gmra.mxu0 %v1016
        %v2644 = vpop.f32.mrf.mxu0
        %v2645 = vadd.f32 0.0, %v2644
        %2646 = vmatmul.f32.gmra.mxu0 %v1019
        %v2647 = vpop.f32.mrf.mxu0
        %v2648 = vadd.f32 0.0, %v2647
        %2649 = vdwg.mxu0
        %v2650 = vmul.f32 %v2538, 2.0
        %v2651 = vmul.f32 %v2603, 2.0
        %v2652 = vmul.f32 %v2541, 2.0
        %v2653 = vmul.f32 %v2606, 2.0
        %v2654 = vmul.f32 %v2544, 2.0
        %v2655 = vmul.f32 %v2609, 2.0
        %v2656 = vmul.f32 %v2547, 2.0
        %v2657 = vmul.f32 %v2612, 2.0
        %v2658 = vmul.f32 %v2550, 2.0
        %v2659 = vmul.f32 %v2615, 2.0
        %v2660 = vmul.f32 %v2553, 2.0
        %v2661 = vmul.f32 %v2618, 2.0
        %v2662 = vmul.f32 %v2556, 2.0
        %v2663 = vmul.f32 %v2621, 2.0
        %v2664 = vmul.f32 %v2559, 2.0
        %v2665 = vmul.f32 %v2624, 2.0
        %v2666 = vmul.f32 %v2562, 2.0
        %v2667 = vmul.f32 %v2627, 2.0
        %v2668 = vmul.f32 %v2565, 2.0
        %v2669 = vmul.f32 %v2630, 2.0
        %v2670 = vmul.f32 %v2568, 2.0
        %v2671 = vmul.f32 %v2633, 2.0
        %v2672 = vmul.f32 %v2571, 2.0
        %v2673 = vmul.f32 %v2636, 2.0
        %v2674 = vmul.f32 %v2574, 2.0
        %v2675 = vmul.f32 %v2639, 2.0
        %v2676 = vmul.f32 %v2577, 2.0
        %v2677 = vmul.f32 %v2642, 2.0
        %v2678 = vmul.f32 %v2580, 2.0
        %v2679 = vmul.f32 %v2645, 2.0
        %v2680 = vmul.f32 %v2583, 2.0
        %v2681 = vmul.f32 %v2648, 2.0
        %v2682 = vsub.f32 %v1185, %v2650
        %v2683 = vsub.f32 %v1185, %v2651
        %v2684 = vsub.f32 %v1189, %v2652
        %v2685 = vsub.f32 %v1189, %v2653
        %v2686 = vsub.f32 %v1193, %v2654
        %v2687 = vsub.f32 %v1193, %v2655
        %v2688 = vsub.f32 %v1197, %v2656
        %v2689 = vsub.f32 %v1197, %v2657
        %v2690 = vsub.f32 %v1201, %v2658
        %v2691 = vsub.f32 %v1201, %v2659
        %v2692 = vsub.f32 %v1205, %v2660
        %v2693 = vsub.f32 %v1205, %v2661
        %v2694 = vsub.f32 %v1209, %v2662
        %v2695 = vsub.f32 %v1209, %v2663
        %v2696 = vsub.f32 %v1213, %v2664
        %v2697 = vsub.f32 %v1213, %v2665
        %v2698 = vsub.f32 %v1217, %v2666
        %v2699 = vsub.f32 %v1217, %v2667
        %v2700 = vsub.f32 %v1221, %v2668
        %v2701 = vsub.f32 %v1221, %v2669
        %v2702 = vsub.f32 %v1225, %v2670
        %v2703 = vsub.f32 %v1225, %v2671
        %v2704 = vsub.f32 %v1229, %v2672
        %v2705 = vsub.f32 %v1229, %v2673
        %v2706 = vsub.f32 %v1233, %v2674
        %v2707 = vsub.f32 %v1233, %v2675
        %v2708 = vsub.f32 %v1237, %v2676
        %v2709 = vsub.f32 %v1237, %v2677
        %v2710 = vsub.f32 %v1241, %v2678
        %v2711 = vsub.f32 %v1241, %v2679
        %v2712 = vsub.f32 %v1245, %v2680
        %v2713 = vsub.f32 %v1245, %v2681
        %v2714 = vmin.f32 %v2682, %v2686
        %v2715 = vmin.f32 %v2684, %v2688
        %v2716 = vmin.f32 %v2714, %v2690
        %v2717 = vmin.f32 %v2715, %v2692
        %v2718 = vmin.f32 %v2716, %v2694
        %v2719 = vmin.f32 %v2717, %v2696
        %v2720 = vmin.f32 %v2718, %v2698
        %v2721 = vmin.f32 %v2719, %v2700
        %v2722 = vmin.f32 %v2720, %v2702
        %v2723 = vmin.f32 %v2721, %v2704
        %v2724 = vmin.f32 %v2722, %v2706
        %v2725 = vmin.f32 %v2723, %v2708
        %v2726 = vmin.f32 %v2724, %v2710
        %v2727 = vmin.f32 %v2725, %v2712
        %v2728 = vmin.f32 %v2726, %v2727
        %v2729 = vrot.slane %v2728, 4
        %v2730 = vmin.f32 %v2728, %v2729
        %v2731 = vrot.slane %v2730, 2
        %v2732 = vmin.f32 %v2730, %v2731
        %v2733 = vrot.slane %v2732, 1
        %v2734 = vmin.f32 %v2732, %v2733
        %v2735 = vmin.f32 %v2683, %v2687
        %v2736 = vmin.f32 %v2685, %v2689
        %v2737 = vmin.f32 %v2735, %v2691
        %v2738 = vmin.f32 %v2736, %v2693
        %v2739 = vmin.f32 %v2737, %v2695
        %v2740 = vmin.f32 %v2738, %v2697
        %v2741 = vmin.f32 %v2739, %v2699
        %v2742 = vmin.f32 %v2740, %v2701
        %v2743 = vmin.f32 %v2741, %v2703
        %v2744 = vmin.f32 %v2742, %v2705
        %v2745 = vmin.f32 %v2743, %v2707
        %v2746 = vmin.f32 %v2744, %v2709
        %v2747 = vmin.f32 %v2745, %v2711
        %v2748 = vmin.f32 %v2746, %v2713
        %v2749 = vmin.f32 %v2747, %v2748
        %v2750 = vrot.slane %v2749, 4
        %v2751 = vmin.f32 %v2749, %v2750
        %v2752 = vrot.slane %v2751, 2
        %v2753 = vmin.f32 %v2751, %v2752
        %v2754 = vrot.slane %v2753, 1
        %v2755 = vmin.f32 %v2753, %v2754
        %vm2756 = vcmp.eq.f32.partialorder %v2682, %v2734
        %vm2757 = vcmp.eq.f32.partialorder %v2683, %v2755
        %vm2758 = vcmp.eq.f32.partialorder %v2684, %v2734
        %vm2759 = vcmp.eq.f32.partialorder %v2685, %v2755
        %vm2760 = vcmp.eq.f32.partialorder %v2686, %v2734
        %vm2761 = vcmp.eq.f32.partialorder %v2687, %v2755
        %vm2762 = vcmp.eq.f32.partialorder %v2688, %v2734
        %vm2763 = vcmp.eq.f32.partialorder %v2689, %v2755
        %vm2764 = vcmp.eq.f32.partialorder %v2690, %v2734
        %vm2765 = vcmp.eq.f32.partialorder %v2691, %v2755
        %vm2766 = vcmp.eq.f32.partialorder %v2692, %v2734
        %vm2767 = vcmp.eq.f32.partialorder %v2693, %v2755
        %vm2768 = vcmp.eq.f32.partialorder %v2694, %v2734
        %vm2769 = vcmp.eq.f32.partialorder %v2695, %v2755
        %vm2770 = vcmp.eq.f32.partialorder %v2696, %v2734
        %vm2771 = vcmp.eq.f32.partialorder %v2697, %v2755
        %vm2772 = vcmp.eq.f32.partialorder %v2698, %v2734
        %vm2773 = vcmp.eq.f32.partialorder %v2699, %v2755
        %vm2774 = vcmp.eq.f32.partialorder %v2700, %v2734
        %vm2775 = vcmp.eq.f32.partialorder %v2701, %v2755
        %vm2776 = vcmp.eq.f32.partialorder %v2702, %v2734
        %vm2777 = vcmp.eq.f32.partialorder %v2703, %v2755
        %vm2778 = vcmp.eq.f32.partialorder %v2704, %v2734
        %vm2779 = vcmp.eq.f32.partialorder %v2705, %v2755
        %vm2780 = vcmp.eq.f32.partialorder %v2706, %v2734
        %vm2781 = vcmp.eq.f32.partialorder %v2707, %v2755
        %vm2782 = vcmp.eq.f32.partialorder %v2708, %v2734
        %vm2783 = vcmp.eq.f32.partialorder %v2709, %v2755
        %vm2784 = vcmp.eq.f32.partialorder %v2710, %v2734
        %vm2785 = vcmp.eq.f32.partialorder %v2711, %v2755
        %vm2786 = vcmp.eq.f32.partialorder %v2712, %v2734
        %vm2787 = vcmp.eq.f32.partialorder %v2713, %v2755
        %v2788 = vsel %vm2756, 1, 0
        %v2789 = vsel %vm2757, 1, 0
        %v2790 = vsel %vm2758, 1, 0
        %v2791 = vsel %vm2759, 1, 0
        %v2792 = vsel %vm2760, 1, 0
        %v2793 = vsel %vm2761, 1, 0
        %v2794 = vsel %vm2762, 1, 0
        %v2795 = vsel %vm2763, 1, 0
        %v2796 = vsel %vm2764, 1, 0
        %v2797 = vsel %vm2765, 1, 0
        %v2798 = vsel %vm2766, 1, 0
        %v2799 = vsel %vm2767, 1, 0
        %v2800 = vsel %vm2768, 1, 0
        %v2801 = vsel %vm2769, 1, 0
        %v2802 = vsel %vm2770, 1, 0
        %v2803 = vsel %vm2771, 1, 0
        %v2804 = vsel %vm2772, 1, 0
        %v2805 = vsel %vm2773, 1, 0
        %v2806 = vsel %vm2774, 1, 0
        %v2807 = vsel %vm2775, 1, 0
        %v2808 = vsel %vm2776, 1, 0
        %v2809 = vsel %vm2777, 1, 0
        %v2810 = vsel %vm2778, 1, 0
        %v2811 = vsel %vm2779, 1, 0
        %v2812 = vsel %vm2780, 1, 0
        %v2813 = vsel %vm2781, 1, 0
        %v2814 = vsel %vm2782, 1, 0
        %v2815 = vsel %vm2783, 1, 0
        %v2816 = vsel %vm2784, 1, 0
        %v2817 = vsel %vm2785, 1, 0
        %v2818 = vsel %vm2786, 1, 0
        %v2819 = vsel %vm2787, 1, 0
        %v2820 = vcvt.s32.f32 %v2788
        %v2821 = vcvt.s32.f32 %v2789
        %v2822 = vcvt.s32.f32 %v2790
        %v2823 = vcvt.s32.f32 %v2791
        %v2824 = vcvt.s32.f32 %v2792
        %v2825 = vcvt.s32.f32 %v2793
        %v2826 = vcvt.s32.f32 %v2794
        %v2827 = vcvt.s32.f32 %v2795
        %v2828 = vcvt.s32.f32 %v2796
        %v2829 = vcvt.s32.f32 %v2797
        %v2830 = vcvt.s32.f32 %v2798
        %v2831 = vcvt.s32.f32 %v2799
        %v2832 = vcvt.s32.f32 %v2800
        %v2833 = vcvt.s32.f32 %v2801
        %v2834 = vcvt.s32.f32 %v2802
        %v2835 = vcvt.s32.f32 %v2803
        %v2836 = vcvt.s32.f32 %v2804
        %v2837 = vcvt.s32.f32 %v2805
        %v2838 = vcvt.s32.f32 %v2806
        %v2839 = vcvt.s32.f32 %v2807
        %v2840 = vcvt.s32.f32 %v2808
        %v2841 = vcvt.s32.f32 %v2809
        %v2842 = vcvt.s32.f32 %v2810
        %v2843 = vcvt.s32.f32 %v2811
        %v2844 = vcvt.s32.f32 %v2812
        %v2845 = vcvt.s32.f32 %v2813
        %v2846 = vcvt.s32.f32 %v2814
        %v2847 = vcvt.s32.f32 %v2815
        %v2848 = vcvt.s32.f32 %v2816
        %v2849 = vcvt.s32.f32 %v2817
        %v2850 = vcvt.s32.f32 %v2818
        %v2851 = vcvt.s32.f32 %v2819
        %2852 = vmatpush.msra.mxu0 %v2850
        %2853 = vmatpush.msra.mxu0 %v2848
        %2854 = vmatpush.msra.mxu0 %v2846
        %2855 = vmatpush.msra.mxu0 %v2844
        %2856 = vmatpush.msra.mxu0 %v2842
        %2857 = vmatpush.msra.mxu0 %v2840
        %2858 = vmatpush.msra.mxu0 %v2838
        %2859 = vmatpush.msra.mxu0 %v2836
        %2860 = vmatpush.msra.mxu0 %v2834
        %2861 = vmatpush.msra.mxu0 %v2832
        %2862 = vmatpush.msra.mxu0 %v2830
        %2863 = vmatpush.msra.mxu0 %v2828
        %2864 = vmatpush.msra.mxu0 %v2826
        %2865 = vmatpush.msra.mxu0 %v2824
        %2866 = vmatpush.msra.mxu0 %v2822
        %2867 = vmatpush.msra.mxu0 %v2820
        %2868 = vmatmul.f32.gmra.mxu0 %v456
        %v2869 = vpop.f32.mrf.mxu0
        %v2870 = vadd.f32 0.0, %v2869
        %2871 = vmatmul.f32.gmra.mxu0 %v457
        %v2872 = vpop.f32.mrf.mxu0
        %v2873 = vadd.f32 0.0, %v2872
        %2874 = vdwg.mxu0
        %2875 = vmatpush.msra.mxu0 %v2851
        %2876 = vmatpush.msra.mxu0 %v2849
        %2877 = vmatpush.msra.mxu0 %v2847
        %2878 = vmatpush.msra.mxu0 %v2845
        %2879 = vmatpush.msra.mxu0 %v2843
        %2880 = vmatpush.msra.mxu0 %v2841
        %2881 = vmatpush.msra.mxu0 %v2839
        %2882 = vmatpush.msra.mxu0 %v2837
        %2883 = vmatpush.msra.mxu0 %v2835
        %2884 = vmatpush.msra.mxu0 %v2833
        %2885 = vmatpush.msra.mxu0 %v2831
        %2886 = vmatpush.msra.mxu0 %v2829
        %2887 = vmatpush.msra.mxu0 %v2827
        %2888 = vmatpush.msra.mxu0 %v2825
        %2889 = vmatpush.msra.mxu0 %v2823
        %2890 = vmatpush.msra.mxu0 %v2821
        %2891 = vmatmul.f32.gmra.mxu0 %v456
        %v2892 = vpop.f32.mrf.mxu0
        %v2893 = vadd.f32 0.0, %v2892
        %2894 = vmatmul.f32.gmra.mxu0 %v457
        %v2895 = vpop.f32.mrf.mxu0
        %v2896 = vadd.f32 0.0, %v2895
        %2897 = vdwg.mxu0
        %v2898 = vsub.f32 %v2870, %v2492
        %v2899 = vsub.f32 %v2893, %v2515
        %v2900 = vsub.f32 %v2873, %v2495
        %v2901 = vsub.f32 %v2896, %v2518
        %v2902 = vmul.f32 %v2898, %v2898
        %v2903 = vmul.f32 %v2899, %v2899
        %v2904 = vmul.f32 %v2900, %v2900
        %v2905 = vmul.f32 %v2901, %v2901
        %v2906 = vadd.f32 %v2902, %v2904
        %v2907 = vrot.slane %v2906, 4
        %v2908 = vadd.f32 %v2906, %v2907
        %v2909 = vrot.slane %v2908, 2
        %v2910 = vadd.f32 %v2908, %v2909
        %v2911 = vrot.slane %v2910, 1
        %v2912 = vadd.f32 %v2910, %v2911
        %v2913 = vadd.f32 %v2903, %v2905
        %v2914 = vrot.slane %v2913, 4
        %v2915 = vadd.f32 %v2913, %v2914
        %v2916 = vrot.slane %v2915, 2
        %v2917 = vadd.f32 %v2915, %v2916
        %v2918 = vrot.slane %v2917, 1
        %v2919 = vadd.f32 %v2917, %v2918
        %v2920 = vadd.f32 %v2217, %v2912
        %v2921 = vadd.f32 %v2218, %v2919
        %2922 = vmatpush.msra.mxu0 0.0
        %2923 = vmatpush.msra.mxu0 0.0
        %2924 = vmatpush.msra.mxu0 0.0
        %2925 = vmatpush.msra.mxu0 0.0
        %2926 = vmatpush.msra.mxu0 0.0
        %2927 = vmatpush.msra.mxu0 0.0
        %2928 = vmatpush.msra.mxu0 0.0
        %2929 = vmatpush.msra.mxu0 0.0
        %2930 = vmatpush.msra.mxu0 0.0
        %2931 = vmatpush.msra.mxu0 0.0
        %2932 = vmatpush.msra.mxu0 0.0
        %2933 = vmatpush.msra.mxu0 0.0
        %2934 = vmatpush.msra.mxu0 0.0
        %2935 = vmatpush.msra.mxu0 0.0
        %2936 = vmatpush.msra.mxu0 %v2873
        %2937 = vmatpush.msra.mxu0 %v2870
        %2938 = vmatmul.f32.gmra.mxu0 %v1507
        %v2939 = vpop.f32.mrf.mxu0
        %v2940 = vadd.f32 %v1490, %v2939
        %2941 = vmatmul.f32.gmra.mxu0 %v1509
        %v2942 = vpop.f32.mrf.mxu0
        %v2943 = vadd.f32 %v1495, %v2942
        %2944 = vmatmul.f32.gmra.mxu0 %v1511
        %v2945 = vpop.f32.mrf.mxu0
        %v2946 = vadd.f32 %v1500, %v2945
        %2947 = vmatmul.f32.gmra.mxu0 %v1513
        %v2948 = vpop.f32.mrf.mxu0
        %v2949 = vadd.f32 %v1505, %v2948
        %2950 = vdwg.mxu0
        %2951 = vmatpush.msra.mxu0 0.0
        %2952 = vmatpush.msra.mxu0 0.0
        %2953 = vmatpush.msra.mxu0 0.0
        %2954 = vmatpush.msra.mxu0 0.0
        %2955 = vmatpush.msra.mxu0 0.0
        %2956 = vmatpush.msra.mxu0 0.0
        %2957 = vmatpush.msra.mxu0 0.0
        %2958 = vmatpush.msra.mxu0 0.0
        %2959 = vmatpush.msra.mxu0 0.0
        %2960 = vmatpush.msra.mxu0 0.0
        %2961 = vmatpush.msra.mxu0 0.0
        %2962 = vmatpush.msra.mxu0 0.0
        %2963 = vmatpush.msra.mxu0 0.0
        %2964 = vmatpush.msra.mxu0 0.0
        %2965 = vmatpush.msra.mxu0 %v2896
        %2966 = vmatpush.msra.mxu0 %v2893
        %2967 = vmatmul.f32.gmra.mxu0 %v1507
        %v2968 = vpop.f32.mrf.mxu0
        %v2969 = vadd.f32 %v1490, %v2968
        %2970 = vmatmul.f32.gmra.mxu0 %v1509
        %v2971 = vpop.f32.mrf.mxu0
        %v2972 = vadd.f32 %v1495, %v2971
        %2973 = vmatmul.f32.gmra.mxu0 %v1511
        %v2974 = vpop.f32.mrf.mxu0
        %v2975 = vadd.f32 %v1500, %v2974
        %2976 = vmatmul.f32.gmra.mxu0 %v1513
        %v2977 = vpop.f32.mrf.mxu0
        %v2978 = vadd.f32 %v1505, %v2977
        %2979 = vdwg.mxu0
        %v2980 = vmax.f32 %v2940, 0.0
        %v2981 = vmax.f32 %v2969, 0.0
        %v2982 = vmax.f32 %v2943, 0.0
        %v2983 = vmax.f32 %v2972, 0.0
        %v2984 = vmax.f32 %v2946, 0.0
        %v2985 = vmax.f32 %v2975, 0.0
        %v2986 = vmax.f32 %v2949, 0.0
        %v2987 = vmax.f32 %v2978, 0.0
        %2988 = vmatpush.msra.mxu0 0.0
        %2989 = vmatpush.msra.mxu0 0.0
        %2990 = vmatpush.msra.mxu0 0.0
        %2991 = vmatpush.msra.mxu0 0.0
        %2992 = vmatpush.msra.mxu0 0.0
        %2993 = vmatpush.msra.mxu0 0.0
        %2994 = vmatpush.msra.mxu0 0.0
        %2995 = vmatpush.msra.mxu0 0.0
        %2996 = vmatpush.msra.mxu0 0.0
        %2997 = vmatpush.msra.mxu0 0.0
        %2998 = vmatpush.msra.mxu0 0.0
        %2999 = vmatpush.msra.mxu0 0.0
        %3000 = vmatpush.msra.mxu0 %v2986
        %3001 = vmatpush.msra.mxu0 %v2984
        %3002 = vmatpush.msra.mxu0 %v2982
        %3003 = vmatpush.msra.mxu0 %v2980
        %3004 = vmatmul.f32.gmra.mxu0 %v1586
        %v3005 = vpop.f32.mrf.mxu0
        %v3006 = vadd.f32 %v1584, %v3005
        %3007 = vdwg.mxu0
        %3008 = vmatpush.msra.mxu0 0.0
        %3009 = vmatpush.msra.mxu0 0.0
        %3010 = vmatpush.msra.mxu0 0.0
        %3011 = vmatpush.msra.mxu0 0.0
        %3012 = vmatpush.msra.mxu0 0.0
        %3013 = vmatpush.msra.mxu0 0.0
        %3014 = vmatpush.msra.mxu0 0.0
        %3015 = vmatpush.msra.mxu0 0.0
        %3016 = vmatpush.msra.mxu0 0.0
        %3017 = vmatpush.msra.mxu0 0.0
        %3018 = vmatpush.msra.mxu0 0.0
        %3019 = vmatpush.msra.mxu0 0.0
        %3020 = vmatpush.msra.mxu0 %v2987
        %3021 = vmatpush.msra.mxu0 %v2985
        %3022 = vmatpush.msra.mxu0 %v2983
        %3023 = vmatpush.msra.mxu0 %v2981
        %3024 = vmatmul.f32.gmra.mxu0 %v1586
        %v3025 = vpop.f32.mrf.mxu0
        %v3026 = vadd.f32 %v1584, %v3025
        %3027 = vdwg.mxu0
        %3028 = vst [vmem:[%s398 + $0x10] sm:$0xf] %v3006
        %3029 = vst [vmem:[%s398 + $0x18] sm:$0xf] %v3026
        %v3031 = vperm.slane %v2441, 0
        %v3032 = vperm.slane %v2441, 1
        %v3035 = vmul.f32 %v716, %v3031
        %v3036 = vmul.f32 %v716, %v3032
        %v3037 = vmul.f32 %v720, %v3031
        %v3038 = vmul.f32 %v720, %v3032
        %v3039 = vmul.f32 %v724, %v3031
        %v3040 = vmul.f32 %v724, %v3032
        %v3041 = vmul.f32 %v728, %v3031
        %v3042 = vmul.f32 %v728, %v3032
        %v3043 = vadd.f32 %v590, %v3035
        %v3044 = vadd.f32 %v591, %v3036
        %v3045 = vadd.f32 %v592, %v3037
        %v3046 = vadd.f32 %v593, %v3038
        %v3047 = vadd.f32 %v594, %v3039
        %v3048 = vadd.f32 %v595, %v3040
        %v3049 = vadd.f32 %v596, %v3041
        %v3050 = vadd.f32 %v597, %v3042
        %v3051 = vmax.f32 %v3043, 0.0
        %v3052 = vmax.f32 %v3044, 0.0
        %v3053 = vmax.f32 %v3045, 0.0
        %v3054 = vmax.f32 %v3046, 0.0
        %v3055 = vmax.f32 %v3047, 0.0
        %v3056 = vmax.f32 %v3048, 0.0
        %v3057 = vmax.f32 %v3049, 0.0
        %v3058 = vmax.f32 %v3050, 0.0
        %v3059 = vmul.f32 %v761, %v3051
        %v3060 = vmul.f32 %v761, %v3052
        %v3061 = vmul.f32 %v765, %v3053
        %v3062 = vmul.f32 %v765, %v3054
        %v3063 = vmul.f32 %v769, %v3055
        %v3064 = vmul.f32 %v769, %v3056
        %v3065 = vmul.f32 %v773, %v3057
        %v3066 = vmul.f32 %v773, %v3058
        %v3067 = vadd.f32 %v3059, %v3061
        %v3068 = vadd.f32 %v3067, %v3063
        %v3069 = vadd.f32 %v3068, %v3065
        %v3070 = vrot.slane %v3069, 4
        %v3071 = vadd.f32 %v3069, %v3070
        %v3072 = vrot.slane %v3071, 2
        %v3073 = vadd.f32 %v3071, %v3072
        %v3074 = vrot.slane %v3073, 1
        %v3075 = vadd.f32 %v3073, %v3074
        %v3076 = vadd.f32 %v3060, %v3062
        %v3077 = vadd.f32 %v3076, %v3064
        %v3078 = vadd.f32 %v3077, %v3066
        %v3079 = vrot.slane %v3078, 4
        %v3080 = vadd.f32 %v3078, %v3079
        %v3081 = vrot.slane %v3080, 2
        %v3082 = vadd.f32 %v3080, %v3081
        %v3083 = vrot.slane %v3082, 1
        %v3084 = vadd.f32 %v3082, %v3083
        %v3085 = vadd.f32 %v3075, %v803
        %v3086 = vadd.f32 %v3084, %v803
        %v3087 = vxor.u32 %v3085, 2147483648
        %v3088 = vxor.u32 %v3086, 2147483648
        %v3089 = vmul.f32 %v3087, 1.442695
        %v3090 = vpow.pop %v3089
        %v3091 = vmul.f32 %v3088, 1.442695
        %v3092 = vpow.pop %v3091
        %v3093 = vadd.f32 %v3090, 1.0
        %v3094 = vadd.f32 %v3092, 1.0
        %v3095 = vrcp.pop %v3093
        %v3096 = vmul.f32 %v3093, %v3095
        %v3097 = vsub.f32 1.0, %v3096
        %v3098 = vmul.f32 %v3095, %v3097
        %v3099 = vadd.f32 %v3095, %v3098
        %vm3100 = vweird.f32 %v3093
        %vm3101 = vweird.f32 %v3095
        %vm3102 = vmor %vm3100, %vm3101
        %v3103 = vsel %vm3102, %v3095, %v3099
        %v3104 = vand.u32 2147483647, %v3093
        %vm3105 = vcmp.eq.f32.partialorder %v3104, 8.507059e+37
        %v3106 = vand.u32 %v3093, 2147483648
        %v3107 = vor.u32 1.1754944e-38, %v3106
        %v3108 = vsel %vm3105, %v3107, %v3103
        %v3109 = vmul.f32 1.0, %v3108
        %v3110 = vrcp.pop %v3094
        %v3111 = vmul.f32 %v3094, %v3110
        %v3112 = vsub.f32 1.0, %v3111
        %v3113 = vmul.f32 %v3110, %v3112
        %v3114 = vadd.f32 %v3110, %v3113
        %vm3115 = vweird.f32 %v3094
        %vm3116 = vweird.f32 %v3110
        %vm3117 = vmor %vm3115, %vm3116
        %v3118 = vsel %vm3117, %v3110, %v3114
        %v3119 = vand.u32 2147483647, %v3094
        %vm3120 = vcmp.eq.f32.partialorder %v3119, 8.507059e+37
        %v3121 = vand.u32 %v3094, 2147483648
        %v3122 = vor.u32 1.1754944e-38, %v3121
        %v3123 = vsel %vm3120, %v3122, %v3118
        %v3124 = vmul.f32 1.0, %v3123
        %v3127 = vrot.slane %v3124, 7
        %v3128 = vsel %vm848, %v3109, %v3127
        %v3130 = vmul.f32 %v2441, %v3128
        %v3131 = vsub.f32 1.0, %v3109
        %v3132 = vsub.f32 1.0, %v3124
        %v3135 = vrot.slane %v3132, 7
        %v3136 = vsel %vm848, %v3131, %v3135
        %v3138 = vmul.f32 %v2441, %v3136
        %s3139 = scalar_lea.vmem %s420, 3
        %3140 = vst.msk [vmem:[%s3139] ss:$8 sm:$0x3] %vm863, %v3130
        %3141 = vst.msk [vmem:[%s3139] ss:$8 sm:$0x0] %vm863, %v3130
        %v3143 = vperm.slane %v3130, 0
        %v3144 = vperm.slane %v3130, 1
        %v3147 = vmul.f32 %v868, %v3143
        %v3148 = vmul.f32 %v868, %v3144
        %v3149 = vmul.f32 %v872, %v3143
        %v3150 = vmul.f32 %v872, %v3144
        %v3151 = vmul.f32 %v876, %v3143
        %v3152 = vmul.f32 %v876, %v3144
        %v3153 = vmul.f32 %v880, %v3143
        %v3154 = vmul.f32 %v880, %v3144
        %v3155 = vadd.f32 %v706, %v3147
        %v3156 = vadd.f32 %v707, %v3148
        %v3157 = vadd.f32 %v708, %v3149
        %v3158 = vadd.f32 %v709, %v3150
        %v3159 = vadd.f32 %v710, %v3151
        %v3160 = vadd.f32 %v711, %v3152
        %v3161 = vadd.f32 %v712, %v3153
        %v3162 = vadd.f32 %v713, %v3154
        %v3163 = vmax.f32 %v3155, 0.0
        %v3164 = vmax.f32 %v3156, 0.0
        %v3165 = vmax.f32 %v3157, 0.0
        %v3166 = vmax.f32 %v3158, 0.0
        %v3167 = vmax.f32 %v3159, 0.0
        %v3168 = vmax.f32 %v3160, 0.0
        %v3169 = vmax.f32 %v3161, 0.0
        %v3170 = vmax.f32 %v3162, 0.0
        %3171 = vmatpush.msra.mxu0 0.0
        %3172 = vmatpush.msra.mxu0 0.0
        %3173 = vmatpush.msra.mxu0 0.0
        %3174 = vmatpush.msra.mxu0 0.0
        %3175 = vmatpush.msra.mxu0 0.0
        %3176 = vmatpush.msra.mxu0 0.0
        %3177 = vmatpush.msra.mxu0 0.0
        %3178 = vmatpush.msra.mxu0 0.0
        %3179 = vmatpush.msra.mxu0 0.0
        %3180 = vmatpush.msra.mxu0 0.0
        %3181 = vmatpush.msra.mxu0 0.0
        %3182 = vmatpush.msra.mxu0 0.0
        %3183 = vmatpush.msra.mxu0 %v3169
        %3184 = vmatpush.msra.mxu0 %v3167
        %3185 = vmatpush.msra.mxu0 %v3165
        %3186 = vmatpush.msra.mxu0 %v3163
        %3187 = vmatmul.f32.gmra.mxu0 %v922
        %v3188 = vpop.f32.mrf.mxu0
        %v3189 = vadd.f32 %v914, %v3188
        %3190 = vmatmul.f32.gmra.mxu0 %v924
        %v3191 = vpop.f32.mrf.mxu0
        %v3192 = vadd.f32 %v919, %v3191
        %3193 = vdwg.mxu0
        %3194 = vmatpush.msra.mxu0 0.0
        %3195 = vmatpush.msra.mxu0 0.0
        %3196 = vmatpush.msra.mxu0 0.0
        %3197 = vmatpush.msra.mxu0 0.0
        %3198 = vmatpush.msra.mxu0 0.0
        %3199 = vmatpush.msra.mxu0 0.0
        %3200 = vmatpush.msra.mxu0 0.0
        %3201 = vmatpush.msra.mxu0 0.0
        %3202 = vmatpush.msra.mxu0 0.0
        %3203 = vmatpush.msra.mxu0 0.0
        %3204 = vmatpush.msra.mxu0 0.0
        %3205 = vmatpush.msra.mxu0 0.0
        %3206 = vmatpush.msra.mxu0 %v3170
        %3207 = vmatpush.msra.mxu0 %v3168
        %3208 = vmatpush.msra.mxu0 %v3166
        %3209 = vmatpush.msra.mxu0 %v3164
        %3210 = vmatmul.f32.gmra.mxu0 %v922
        %v3211 = vpop.f32.mrf.mxu0
        %v3212 = vadd.f32 %v914, %v3211
        %3213 = vmatmul.f32.gmra.mxu0 %v924
        %v3214 = vpop.f32.mrf.mxu0
        %v3215 = vadd.f32 %v919, %v3214
        %3216 = vdwg.mxu0
        %3217 = vmatpush.msra.mxu0 0.0
        %3218 = vmatpush.msra.mxu0 0.0
        %3219 = vmatpush.msra.mxu0 0.0
        %3220 = vmatpush.msra.mxu0 0.0
        %3221 = vmatpush.msra.mxu0 0.0
        %3222 = vmatpush.msra.mxu0 0.0
        %3223 = vmatpush.msra.mxu0 0.0
        %3224 = vmatpush.msra.mxu0 0.0
        %3225 = vmatpush.msra.mxu0 0.0
        %3226 = vmatpush.msra.mxu0 0.0
        %3227 = vmatpush.msra.mxu0 0.0
        %3228 = vmatpush.msra.mxu0 0.0
        %3229 = vmatpush.msra.mxu0 0.0
        %3230 = vmatpush.msra.mxu0 0.0
        %3231 = vmatpush.msra.mxu0 %v3192
        %3232 = vmatpush.msra.mxu0 %v3189
        %3233 = vmatmul.f32.gmra.mxu0 %v974
        %v3234 = vpop.f32.mrf.mxu0
        %v3235 = vadd.f32 0.0, %v3234
        %3236 = vmatmul.f32.gmra.mxu0 %v977
        %v3237 = vpop.f32.mrf.mxu0
        %v3238 = vadd.f32 0.0, %v3237
        %3239 = vmatmul.f32.gmra.mxu0 %v980
        %v3240 = vpop.f32.mrf.mxu0
        %v3241 = vadd.f32 0.0, %v3240
        %3242 = vmatmul.f32.gmra.mxu0 %v983
        %v3243 = vpop.f32.mrf.mxu0
        %v3244 = vadd.f32 0.0, %v3243
        %3245 = vmatmul.f32.gmra.mxu0 %v986
        %v3246 = vpop.f32.mrf.mxu0
        %v3247 = vadd.f32 0.0, %v3246
        %3248 = vmatmul.f32.gmra.mxu0 %v989
        %v3249 = vpop.f32.mrf.mxu0
        %v3250 = vadd.f32 0.0, %v3249
        %3251 = vmatmul.f32.gmra.mxu0 %v992
        %v3252 = vpop.f32.mrf.mxu0
        %v3253 = vadd.f32 0.0, %v3252
        %3254 = vmatmul.f32.gmra.mxu0 %v995
        %v3255 = vpop.f32.mrf.mxu0
        %v3256 = vadd.f32 0.0, %v3255
        %3257 = vmatmul.f32.gmra.mxu0 %v998
        %v3258 = vpop.f32.mrf.mxu0
        %v3259 = vadd.f32 0.0, %v3258
        %3260 = vmatmul.f32.gmra.mxu0 %v1001
        %v3261 = vpop.f32.mrf.mxu0
        %v3262 = vadd.f32 0.0, %v3261
        %3263 = vmatmul.f32.gmra.mxu0 %v1004
        %v3264 = vpop.f32.mrf.mxu0
        %v3265 = vadd.f32 0.0, %v3264
        %3266 = vmatmul.f32.gmra.mxu0 %v1007
        %v3267 = vpop.f32.mrf.mxu0
        %v3268 = vadd.f32 0.0, %v3267
        %3269 = vmatmul.f32.gmra.mxu0 %v1010
        %v3270 = vpop.f32.mrf.mxu0
        %v3271 = vadd.f32 0.0, %v3270
        %3272 = vmatmul.f32.gmra.mxu0 %v1013
        %v3273 = vpop.f32.mrf.mxu0
        %v3274 = vadd.f32 0.0, %v3273
        %3275 = vmatmul.f32.gmra.mxu0 %v1016
        %v3276 = vpop.f32.mrf.mxu0
        %v3277 = vadd.f32 0.0, %v3276
        %3278 = vmatmul.f32.gmra.mxu0 %v1019
        %v3279 = vpop.f32.mrf.mxu0
        %v3280 = vadd.f32 0.0, %v3279
        %3281 = vdwg.mxu0
        %3282 = vmatpush.msra.mxu0 0.0
        %3283 = vmatpush.msra.mxu0 0.0
        %3284 = vmatpush.msra.mxu0 0.0
        %3285 = vmatpush.msra.mxu0 0.0
        %3286 = vmatpush.msra.mxu0 0.0
        %3287 = vmatpush.msra.mxu0 0.0
        %3288 = vmatpush.msra.mxu0 0.0
        %3289 = vmatpush.msra.mxu0 0.0
        %3290 = vmatpush.msra.mxu0 0.0
        %3291 = vmatpush.msra.mxu0 0.0
        %3292 = vmatpush.msra.mxu0 0.0
        %3293 = vmatpush.msra.mxu0 0.0
        %3294 = vmatpush.msra.mxu0 0.0
        %3295 = vmatpush.msra.mxu0 0.0
        %3296 = vmatpush.msra.mxu0 %v3215
        %3297 = vmatpush.msra.mxu0 %v3212
        %3298 = vmatmul.f32.gmra.mxu0 %v974
        %v3299 = vpop.f32.mrf.mxu0
        %v3300 = vadd.f32 0.0, %v3299
        %3301 = vmatmul.f32.gmra.mxu0 %v977
        %v3302 = vpop.f32.mrf.mxu0
        %v3303 = vadd.f32 0.0, %v3302
        %3304 = vmatmul.f32.gmra.mxu0 %v980
        %v3305 = vpop.f32.mrf.mxu0
        %v3306 = vadd.f32 0.0, %v3305
        %3307 = vmatmul.f32.gmra.mxu0 %v983
        %v3308 = vpop.f32.mrf.mxu0
        %v3309 = vadd.f32 0.0, %v3308
        %3310 = vmatmul.f32.gmra.mxu0 %v986
        %v3311 = vpop.f32.mrf.mxu0
        %v3312 = vadd.f32 0.0, %v3311
        %3313 = vmatmul.f32.gmra.mxu0 %v989
        %v3314 = vpop.f32.mrf.mxu0
        %v3315 = vadd.f32 0.0, %v3314
        %3316 = vmatmul.f32.gmra.mxu0 %v992
        %v3317 = vpop.f32.mrf.mxu0
        %v3318 = vadd.f32 0.0, %v3317
        %3319 = vmatmul.f32.gmra.mxu0 %v995
        %v3320 = vpop.f32.mrf.mxu0
        %v3321 = vadd.f32 0.0, %v3320
        %3322 = vmatmul.f32.gmra.mxu0 %v998
        %v3323 = vpop.f32.mrf.mxu0
        %v3324 = vadd.f32 0.0, %v3323
        %3325 = vmatmul.f32.gmra.mxu0 %v1001
        %v3326 = vpop.f32.mrf.mxu0
        %v3327 = vadd.f32 0.0, %v3326
        %3328 = vmatmul.f32.gmra.mxu0 %v1004
        %v3329 = vpop.f32.mrf.mxu0
        %v3330 = vadd.f32 0.0, %v3329
        %3331 = vmatmul.f32.gmra.mxu0 %v1007
        %v3332 = vpop.f32.mrf.mxu0
        %v3333 = vadd.f32 0.0, %v3332
        %3334 = vmatmul.f32.gmra.mxu0 %v1010
        %v3335 = vpop.f32.mrf.mxu0
        %v3336 = vadd.f32 0.0, %v3335
        %3337 = vmatmul.f32.gmra.mxu0 %v1013
        %v3338 = vpop.f32.mrf.mxu0
        %v3339 = vadd.f32 0.0, %v3338
        %3340 = vmatmul.f32.gmra.mxu0 %v1016
        %v3341 = vpop.f32.mrf.mxu0
        %v3342 = vadd.f32 0.0, %v3341
        %3343 = vmatmul.f32.gmra.mxu0 %v1019
        %v3344 = vpop.f32.mrf.mxu0
        %v3345 = vadd.f32 0.0, %v3344
        %3346 = vdwg.mxu0
        %v3347 = vmul.f32 %v3235, 2.0
        %v3348 = vmul.f32 %v3300, 2.0
        %v3349 = vmul.f32 %v3238, 2.0
        %v3350 = vmul.f32 %v3303, 2.0
        %v3351 = vmul.f32 %v3241, 2.0
        %v3352 = vmul.f32 %v3306, 2.0
        %v3353 = vmul.f32 %v3244, 2.0
        %v3354 = vmul.f32 %v3309, 2.0
        %v3355 = vmul.f32 %v3247, 2.0
        %v3356 = vmul.f32 %v3312, 2.0
        %v3357 = vmul.f32 %v3250, 2.0
        %v3358 = vmul.f32 %v3315, 2.0
        %v3359 = vmul.f32 %v3253, 2.0
        %v3360 = vmul.f32 %v3318, 2.0
        %v3361 = vmul.f32 %v3256, 2.0
        %v3362 = vmul.f32 %v3321, 2.0
        %v3363 = vmul.f32 %v3259, 2.0
        %v3364 = vmul.f32 %v3324, 2.0
        %v3365 = vmul.f32 %v3262, 2.0
        %v3366 = vmul.f32 %v3327, 2.0
        %v3367 = vmul.f32 %v3265, 2.0
        %v3368 = vmul.f32 %v3330, 2.0
        %v3369 = vmul.f32 %v3268, 2.0
        %v3370 = vmul.f32 %v3333, 2.0
        %v3371 = vmul.f32 %v3271, 2.0
        %v3372 = vmul.f32 %v3336, 2.0
        %v3373 = vmul.f32 %v3274, 2.0
        %v3374 = vmul.f32 %v3339, 2.0
        %v3375 = vmul.f32 %v3277, 2.0
        %v3376 = vmul.f32 %v3342, 2.0
        %v3377 = vmul.f32 %v3280, 2.0
        %v3378 = vmul.f32 %v3345, 2.0
        %v3379 = vsub.f32 %v1185, %v3347
        %v3380 = vsub.f32 %v1185, %v3348
        %v3381 = vsub.f32 %v1189, %v3349
        %v3382 = vsub.f32 %v1189, %v3350
        %v3383 = vsub.f32 %v1193, %v3351
        %v3384 = vsub.f32 %v1193, %v3352
        %v3385 = vsub.f32 %v1197, %v3353
        %v3386 = vsub.f32 %v1197, %v3354
        %v3387 = vsub.f32 %v1201, %v3355
        %v3388 = vsub.f32 %v1201, %v3356
        %v3389 = vsub.f32 %v1205, %v3357
        %v3390 = vsub.f32 %v1205, %v3358
        %v3391 = vsub.f32 %v1209, %v3359
        %v3392 = vsub.f32 %v1209, %v3360
        %v3393 = vsub.f32 %v1213, %v3361
        %v3394 = vsub.f32 %v1213, %v3362
        %v3395 = vsub.f32 %v1217, %v3363
        %v3396 = vsub.f32 %v1217, %v3364
        %v3397 = vsub.f32 %v1221, %v3365
        %v3398 = vsub.f32 %v1221, %v3366
        %v3399 = vsub.f32 %v1225, %v3367
        %v3400 = vsub.f32 %v1225, %v3368
        %v3401 = vsub.f32 %v1229, %v3369
        %v3402 = vsub.f32 %v1229, %v3370
        %v3403 = vsub.f32 %v1233, %v3371
        %v3404 = vsub.f32 %v1233, %v3372
        %v3405 = vsub.f32 %v1237, %v3373
        %v3406 = vsub.f32 %v1237, %v3374
        %v3407 = vsub.f32 %v1241, %v3375
        %v3408 = vsub.f32 %v1241, %v3376
        %v3409 = vsub.f32 %v1245, %v3377
        %v3410 = vsub.f32 %v1245, %v3378
        %v3411 = vmin.f32 %v3379, %v3383
        %v3412 = vmin.f32 %v3381, %v3385
        %v3413 = vmin.f32 %v3411, %v3387
        %v3414 = vmin.f32 %v3412, %v3389
        %v3415 = vmin.f32 %v3413, %v3391
        %v3416 = vmin.f32 %v3414, %v3393
        %v3417 = vmin.f32 %v3415, %v3395
        %v3418 = vmin.f32 %v3416, %v3397
        %v3419 = vmin.f32 %v3417, %v3399
        %v3420 = vmin.f32 %v3418, %v3401
        %v3421 = vmin.f32 %v3419, %v3403
        %v3422 = vmin.f32 %v3420, %v3405
        %v3423 = vmin.f32 %v3421, %v3407
        %v3424 = vmin.f32 %v3422, %v3409
        %v3425 = vmin.f32 %v3423, %v3424
        %v3426 = vrot.slane %v3425, 4
        %v3427 = vmin.f32 %v3425, %v3426
        %v3428 = vrot.slane %v3427, 2
        %v3429 = vmin.f32 %v3427, %v3428
        %v3430 = vrot.slane %v3429, 1
        %v3431 = vmin.f32 %v3429, %v3430
        %v3432 = vmin.f32 %v3380, %v3384
        %v3433 = vmin.f32 %v3382, %v3386
        %v3434 = vmin.f32 %v3432, %v3388
        %v3435 = vmin.f32 %v3433, %v3390
        %v3436 = vmin.f32 %v3434, %v3392
        %v3437 = vmin.f32 %v3435, %v3394
        %v3438 = vmin.f32 %v3436, %v3396
        %v3439 = vmin.f32 %v3437, %v3398
        %v3440 = vmin.f32 %v3438, %v3400
        %v3441 = vmin.f32 %v3439, %v3402
        %v3442 = vmin.f32 %v3440, %v3404
        %v3443 = vmin.f32 %v3441, %v3406
        %v3444 = vmin.f32 %v3442, %v3408
        %v3445 = vmin.f32 %v3443, %v3410
        %v3446 = vmin.f32 %v3444, %v3445
        %v3447 = vrot.slane %v3446, 4
        %v3448 = vmin.f32 %v3446, %v3447
        %v3449 = vrot.slane %v3448, 2
        %v3450 = vmin.f32 %v3448, %v3449
        %v3451 = vrot.slane %v3450, 1
        %v3452 = vmin.f32 %v3450, %v3451
        %vm3453 = vcmp.eq.f32.partialorder %v3379, %v3431
        %vm3454 = vcmp.eq.f32.partialorder %v3380, %v3452
        %vm3455 = vcmp.eq.f32.partialorder %v3381, %v3431
        %vm3456 = vcmp.eq.f32.partialorder %v3382, %v3452
        %vm3457 = vcmp.eq.f32.partialorder %v3383, %v3431
        %vm3458 = vcmp.eq.f32.partialorder %v3384, %v3452
        %vm3459 = vcmp.eq.f32.partialorder %v3385, %v3431
        %vm3460 = vcmp.eq.f32.partialorder %v3386, %v3452
        %vm3461 = vcmp.eq.f32.partialorder %v3387, %v3431
        %vm3462 = vcmp.eq.f32.partialorder %v3388, %v3452
        %vm3463 = vcmp.eq.f32.partialorder %v3389, %v3431
        %vm3464 = vcmp.eq.f32.partialorder %v3390, %v3452
        %vm3465 = vcmp.eq.f32.partialorder %v3391, %v3431
        %vm3466 = vcmp.eq.f32.partialorder %v3392, %v3452
        %vm3467 = vcmp.eq.f32.partialorder %v3393, %v3431
        %vm3468 = vcmp.eq.f32.partialorder %v3394, %v3452
        %vm3469 = vcmp.eq.f32.partialorder %v3395, %v3431
        %vm3470 = vcmp.eq.f32.partialorder %v3396, %v3452
        %vm3471 = vcmp.eq.f32.partialorder %v3397, %v3431
        %vm3472 = vcmp.eq.f32.partialorder %v3398, %v3452
        %vm3473 = vcmp.eq.f32.partialorder %v3399, %v3431
        %vm3474 = vcmp.eq.f32.partialorder %v3400, %v3452
        %vm3475 = vcmp.eq.f32.partialorder %v3401, %v3431
        %vm3476 = vcmp.eq.f32.partialorder %v3402, %v3452
        %vm3477 = vcmp.eq.f32.partialorder %v3403, %v3431
        %vm3478 = vcmp.eq.f32.partialorder %v3404, %v3452
        %vm3479 = vcmp.eq.f32.partialorder %v3405, %v3431
        %vm3480 = vcmp.eq.f32.partialorder %v3406, %v3452
        %vm3481 = vcmp.eq.f32.partialorder %v3407, %v3431
        %vm3482 = vcmp.eq.f32.partialorder %v3408, %v3452
        %vm3483 = vcmp.eq.f32.partialorder %v3409, %v3431
        %vm3484 = vcmp.eq.f32.partialorder %v3410, %v3452
        %v3485 = vsel %vm3453, 1, 0
        %v3486 = vsel %vm3454, 1, 0
        %v3487 = vsel %vm3455, 1, 0
        %v3488 = vsel %vm3456, 1, 0
        %v3489 = vsel %vm3457, 1, 0
        %v3490 = vsel %vm3458, 1, 0
        %v3491 = vsel %vm3459, 1, 0
        %v3492 = vsel %vm3460, 1, 0
        %v3493 = vsel %vm3461, 1, 0
        %v3494 = vsel %vm3462, 1, 0
        %v3495 = vsel %vm3463, 1, 0
        %v3496 = vsel %vm3464, 1, 0
        %v3497 = vsel %vm3465, 1, 0
        %v3498 = vsel %vm3466, 1, 0
        %v3499 = vsel %vm3467, 1, 0
        %v3500 = vsel %vm3468, 1, 0
        %v3501 = vsel %vm3469, 1, 0
        %v3502 = vsel %vm3470, 1, 0
        %v3503 = vsel %vm3471, 1, 0
        %v3504 = vsel %vm3472, 1, 0
        %v3505 = vsel %vm3473, 1, 0
        %v3506 = vsel %vm3474, 1, 0
        %v3507 = vsel %vm3475, 1, 0
        %v3508 = vsel %vm3476, 1, 0
        %v3509 = vsel %vm3477, 1, 0
        %v3510 = vsel %vm3478, 1, 0
        %v3511 = vsel %vm3479, 1, 0
        %v3512 = vsel %vm3480, 1, 0
        %v3513 = vsel %vm3481, 1, 0
        %v3514 = vsel %vm3482, 1, 0
        %v3515 = vsel %vm3483, 1, 0
        %v3516 = vsel %vm3484, 1, 0
        %v3517 = vcvt.s32.f32 %v3485
        %v3518 = vcvt.s32.f32 %v3486
        %v3519 = vcvt.s32.f32 %v3487
        %v3520 = vcvt.s32.f32 %v3488
        %v3521 = vcvt.s32.f32 %v3489
        %v3522 = vcvt.s32.f32 %v3490
        %v3523 = vcvt.s32.f32 %v3491
        %v3524 = vcvt.s32.f32 %v3492
        %v3525 = vcvt.s32.f32 %v3493
        %v3526 = vcvt.s32.f32 %v3494
        %v3527 = vcvt.s32.f32 %v3495
        %v3528 = vcvt.s32.f32 %v3496
        %v3529 = vcvt.s32.f32 %v3497
        %v3530 = vcvt.s32.f32 %v3498
        %v3531 = vcvt.s32.f32 %v3499
        %v3532 = vcvt.s32.f32 %v3500
        %v3533 = vcvt.s32.f32 %v3501
        %v3534 = vcvt.s32.f32 %v3502
        %v3535 = vcvt.s32.f32 %v3503
        %v3536 = vcvt.s32.f32 %v3504
        %v3537 = vcvt.s32.f32 %v3505
        %v3538 = vcvt.s32.f32 %v3506
        %v3539 = vcvt.s32.f32 %v3507
        %v3540 = vcvt.s32.f32 %v3508
        %v3541 = vcvt.s32.f32 %v3509
        %v3542 = vcvt.s32.f32 %v3510
        %v3543 = vcvt.s32.f32 %v3511
        %v3544 = vcvt.s32.f32 %v3512
        %v3545 = vcvt.s32.f32 %v3513
        %v3546 = vcvt.s32.f32 %v3514
        %v3547 = vcvt.s32.f32 %v3515
        %v3548 = vcvt.s32.f32 %v3516
        %3549 = vmatpush.msra.mxu0 %v3547
        %3550 = vmatpush.msra.mxu0 %v3545
        %3551 = vmatpush.msra.mxu0 %v3543
        %3552 = vmatpush.msra.mxu0 %v3541
        %3553 = vmatpush.msra.mxu0 %v3539
        %3554 = vmatpush.msra.mxu0 %v3537
        %3555 = vmatpush.msra.mxu0 %v3535
        %3556 = vmatpush.msra.mxu0 %v3533
        %3557 = vmatpush.msra.mxu0 %v3531
        %3558 = vmatpush.msra.mxu0 %v3529
        %3559 = vmatpush.msra.mxu0 %v3527
        %3560 = vmatpush.msra.mxu0 %v3525
        %3561 = vmatpush.msra.mxu0 %v3523
        %3562 = vmatpush.msra.mxu0 %v3521
        %3563 = vmatpush.msra.mxu0 %v3519
        %3564 = vmatpush.msra.mxu0 %v3517
        %3565 = vmatmul.f32.gmra.mxu0 %v456
        %v3566 = vpop.f32.mrf.mxu0
        %v3567 = vadd.f32 0.0, %v3566
        %3568 = vmatmul.f32.gmra.mxu0 %v457
        %v3569 = vpop.f32.mrf.mxu0
        %v3570 = vadd.f32 0.0, %v3569
        %3571 = vdwg.mxu0
        %3572 = vmatpush.msra.mxu0 %v3548
        %3573 = vmatpush.msra.mxu0 %v3546
        %3574 = vmatpush.msra.mxu0 %v3544
        %3575 = vmatpush.msra.mxu0 %v3542
        %3576 = vmatpush.msra.mxu0 %v3540
        %3577 = vmatpush.msra.mxu0 %v3538
        %3578 = vmatpush.msra.mxu0 %v3536
        %3579 = vmatpush.msra.mxu0 %v3534
        %3580 = vmatpush.msra.mxu0 %v3532
        %3581 = vmatpush.msra.mxu0 %v3530
        %3582 = vmatpush.msra.mxu0 %v3528
        %3583 = vmatpush.msra.mxu0 %v3526
        %3584 = vmatpush.msra.mxu0 %v3524
        %3585 = vmatpush.msra.mxu0 %v3522
        %3586 = vmatpush.msra.mxu0 %v3520
        %3587 = vmatpush.msra.mxu0 %v3518
        %3588 = vmatmul.f32.gmra.mxu0 %v456
        %v3589 = vpop.f32.mrf.mxu0
        %v3590 = vadd.f32 0.0, %v3589
        %3591 = vmatmul.f32.gmra.mxu0 %v457
        %v3592 = vpop.f32.mrf.mxu0
        %v3593 = vadd.f32 0.0, %v3592
        %3594 = vdwg.mxu0
        %v3595 = vsub.f32 %v3567, %v3189
        %v3596 = vsub.f32 %v3590, %v3212
        %v3597 = vsub.f32 %v3570, %v3192
        %v3598 = vsub.f32 %v3593, %v3215
        %v3599 = vmul.f32 %v3595, %v3595
        %v3600 = vmul.f32 %v3596, %v3596
        %v3601 = vmul.f32 %v3597, %v3597
        %v3602 = vmul.f32 %v3598, %v3598
        %v3603 = vadd.f32 %v3599, %v3601
        %v3604 = vrot.slane %v3603, 4
        %v3605 = vadd.f32 %v3603, %v3604
        %v3606 = vrot.slane %v3605, 2
        %v3607 = vadd.f32 %v3605, %v3606
        %v3608 = vrot.slane %v3607, 1
        %v3609 = vadd.f32 %v3607, %v3608
        %v3610 = vadd.f32 %v3600, %v3602
        %v3611 = vrot.slane %v3610, 4
        %v3612 = vadd.f32 %v3610, %v3611
        %v3613 = vrot.slane %v3612, 2
        %v3614 = vadd.f32 %v3612, %v3613
        %v3615 = vrot.slane %v3614, 1
        %v3616 = vadd.f32 %v3614, %v3615
        %v3617 = vadd.f32 %v2920, %v3609
        %v3618 = vadd.f32 %v2921, %v3616
        %3619 = vmatpush.msra.mxu0 0.0
        %3620 = vmatpush.msra.mxu0 0.0
        %3621 = vmatpush.msra.mxu0 0.0
        %3622 = vmatpush.msra.mxu0 0.0
        %3623 = vmatpush.msra.mxu0 0.0
        %3624 = vmatpush.msra.mxu0 0.0
        %3625 = vmatpush.msra.mxu0 0.0
        %3626 = vmatpush.msra.mxu0 0.0
        %3627 = vmatpush.msra.mxu0 0.0
        %3628 = vmatpush.msra.mxu0 0.0
        %3629 = vmatpush.msra.mxu0 0.0
        %3630 = vmatpush.msra.mxu0 0.0
        %3631 = vmatpush.msra.mxu0 0.0
        %3632 = vmatpush.msra.mxu0 0.0
        %3633 = vmatpush.msra.mxu0 %v3570
        %3634 = vmatpush.msra.mxu0 %v3567
        %3635 = vmatmul.f32.gmra.mxu0 %v1507
        %v3636 = vpop.f32.mrf.mxu0
        %v3637 = vadd.f32 %v1490, %v3636
        %3638 = vmatmul.f32.gmra.mxu0 %v1509
        %v3639 = vpop.f32.mrf.mxu0
        %v3640 = vadd.f32 %v1495, %v3639
        %3641 = vmatmul.f32.gmra.mxu0 %v1511
        %v3642 = vpop.f32.mrf.mxu0
        %v3643 = vadd.f32 %v1500, %v3642
        %3644 = vmatmul.f32.gmra.mxu0 %v1513
        %v3645 = vpop.f32.mrf.mxu0
        %v3646 = vadd.f32 %v1505, %v3645
        %3647 = vdwg.mxu0
        %3648 = vmatpush.msra.mxu0 0.0
        %3649 = vmatpush.msra.mxu0 0.0
        %3650 = vmatpush.msra.mxu0 0.0
        %3651 = vmatpush.msra.mxu0 0.0
        %3652 = vmatpush.msra.mxu0 0.0
        %3653 = vmatpush.msra.mxu0 0.0
        %3654 = vmatpush.msra.mxu0 0.0
        %3655 = vmatpush.msra.mxu0 0.0
        %3656 = vmatpush.msra.mxu0 0.0
        %3657 = vmatpush.msra.mxu0 0.0
        %3658 = vmatpush.msra.mxu0 0.0
        %3659 = vmatpush.msra.mxu0 0.0
        %3660 = vmatpush.msra.mxu0 0.0
        %3661 = vmatpush.msra.mxu0 0.0
        %3662 = vmatpush.msra.mxu0 %v3593
        %3663 = vmatpush.msra.mxu0 %v3590
        %3664 = vmatmul.f32.gmra.mxu0 %v1507
        %v3665 = vpop.f32.mrf.mxu0
        %v3666 = vadd.f32 %v1490, %v3665
        %3667 = vmatmul.f32.gmra.mxu0 %v1509
        %v3668 = vpop.f32.mrf.mxu0
        %v3669 = vadd.f32 %v1495, %v3668
        %3670 = vmatmul.f32.gmra.mxu0 %v1511
        %v3671 = vpop.f32.mrf.mxu0
        %v3672 = vadd.f32 %v1500, %v3671
        %3673 = vmatmul.f32.gmra.mxu0 %v1513
        %v3674 = vpop.f32.mrf.mxu0
        %v3675 = vadd.f32 %v1505, %v3674
        %3676 = vdwg.mxu0
        %v3677 = vmax.f32 %v3637, 0.0
        %v3678 = vmax.f32 %v3666, 0.0
        %v3679 = vmax.f32 %v3640, 0.0
        %v3680 = vmax.f32 %v3669, 0.0
        %v3681 = vmax.f32 %v3643, 0.0
        %v3682 = vmax.f32 %v3672, 0.0
        %v3683 = vmax.f32 %v3646, 0.0
        %v3684 = vmax.f32 %v3675, 0.0
        %3685 = vmatpush.msra.mxu0 0.0
        %3686 = vmatpush.msra.mxu0 0.0
        %3687 = vmatpush.msra.mxu0 0.0
        %3688 = vmatpush.msra.mxu0 0.0
        %3689 = vmatpush.msra.mxu0 0.0
        %3690 = vmatpush.msra.mxu0 0.0
        %3691 = vmatpush.msra.mxu0 0.0
        %3692 = vmatpush.msra.mxu0 0.0
        %3693 = vmatpush.msra.mxu0 0.0
        %3694 = vmatpush.msra.mxu0 0.0
        %3695 = vmatpush.msra.mxu0 0.0
        %3696 = vmatpush.msra.mxu0 0.0
        %3697 = vmatpush.msra.mxu0 %v3683
        %3698 = vmatpush.msra.mxu0 %v3681
        %3699 = vmatpush.msra.mxu0 %v3679
        %3700 = vmatpush.msra.mxu0 %v3677
        %3701 = vmatmul.f32.gmra.mxu0 %v1586
        %v3702 = vpop.f32.mrf.mxu0
        %v3703 = vadd.f32 %v1584, %v3702
        %3704 = vdwg.mxu0
        %3705 = vmatpush.msra.mxu0 0.0
        %3706 = vmatpush.msra.mxu0 0.0
        %3707 = vmatpush.msra.mxu0 0.0
        %3708 = vmatpush.msra.mxu0 0.0
        %3709 = vmatpush.msra.mxu0 0.0
        %3710 = vmatpush.msra.mxu0 0.0
        %3711 = vmatpush.msra.mxu0 0.0
        %3712 = vmatpush.msra.mxu0 0.0
        %3713 = vmatpush.msra.mxu0 0.0
        %3714 = vmatpush.msra.mxu0 0.0
        %3715 = vmatpush.msra.mxu0 0.0
        %3716 = vmatpush.msra.mxu0 0.0
        %3717 = vmatpush.msra.mxu0 %v3684
        %3718 = vmatpush.msra.mxu0 %v3682
        %3719 = vmatpush.msra.mxu0 %v3680
        %3720 = vmatpush.msra.mxu0 %v3678
        %3721 = vmatmul.f32.gmra.mxu0 %v1586
        %v3722 = vpop.f32.mrf.mxu0
        %v3723 = vadd.f32 %v1584, %v3722
        %3724 = vdwg.mxu0
        %v3727 = vrot.slane %v3703, 4
        %v3728 = vrot.slane %v3723, 4
        %3731 = vst [vmem:[%s398 + $0x10] sm:$0xf0] %v3727
        %3732 = vst [vmem:[%s398 + $0x18] sm:$0xf0] %v3728
        %v3734 = vperm.slane %v3138, 0
        %v3735 = vperm.slane %v3138, 1
        %v3738 = vmul.f32 %v716, %v3734
        %v3739 = vmul.f32 %v716, %v3735
        %v3740 = vmul.f32 %v720, %v3734
        %v3741 = vmul.f32 %v720, %v3735
        %v3742 = vmul.f32 %v724, %v3734
        %v3743 = vmul.f32 %v724, %v3735
        %v3744 = vmul.f32 %v728, %v3734
        %v3745 = vmul.f32 %v728, %v3735
        %v3746 = vadd.f32 %v590, %v3738
        %v3747 = vadd.f32 %v591, %v3739
        %v3748 = vadd.f32 %v592, %v3740
        %v3749 = vadd.f32 %v593, %v3741
        %v3750 = vadd.f32 %v594, %v3742
        %v3751 = vadd.f32 %v595, %v3743
        %v3752 = vadd.f32 %v596, %v3744
        %v3753 = vadd.f32 %v597, %v3745
        %v3754 = vmax.f32 %v3746, 0.0
        %v3755 = vmax.f32 %v3747, 0.0
        %v3756 = vmax.f32 %v3748, 0.0
        %v3757 = vmax.f32 %v3749, 0.0
        %v3758 = vmax.f32 %v3750, 0.0
        %v3759 = vmax.f32 %v3751, 0.0
        %v3760 = vmax.f32 %v3752, 0.0
        %v3761 = vmax.f32 %v3753, 0.0
        %v3762 = vmul.f32 %v761, %v3754
        %v3763 = vmul.f32 %v761, %v3755
        %v3764 = vmul.f32 %v765, %v3756
        %v3765 = vmul.f32 %v765, %v3757
        %v3766 = vmul.f32 %v769, %v3758
        %v3767 = vmul.f32 %v769, %v3759
        %v3768 = vmul.f32 %v773, %v3760
        %v3769 = vmul.f32 %v773, %v3761
        %v3770 = vadd.f32 %v3762, %v3764
        %v3771 = vadd.f32 %v3770, %v3766
        %v3772 = vadd.f32 %v3771, %v3768
        %v3773 = vrot.slane %v3772, 4
        %v3774 = vadd.f32 %v3772, %v3773
        %v3775 = vrot.slane %v3774, 2
        %v3776 = vadd.f32 %v3774, %v3775
        %v3777 = vrot.slane %v3776, 1
        %v3778 = vadd.f32 %v3776, %v3777
        %v3779 = vadd.f32 %v3763, %v3765
        %v3780 = vadd.f32 %v3779, %v3767
        %v3781 = vadd.f32 %v3780, %v3769
        %v3782 = vrot.slane %v3781, 4
        %v3783 = vadd.f32 %v3781, %v3782
        %v3784 = vrot.slane %v3783, 2
        %v3785 = vadd.f32 %v3783, %v3784
        %v3786 = vrot.slane %v3785, 1
        %v3787 = vadd.f32 %v3785, %v3786
        %v3788 = vadd.f32 %v3778, %v803
        %v3789 = vadd.f32 %v3787, %v803
        %v3790 = vxor.u32 %v3788, 2147483648
        %v3791 = vxor.u32 %v3789, 2147483648
        %v3792 = vmul.f32 %v3790, 1.442695
        %v3793 = vpow.pop %v3792
        %v3794 = vmul.f32 %v3791, 1.442695
        %v3795 = vpow.pop %v3794
        %v3796 = vadd.f32 %v3793, 1.0
        %v3797 = vadd.f32 %v3795, 1.0
        %v3798 = vrcp.pop %v3796
        %v3799 = vmul.f32 %v3796, %v3798
        %v3800 = vsub.f32 1.0, %v3799
        %v3801 = vmul.f32 %v3798, %v3800
        %v3802 = vadd.f32 %v3798, %v3801
        %vm3803 = vweird.f32 %v3796
        %vm3804 = vweird.f32 %v3798
        %vm3805 = vmor %vm3803, %vm3804
        %v3806 = vsel %vm3805, %v3798, %v3802
        %v3807 = vand.u32 2147483647, %v3796
        %vm3808 = vcmp.eq.f32.partialorder %v3807, 8.507059e+37
        %v3809 = vand.u32 %v3796, 2147483648
        %v3810 = vor.u32 1.1754944e-38, %v3809
        %v3811 = vsel %vm3808, %v3810, %v3806
        %v3812 = vmul.f32 1.0, %v3811
        %v3813 = vrcp.pop %v3797
        %v3814 = vmul.f32 %v3797, %v3813
        %v3815 = vsub.f32 1.0, %v3814
        %v3816 = vmul.f32 %v3813, %v3815
        %v3817 = vadd.f32 %v3813, %v3816
        %vm3818 = vweird.f32 %v3797
        %vm3819 = vweird.f32 %v3813
        %vm3820 = vmor %vm3818, %vm3819
        %v3821 = vsel %vm3820, %v3813, %v3817
        %v3822 = vand.u32 2147483647, %v3797
        %vm3823 = vcmp.eq.f32.partialorder %v3822, 8.507059e+37
        %v3824 = vand.u32 %v3797, 2147483648
        %v3825 = vor.u32 1.1754944e-38, %v3824
        %v3826 = vsel %vm3823, %v3825, %v3821
        %v3827 = vmul.f32 1.0, %v3826
        %v3830 = vrot.slane %v3827, 7
        %v3831 = vsel %vm848, %v3812, %v3830
        %v3833 = vmul.f32 %v3138, %v3831
        %v3834 = vsub.f32 1.0, %v3812
        %v3835 = vsub.f32 1.0, %v3827
        %v3838 = vrot.slane %v3835, 7
        %v3839 = vsel %vm848, %v3834, %v3838
        %v3841 = vmul.f32 %v3138, %v3839
        %s3842 = scalar_lea.vmem %s420, 4
        %3843 = vst.msk [vmem:[%s3842] ss:$8 sm:$0x3] %vm863, %v3833
        %3844 = vst.msk [vmem:[%s3842] ss:$8 sm:$0x0] %vm863, %v3833
        %v3846 = vperm.slane %v3833, 0
        %v3847 = vperm.slane %v3833, 1
        %v3850 = vmul.f32 %v868, %v3846
        %v3851 = vmul.f32 %v868, %v3847
        %v3852 = vmul.f32 %v872, %v3846
        %v3853 = vmul.f32 %v872, %v3847
        %v3854 = vmul.f32 %v876, %v3846
        %v3855 = vmul.f32 %v876, %v3847
        %v3856 = vmul.f32 %v880, %v3846
        %v3857 = vmul.f32 %v880, %v3847
        %v3858 = vadd.f32 %v706, %v3850
        %v3859 = vadd.f32 %v707, %v3851
        %v3860 = vadd.f32 %v708, %v3852
        %v3861 = vadd.f32 %v709, %v3853
        %v3862 = vadd.f32 %v710, %v3854
        %v3863 = vadd.f32 %v711, %v3855
        %v3864 = vadd.f32 %v712, %v3856
        %v3865 = vadd.f32 %v713, %v3857
        %v3866 = vmax.f32 %v3858, 0.0
        %v3867 = vmax.f32 %v3859, 0.0
        %v3868 = vmax.f32 %v3860, 0.0
        %v3869 = vmax.f32 %v3861, 0.0
        %v3870 = vmax.f32 %v3862, 0.0
        %v3871 = vmax.f32 %v3863, 0.0
        %v3872 = vmax.f32 %v3864, 0.0
        %v3873 = vmax.f32 %v3865, 0.0
        %3874 = vmatpush.msra.mxu0 0.0
        %3875 = vmatpush.msra.mxu0 0.0
        %3876 = vmatpush.msra.mxu0 0.0
        %3877 = vmatpush.msra.mxu0 0.0
        %3878 = vmatpush.msra.mxu0 0.0
        %3879 = vmatpush.msra.mxu0 0.0
        %3880 = vmatpush.msra.mxu0 0.0
        %3881 = vmatpush.msra.mxu0 0.0
        %3882 = vmatpush.msra.mxu0 0.0
        %3883 = vmatpush.msra.mxu0 0.0
        %3884 = vmatpush.msra.mxu0 0.0
        %3885 = vmatpush.msra.mxu0 0.0
        %3886 = vmatpush.msra.mxu0 %v3872
        %3887 = vmatpush.msra.mxu0 %v3870
        %3888 = vmatpush.msra.mxu0 %v3868
        %3889 = vmatpush.msra.mxu0 %v3866
        %3890 = vmatmul.f32.gmra.mxu0 %v922
        %v3891 = vpop.f32.mrf.mxu0
        %v3892 = vadd.f32 %v914, %v3891
        %3893 = vmatmul.f32.gmra.mxu0 %v924
        %v3894 = vpop.f32.mrf.mxu0
        %v3895 = vadd.f32 %v919, %v3894
        %3896 = vdwg.mxu0
        %3897 = vmatpush.msra.mxu0 0.0
        %3898 = vmatpush.msra.mxu0 0.0
        %3899 = vmatpush.msra.mxu0 0.0
        %3900 = vmatpush.msra.mxu0 0.0
        %3901 = vmatpush.msra.mxu0 0.0
        %3902 = vmatpush.msra.mxu0 0.0
        %3903 = vmatpush.msra.mxu0 0.0
        %3904 = vmatpush.msra.mxu0 0.0
        %3905 = vmatpush.msra.mxu0 0.0
        %3906 = vmatpush.msra.mxu0 0.0
        %3907 = vmatpush.msra.mxu0 0.0
        %3908 = vmatpush.msra.mxu0 0.0
        %3909 = vmatpush.msra.mxu0 %v3873
        %3910 = vmatpush.msra.mxu0 %v3871
        %3911 = vmatpush.msra.mxu0 %v3869
        %3912 = vmatpush.msra.mxu0 %v3867
        %3913 = vmatmul.f32.gmra.mxu0 %v922
        %v3914 = vpop.f32.mrf.mxu0
        %v3915 = vadd.f32 %v914, %v3914
        %3916 = vmatmul.f32.gmra.mxu0 %v924
        %v3917 = vpop.f32.mrf.mxu0
        %v3918 = vadd.f32 %v919, %v3917
        %3919 = vdwg.mxu0
        %3920 = vmatpush.msra.mxu0 0.0
        %3921 = vmatpush.msra.mxu0 0.0
        %3922 = vmatpush.msra.mxu0 0.0
        %3923 = vmatpush.msra.mxu0 0.0
        %3924 = vmatpush.msra.mxu0 0.0
        %3925 = vmatpush.msra.mxu0 0.0
        %3926 = vmatpush.msra.mxu0 0.0
        %3927 = vmatpush.msra.mxu0 0.0
        %3928 = vmatpush.msra.mxu0 0.0
        %3929 = vmatpush.msra.mxu0 0.0
        %3930 = vmatpush.msra.mxu0 0.0
        %3931 = vmatpush.msra.mxu0 0.0
        %3932 = vmatpush.msra.mxu0 0.0
        %3933 = vmatpush.msra.mxu0 0.0
        %3934 = vmatpush.msra.mxu0 %v3895
        %3935 = vmatpush.msra.mxu0 %v3892
        %3936 = vmatmul.f32.gmra.mxu0 %v974
        %v3937 = vpop.f32.mrf.mxu0
        %v3938 = vadd.f32 0.0, %v3937
        %3939 = vmatmul.f32.gmra.mxu0 %v977
        %v3940 = vpop.f32.mrf.mxu0
        %v3941 = vadd.f32 0.0, %v3940
        %3942 = vmatmul.f32.gmra.mxu0 %v980
        %v3943 = vpop.f32.mrf.mxu0
        %v3944 = vadd.f32 0.0, %v3943
        %3945 = vmatmul.f32.gmra.mxu0 %v983
        %v3946 = vpop.f32.mrf.mxu0
        %v3947 = vadd.f32 0.0, %v3946
        %3948 = vmatmul.f32.gmra.mxu0 %v986
        %v3949 = vpop.f32.mrf.mxu0
        %v3950 = vadd.f32 0.0, %v3949
        %3951 = vmatmul.f32.gmra.mxu0 %v989
        %v3952 = vpop.f32.mrf.mxu0
        %v3953 = vadd.f32 0.0, %v3952
        %3954 = vmatmul.f32.gmra.mxu0 %v992
        %v3955 = vpop.f32.mrf.mxu0
        %v3956 = vadd.f32 0.0, %v3955
        %3957 = vmatmul.f32.gmra.mxu0 %v995
        %v3958 = vpop.f32.mrf.mxu0
        %v3959 = vadd.f32 0.0, %v3958
        %3960 = vmatmul.f32.gmra.mxu0 %v998
        %v3961 = vpop.f32.mrf.mxu0
        %v3962 = vadd.f32 0.0, %v3961
        %3963 = vmatmul.f32.gmra.mxu0 %v1001
        %v3964 = vpop.f32.mrf.mxu0
        %v3965 = vadd.f32 0.0, %v3964
        %3966 = vmatmul.f32.gmra.mxu0 %v1004
        %v3967 = vpop.f32.mrf.mxu0
        %v3968 = vadd.f32 0.0, %v3967
        %3969 = vmatmul.f32.gmra.mxu0 %v1007
        %v3970 = vpop.f32.mrf.mxu0
        %v3971 = vadd.f32 0.0, %v3970
        %3972 = vmatmul.f32.gmra.mxu0 %v1010
        %v3973 = vpop.f32.mrf.mxu0
        %v3974 = vadd.f32 0.0, %v3973
        %3975 = vmatmul.f32.gmra.mxu0 %v1013
        %v3976 = vpop.f32.mrf.mxu0
        %v3977 = vadd.f32 0.0, %v3976
        %3978 = vmatmul.f32.gmra.mxu0 %v1016
        %v3979 = vpop.f32.mrf.mxu0
        %v3980 = vadd.f32 0.0, %v3979
        %3981 = vmatmul.f32.gmra.mxu0 %v1019
        %v3982 = vpop.f32.mrf.mxu0
        %v3983 = vadd.f32 0.0, %v3982
        %3984 = vdwg.mxu0
        %3985 = vmatpush.msra.mxu0 0.0
        %3986 = vmatpush.msra.mxu0 0.0
        %3987 = vmatpush.msra.mxu0 0.0
        %3988 = vmatpush.msra.mxu0 0.0
        %3989 = vmatpush.msra.mxu0 0.0
        %3990 = vmatpush.msra.mxu0 0.0
        %3991 = vmatpush.msra.mxu0 0.0
        %3992 = vmatpush.msra.mxu0 0.0
        %3993 = vmatpush.msra.mxu0 0.0
        %3994 = vmatpush.msra.mxu0 0.0
        %3995 = vmatpush.msra.mxu0 0.0
        %3996 = vmatpush.msra.mxu0 0.0
        %3997 = vmatpush.msra.mxu0 0.0
        %3998 = vmatpush.msra.mxu0 0.0
        %3999 = vmatpush.msra.mxu0 %v3918
        %4000 = vmatpush.msra.mxu0 %v3915
        %4001 = vmatmul.f32.gmra.mxu0 %v974
        %v4002 = vpop.f32.mrf.mxu0
        %v4003 = vadd.f32 0.0, %v4002
        %4004 = vmatmul.f32.gmra.mxu0 %v977
        %v4005 = vpop.f32.mrf.mxu0
        %v4006 = vadd.f32 0.0, %v4005
        %4007 = vmatmul.f32.gmra.mxu0 %v980
        %v4008 = vpop.f32.mrf.mxu0
        %v4009 = vadd.f32 0.0, %v4008
        %4010 = vmatmul.f32.gmra.mxu0 %v983
        %v4011 = vpop.f32.mrf.mxu0
        %v4012 = vadd.f32 0.0, %v4011
        %4013 = vmatmul.f32.gmra.mxu0 %v986
        %v4014 = vpop.f32.mrf.mxu0
        %v4015 = vadd.f32 0.0, %v4014
        %4016 = vmatmul.f32.gmra.mxu0 %v989
        %v4017 = vpop.f32.mrf.mxu0
        %v4018 = vadd.f32 0.0, %v4017
        %4019 = vmatmul.f32.gmra.mxu0 %v992
        %v4020 = vpop.f32.mrf.mxu0
        %v4021 = vadd.f32 0.0, %v4020
        %4022 = vmatmul.f32.gmra.mxu0 %v995
        %v4023 = vpop.f32.mrf.mxu0
        %v4024 = vadd.f32 0.0, %v4023
        %4025 = vmatmul.f32.gmra.mxu0 %v998
        %v4026 = vpop.f32.mrf.mxu0
        %v4027 = vadd.f32 0.0, %v4026
        %4028 = vmatmul.f32.gmra.mxu0 %v1001
        %v4029 = vpop.f32.mrf.mxu0
        %v4030 = vadd.f32 0.0, %v4029
        %4031 = vmatmul.f32.gmra.mxu0 %v1004
        %v4032 = vpop.f32.mrf.mxu0
        %v4033 = vadd.f32 0.0, %v4032
        %4034 = vmatmul.f32.gmra.mxu0 %v1007
        %v4035 = vpop.f32.mrf.mxu0
        %v4036 = vadd.f32 0.0, %v4035
        %4037 = vmatmul.f32.gmra.mxu0 %v1010
        %v4038 = vpop.f32.mrf.mxu0
        %v4039 = vadd.f32 0.0, %v4038
        %4040 = vmatmul.f32.gmra.mxu0 %v1013
        %v4041 = vpop.f32.mrf.mxu0
        %v4042 = vadd.f32 0.0, %v4041
        %4043 = vmatmul.f32.gmra.mxu0 %v1016
        %v4044 = vpop.f32.mrf.mxu0
        %v4045 = vadd.f32 0.0, %v4044
        %4046 = vmatmul.f32.gmra.mxu0 %v1019
        %v4047 = vpop.f32.mrf.mxu0
        %v4048 = vadd.f32 0.0, %v4047
        %4049 = vdwg.mxu0
        %v4050 = vmul.f32 %v3938, 2.0
        %v4051 = vmul.f32 %v4003, 2.0
        %v4052 = vmul.f32 %v3941, 2.0
        %v4053 = vmul.f32 %v4006, 2.0
        %v4054 = vmul.f32 %v3944, 2.0
        %v4055 = vmul.f32 %v4009, 2.0
        %v4056 = vmul.f32 %v3947, 2.0
        %v4057 = vmul.f32 %v4012, 2.0
        %v4058 = vmul.f32 %v3950, 2.0
        %v4059 = vmul.f32 %v4015, 2.0
        %v4060 = vmul.f32 %v3953, 2.0
        %v4061 = vmul.f32 %v4018, 2.0
        %v4062 = vmul.f32 %v3956, 2.0
        %v4063 = vmul.f32 %v4021, 2.0
        %v4064 = vmul.f32 %v3959, 2.0
        %v4065 = vmul.f32 %v4024, 2.0
        %v4066 = vmul.f32 %v3962, 2.0
        %v4067 = vmul.f32 %v4027, 2.0
        %v4068 = vmul.f32 %v3965, 2.0
        %v4069 = vmul.f32 %v4030, 2.0
        %v4070 = vmul.f32 %v3968, 2.0
        %v4071 = vmul.f32 %v4033, 2.0
        %v4072 = vmul.f32 %v3971, 2.0
        %v4073 = vmul.f32 %v4036, 2.0
        %v4074 = vmul.f32 %v3974, 2.0
        %v4075 = vmul.f32 %v4039, 2.0
        %v4076 = vmul.f32 %v3977, 2.0
        %v4077 = vmul.f32 %v4042, 2.0
        %v4078 = vmul.f32 %v3980, 2.0
        %v4079 = vmul.f32 %v4045, 2.0
        %v4080 = vmul.f32 %v3983, 2.0
        %v4081 = vmul.f32 %v4048, 2.0
        %v4082 = vsub.f32 %v1185, %v4050
        %v4083 = vsub.f32 %v1185, %v4051
        %v4084 = vsub.f32 %v1189, %v4052
        %v4085 = vsub.f32 %v1189, %v4053
        %v4086 = vsub.f32 %v1193, %v4054
        %v4087 = vsub.f32 %v1193, %v4055
        %v4088 = vsub.f32 %v1197, %v4056
        %v4089 = vsub.f32 %v1197, %v4057
        %v4090 = vsub.f32 %v1201, %v4058
        %v4091 = vsub.f32 %v1201, %v4059
        %v4092 = vsub.f32 %v1205, %v4060
        %v4093 = vsub.f32 %v1205, %v4061
        %v4094 = vsub.f32 %v1209, %v4062
        %v4095 = vsub.f32 %v1209, %v4063
        %v4096 = vsub.f32 %v1213, %v4064
        %v4097 = vsub.f32 %v1213, %v4065
        %v4098 = vsub.f32 %v1217, %v4066
        %v4099 = vsub.f32 %v1217, %v4067
        %v4100 = vsub.f32 %v1221, %v4068
        %v4101 = vsub.f32 %v1221, %v4069
        %v4102 = vsub.f32 %v1225, %v4070
        %v4103 = vsub.f32 %v1225, %v4071
        %v4104 = vsub.f32 %v1229, %v4072
        %v4105 = vsub.f32 %v1229, %v4073
        %v4106 = vsub.f32 %v1233, %v4074
        %v4107 = vsub.f32 %v1233, %v4075
        %v4108 = vsub.f32 %v1237, %v4076
        %v4109 = vsub.f32 %v1237, %v4077
        %v4110 = vsub.f32 %v1241, %v4078
        %v4111 = vsub.f32 %v1241, %v4079
        %v4112 = vsub.f32 %v1245, %v4080
        %v4113 = vsub.f32 %v1245, %v4081
        %v4114 = vmin.f32 %v4082, %v4086
        %v4115 = vmin.f32 %v4084, %v4088
        %v4116 = vmin.f32 %v4114, %v4090
        %v4117 = vmin.f32 %v4115, %v4092
        %v4118 = vmin.f32 %v4116, %v4094
        %v4119 = vmin.f32 %v4117, %v4096
        %v4120 = vmin.f32 %v4118, %v4098
        %v4121 = vmin.f32 %v4119, %v4100
        %v4122 = vmin.f32 %v4120, %v4102
        %v4123 = vmin.f32 %v4121, %v4104
        %v4124 = vmin.f32 %v4122, %v4106
        %v4125 = vmin.f32 %v4123, %v4108
        %v4126 = vmin.f32 %v4124, %v4110
        %v4127 = vmin.f32 %v4125, %v4112
        %v4128 = vmin.f32 %v4126, %v4127
        %v4129 = vrot.slane %v4128, 4
        %v4130 = vmin.f32 %v4128, %v4129
        %v4131 = vrot.slane %v4130, 2
        %v4132 = vmin.f32 %v4130, %v4131
        %v4133 = vrot.slane %v4132, 1
        %v4134 = vmin.f32 %v4132, %v4133
        %v4135 = vmin.f32 %v4083, %v4087
        %v4136 = vmin.f32 %v4085, %v4089
        %v4137 = vmin.f32 %v4135, %v4091
        %v4138 = vmin.f32 %v4136, %v4093
        %v4139 = vmin.f32 %v4137, %v4095
        %v4140 = vmin.f32 %v4138, %v4097
        %v4141 = vmin.f32 %v4139, %v4099
        %v4142 = vmin.f32 %v4140, %v4101
        %v4143 = vmin.f32 %v4141, %v4103
        %v4144 = vmin.f32 %v4142, %v4105
        %v4145 = vmin.f32 %v4143, %v4107
        %v4146 = vmin.f32 %v4144, %v4109
        %v4147 = vmin.f32 %v4145, %v4111
        %v4148 = vmin.f32 %v4146, %v4113
        %v4149 = vmin.f32 %v4147, %v4148
        %v4150 = vrot.slane %v4149, 4
        %v4151 = vmin.f32 %v4149, %v4150
        %v4152 = vrot.slane %v4151, 2
        %v4153 = vmin.f32 %v4151, %v4152
        %v4154 = vrot.slane %v4153, 1
        %v4155 = vmin.f32 %v4153, %v4154
        %vm4156 = vcmp.eq.f32.partialorder %v4082, %v4134
        %vm4157 = vcmp.eq.f32.partialorder %v4083, %v4155
        %vm4158 = vcmp.eq.f32.partialorder %v4084, %v4134
        %vm4159 = vcmp.eq.f32.partialorder %v4085, %v4155
        %vm4160 = vcmp.eq.f32.partialorder %v4086, %v4134
        %vm4161 = vcmp.eq.f32.partialorder %v4087, %v4155
        %vm4162 = vcmp.eq.f32.partialorder %v4088, %v4134
        %vm4163 = vcmp.eq.f32.partialorder %v4089, %v4155
        %vm4164 = vcmp.eq.f32.partialorder %v4090, %v4134
        %vm4165 = vcmp.eq.f32.partialorder %v4091, %v4155
        %vm4166 = vcmp.eq.f32.partialorder %v4092, %v4134
        %vm4167 = vcmp.eq.f32.partialorder %v4093, %v4155
        %vm4168 = vcmp.eq.f32.partialorder %v4094, %v4134
        %vm4169 = vcmp.eq.f32.partialorder %v4095, %v4155
        %vm4170 = vcmp.eq.f32.partialorder %v4096, %v4134
        %vm4171 = vcmp.eq.f32.partialorder %v4097, %v4155
        %vm4172 = vcmp.eq.f32.partialorder %v4098, %v4134
        %vm4173 = vcmp.eq.f32.partialorder %v4099, %v4155
        %vm4174 = vcmp.eq.f32.partialorder %v4100, %v4134
        %vm4175 = vcmp.eq.f32.partialorder %v4101, %v4155
        %vm4176 = vcmp.eq.f32.partialorder %v4102, %v4134
        %vm4177 = vcmp.eq.f32.partialorder %v4103, %v4155
        %vm4178 = vcmp.eq.f32.partialorder %v4104, %v4134
        %vm4179 = vcmp.eq.f32.partialorder %v4105, %v4155
        %vm4180 = vcmp.eq.f32.partialorder %v4106, %v4134
        %vm4181 = vcmp.eq.f32.partialorder %v4107, %v4155
        %vm4182 = vcmp.eq.f32.partialorder %v4108, %v4134
        %vm4183 = vcmp.eq.f32.partialorder %v4109, %v4155
        %vm4184 = vcmp.eq.f32.partialorder %v4110, %v4134
        %vm4185 = vcmp.eq.f32.partialorder %v4111, %v4155
        %vm4186 = vcmp.eq.f32.partialorder %v4112, %v4134
        %vm4187 = vcmp.eq.f32.partialorder %v4113, %v4155
        %v4188 = vsel %vm4156, 1, 0
        %v4189 = vsel %vm4157, 1, 0
        %v4190 = vsel %vm4158, 1, 0
        %v4191 = vsel %vm4159, 1, 0
        %v4192 = vsel %vm4160, 1, 0
        %v4193 = vsel %vm4161, 1, 0
        %v4194 = vsel %vm4162, 1, 0
        %v4195 = vsel %vm4163, 1, 0
        %v4196 = vsel %vm4164, 1, 0
        %v4197 = vsel %vm4165, 1, 0
        %v4198 = vsel %vm4166, 1, 0
        %v4199 = vsel %vm4167, 1, 0
        %v4200 = vsel %vm4168, 1, 0
        %v4201 = vsel %vm4169, 1, 0
        %v4202 = vsel %vm4170, 1, 0
        %v4203 = vsel %vm4171, 1, 0
        %v4204 = vsel %vm4172, 1, 0
        %v4205 = vsel %vm4173, 1, 0
        %v4206 = vsel %vm4174, 1, 0
        %v4207 = vsel %vm4175, 1, 0
        %v4208 = vsel %vm4176, 1, 0
        %v4209 = vsel %vm4177, 1, 0
        %v4210 = vsel %vm4178, 1, 0
        %v4211 = vsel %vm4179, 1, 0
        %v4212 = vsel %vm4180, 1, 0
        %v4213 = vsel %vm4181, 1, 0
        %v4214 = vsel %vm4182, 1, 0
        %v4215 = vsel %vm4183, 1, 0
        %v4216 = vsel %vm4184, 1, 0
        %v4217 = vsel %vm4185, 1, 0
        %v4218 = vsel %vm4186, 1, 0
        %v4219 = vsel %vm4187, 1, 0
        %v4220 = vcvt.s32.f32 %v4188
        %v4221 = vcvt.s32.f32 %v4189
        %v4222 = vcvt.s32.f32 %v4190
        %v4223 = vcvt.s32.f32 %v4191
        %v4224 = vcvt.s32.f32 %v4192
        %v4225 = vcvt.s32.f32 %v4193
        %v4226 = vcvt.s32.f32 %v4194
        %v4227 = vcvt.s32.f32 %v4195
        %v4228 = vcvt.s32.f32 %v4196
        %v4229 = vcvt.s32.f32 %v4197
        %v4230 = vcvt.s32.f32 %v4198
        %v4231 = vcvt.s32.f32 %v4199
        %v4232 = vcvt.s32.f32 %v4200
        %v4233 = vcvt.s32.f32 %v4201
        %v4234 = vcvt.s32.f32 %v4202
        %v4235 = vcvt.s32.f32 %v4203
        %v4236 = vcvt.s32.f32 %v4204
        %v4237 = vcvt.s32.f32 %v4205
        %v4238 = vcvt.s32.f32 %v4206
        %v4239 = vcvt.s32.f32 %v4207
        %v4240 = vcvt.s32.f32 %v4208
        %v4241 = vcvt.s32.f32 %v4209
        %v4242 = vcvt.s32.f32 %v4210
        %v4243 = vcvt.s32.f32 %v4211
        %v4244 = vcvt.s32.f32 %v4212
        %v4245 = vcvt.s32.f32 %v4213
        %v4246 = vcvt.s32.f32 %v4214
        %v4247 = vcvt.s32.f32 %v4215
        %v4248 = vcvt.s32.f32 %v4216
        %v4249 = vcvt.s32.f32 %v4217
        %v4250 = vcvt.s32.f32 %v4218
        %v4251 = vcvt.s32.f32 %v4219
        %4252 = vmatpush.msra.mxu0 %v4250
        %4253 = vmatpush.msra.mxu0 %v4248
        %4254 = vmatpush.msra.mxu0 %v4246
        %4255 = vmatpush.msra.mxu0 %v4244
        %4256 = vmatpush.msra.mxu0 %v4242
        %4257 = vmatpush.msra.mxu0 %v4240
        %4258 = vmatpush.msra.mxu0 %v4238
        %4259 = vmatpush.msra.mxu0 %v4236
        %4260 = vmatpush.msra.mxu0 %v4234
        %4261 = vmatpush.msra.mxu0 %v4232
        %4262 = vmatpush.msra.mxu0 %v4230
        %4263 = vmatpush.msra.mxu0 %v4228
        %4264 = vmatpush.msra.mxu0 %v4226
        %4265 = vmatpush.msra.mxu0 %v4224
        %4266 = vmatpush.msra.mxu0 %v4222
        %4267 = vmatpush.msra.mxu0 %v4220
        %4268 = vmatmul.f32.gmra.mxu0 %v456
        %v4269 = vpop.f32.mrf.mxu0
        %v4270 = vadd.f32 0.0, %v4269
        %4271 = vmatmul.f32.gmra.mxu0 %v457
        %v4272 = vpop.f32.mrf.mxu0
        %v4273 = vadd.f32 0.0, %v4272
        %4274 = vdwg.mxu0
        %4275 = vmatpush.msra.mxu0 %v4251
        %4276 = vmatpush.msra.mxu0 %v4249
        %4277 = vmatpush.msra.mxu0 %v4247
        %4278 = vmatpush.msra.mxu0 %v4245
        %4279 = vmatpush.msra.mxu0 %v4243
        %4280 = vmatpush.msra.mxu0 %v4241
        %4281 = vmatpush.msra.mxu0 %v4239
        %4282 = vmatpush.msra.mxu0 %v4237
        %4283 = vmatpush.msra.mxu0 %v4235
        %4284 = vmatpush.msra.mxu0 %v4233
        %4285 = vmatpush.msra.mxu0 %v4231
        %4286 = vmatpush.msra.mxu0 %v4229
        %4287 = vmatpush.msra.mxu0 %v4227
        %4288 = vmatpush.msra.mxu0 %v4225
        %4289 = vmatpush.msra.mxu0 %v4223
        %4290 = vmatpush.msra.mxu0 %v4221
        %4291 = vmatmul.f32.gmra.mxu0 %v456
        %v4292 = vpop.f32.mrf.mxu0
        %v4293 = vadd.f32 0.0, %v4292
        %4294 = vmatmul.f32.gmra.mxu0 %v457
        %v4295 = vpop.f32.mrf.mxu0
        %v4296 = vadd.f32 0.0, %v4295
        %4297 = vdwg.mxu0
        %v4298 = vsub.f32 %v4270, %v3892
        %v4299 = vsub.f32 %v4293, %v3915
        %v4300 = vsub.f32 %v4273, %v3895
        %v4301 = vsub.f32 %v4296, %v3918
        %v4302 = vmul.f32 %v4298, %v4298
        %v4303 = vmul.f32 %v4299, %v4299
        %v4304 = vmul.f32 %v4300, %v4300
        %v4305 = vmul.f32 %v4301, %v4301
        %v4306 = vadd.f32 %v4302, %v4304
        %v4307 = vrot.slane %v4306, 4
        %v4308 = vadd.f32 %v4306, %v4307
        %v4309 = vrot.slane %v4308, 2
        %v4310 = vadd.f32 %v4308, %v4309
        %v4311 = vrot.slane %v4310, 1
        %v4312 = vadd.f32 %v4310, %v4311
        %v4313 = vadd.f32 %v4303, %v4305
        %v4314 = vrot.slane %v4313, 4
        %v4315 = vadd.f32 %v4313, %v4314
        %v4316 = vrot.slane %v4315, 2
        %v4317 = vadd.f32 %v4315, %v4316
        %v4318 = vrot.slane %v4317, 1
        %v4319 = vadd.f32 %v4317, %v4318
        %v4320 = vadd.f32 %v3617, %v4312
        %v4321 = vadd.f32 %v3618, %v4319
        %4322 = vmatpush.msra.mxu0 0.0
        %4323 = vmatpush.msra.mxu0 0.0
        %4324 = vmatpush.msra.mxu0 0.0
        %4325 = vmatpush.msra.mxu0 0.0
        %4326 = vmatpush.msra.mxu0 0.0
        %4327 = vmatpush.msra.mxu0 0.0
        %4328 = vmatpush.msra.mxu0 0.0
        %4329 = vmatpush.msra.mxu0 0.0
        %4330 = vmatpush.msra.mxu0 0.0
        %4331 = vmatpush.msra.mxu0 0.0
        %4332 = vmatpush.msra.mxu0 0.0
        %4333 = vmatpush.msra.mxu0 0.0
        %4334 = vmatpush.msra.mxu0 0.0
        %4335 = vmatpush.msra.mxu0 0.0
        %4336 = vmatpush.msra.mxu0 %v4273
        %4337 = vmatpush.msra.mxu0 %v4270
        %4338 = vmatmul.f32.gmra.mxu0 %v1507
        %v4339 = vpop.f32.mrf.mxu0
        %v4340 = vadd.f32 %v1490, %v4339
        %4341 = vmatmul.f32.gmra.mxu0 %v1509
        %v4342 = vpop.f32.mrf.mxu0
        %v4343 = vadd.f32 %v1495, %v4342
        %4344 = vmatmul.f32.gmra.mxu0 %v1511
        %v4345 = vpop.f32.mrf.mxu0
        %v4346 = vadd.f32 %v1500, %v4345
        %4347 = vmatmul.f32.gmra.mxu0 %v1513
        %v4348 = vpop.f32.mrf.mxu0
        %v4349 = vadd.f32 %v1505, %v4348
        %4350 = vdwg.mxu0
        %4351 = vmatpush.msra.mxu0 0.0
        %4352 = vmatpush.msra.mxu0 0.0
        %4353 = vmatpush.msra.mxu0 0.0
        %4354 = vmatpush.msra.mxu0 0.0
        %4355 = vmatpush.msra.mxu0 0.0
        %4356 = vmatpush.msra.mxu0 0.0
        %4357 = vmatpush.msra.mxu0 0.0
        %4358 = vmatpush.msra.mxu0 0.0
        %4359 = vmatpush.msra.mxu0 0.0
        %4360 = vmatpush.msra.mxu0 0.0
        %4361 = vmatpush.msra.mxu0 0.0
        %4362 = vmatpush.msra.mxu0 0.0
        %4363 = vmatpush.msra.mxu0 0.0
        %4364 = vmatpush.msra.mxu0 0.0
        %4365 = vmatpush.msra.mxu0 %v4296
        %4366 = vmatpush.msra.mxu0 %v4293
        %4367 = vmatmul.f32.gmra.mxu0 %v1507
        %v4368 = vpop.f32.mrf.mxu0
        %v4369 = vadd.f32 %v1490, %v4368
        %4370 = vmatmul.f32.gmra.mxu0 %v1509
        %v4371 = vpop.f32.mrf.mxu0
        %v4372 = vadd.f32 %v1495, %v4371
        %4373 = vmatmul.f32.gmra.mxu0 %v1511
        %v4374 = vpop.f32.mrf.mxu0
        %v4375 = vadd.f32 %v1500, %v4374
        %4376 = vmatmul.f32.gmra.mxu0 %v1513
        %v4377 = vpop.f32.mrf.mxu0
        %v4378 = vadd.f32 %v1505, %v4377
        %4379 = vdwg.mxu0
        %v4380 = vmax.f32 %v4340, 0.0
        %v4381 = vmax.f32 %v4369, 0.0
        %v4382 = vmax.f32 %v4343, 0.0
        %v4383 = vmax.f32 %v4372, 0.0
        %v4384 = vmax.f32 %v4346, 0.0
        %v4385 = vmax.f32 %v4375, 0.0
        %v4386 = vmax.f32 %v4349, 0.0
        %v4387 = vmax.f32 %v4378, 0.0
        %4388 = vmatpush.msra.mxu0 0.0
        %4389 = vmatpush.msra.mxu0 0.0
        %4390 = vmatpush.msra.mxu0 0.0
        %4391 = vmatpush.msra.mxu0 0.0
        %4392 = vmatpush.msra.mxu0 0.0
        %4393 = vmatpush.msra.mxu0 0.0
        %4394 = vmatpush.msra.mxu0 0.0
        %4395 = vmatpush.msra.mxu0 0.0
        %4396 = vmatpush.msra.mxu0 0.0
        %4397 = vmatpush.msra.mxu0 0.0
        %4398 = vmatpush.msra.mxu0 0.0
        %4399 = vmatpush.msra.mxu0 0.0
        %4400 = vmatpush.msra.mxu0 %v4386
        %4401 = vmatpush.msra.mxu0 %v4384
        %4402 = vmatpush.msra.mxu0 %v4382
        %4403 = vmatpush.msra.mxu0 %v4380
        %4404 = vmatmul.f32.gmra.mxu0 %v1586
        %v4405 = vpop.f32.mrf.mxu0
        %v4406 = vadd.f32 %v1584, %v4405
        %4407 = vdwg.mxu0
        %4408 = vmatpush.msra.mxu0 0.0
        %4409 = vmatpush.msra.mxu0 0.0
        %4410 = vmatpush.msra.mxu0 0.0
        %4411 = vmatpush.msra.mxu0 0.0
        %4412 = vmatpush.msra.mxu0 0.0
        %4413 = vmatpush.msra.mxu0 0.0
        %4414 = vmatpush.msra.mxu0 0.0
        %4415 = vmatpush.msra.mxu0 0.0
        %4416 = vmatpush.msra.mxu0 0.0
        %4417 = vmatpush.msra.mxu0 0.0
        %4418 = vmatpush.msra.mxu0 0.0
        %4419 = vmatpush.msra.mxu0 0.0
        %4420 = vmatpush.msra.mxu0 %v4387
        %4421 = vmatpush.msra.mxu0 %v4385
        %4422 = vmatpush.msra.mxu0 %v4383
        %4423 = vmatpush.msra.mxu0 %v4381
        %4424 = vmatmul.f32.gmra.mxu0 %v1586
        %v4425 = vpop.f32.mrf.mxu0
        %v4426 = vadd.f32 %v1584, %v4425
        %4427 = vdwg.mxu0
        %4428 = vst [vmem:[%s398 + $0x20] sm:$0xf] %v4406
        %4429 = vst [vmem:[%s398 + $0x28] sm:$0xf] %v4426
        %v4431 = vperm.slane %v3841, 0
        %v4432 = vperm.slane %v3841, 1
        %v4435 = vmul.f32 %v716, %v4431
        %v4436 = vmul.f32 %v716, %v4432
        %v4437 = vmul.f32 %v720, %v4431
        %v4438 = vmul.f32 %v720, %v4432
        %v4439 = vmul.f32 %v724, %v4431
        %v4440 = vmul.f32 %v724, %v4432
        %v4441 = vmul.f32 %v728, %v4431
        %v4442 = vmul.f32 %v728, %v4432
        %v4443 = vadd.f32 %v590, %v4435
        %v4444 = vadd.f32 %v591, %v4436
        %v4445 = vadd.f32 %v592, %v4437
        %v4446 = vadd.f32 %v593, %v4438
        %v4447 = vadd.f32 %v594, %v4439
        %v4448 = vadd.f32 %v595, %v4440
        %v4449 = vadd.f32 %v596, %v4441
        %v4450 = vadd.f32 %v597, %v4442
        %v4451 = vmax.f32 %v4443, 0.0
        %v4452 = vmax.f32 %v4444, 0.0
        %v4453 = vmax.f32 %v4445, 0.0
        %v4454 = vmax.f32 %v4446, 0.0
        %v4455 = vmax.f32 %v4447, 0.0
        %v4456 = vmax.f32 %v4448, 0.0
        %v4457 = vmax.f32 %v4449, 0.0
        %v4458 = vmax.f32 %v4450, 0.0
        %v4459 = vmul.f32 %v761, %v4451
        %v4460 = vmul.f32 %v761, %v4452
        %v4461 = vmul.f32 %v765, %v4453
        %v4462 = vmul.f32 %v765, %v4454
        %v4463 = vmul.f32 %v769, %v4455
        %v4464 = vmul.f32 %v769, %v4456
        %v4465 = vmul.f32 %v773, %v4457
        %v4466 = vmul.f32 %v773, %v4458
        %v4467 = vadd.f32 %v4459, %v4461
        %v4468 = vadd.f32 %v4467, %v4463
        %v4469 = vadd.f32 %v4468, %v4465
        %v4470 = vrot.slane %v4469, 4
        %v4471 = vadd.f32 %v4469, %v4470
        %v4472 = vrot.slane %v4471, 2
        %v4473 = vadd.f32 %v4471, %v4472
        %v4474 = vrot.slane %v4473, 1
        %v4475 = vadd.f32 %v4473, %v4474
        %v4476 = vadd.f32 %v4460, %v4462
        %v4477 = vadd.f32 %v4476, %v4464
        %v4478 = vadd.f32 %v4477, %v4466
        %v4479 = vrot.slane %v4478, 4
        %v4480 = vadd.f32 %v4478, %v4479
        %v4481 = vrot.slane %v4480, 2
        %v4482 = vadd.f32 %v4480, %v4481
        %v4483 = vrot.slane %v4482, 1
        %v4484 = vadd.f32 %v4482, %v4483
        %v4485 = vadd.f32 %v4475, %v803
        %v4486 = vadd.f32 %v4484, %v803
        %v4487 = vxor.u32 %v4485, 2147483648
        %v4488 = vxor.u32 %v4486, 2147483648
        %v4489 = vmul.f32 %v4487, 1.442695
        %v4490 = vpow.pop %v4489
        %v4491 = vmul.f32 %v4488, 1.442695
        %v4492 = vpow.pop %v4491
        %v4493 = vadd.f32 %v4490, 1.0
        %v4494 = vadd.f32 %v4492, 1.0
        %v4495 = vrcp.pop %v4493
        %v4496 = vmul.f32 %v4493, %v4495
        %v4497 = vsub.f32 1.0, %v4496
        %v4498 = vmul.f32 %v4495, %v4497
        %v4499 = vadd.f32 %v4495, %v4498
        %vm4500 = vweird.f32 %v4493
        %vm4501 = vweird.f32 %v4495
        %vm4502 = vmor %vm4500, %vm4501
        %v4503 = vsel %vm4502, %v4495, %v4499
        %v4504 = vand.u32 2147483647, %v4493
        %vm4505 = vcmp.eq.f32.partialorder %v4504, 8.507059e+37
        %v4506 = vand.u32 %v4493, 2147483648
        %v4507 = vor.u32 1.1754944e-38, %v4506
        %v4508 = vsel %vm4505, %v4507, %v4503
        %v4509 = vmul.f32 1.0, %v4508
        %v4510 = vrcp.pop %v4494
        %v4511 = vmul.f32 %v4494, %v4510
        %v4512 = vsub.f32 1.0, %v4511
        %v4513 = vmul.f32 %v4510, %v4512
        %v4514 = vadd.f32 %v4510, %v4513
        %vm4515 = vweird.f32 %v4494
        %vm4516 = vweird.f32 %v4510
        %vm4517 = vmor %vm4515, %vm4516
        %v4518 = vsel %vm4517, %v4510, %v4514
        %v4519 = vand.u32 2147483647, %v4494
        %vm4520 = vcmp.eq.f32.partialorder %v4519, 8.507059e+37
        %v4521 = vand.u32 %v4494, 2147483648
        %v4522 = vor.u32 1.1754944e-38, %v4521
        %v4523 = vsel %vm4520, %v4522, %v4518
        %v4524 = vmul.f32 1.0, %v4523
        %v4527 = vrot.slane %v4524, 7
        %v4528 = vsel %vm848, %v4509, %v4527
        %v4530 = vmul.f32 %v3841, %v4528
        %v4531 = vsub.f32 1.0, %v4509
        %v4532 = vsub.f32 1.0, %v4524
        %v4535 = vrot.slane %v4532, 7
        %v4536 = vsel %vm848, %v4531, %v4535
        %v4538 = vmul.f32 %v3841, %v4536
        %s4539 = scalar_lea.vmem %s420, 5
        %4540 = vst.msk [vmem:[%s4539] ss:$8 sm:$0x3] %vm863, %v4530
        %4541 = vst.msk [vmem:[%s4539] ss:$8 sm:$0x0] %vm863, %v4530
        %v4543 = vperm.slane %v4530, 0
        %v4544 = vperm.slane %v4530, 1
        %v4547 = vmul.f32 %v868, %v4543
        %v4548 = vmul.f32 %v868, %v4544
        %v4549 = vmul.f32 %v872, %v4543
        %v4550 = vmul.f32 %v872, %v4544
        %v4551 = vmul.f32 %v876, %v4543
        %v4552 = vmul.f32 %v876, %v4544
        %v4553 = vmul.f32 %v880, %v4543
        %v4554 = vmul.f32 %v880, %v4544
        %v4555 = vadd.f32 %v706, %v4547
        %v4556 = vadd.f32 %v707, %v4548
        %v4557 = vadd.f32 %v708, %v4549
        %v4558 = vadd.f32 %v709, %v4550
        %v4559 = vadd.f32 %v710, %v4551
        %v4560 = vadd.f32 %v711, %v4552
        %v4561 = vadd.f32 %v712, %v4553
        %v4562 = vadd.f32 %v713, %v4554
        %v4563 = vmax.f32 %v4555, 0.0
        %v4564 = vmax.f32 %v4556, 0.0
        %v4565 = vmax.f32 %v4557, 0.0
        %v4566 = vmax.f32 %v4558, 0.0
        %v4567 = vmax.f32 %v4559, 0.0
        %v4568 = vmax.f32 %v4560, 0.0
        %v4569 = vmax.f32 %v4561, 0.0
        %v4570 = vmax.f32 %v4562, 0.0
        %4571 = vmatpush.msra.mxu0 0.0
        %4572 = vmatpush.msra.mxu0 0.0
        %4573 = vmatpush.msra.mxu0 0.0
        %4574 = vmatpush.msra.mxu0 0.0
        %4575 = vmatpush.msra.mxu0 0.0
        %4576 = vmatpush.msra.mxu0 0.0
        %4577 = vmatpush.msra.mxu0 0.0
        %4578 = vmatpush.msra.mxu0 0.0
        %4579 = vmatpush.msra.mxu0 0.0
        %4580 = vmatpush.msra.mxu0 0.0
        %4581 = vmatpush.msra.mxu0 0.0
        %4582 = vmatpush.msra.mxu0 0.0
        %4583 = vmatpush.msra.mxu0 %v4569
        %4584 = vmatpush.msra.mxu0 %v4567
        %4585 = vmatpush.msra.mxu0 %v4565
        %4586 = vmatpush.msra.mxu0 %v4563
        %4587 = vmatmul.f32.gmra.mxu0 %v922
        %v4588 = vpop.f32.mrf.mxu0
        %v4589 = vadd.f32 %v914, %v4588
        %4590 = vmatmul.f32.gmra.mxu0 %v924
        %v4591 = vpop.f32.mrf.mxu0
        %v4592 = vadd.f32 %v919, %v4591
        %4593 = vdwg.mxu0
        %4594 = vmatpush.msra.mxu0 0.0
        %4595 = vmatpush.msra.mxu0 0.0
        %4596 = vmatpush.msra.mxu0 0.0
        %4597 = vmatpush.msra.mxu0 0.0
        %4598 = vmatpush.msra.mxu0 0.0
        %4599 = vmatpush.msra.mxu0 0.0
        %4600 = vmatpush.msra.mxu0 0.0
        %4601 = vmatpush.msra.mxu0 0.0
        %4602 = vmatpush.msra.mxu0 0.0
        %4603 = vmatpush.msra.mxu0 0.0
        %4604 = vmatpush.msra.mxu0 0.0
        %4605 = vmatpush.msra.mxu0 0.0
        %4606 = vmatpush.msra.mxu0 %v4570
        %4607 = vmatpush.msra.mxu0 %v4568
        %4608 = vmatpush.msra.mxu0 %v4566
        %4609 = vmatpush.msra.mxu0 %v4564
        %4610 = vmatmul.f32.gmra.mxu0 %v922
        %v4611 = vpop.f32.mrf.mxu0
        %v4612 = vadd.f32 %v914, %v4611
        %4613 = vmatmul.f32.gmra.mxu0 %v924
        %v4614 = vpop.f32.mrf.mxu0
        %v4615 = vadd.f32 %v919, %v4614
        %4616 = vdwg.mxu0
        %4617 = vmatpush.msra.mxu0 0.0
        %4618 = vmatpush.msra.mxu0 0.0
        %4619 = vmatpush.msra.mxu0 0.0
        %4620 = vmatpush.msra.mxu0 0.0
        %4621 = vmatpush.msra.mxu0 0.0
        %4622 = vmatpush.msra.mxu0 0.0
        %4623 = vmatpush.msra.mxu0 0.0
        %4624 = vmatpush.msra.mxu0 0.0
        %4625 = vmatpush.msra.mxu0 0.0
        %4626 = vmatpush.msra.mxu0 0.0
        %4627 = vmatpush.msra.mxu0 0.0
        %4628 = vmatpush.msra.mxu0 0.0
        %4629 = vmatpush.msra.mxu0 0.0
        %4630 = vmatpush.msra.mxu0 0.0
        %4631 = vmatpush.msra.mxu0 %v4592
        %4632 = vmatpush.msra.mxu0 %v4589
        %4633 = vmatmul.f32.gmra.mxu0 %v974
        %v4634 = vpop.f32.mrf.mxu0
        %v4635 = vadd.f32 0.0, %v4634
        %4636 = vmatmul.f32.gmra.mxu0 %v977
        %v4637 = vpop.f32.mrf.mxu0
        %v4638 = vadd.f32 0.0, %v4637
        %4639 = vmatmul.f32.gmra.mxu0 %v980
        %v4640 = vpop.f32.mrf.mxu0
        %v4641 = vadd.f32 0.0, %v4640
        %4642 = vmatmul.f32.gmra.mxu0 %v983
        %v4643 = vpop.f32.mrf.mxu0
        %v4644 = vadd.f32 0.0, %v4643
        %4645 = vmatmul.f32.gmra.mxu0 %v986
        %v4646 = vpop.f32.mrf.mxu0
        %v4647 = vadd.f32 0.0, %v4646
        %4648 = vmatmul.f32.gmra.mxu0 %v989
        %v4649 = vpop.f32.mrf.mxu0
        %v4650 = vadd.f32 0.0, %v4649
        %4651 = vmatmul.f32.gmra.mxu0 %v992
        %v4652 = vpop.f32.mrf.mxu0
        %v4653 = vadd.f32 0.0, %v4652
        %4654 = vmatmul.f32.gmra.mxu0 %v995
        %v4655 = vpop.f32.mrf.mxu0
        %v4656 = vadd.f32 0.0, %v4655
        %4657 = vmatmul.f32.gmra.mxu0 %v998
        %v4658 = vpop.f32.mrf.mxu0
        %v4659 = vadd.f32 0.0, %v4658
        %4660 = vmatmul.f32.gmra.mxu0 %v1001
        %v4661 = vpop.f32.mrf.mxu0
        %v4662 = vadd.f32 0.0, %v4661
        %4663 = vmatmul.f32.gmra.mxu0 %v1004
        %v4664 = vpop.f32.mrf.mxu0
        %v4665 = vadd.f32 0.0, %v4664
        %4666 = vmatmul.f32.gmra.mxu0 %v1007
        %v4667 = vpop.f32.mrf.mxu0
        %v4668 = vadd.f32 0.0, %v4667
        %4669 = vmatmul.f32.gmra.mxu0 %v1010
        %v4670 = vpop.f32.mrf.mxu0
        %v4671 = vadd.f32 0.0, %v4670
        %4672 = vmatmul.f32.gmra.mxu0 %v1013
        %v4673 = vpop.f32.mrf.mxu0
        %v4674 = vadd.f32 0.0, %v4673
        %4675 = vmatmul.f32.gmra.mxu0 %v1016
        %v4676 = vpop.f32.mrf.mxu0
        %v4677 = vadd.f32 0.0, %v4676
        %4678 = vmatmul.f32.gmra.mxu0 %v1019
        %v4679 = vpop.f32.mrf.mxu0
        %v4680 = vadd.f32 0.0, %v4679
        %4681 = vdwg.mxu0
        %4682 = vmatpush.msra.mxu0 0.0
        %4683 = vmatpush.msra.mxu0 0.0
        %4684 = vmatpush.msra.mxu0 0.0
        %4685 = vmatpush.msra.mxu0 0.0
        %4686 = vmatpush.msra.mxu0 0.0
        %4687 = vmatpush.msra.mxu0 0.0
        %4688 = vmatpush.msra.mxu0 0.0
        %4689 = vmatpush.msra.mxu0 0.0
        %4690 = vmatpush.msra.mxu0 0.0
        %4691 = vmatpush.msra.mxu0 0.0
        %4692 = vmatpush.msra.mxu0 0.0
        %4693 = vmatpush.msra.mxu0 0.0
        %4694 = vmatpush.msra.mxu0 0.0
        %4695 = vmatpush.msra.mxu0 0.0
        %4696 = vmatpush.msra.mxu0 %v4615
        %4697 = vmatpush.msra.mxu0 %v4612
        %4698 = vmatmul.f32.gmra.mxu0 %v974
        %v4699 = vpop.f32.mrf.mxu0
        %v4700 = vadd.f32 0.0, %v4699
        %4701 = vmatmul.f32.gmra.mxu0 %v977
        %v4702 = vpop.f32.mrf.mxu0
        %v4703 = vadd.f32 0.0, %v4702
        %4704 = vmatmul.f32.gmra.mxu0 %v980
        %v4705 = vpop.f32.mrf.mxu0
        %v4706 = vadd.f32 0.0, %v4705
        %4707 = vmatmul.f32.gmra.mxu0 %v983
        %v4708 = vpop.f32.mrf.mxu0
        %v4709 = vadd.f32 0.0, %v4708
        %4710 = vmatmul.f32.gmra.mxu0 %v986
        %v4711 = vpop.f32.mrf.mxu0
        %v4712 = vadd.f32 0.0, %v4711
        %4713 = vmatmul.f32.gmra.mxu0 %v989
        %v4714 = vpop.f32.mrf.mxu0
        %v4715 = vadd.f32 0.0, %v4714
        %4716 = vmatmul.f32.gmra.mxu0 %v992
        %v4717 = vpop.f32.mrf.mxu0
        %v4718 = vadd.f32 0.0, %v4717
        %4719 = vmatmul.f32.gmra.mxu0 %v995
        %v4720 = vpop.f32.mrf.mxu0
        %v4721 = vadd.f32 0.0, %v4720
        %4722 = vmatmul.f32.gmra.mxu0 %v998
        %v4723 = vpop.f32.mrf.mxu0
        %v4724 = vadd.f32 0.0, %v4723
        %4725 = vmatmul.f32.gmra.mxu0 %v1001
        %v4726 = vpop.f32.mrf.mxu0
        %v4727 = vadd.f32 0.0, %v4726
        %4728 = vmatmul.f32.gmra.mxu0 %v1004
        %v4729 = vpop.f32.mrf.mxu0
        %v4730 = vadd.f32 0.0, %v4729
        %4731 = vmatmul.f32.gmra.mxu0 %v1007
        %v4732 = vpop.f32.mrf.mxu0
        %v4733 = vadd.f32 0.0, %v4732
        %4734 = vmatmul.f32.gmra.mxu0 %v1010
        %v4735 = vpop.f32.mrf.mxu0
        %v4736 = vadd.f32 0.0, %v4735
        %4737 = vmatmul.f32.gmra.mxu0 %v1013
        %v4738 = vpop.f32.mrf.mxu0
        %v4739 = vadd.f32 0.0, %v4738
        %4740 = vmatmul.f32.gmra.mxu0 %v1016
        %v4741 = vpop.f32.mrf.mxu0
        %v4742 = vadd.f32 0.0, %v4741
        %4743 = vmatmul.f32.gmra.mxu0 %v1019
        %v4744 = vpop.f32.mrf.mxu0
        %v4745 = vadd.f32 0.0, %v4744
        %4746 = vdwg.mxu0
        %v4747 = vmul.f32 %v4635, 2.0
        %v4748 = vmul.f32 %v4700, 2.0
        %v4749 = vmul.f32 %v4638, 2.0
        %v4750 = vmul.f32 %v4703, 2.0
        %v4751 = vmul.f32 %v4641, 2.0
        %v4752 = vmul.f32 %v4706, 2.0
        %v4753 = vmul.f32 %v4644, 2.0
        %v4754 = vmul.f32 %v4709, 2.0
        %v4755 = vmul.f32 %v4647, 2.0
        %v4756 = vmul.f32 %v4712, 2.0
        %v4757 = vmul.f32 %v4650, 2.0
        %v4758 = vmul.f32 %v4715, 2.0
        %v4759 = vmul.f32 %v4653, 2.0
        %v4760 = vmul.f32 %v4718, 2.0
        %v4761 = vmul.f32 %v4656, 2.0
        %v4762 = vmul.f32 %v4721, 2.0
        %v4763 = vmul.f32 %v4659, 2.0
        %v4764 = vmul.f32 %v4724, 2.0
        %v4765 = vmul.f32 %v4662, 2.0
        %v4766 = vmul.f32 %v4727, 2.0
        %v4767 = vmul.f32 %v4665, 2.0
        %v4768 = vmul.f32 %v4730, 2.0
        %v4769 = vmul.f32 %v4668, 2.0
        %v4770 = vmul.f32 %v4733, 2.0
        %v4771 = vmul.f32 %v4671, 2.0
        %v4772 = vmul.f32 %v4736, 2.0
        %v4773 = vmul.f32 %v4674, 2.0
        %v4774 = vmul.f32 %v4739, 2.0
        %v4775 = vmul.f32 %v4677, 2.0
        %v4776 = vmul.f32 %v4742, 2.0
        %v4777 = vmul.f32 %v4680, 2.0
        %v4778 = vmul.f32 %v4745, 2.0
        %v4779 = vsub.f32 %v1185, %v4747
        %v4780 = vsub.f32 %v1185, %v4748
        %v4781 = vsub.f32 %v1189, %v4749
        %v4782 = vsub.f32 %v1189, %v4750
        %v4783 = vsub.f32 %v1193, %v4751
        %v4784 = vsub.f32 %v1193, %v4752
        %v4785 = vsub.f32 %v1197, %v4753
        %v4786 = vsub.f32 %v1197, %v4754
        %v4787 = vsub.f32 %v1201, %v4755
        %v4788 = vsub.f32 %v1201, %v4756
        %v4789 = vsub.f32 %v1205, %v4757
        %v4790 = vsub.f32 %v1205, %v4758
        %v4791 = vsub.f32 %v1209, %v4759
        %v4792 = vsub.f32 %v1209, %v4760
        %v4793 = vsub.f32 %v1213, %v4761
        %v4794 = vsub.f32 %v1213, %v4762
        %v4795 = vsub.f32 %v1217, %v4763
        %v4796 = vsub.f32 %v1217, %v4764
        %v4797 = vsub.f32 %v1221, %v4765
        %v4798 = vsub.f32 %v1221, %v4766
        %v4799 = vsub.f32 %v1225, %v4767
        %v4800 = vsub.f32 %v1225, %v4768
        %v4801 = vsub.f32 %v1229, %v4769
        %v4802 = vsub.f32 %v1229, %v4770
        %v4803 = vsub.f32 %v1233, %v4771
        %v4804 = vsub.f32 %v1233, %v4772
        %v4805 = vsub.f32 %v1237, %v4773
        %v4806 = vsub.f32 %v1237, %v4774
        %v4807 = vsub.f32 %v1241, %v4775
        %v4808 = vsub.f32 %v1241, %v4776
        %v4809 = vsub.f32 %v1245, %v4777
        %v4810 = vsub.f32 %v1245, %v4778
        %v4811 = vmin.f32 %v4779, %v4783
        %v4812 = vmin.f32 %v4781, %v4785
        %v4813 = vmin.f32 %v4811, %v4787
        %v4814 = vmin.f32 %v4812, %v4789
        %v4815 = vmin.f32 %v4813, %v4791
        %v4816 = vmin.f32 %v4814, %v4793
        %v4817 = vmin.f32 %v4815, %v4795
        %v4818 = vmin.f32 %v4816, %v4797
        %v4819 = vmin.f32 %v4817, %v4799
        %v4820 = vmin.f32 %v4818, %v4801
        %v4821 = vmin.f32 %v4819, %v4803
        %v4822 = vmin.f32 %v4820, %v4805
        %v4823 = vmin.f32 %v4821, %v4807
        %v4824 = vmin.f32 %v4822, %v4809
        %v4825 = vmin.f32 %v4823, %v4824
        %v4826 = vrot.slane %v4825, 4
        %v4827 = vmin.f32 %v4825, %v4826
        %v4828 = vrot.slane %v4827, 2
        %v4829 = vmin.f32 %v4827, %v4828
        %v4830 = vrot.slane %v4829, 1
        %v4831 = vmin.f32 %v4829, %v4830
        %v4832 = vmin.f32 %v4780, %v4784
        %v4833 = vmin.f32 %v4782, %v4786
        %v4834 = vmin.f32 %v4832, %v4788
        %v4835 = vmin.f32 %v4833, %v4790
        %v4836 = vmin.f32 %v4834, %v4792
        %v4837 = vmin.f32 %v4835, %v4794
        %v4838 = vmin.f32 %v4836, %v4796
        %v4839 = vmin.f32 %v4837, %v4798
        %v4840 = vmin.f32 %v4838, %v4800
        %v4841 = vmin.f32 %v4839, %v4802
        %v4842 = vmin.f32 %v4840, %v4804
        %v4843 = vmin.f32 %v4841, %v4806
        %v4844 = vmin.f32 %v4842, %v4808
        %v4845 = vmin.f32 %v4843, %v4810
        %v4846 = vmin.f32 %v4844, %v4845
        %v4847 = vrot.slane %v4846, 4
        %v4848 = vmin.f32 %v4846, %v4847
        %v4849 = vrot.slane %v4848, 2
        %v4850 = vmin.f32 %v4848, %v4849
        %v4851 = vrot.slane %v4850, 1
        %v4852 = vmin.f32 %v4850, %v4851
        %vm4853 = vcmp.eq.f32.partialorder %v4779, %v4831
        %vm4854 = vcmp.eq.f32.partialorder %v4780, %v4852
        %vm4855 = vcmp.eq.f32.partialorder %v4781, %v4831
        %vm4856 = vcmp.eq.f32.partialorder %v4782, %v4852
        %vm4857 = vcmp.eq.f32.partialorder %v4783, %v4831
        %vm4858 = vcmp.eq.f32.partialorder %v4784, %v4852
        %vm4859 = vcmp.eq.f32.partialorder %v4785, %v4831
        %vm4860 = vcmp.eq.f32.partialorder %v4786, %v4852
        %vm4861 = vcmp.eq.f32.partialorder %v4787, %v4831
        %vm4862 = vcmp.eq.f32.partialorder %v4788, %v4852
        %vm4863 = vcmp.eq.f32.partialorder %v4789, %v4831
        %vm4864 = vcmp.eq.f32.partialorder %v4790, %v4852
        %vm4865 = vcmp.eq.f32.partialorder %v4791, %v4831
        %vm4866 = vcmp.eq.f32.partialorder %v4792, %v4852
        %vm4867 = vcmp.eq.f32.partialorder %v4793, %v4831
        %vm4868 = vcmp.eq.f32.partialorder %v4794, %v4852
        %vm4869 = vcmp.eq.f32.partialorder %v4795, %v4831
        %vm4870 = vcmp.eq.f32.partialorder %v4796, %v4852
        %vm4871 = vcmp.eq.f32.partialorder %v4797, %v4831
        %vm4872 = vcmp.eq.f32.partialorder %v4798, %v4852
        %vm4873 = vcmp.eq.f32.partialorder %v4799, %v4831
        %vm4874 = vcmp.eq.f32.partialorder %v4800, %v4852
        %vm4875 = vcmp.eq.f32.partialorder %v4801, %v4831
        %vm4876 = vcmp.eq.f32.partialorder %v4802, %v4852
        %vm4877 = vcmp.eq.f32.partialorder %v4803, %v4831
        %vm4878 = vcmp.eq.f32.partialorder %v4804, %v4852
        %vm4879 = vcmp.eq.f32.partialorder %v4805, %v4831
        %vm4880 = vcmp.eq.f32.partialorder %v4806, %v4852
        %vm4881 = vcmp.eq.f32.partialorder %v4807, %v4831
        %vm4882 = vcmp.eq.f32.partialorder %v4808, %v4852
        %vm4883 = vcmp.eq.f32.partialorder %v4809, %v4831
        %vm4884 = vcmp.eq.f32.partialorder %v4810, %v4852
        %v4885 = vsel %vm4853, 1, 0
        %v4886 = vsel %vm4854, 1, 0
        %v4887 = vsel %vm4855, 1, 0
        %v4888 = vsel %vm4856, 1, 0
        %v4889 = vsel %vm4857, 1, 0
        %v4890 = vsel %vm4858, 1, 0
        %v4891 = vsel %vm4859, 1, 0
        %v4892 = vsel %vm4860, 1, 0
        %v4893 = vsel %vm4861, 1, 0
        %v4894 = vsel %vm4862, 1, 0
        %v4895 = vsel %vm4863, 1, 0
        %v4896 = vsel %vm4864, 1, 0
        %v4897 = vsel %vm4865, 1, 0
        %v4898 = vsel %vm4866, 1, 0
        %v4899 = vsel %vm4867, 1, 0
        %v4900 = vsel %vm4868, 1, 0
        %v4901 = vsel %vm4869, 1, 0
        %v4902 = vsel %vm4870, 1, 0
        %v4903 = vsel %vm4871, 1, 0
        %v4904 = vsel %vm4872, 1, 0
        %v4905 = vsel %vm4873, 1, 0
        %v4906 = vsel %vm4874, 1, 0
        %v4907 = vsel %vm4875, 1, 0
        %v4908 = vsel %vm4876, 1, 0
        %v4909 = vsel %vm4877, 1, 0
        %v4910 = vsel %vm4878, 1, 0
        %v4911 = vsel %vm4879, 1, 0
        %v4912 = vsel %vm4880, 1, 0
        %v4913 = vsel %vm4881, 1, 0
        %v4914 = vsel %vm4882, 1, 0
        %v4915 = vsel %vm4883, 1, 0
        %v4916 = vsel %vm4884, 1, 0
        %v4917 = vcvt.s32.f32 %v4885
        %v4918 = vcvt.s32.f32 %v4886
        %v4919 = vcvt.s32.f32 %v4887
        %v4920 = vcvt.s32.f32 %v4888
        %v4921 = vcvt.s32.f32 %v4889
        %v4922 = vcvt.s32.f32 %v4890
        %v4923 = vcvt.s32.f32 %v4891
        %v4924 = vcvt.s32.f32 %v4892
        %v4925 = vcvt.s32.f32 %v4893
        %v4926 = vcvt.s32.f32 %v4894
        %v4927 = vcvt.s32.f32 %v4895
        %v4928 = vcvt.s32.f32 %v4896
        %v4929 = vcvt.s32.f32 %v4897
        %v4930 = vcvt.s32.f32 %v4898
        %v4931 = vcvt.s32.f32 %v4899
        %v4932 = vcvt.s32.f32 %v4900
        %v4933 = vcvt.s32.f32 %v4901
        %v4934 = vcvt.s32.f32 %v4902
        %v4935 = vcvt.s32.f32 %v4903
        %v4936 = vcvt.s32.f32 %v4904
        %v4937 = vcvt.s32.f32 %v4905
        %v4938 = vcvt.s32.f32 %v4906
        %v4939 = vcvt.s32.f32 %v4907
        %v4940 = vcvt.s32.f32 %v4908
        %v4941 = vcvt.s32.f32 %v4909
        %v4942 = vcvt.s32.f32 %v4910
        %v4943 = vcvt.s32.f32 %v4911
        %v4944 = vcvt.s32.f32 %v4912
        %v4945 = vcvt.s32.f32 %v4913
        %v4946 = vcvt.s32.f32 %v4914
        %v4947 = vcvt.s32.f32 %v4915
        %v4948 = vcvt.s32.f32 %v4916
        %4949 = vmatpush.msra.mxu0 %v4947
        %4950 = vmatpush.msra.mxu0 %v4945
        %4951 = vmatpush.msra.mxu0 %v4943
        %4952 = vmatpush.msra.mxu0 %v4941
        %4953 = vmatpush.msra.mxu0 %v4939
        %4954 = vmatpush.msra.mxu0 %v4937
        %4955 = vmatpush.msra.mxu0 %v4935
        %4956 = vmatpush.msra.mxu0 %v4933
        %4957 = vmatpush.msra.mxu0 %v4931
        %4958 = vmatpush.msra.mxu0 %v4929
        %4959 = vmatpush.msra.mxu0 %v4927
        %4960 = vmatpush.msra.mxu0 %v4925
        %4961 = vmatpush.msra.mxu0 %v4923
        %4962 = vmatpush.msra.mxu0 %v4921
        %4963 = vmatpush.msra.mxu0 %v4919
        %4964 = vmatpush.msra.mxu0 %v4917
        %4965 = vmatmul.f32.gmra.mxu0 %v456
        %v4966 = vpop.f32.mrf.mxu0
        %v4967 = vadd.f32 0.0, %v4966
        %4968 = vmatmul.f32.gmra.mxu0 %v457
        %v4969 = vpop.f32.mrf.mxu0
        %v4970 = vadd.f32 0.0, %v4969
        %4971 = vdwg.mxu0
        %4972 = vmatpush.msra.mxu0 %v4948
        %4973 = vmatpush.msra.mxu0 %v4946
        %4974 = vmatpush.msra.mxu0 %v4944
        %4975 = vmatpush.msra.mxu0 %v4942
        %4976 = vmatpush.msra.mxu0 %v4940
        %4977 = vmatpush.msra.mxu0 %v4938
        %4978 = vmatpush.msra.mxu0 %v4936
        %4979 = vmatpush.msra.mxu0 %v4934
        %4980 = vmatpush.msra.mxu0 %v4932
        %4981 = vmatpush.msra.mxu0 %v4930
        %4982 = vmatpush.msra.mxu0 %v4928
        %4983 = vmatpush.msra.mxu0 %v4926
        %4984 = vmatpush.msra.mxu0 %v4924
        %4985 = vmatpush.msra.mxu0 %v4922
        %4986 = vmatpush.msra.mxu0 %v4920
        %4987 = vmatpush.msra.mxu0 %v4918
        %4988 = vmatmul.f32.gmra.mxu0 %v456
        %v4989 = vpop.f32.mrf.mxu0
        %v4990 = vadd.f32 0.0, %v4989
        %4991 = vmatmul.f32.gmra.mxu0 %v457
        %v4992 = vpop.f32.mrf.mxu0
        %v4993 = vadd.f32 0.0, %v4992
        %4994 = vdwg.mxu0
        %v4995 = vsub.f32 %v4967, %v4589
        %v4996 = vsub.f32 %v4990, %v4612
        %v4997 = vsub.f32 %v4970, %v4592
        %v4998 = vsub.f32 %v4993, %v4615
        %v4999 = vmul.f32 %v4995, %v4995
        %v5000 = vmul.f32 %v4996, %v4996
        %v5001 = vmul.f32 %v4997, %v4997
        %v5002 = vmul.f32 %v4998, %v4998
        %v5003 = vadd.f32 %v4999, %v5001
        %v5004 = vrot.slane %v5003, 4
        %v5005 = vadd.f32 %v5003, %v5004
        %v5006 = vrot.slane %v5005, 2
        %v5007 = vadd.f32 %v5005, %v5006
        %v5008 = vrot.slane %v5007, 1
        %v5009 = vadd.f32 %v5007, %v5008
        %v5010 = vadd.f32 %v5000, %v5002
        %v5011 = vrot.slane %v5010, 4
        %v5012 = vadd.f32 %v5010, %v5011
        %v5013 = vrot.slane %v5012, 2
        %v5014 = vadd.f32 %v5012, %v5013
        %v5015 = vrot.slane %v5014, 1
        %v5016 = vadd.f32 %v5014, %v5015
        %v5017 = vadd.f32 %v4320, %v5009
        %v5018 = vadd.f32 %v4321, %v5016
        %5019 = vmatpush.msra.mxu0 0.0
        %5020 = vmatpush.msra.mxu0 0.0
        %5021 = vmatpush.msra.mxu0 0.0
        %5022 = vmatpush.msra.mxu0 0.0
        %5023 = vmatpush.msra.mxu0 0.0
        %5024 = vmatpush.msra.mxu0 0.0
        %5025 = vmatpush.msra.mxu0 0.0
        %5026 = vmatpush.msra.mxu0 0.0
        %5027 = vmatpush.msra.mxu0 0.0
        %5028 = vmatpush.msra.mxu0 0.0
        %5029 = vmatpush.msra.mxu0 0.0
        %5030 = vmatpush.msra.mxu0 0.0
        %5031 = vmatpush.msra.mxu0 0.0
        %5032 = vmatpush.msra.mxu0 0.0
        %5033 = vmatpush.msra.mxu0 %v4970
        %5034 = vmatpush.msra.mxu0 %v4967
        %5035 = vmatmul.f32.gmra.mxu0 %v1507
        %v5036 = vpop.f32.mrf.mxu0
        %v5037 = vadd.f32 %v1490, %v5036
        %5038 = vmatmul.f32.gmra.mxu0 %v1509
        %v5039 = vpop.f32.mrf.mxu0
        %v5040 = vadd.f32 %v1495, %v5039
        %5041 = vmatmul.f32.gmra.mxu0 %v1511
        %v5042 = vpop.f32.mrf.mxu0
        %v5043 = vadd.f32 %v1500, %v5042
        %5044 = vmatmul.f32.gmra.mxu0 %v1513
        %v5045 = vpop.f32.mrf.mxu0
        %v5046 = vadd.f32 %v1505, %v5045
        %5047 = vdwg.mxu0
        %5048 = vmatpush.msra.mxu0 0.0
        %5049 = vmatpush.msra.mxu0 0.0
        %5050 = vmatpush.msra.mxu0 0.0
        %5051 = vmatpush.msra.mxu0 0.0
        %5052 = vmatpush.msra.mxu0 0.0
        %5053 = vmatpush.msra.mxu0 0.0
        %5054 = vmatpush.msra.mxu0 0.0
        %5055 = vmatpush.msra.mxu0 0.0
        %5056 = vmatpush.msra.mxu0 0.0
        %5057 = vmatpush.msra.mxu0 0.0
        %5058 = vmatpush.msra.mxu0 0.0
        %5059 = vmatpush.msra.mxu0 0.0
        %5060 = vmatpush.msra.mxu0 0.0
        %5061 = vmatpush.msra.mxu0 0.0
        %5062 = vmatpush.msra.mxu0 %v4993
        %5063 = vmatpush.msra.mxu0 %v4990
        %5064 = vmatmul.f32.gmra.mxu0 %v1507
        %v5065 = vpop.f32.mrf.mxu0
        %v5066 = vadd.f32 %v1490, %v5065
        %5067 = vmatmul.f32.gmra.mxu0 %v1509
        %v5068 = vpop.f32.mrf.mxu0
        %v5069 = vadd.f32 %v1495, %v5068
        %5070 = vmatmul.f32.gmra.mxu0 %v1511
        %v5071 = vpop.f32.mrf.mxu0
        %v5072 = vadd.f32 %v1500, %v5071
        %5073 = vmatmul.f32.gmra.mxu0 %v1513
        %v5074 = vpop.f32.mrf.mxu0
        %v5075 = vadd.f32 %v1505, %v5074
        %5076 = vdwg.mxu0
        %v5077 = vmax.f32 %v5037, 0.0
        %v5078 = vmax.f32 %v5066, 0.0
        %v5079 = vmax.f32 %v5040, 0.0
        %v5080 = vmax.f32 %v5069, 0.0
        %v5081 = vmax.f32 %v5043, 0.0
        %v5082 = vmax.f32 %v5072, 0.0
        %v5083 = vmax.f32 %v5046, 0.0
        %v5084 = vmax.f32 %v5075, 0.0
        %5085 = vmatpush.msra.mxu0 0.0
        %5086 = vmatpush.msra.mxu0 0.0
        %5087 = vmatpush.msra.mxu0 0.0
        %5088 = vmatpush.msra.mxu0 0.0
        %5089 = vmatpush.msra.mxu0 0.0
        %5090 = vmatpush.msra.mxu0 0.0
        %5091 = vmatpush.msra.mxu0 0.0
        %5092 = vmatpush.msra.mxu0 0.0
        %5093 = vmatpush.msra.mxu0 0.0
        %5094 = vmatpush.msra.mxu0 0.0
        %5095 = vmatpush.msra.mxu0 0.0
        %5096 = vmatpush.msra.mxu0 0.0
        %5097 = vmatpush.msra.mxu0 %v5083
        %5098 = vmatpush.msra.mxu0 %v5081
        %5099 = vmatpush.msra.mxu0 %v5079
        %5100 = vmatpush.msra.mxu0 %v5077
        %5101 = vmatmul.f32.gmra.mxu0 %v1586
        %v5102 = vpop.f32.mrf.mxu0
        %v5103 = vadd.f32 %v1584, %v5102
        %5104 = vdwg.mxu0
        %5105 = vmatpush.msra.mxu0 0.0
        %5106 = vmatpush.msra.mxu0 0.0
        %5107 = vmatpush.msra.mxu0 0.0
        %5108 = vmatpush.msra.mxu0 0.0
        %5109 = vmatpush.msra.mxu0 0.0
        %5110 = vmatpush.msra.mxu0 0.0
        %5111 = vmatpush.msra.mxu0 0.0
        %5112 = vmatpush.msra.mxu0 0.0
        %5113 = vmatpush.msra.mxu0 0.0
        %5114 = vmatpush.msra.mxu0 0.0
        %5115 = vmatpush.msra.mxu0 0.0
        %5116 = vmatpush.msra.mxu0 0.0
        %5117 = vmatpush.msra.mxu0 %v5084
        %5118 = vmatpush.msra.mxu0 %v5082
        %5119 = vmatpush.msra.mxu0 %v5080
        %5120 = vmatpush.msra.mxu0 %v5078
        %5121 = vmatmul.f32.gmra.mxu0 %v1586
        %v5122 = vpop.f32.mrf.mxu0
        %v5123 = vadd.f32 %v1584, %v5122
        %5124 = vdwg.mxu0
        %v5127 = vrot.slane %v5103, 4
        %v5128 = vrot.slane %v5123, 4
        %5131 = vst [vmem:[%s398 + $0x20] sm:$0xf0] %v5127
        %5132 = vst [vmem:[%s398 + $0x28] sm:$0xf0] %v5128
        %v5134 = vperm.slane %v4538, 0
        %v5135 = vperm.slane %v4538, 1
        %v5138 = vmul.f32 %v716, %v5134
        %v5139 = vmul.f32 %v716, %v5135
        %v5140 = vmul.f32 %v720, %v5134
        %v5141 = vmul.f32 %v720, %v5135
        %v5142 = vmul.f32 %v724, %v5134
        %v5143 = vmul.f32 %v724, %v5135
        %v5144 = vmul.f32 %v728, %v5134
        %v5145 = vmul.f32 %v728, %v5135
        %v5146 = vadd.f32 %v590, %v5138
        %v5147 = vadd.f32 %v591, %v5139
        %v5148 = vadd.f32 %v592, %v5140
        %v5149 = vadd.f32 %v593, %v5141
        %v5150 = vadd.f32 %v594, %v5142
        %v5151 = vadd.f32 %v595, %v5143
        %v5152 = vadd.f32 %v596, %v5144
        %v5153 = vadd.f32 %v597, %v5145
        %v5154 = vmax.f32 %v5146, 0.0
        %v5155 = vmax.f32 %v5147, 0.0
        %v5156 = vmax.f32 %v5148, 0.0
        %v5157 = vmax.f32 %v5149, 0.0
        %v5158 = vmax.f32 %v5150, 0.0
        %v5159 = vmax.f32 %v5151, 0.0
        %v5160 = vmax.f32 %v5152, 0.0
        %v5161 = vmax.f32 %v5153, 0.0
        %v5162 = vmul.f32 %v761, %v5154
        %v5163 = vmul.f32 %v761, %v5155
        %v5164 = vmul.f32 %v765, %v5156
        %v5165 = vmul.f32 %v765, %v5157
        %v5166 = vmul.f32 %v769, %v5158
        %v5167 = vmul.f32 %v769, %v5159
        %v5168 = vmul.f32 %v773, %v5160
        %v5169 = vmul.f32 %v773, %v5161
        %v5170 = vadd.f32 %v5162, %v5164
        %v5171 = vadd.f32 %v5170, %v5166
        %v5172 = vadd.f32 %v5171, %v5168
        %v5173 = vrot.slane %v5172, 4
        %v5174 = vadd.f32 %v5172, %v5173
        %v5175 = vrot.slane %v5174, 2
        %v5176 = vadd.f32 %v5174, %v5175
        %v5177 = vrot.slane %v5176, 1
        %v5178 = vadd.f32 %v5176, %v5177
        %v5179 = vadd.f32 %v5163, %v5165
        %v5180 = vadd.f32 %v5179, %v5167
        %v5181 = vadd.f32 %v5180, %v5169
        %v5182 = vrot.slane %v5181, 4
        %v5183 = vadd.f32 %v5181, %v5182
        %v5184 = vrot.slane %v5183, 2
        %v5185 = vadd.f32 %v5183, %v5184
        %v5186 = vrot.slane %v5185, 1
        %v5187 = vadd.f32 %v5185, %v5186
        %v5188 = vadd.f32 %v5178, %v803
        %v5189 = vadd.f32 %v5187, %v803
        %v5190 = vxor.u32 %v5188, 2147483648
        %v5191 = vxor.u32 %v5189, 2147483648
        %v5192 = vmul.f32 %v5190, 1.442695
        %v5193 = vpow.pop %v5192
        %v5194 = vmul.f32 %v5191, 1.442695
        %v5195 = vpow.pop %v5194
        %v5196 = vadd.f32 %v5193, 1.0
        %v5197 = vadd.f32 %v5195, 1.0
        %v5198 = vrcp.pop %v5196
        %v5199 = vmul.f32 %v5196, %v5198
        %v5200 = vsub.f32 1.0, %v5199
        %v5201 = vmul.f32 %v5198, %v5200
        %v5202 = vadd.f32 %v5198, %v5201
        %vm5203 = vweird.f32 %v5196
        %vm5204 = vweird.f32 %v5198
        %vm5205 = vmor %vm5203, %vm5204
        %v5206 = vsel %vm5205, %v5198, %v5202
        %v5207 = vand.u32 2147483647, %v5196
        %vm5208 = vcmp.eq.f32.partialorder %v5207, 8.507059e+37
        %v5209 = vand.u32 %v5196, 2147483648
        %v5210 = vor.u32 1.1754944e-38, %v5209
        %v5211 = vsel %vm5208, %v5210, %v5206
        %v5212 = vmul.f32 1.0, %v5211
        %v5213 = vrcp.pop %v5197
        %v5214 = vmul.f32 %v5197, %v5213
        %v5215 = vsub.f32 1.0, %v5214
        %v5216 = vmul.f32 %v5213, %v5215
        %v5217 = vadd.f32 %v5213, %v5216
        %vm5218 = vweird.f32 %v5197
        %vm5219 = vweird.f32 %v5213
        %vm5220 = vmor %vm5218, %vm5219
        %v5221 = vsel %vm5220, %v5213, %v5217
        %v5222 = vand.u32 2147483647, %v5197
        %vm5223 = vcmp.eq.f32.partialorder %v5222, 8.507059e+37
        %v5224 = vand.u32 %v5197, 2147483648
        %v5225 = vor.u32 1.1754944e-38, %v5224
        %v5226 = vsel %vm5223, %v5225, %v5221
        %v5227 = vmul.f32 1.0, %v5226
        %v5230 = vrot.slane %v5227, 7
        %v5231 = vsel %vm848, %v5212, %v5230
        %v5233 = vmul.f32 %v4538, %v5231
        %v5234 = vsub.f32 1.0, %v5212
        %v5235 = vsub.f32 1.0, %v5227
        %v5238 = vrot.slane %v5235, 7
        %v5239 = vsel %vm848, %v5234, %v5238
        %v5241 = vmul.f32 %v4538, %v5239
        %s5242 = scalar_lea.vmem %s420, 6
        %5243 = vst.msk [vmem:[%s5242] ss:$8 sm:$0x3] %vm863, %v5233
        %5244 = vst.msk [vmem:[%s5242] ss:$8 sm:$0x0] %vm863, %v5233
        %v5246 = vperm.slane %v5233, 0
        %v5247 = vperm.slane %v5233, 1
        %v5250 = vmul.f32 %v868, %v5246
        %v5251 = vmul.f32 %v868, %v5247
        %v5252 = vmul.f32 %v872, %v5246
        %v5253 = vmul.f32 %v872, %v5247
        %v5254 = vmul.f32 %v876, %v5246
        %v5255 = vmul.f32 %v876, %v5247
        %v5256 = vmul.f32 %v880, %v5246
        %v5257 = vmul.f32 %v880, %v5247
        %v5258 = vadd.f32 %v706, %v5250
        %v5259 = vadd.f32 %v707, %v5251
        %v5260 = vadd.f32 %v708, %v5252
        %v5261 = vadd.f32 %v709, %v5253
        %v5262 = vadd.f32 %v710, %v5254
        %v5263 = vadd.f32 %v711, %v5255
        %v5264 = vadd.f32 %v712, %v5256
        %v5265 = vadd.f32 %v713, %v5257
        %v5266 = vmax.f32 %v5258, 0.0
        %v5267 = vmax.f32 %v5259, 0.0
        %v5268 = vmax.f32 %v5260, 0.0
        %v5269 = vmax.f32 %v5261, 0.0
        %v5270 = vmax.f32 %v5262, 0.0
        %v5271 = vmax.f32 %v5263, 0.0
        %v5272 = vmax.f32 %v5264, 0.0
        %v5273 = vmax.f32 %v5265, 0.0
        %5274 = vmatpush.msra.mxu0 0.0
        %5275 = vmatpush.msra.mxu0 0.0
        %5276 = vmatpush.msra.mxu0 0.0
        %5277 = vmatpush.msra.mxu0 0.0
        %5278 = vmatpush.msra.mxu0 0.0
        %5279 = vmatpush.msra.mxu0 0.0
        %5280 = vmatpush.msra.mxu0 0.0
        %5281 = vmatpush.msra.mxu0 0.0
        %5282 = vmatpush.msra.mxu0 0.0
        %5283 = vmatpush.msra.mxu0 0.0
        %5284 = vmatpush.msra.mxu0 0.0
        %5285 = vmatpush.msra.mxu0 0.0
        %5286 = vmatpush.msra.mxu0 %v5272
        %5287 = vmatpush.msra.mxu0 %v5270
        %5288 = vmatpush.msra.mxu0 %v5268
        %5289 = vmatpush.msra.mxu0 %v5266
        %5290 = vmatmul.f32.gmra.mxu0 %v922
        %v5291 = vpop.f32.mrf.mxu0
        %v5292 = vadd.f32 %v914, %v5291
        %5293 = vmatmul.f32.gmra.mxu0 %v924
        %v5294 = vpop.f32.mrf.mxu0
        %v5295 = vadd.f32 %v919, %v5294
        %5296 = vdwg.mxu0
        %5297 = vmatpush.msra.mxu0 0.0
        %5298 = vmatpush.msra.mxu0 0.0
        %5299 = vmatpush.msra.mxu0 0.0
        %5300 = vmatpush.msra.mxu0 0.0
        %5301 = vmatpush.msra.mxu0 0.0
        %5302 = vmatpush.msra.mxu0 0.0
        %5303 = vmatpush.msra.mxu0 0.0
        %5304 = vmatpush.msra.mxu0 0.0
        %5305 = vmatpush.msra.mxu0 0.0
        %5306 = vmatpush.msra.mxu0 0.0
        %5307 = vmatpush.msra.mxu0 0.0
        %5308 = vmatpush.msra.mxu0 0.0
        %5309 = vmatpush.msra.mxu0 %v5273
        %5310 = vmatpush.msra.mxu0 %v5271
        %5311 = vmatpush.msra.mxu0 %v5269
        %5312 = vmatpush.msra.mxu0 %v5267
        %5313 = vmatmul.f32.gmra.mxu0 %v922
        %v5314 = vpop.f32.mrf.mxu0
        %v5315 = vadd.f32 %v914, %v5314
        %5316 = vmatmul.f32.gmra.mxu0 %v924
        %v5317 = vpop.f32.mrf.mxu0
        %v5318 = vadd.f32 %v919, %v5317
        %5319 = vdwg.mxu0
        %5320 = vmatpush.msra.mxu0 0.0
        %5321 = vmatpush.msra.mxu0 0.0
        %5322 = vmatpush.msra.mxu0 0.0
        %5323 = vmatpush.msra.mxu0 0.0
        %5324 = vmatpush.msra.mxu0 0.0
        %5325 = vmatpush.msra.mxu0 0.0
        %5326 = vmatpush.msra.mxu0 0.0
        %5327 = vmatpush.msra.mxu0 0.0
        %5328 = vmatpush.msra.mxu0 0.0
        %5329 = vmatpush.msra.mxu0 0.0
        %5330 = vmatpush.msra.mxu0 0.0
        %5331 = vmatpush.msra.mxu0 0.0
        %5332 = vmatpush.msra.mxu0 0.0
        %5333 = vmatpush.msra.mxu0 0.0
        %5334 = vmatpush.msra.mxu0 %v5295
        %5335 = vmatpush.msra.mxu0 %v5292
        %5336 = vmatmul.f32.gmra.mxu0 %v974
        %v5337 = vpop.f32.mrf.mxu0
        %v5338 = vadd.f32 0.0, %v5337
        %5339 = vmatmul.f32.gmra.mxu0 %v977
        %v5340 = vpop.f32.mrf.mxu0
        %v5341 = vadd.f32 0.0, %v5340
        %5342 = vmatmul.f32.gmra.mxu0 %v980
        %v5343 = vpop.f32.mrf.mxu0
        %v5344 = vadd.f32 0.0, %v5343
        %5345 = vmatmul.f32.gmra.mxu0 %v983
        %v5346 = vpop.f32.mrf.mxu0
        %v5347 = vadd.f32 0.0, %v5346
        %5348 = vmatmul.f32.gmra.mxu0 %v986
        %v5349 = vpop.f32.mrf.mxu0
        %v5350 = vadd.f32 0.0, %v5349
        %5351 = vmatmul.f32.gmra.mxu0 %v989
        %v5352 = vpop.f32.mrf.mxu0
        %v5353 = vadd.f32 0.0, %v5352
        %5354 = vmatmul.f32.gmra.mxu0 %v992
        %v5355 = vpop.f32.mrf.mxu0
        %v5356 = vadd.f32 0.0, %v5355
        %5357 = vmatmul.f32.gmra.mxu0 %v995
        %v5358 = vpop.f32.mrf.mxu0
        %v5359 = vadd.f32 0.0, %v5358
        %5360 = vmatmul.f32.gmra.mxu0 %v998
        %v5361 = vpop.f32.mrf.mxu0
        %v5362 = vadd.f32 0.0, %v5361
        %5363 = vmatmul.f32.gmra.mxu0 %v1001
        %v5364 = vpop.f32.mrf.mxu0
        %v5365 = vadd.f32 0.0, %v5364
        %5366 = vmatmul.f32.gmra.mxu0 %v1004
        %v5367 = vpop.f32.mrf.mxu0
        %v5368 = vadd.f32 0.0, %v5367
        %5369 = vmatmul.f32.gmra.mxu0 %v1007
        %v5370 = vpop.f32.mrf.mxu0
        %v5371 = vadd.f32 0.0, %v5370
        %5372 = vmatmul.f32.gmra.mxu0 %v1010
        %v5373 = vpop.f32.mrf.mxu0
        %v5374 = vadd.f32 0.0, %v5373
        %5375 = vmatmul.f32.gmra.mxu0 %v1013
        %v5376 = vpop.f32.mrf.mxu0
        %v5377 = vadd.f32 0.0, %v5376
        %5378 = vmatmul.f32.gmra.mxu0 %v1016
        %v5379 = vpop.f32.mrf.mxu0
        %v5380 = vadd.f32 0.0, %v5379
        %5381 = vmatmul.f32.gmra.mxu0 %v1019
        %v5382 = vpop.f32.mrf.mxu0
        %v5383 = vadd.f32 0.0, %v5382
        %5384 = vdwg.mxu0
        %5385 = vmatpush.msra.mxu0 0.0
        %5386 = vmatpush.msra.mxu0 0.0
        %5387 = vmatpush.msra.mxu0 0.0
        %5388 = vmatpush.msra.mxu0 0.0
        %5389 = vmatpush.msra.mxu0 0.0
        %5390 = vmatpush.msra.mxu0 0.0
        %5391 = vmatpush.msra.mxu0 0.0
        %5392 = vmatpush.msra.mxu0 0.0
        %5393 = vmatpush.msra.mxu0 0.0
        %5394 = vmatpush.msra.mxu0 0.0
        %5395 = vmatpush.msra.mxu0 0.0
        %5396 = vmatpush.msra.mxu0 0.0
        %5397 = vmatpush.msra.mxu0 0.0
        %5398 = vmatpush.msra.mxu0 0.0
        %5399 = vmatpush.msra.mxu0 %v5318
        %5400 = vmatpush.msra.mxu0 %v5315
        %5401 = vmatmul.f32.gmra.mxu0 %v974
        %v5402 = vpop.f32.mrf.mxu0
        %v5403 = vadd.f32 0.0, %v5402
        %5404 = vmatmul.f32.gmra.mxu0 %v977
        %v5405 = vpop.f32.mrf.mxu0
        %v5406 = vadd.f32 0.0, %v5405
        %5407 = vmatmul.f32.gmra.mxu0 %v980
        %v5408 = vpop.f32.mrf.mxu0
        %v5409 = vadd.f32 0.0, %v5408
        %5410 = vmatmul.f32.gmra.mxu0 %v983
        %v5411 = vpop.f32.mrf.mxu0
        %v5412 = vadd.f32 0.0, %v5411
        %5413 = vmatmul.f32.gmra.mxu0 %v986
        %v5414 = vpop.f32.mrf.mxu0
        %v5415 = vadd.f32 0.0, %v5414
        %5416 = vmatmul.f32.gmra.mxu0 %v989
        %v5417 = vpop.f32.mrf.mxu0
        %v5418 = vadd.f32 0.0, %v5417
        %5419 = vmatmul.f32.gmra.mxu0 %v992
        %v5420 = vpop.f32.mrf.mxu0
        %v5421 = vadd.f32 0.0, %v5420
        %5422 = vmatmul.f32.gmra.mxu0 %v995
        %v5423 = vpop.f32.mrf.mxu0
        %v5424 = vadd.f32 0.0, %v5423
        %5425 = vmatmul.f32.gmra.mxu0 %v998
        %v5426 = vpop.f32.mrf.mxu0
        %v5427 = vadd.f32 0.0, %v5426
        %5428 = vmatmul.f32.gmra.mxu0 %v1001
        %v5429 = vpop.f32.mrf.mxu0
        %v5430 = vadd.f32 0.0, %v5429
        %5431 = vmatmul.f32.gmra.mxu0 %v1004
        %v5432 = vpop.f32.mrf.mxu0
        %v5433 = vadd.f32 0.0, %v5432
        %5434 = vmatmul.f32.gmra.mxu0 %v1007
        %v5435 = vpop.f32.mrf.mxu0
        %v5436 = vadd.f32 0.0, %v5435
        %5437 = vmatmul.f32.gmra.mxu0 %v1010
        %v5438 = vpop.f32.mrf.mxu0
        %v5439 = vadd.f32 0.0, %v5438
        %5440 = vmatmul.f32.gmra.mxu0 %v1013
        %v5441 = vpop.f32.mrf.mxu0
        %v5442 = vadd.f32 0.0, %v5441
        %5443 = vmatmul.f32.gmra.mxu0 %v1016
        %v5444 = vpop.f32.mrf.mxu0
        %v5445 = vadd.f32 0.0, %v5444
        %5446 = vmatmul.f32.gmra.mxu0 %v1019
        %v5447 = vpop.f32.mrf.mxu0
        %v5448 = vadd.f32 0.0, %v5447
        %5449 = vdwg.mxu0
        %v5450 = vmul.f32 %v5338, 2.0
        %v5451 = vmul.f32 %v5403, 2.0
        %v5452 = vmul.f32 %v5341, 2.0
        %v5453 = vmul.f32 %v5406, 2.0
        %v5454 = vmul.f32 %v5344, 2.0
        %v5455 = vmul.f32 %v5409, 2.0
        %v5456 = vmul.f32 %v5347, 2.0
        %v5457 = vmul.f32 %v5412, 2.0
        %v5458 = vmul.f32 %v5350, 2.0
        %v5459 = vmul.f32 %v5415, 2.0
        %v5460 = vmul.f32 %v5353, 2.0
        %v5461 = vmul.f32 %v5418, 2.0
        %v5462 = vmul.f32 %v5356, 2.0
        %v5463 = vmul.f32 %v5421, 2.0
        %v5464 = vmul.f32 %v5359, 2.0
        %v5465 = vmul.f32 %v5424, 2.0
        %v5466 = vmul.f32 %v5362, 2.0
        %v5467 = vmul.f32 %v5427, 2.0
        %v5468 = vmul.f32 %v5365, 2.0
        %v5469 = vmul.f32 %v5430, 2.0
        %v5470 = vmul.f32 %v5368, 2.0
        %v5471 = vmul.f32 %v5433, 2.0
        %v5472 = vmul.f32 %v5371, 2.0
        %v5473 = vmul.f32 %v5436, 2.0
        %v5474 = vmul.f32 %v5374, 2.0
        %v5475 = vmul.f32 %v5439, 2.0
        %v5476 = vmul.f32 %v5377, 2.0
        %v5477 = vmul.f32 %v5442, 2.0
        %v5478 = vmul.f32 %v5380, 2.0
        %v5479 = vmul.f32 %v5445, 2.0
        %v5480 = vmul.f32 %v5383, 2.0
        %v5481 = vmul.f32 %v5448, 2.0
        %v5482 = vsub.f32 %v1185, %v5450
        %v5483 = vsub.f32 %v1185, %v5451
        %v5484 = vsub.f32 %v1189, %v5452
        %v5485 = vsub.f32 %v1189, %v5453
        %v5486 = vsub.f32 %v1193, %v5454
        %v5487 = vsub.f32 %v1193, %v5455
        %v5488 = vsub.f32 %v1197, %v5456
        %v5489 = vsub.f32 %v1197, %v5457
        %v5490 = vsub.f32 %v1201, %v5458
        %v5491 = vsub.f32 %v1201, %v5459
        %v5492 = vsub.f32 %v1205, %v5460
        %v5493 = vsub.f32 %v1205, %v5461
        %v5494 = vsub.f32 %v1209, %v5462
        %v5495 = vsub.f32 %v1209, %v5463
        %v5496 = vsub.f32 %v1213, %v5464
        %v5497 = vsub.f32 %v1213, %v5465
        %v5498 = vsub.f32 %v1217, %v5466
        %v5499 = vsub.f32 %v1217, %v5467
        %v5500 = vsub.f32 %v1221, %v5468
        %v5501 = vsub.f32 %v1221, %v5469
        %v5502 = vsub.f32 %v1225, %v5470
        %v5503 = vsub.f32 %v1225, %v5471
        %v5504 = vsub.f32 %v1229, %v5472
        %v5505 = vsub.f32 %v1229, %v5473
        %v5506 = vsub.f32 %v1233, %v5474
        %v5507 = vsub.f32 %v1233, %v5475
        %v5508 = vsub.f32 %v1237, %v5476
        %v5509 = vsub.f32 %v1237, %v5477
        %v5510 = vsub.f32 %v1241, %v5478
        %v5511 = vsub.f32 %v1241, %v5479
        %v5512 = vsub.f32 %v1245, %v5480
        %v5513 = vsub.f32 %v1245, %v5481
        %v5514 = vmin.f32 %v5482, %v5486
        %v5515 = vmin.f32 %v5484, %v5488
        %v5516 = vmin.f32 %v5514, %v5490
        %v5517 = vmin.f32 %v5515, %v5492
        %v5518 = vmin.f32 %v5516, %v5494
        %v5519 = vmin.f32 %v5517, %v5496
        %v5520 = vmin.f32 %v5518, %v5498
        %v5521 = vmin.f32 %v5519, %v5500
        %v5522 = vmin.f32 %v5520, %v5502
        %v5523 = vmin.f32 %v5521, %v5504
        %v5524 = vmin.f32 %v5522, %v5506
        %v5525 = vmin.f32 %v5523, %v5508
        %v5526 = vmin.f32 %v5524, %v5510
        %v5527 = vmin.f32 %v5525, %v5512
        %v5528 = vmin.f32 %v5526, %v5527
        %v5529 = vrot.slane %v5528, 4
        %v5530 = vmin.f32 %v5528, %v5529
        %v5531 = vrot.slane %v5530, 2
        %v5532 = vmin.f32 %v5530, %v5531
        %v5533 = vrot.slane %v5532, 1
        %v5534 = vmin.f32 %v5532, %v5533
        %v5535 = vmin.f32 %v5483, %v5487
        %v5536 = vmin.f32 %v5485, %v5489
        %v5537 = vmin.f32 %v5535, %v5491
        %v5538 = vmin.f32 %v5536, %v5493
        %v5539 = vmin.f32 %v5537, %v5495
        %v5540 = vmin.f32 %v5538, %v5497
        %v5541 = vmin.f32 %v5539, %v5499
        %v5542 = vmin.f32 %v5540, %v5501
        %v5543 = vmin.f32 %v5541, %v5503
        %v5544 = vmin.f32 %v5542, %v5505
        %v5545 = vmin.f32 %v5543, %v5507
        %v5546 = vmin.f32 %v5544, %v5509
        %v5547 = vmin.f32 %v5545, %v5511
        %v5548 = vmin.f32 %v5546, %v5513
        %v5549 = vmin.f32 %v5547, %v5548
        %v5550 = vrot.slane %v5549, 4
        %v5551 = vmin.f32 %v5549, %v5550
        %v5552 = vrot.slane %v5551, 2
        %v5553 = vmin.f32 %v5551, %v5552
        %v5554 = vrot.slane %v5553, 1
        %v5555 = vmin.f32 %v5553, %v5554
        %vm5556 = vcmp.eq.f32.partialorder %v5482, %v5534
        %vm5557 = vcmp.eq.f32.partialorder %v5483, %v5555
        %vm5558 = vcmp.eq.f32.partialorder %v5484, %v5534
        %vm5559 = vcmp.eq.f32.partialorder %v5485, %v5555
        %vm5560 = vcmp.eq.f32.partialorder %v5486, %v5534
        %vm5561 = vcmp.eq.f32.partialorder %v5487, %v5555
        %vm5562 = vcmp.eq.f32.partialorder %v5488, %v5534
        %vm5563 = vcmp.eq.f32.partialorder %v5489, %v5555
        %vm5564 = vcmp.eq.f32.partialorder %v5490, %v5534
        %vm5565 = vcmp.eq.f32.partialorder %v5491, %v5555
        %vm5566 = vcmp.eq.f32.partialorder %v5492, %v5534
        %vm5567 = vcmp.eq.f32.partialorder %v5493, %v5555
        %vm5568 = vcmp.eq.f32.partialorder %v5494, %v5534
        %vm5569 = vcmp.eq.f32.partialorder %v5495, %v5555
        %vm5570 = vcmp.eq.f32.partialorder %v5496, %v5534
        %vm5571 = vcmp.eq.f32.partialorder %v5497, %v5555
        %vm5572 = vcmp.eq.f32.partialorder %v5498, %v5534
        %vm5573 = vcmp.eq.f32.partialorder %v5499, %v5555
        %vm5574 = vcmp.eq.f32.partialorder %v5500, %v5534
        %vm5575 = vcmp.eq.f32.partialorder %v5501, %v5555
        %vm5576 = vcmp.eq.f32.partialorder %v5502, %v5534
        %vm5577 = vcmp.eq.f32.partialorder %v5503, %v5555
        %vm5578 = vcmp.eq.f32.partialorder %v5504, %v5534
        %vm5579 = vcmp.eq.f32.partialorder %v5505, %v5555
        %vm5580 = vcmp.eq.f32.partialorder %v5506, %v5534
        %vm5581 = vcmp.eq.f32.partialorder %v5507, %v5555
        %vm5582 = vcmp.eq.f32.partialorder %v5508, %v5534
        %vm5583 = vcmp.eq.f32.partialorder %v5509, %v5555
        %vm5584 = vcmp.eq.f32.partialorder %v5510, %v5534
        %vm5585 = vcmp.eq.f32.partialorder %v5511, %v5555
        %vm5586 = vcmp.eq.f32.partialorder %v5512, %v5534
        %vm5587 = vcmp.eq.f32.partialorder %v5513, %v5555
        %v5588 = vsel %vm5556, 1, 0
        %v5589 = vsel %vm5557, 1, 0
        %v5590 = vsel %vm5558, 1, 0
        %v5591 = vsel %vm5559, 1, 0
        %v5592 = vsel %vm5560, 1, 0
        %v5593 = vsel %vm5561, 1, 0
        %v5594 = vsel %vm5562, 1, 0
        %v5595 = vsel %vm5563, 1, 0
        %v5596 = vsel %vm5564, 1, 0
        %v5597 = vsel %vm5565, 1, 0
        %v5598 = vsel %vm5566, 1, 0
        %v5599 = vsel %vm5567, 1, 0
        %v5600 = vsel %vm5568, 1, 0
        %v5601 = vsel %vm5569, 1, 0
        %v5602 = vsel %vm5570, 1, 0
        %v5603 = vsel %vm5571, 1, 0
        %v5604 = vsel %vm5572, 1, 0
        %v5605 = vsel %vm5573, 1, 0
        %v5606 = vsel %vm5574, 1, 0
        %v5607 = vsel %vm5575, 1, 0
        %v5608 = vsel %vm5576, 1, 0
        %v5609 = vsel %vm5577, 1, 0
        %v5610 = vsel %vm5578, 1, 0
        %v5611 = vsel %vm5579, 1, 0
        %v5612 = vsel %vm5580, 1, 0
        %v5613 = vsel %vm5581, 1, 0
        %v5614 = vsel %vm5582, 1, 0
        %v5615 = vsel %vm5583, 1, 0
        %v5616 = vsel %vm5584, 1, 0
        %v5617 = vsel %vm5585, 1, 0
        %v5618 = vsel %vm5586, 1, 0
        %v5619 = vsel %vm5587, 1, 0
        %v5620 = vcvt.s32.f32 %v5588
        %v5621 = vcvt.s32.f32 %v5589
        %v5622 = vcvt.s32.f32 %v5590
        %v5623 = vcvt.s32.f32 %v5591
        %v5624 = vcvt.s32.f32 %v5592
        %v5625 = vcvt.s32.f32 %v5593
        %v5626 = vcvt.s32.f32 %v5594
        %v5627 = vcvt.s32.f32 %v5595
        %v5628 = vcvt.s32.f32 %v5596
        %v5629 = vcvt.s32.f32 %v5597
        %v5630 = vcvt.s32.f32 %v5598
        %v5631 = vcvt.s32.f32 %v5599
        %v5632 = vcvt.s32.f32 %v5600
        %v5633 = vcvt.s32.f32 %v5601
        %v5634 = vcvt.s32.f32 %v5602
        %v5635 = vcvt.s32.f32 %v5603
        %v5636 = vcvt.s32.f32 %v5604
        %v5637 = vcvt.s32.f32 %v5605
        %v5638 = vcvt.s32.f32 %v5606
        %v5639 = vcvt.s32.f32 %v5607
        %v5640 = vcvt.s32.f32 %v5608
        %v5641 = vcvt.s32.f32 %v5609
        %v5642 = vcvt.s32.f32 %v5610
        %v5643 = vcvt.s32.f32 %v5611
        %v5644 = vcvt.s32.f32 %v5612
        %v5645 = vcvt.s32.f32 %v5613
        %v5646 = vcvt.s32.f32 %v5614
        %v5647 = vcvt.s32.f32 %v5615
        %v5648 = vcvt.s32.f32 %v5616
        %v5649 = vcvt.s32.f32 %v5617
        %v5650 = vcvt.s32.f32 %v5618
        %v5651 = vcvt.s32.f32 %v5619
        %5652 = vmatpush.msra.mxu0 %v5650
        %5653 = vmatpush.msra.mxu0 %v5648
        %5654 = vmatpush.msra.mxu0 %v5646
        %5655 = vmatpush.msra.mxu0 %v5644
        %5656 = vmatpush.msra.mxu0 %v5642
        %5657 = vmatpush.msra.mxu0 %v5640
        %5658 = vmatpush.msra.mxu0 %v5638
        %5659 = vmatpush.msra.mxu0 %v5636
        %5660 = vmatpush.msra.mxu0 %v5634
        %5661 = vmatpush.msra.mxu0 %v5632
        %5662 = vmatpush.msra.mxu0 %v5630
        %5663 = vmatpush.msra.mxu0 %v5628
        %5664 = vmatpush.msra.mxu0 %v5626
        %5665 = vmatpush.msra.mxu0 %v5624
        %5666 = vmatpush.msra.mxu0 %v5622
        %5667 = vmatpush.msra.mxu0 %v5620
        %5668 = vmatmul.f32.gmra.mxu0 %v456
        %v5669 = vpop.f32.mrf.mxu0
        %v5670 = vadd.f32 0.0, %v5669
        %5671 = vmatmul.f32.gmra.mxu0 %v457
        %v5672 = vpop.f32.mrf.mxu0
        %v5673 = vadd.f32 0.0, %v5672
        %5674 = vdwg.mxu0
        %5675 = vmatpush.msra.mxu0 %v5651
        %5676 = vmatpush.msra.mxu0 %v5649
        %5677 = vmatpush.msra.mxu0 %v5647
        %5678 = vmatpush.msra.mxu0 %v5645
        %5679 = vmatpush.msra.mxu0 %v5643
        %5680 = vmatpush.msra.mxu0 %v5641
        %5681 = vmatpush.msra.mxu0 %v5639
        %5682 = vmatpush.msra.mxu0 %v5637
        %5683 = vmatpush.msra.mxu0 %v5635
        %5684 = vmatpush.msra.mxu0 %v5633
        %5685 = vmatpush.msra.mxu0 %v5631
        %5686 = vmatpush.msra.mxu0 %v5629
        %5687 = vmatpush.msra.mxu0 %v5627
        %5688 = vmatpush.msra.mxu0 %v5625
        %5689 = vmatpush.msra.mxu0 %v5623
        %5690 = vmatpush.msra.mxu0 %v5621
        %5691 = vmatmul.f32.gmra.mxu0 %v456
        %v5692 = vpop.f32.mrf.mxu0
        %v5693 = vadd.f32 0.0, %v5692
        %5694 = vmatmul.f32.gmra.mxu0 %v457
        %v5695 = vpop.f32.mrf.mxu0
        %v5696 = vadd.f32 0.0, %v5695
        %5697 = vdwg.mxu0
        %v5698 = vsub.f32 %v5670, %v5292
        %v5699 = vsub.f32 %v5693, %v5315
        %v5700 = vsub.f32 %v5673, %v5295
        %v5701 = vsub.f32 %v5696, %v5318
        %v5702 = vmul.f32 %v5698, %v5698
        %v5703 = vmul.f32 %v5699, %v5699
        %v5704 = vmul.f32 %v5700, %v5700
        %v5705 = vmul.f32 %v5701, %v5701
        %v5706 = vadd.f32 %v5702, %v5704
        %v5707 = vrot.slane %v5706, 4
        %v5708 = vadd.f32 %v5706, %v5707
        %v5709 = vrot.slane %v5708, 2
        %v5710 = vadd.f32 %v5708, %v5709
        %v5711 = vrot.slane %v5710, 1
        %v5712 = vadd.f32 %v5710, %v5711
        %v5713 = vadd.f32 %v5703, %v5705
        %v5714 = vrot.slane %v5713, 4
        %v5715 = vadd.f32 %v5713, %v5714
        %v5716 = vrot.slane %v5715, 2
        %v5717 = vadd.f32 %v5715, %v5716
        %v5718 = vrot.slane %v5717, 1
        %v5719 = vadd.f32 %v5717, %v5718
        %v5720 = vadd.f32 %v5017, %v5712
        %v5721 = vadd.f32 %v5018, %v5719
        %5722 = vmatpush.msra.mxu0 0.0
        %5723 = vmatpush.msra.mxu0 0.0
        %5724 = vmatpush.msra.mxu0 0.0
        %5725 = vmatpush.msra.mxu0 0.0
        %5726 = vmatpush.msra.mxu0 0.0
        %5727 = vmatpush.msra.mxu0 0.0
        %5728 = vmatpush.msra.mxu0 0.0
        %5729 = vmatpush.msra.mxu0 0.0
        %5730 = vmatpush.msra.mxu0 0.0
        %5731 = vmatpush.msra.mxu0 0.0
        %5732 = vmatpush.msra.mxu0 0.0
        %5733 = vmatpush.msra.mxu0 0.0
        %5734 = vmatpush.msra.mxu0 0.0
        %5735 = vmatpush.msra.mxu0 0.0
        %5736 = vmatpush.msra.mxu0 %v5673
        %5737 = vmatpush.msra.mxu0 %v5670
        %5738 = vmatmul.f32.gmra.mxu0 %v1507
        %v5739 = vpop.f32.mrf.mxu0
        %v5740 = vadd.f32 %v1490, %v5739
        %5741 = vmatmul.f32.gmra.mxu0 %v1509
        %v5742 = vpop.f32.mrf.mxu0
        %v5743 = vadd.f32 %v1495, %v5742
        %5744 = vmatmul.f32.gmra.mxu0 %v1511
        %v5745 = vpop.f32.mrf.mxu0
        %v5746 = vadd.f32 %v1500, %v5745
        %5747 = vmatmul.f32.gmra.mxu0 %v1513
        %v5748 = vpop.f32.mrf.mxu0
        %v5749 = vadd.f32 %v1505, %v5748
        %5750 = vdwg.mxu0
        %5751 = vmatpush.msra.mxu0 0.0
        %5752 = vmatpush.msra.mxu0 0.0
        %5753 = vmatpush.msra.mxu0 0.0
        %5754 = vmatpush.msra.mxu0 0.0
        %5755 = vmatpush.msra.mxu0 0.0
        %5756 = vmatpush.msra.mxu0 0.0
        %5757 = vmatpush.msra.mxu0 0.0
        %5758 = vmatpush.msra.mxu0 0.0
        %5759 = vmatpush.msra.mxu0 0.0
        %5760 = vmatpush.msra.mxu0 0.0
        %5761 = vmatpush.msra.mxu0 0.0
        %5762 = vmatpush.msra.mxu0 0.0
        %5763 = vmatpush.msra.mxu0 0.0
        %5764 = vmatpush.msra.mxu0 0.0
        %5765 = vmatpush.msra.mxu0 %v5696
        %5766 = vmatpush.msra.mxu0 %v5693
        %5767 = vmatmul.f32.gmra.mxu0 %v1507
        %v5768 = vpop.f32.mrf.mxu0
        %v5769 = vadd.f32 %v1490, %v5768
        %5770 = vmatmul.f32.gmra.mxu0 %v1509
        %v5771 = vpop.f32.mrf.mxu0
        %v5772 = vadd.f32 %v1495, %v5771
        %5773 = vmatmul.f32.gmra.mxu0 %v1511
        %v5774 = vpop.f32.mrf.mxu0
        %v5775 = vadd.f32 %v1500, %v5774
        %5776 = vmatmul.f32.gmra.mxu0 %v1513
        %v5777 = vpop.f32.mrf.mxu0
        %v5778 = vadd.f32 %v1505, %v5777
        %5779 = vdwg.mxu0
        %v5780 = vmax.f32 %v5740, 0.0
        %v5781 = vmax.f32 %v5769, 0.0
        %v5782 = vmax.f32 %v5743, 0.0
        %v5783 = vmax.f32 %v5772, 0.0
        %v5784 = vmax.f32 %v5746, 0.0
        %v5785 = vmax.f32 %v5775, 0.0
        %v5786 = vmax.f32 %v5749, 0.0
        %v5787 = vmax.f32 %v5778, 0.0
        %5788 = vmatpush.msra.mxu0 0.0
        %5789 = vmatpush.msra.mxu0 0.0
        %5790 = vmatpush.msra.mxu0 0.0
        %5791 = vmatpush.msra.mxu0 0.0
        %5792 = vmatpush.msra.mxu0 0.0
        %5793 = vmatpush.msra.mxu0 0.0
        %5794 = vmatpush.msra.mxu0 0.0
        %5795 = vmatpush.msra.mxu0 0.0
        %5796 = vmatpush.msra.mxu0 0.0
        %5797 = vmatpush.msra.mxu0 0.0
        %5798 = vmatpush.msra.mxu0 0.0
        %5799 = vmatpush.msra.mxu0 0.0
        %5800 = vmatpush.msra.mxu0 %v5786
        %5801 = vmatpush.msra.mxu0 %v5784
        %5802 = vmatpush.msra.mxu0 %v5782
        %5803 = vmatpush.msra.mxu0 %v5780
        %5804 = vmatmul.f32.gmra.mxu0 %v1586
        %v5805 = vpop.f32.mrf.mxu0
        %v5806 = vadd.f32 %v1584, %v5805
        %5807 = vdwg.mxu0
        %5808 = vmatpush.msra.mxu0 0.0
        %5809 = vmatpush.msra.mxu0 0.0
        %5810 = vmatpush.msra.mxu0 0.0
        %5811 = vmatpush.msra.mxu0 0.0
        %5812 = vmatpush.msra.mxu0 0.0
        %5813 = vmatpush.msra.mxu0 0.0
        %5814 = vmatpush.msra.mxu0 0.0
        %5815 = vmatpush.msra.mxu0 0.0
        %5816 = vmatpush.msra.mxu0 0.0
        %5817 = vmatpush.msra.mxu0 0.0
        %5818 = vmatpush.msra.mxu0 0.0
        %5819 = vmatpush.msra.mxu0 0.0
        %5820 = vmatpush.msra.mxu0 %v5787
        %5821 = vmatpush.msra.mxu0 %v5785
        %5822 = vmatpush.msra.mxu0 %v5783
        %5823 = vmatpush.msra.mxu0 %v5781
        %5824 = vmatmul.f32.gmra.mxu0 %v1586
        %v5825 = vpop.f32.mrf.mxu0
        %v5826 = vadd.f32 %v1584, %v5825
        %5827 = vdwg.mxu0
        %5828 = vst [vmem:[%s398 + $0x30] sm:$0xf] %v5806
        %5829 = vst [vmem:[%s398 + $0x38] sm:$0xf] %v5826
        %s5830 = scalar_lea.vmem %s420, 7
        %5831 = vst.msk [vmem:[%s5830] ss:$8 sm:$0x3] %vm863, %v5241
        %5832 = vst.msk [vmem:[%s5830] ss:$8 sm:$0x0] %vm863, %v5241
        %v5834 = vperm.slane %v5241, 0
        %v5835 = vperm.slane %v5241, 1
        %v5838 = vmul.f32 %v868, %v5834
        %v5839 = vmul.f32 %v868, %v5835
        %v5840 = vmul.f32 %v872, %v5834
        %v5841 = vmul.f32 %v872, %v5835
        %v5842 = vmul.f32 %v876, %v5834
        %v5843 = vmul.f32 %v876, %v5835
        %v5844 = vmul.f32 %v880, %v5834
        %v5845 = vmul.f32 %v880, %v5835
        %v5846 = vadd.f32 %v706, %v5838
        %v5847 = vadd.f32 %v707, %v5839
        %v5848 = vadd.f32 %v708, %v5840
        %v5849 = vadd.f32 %v709, %v5841
        %v5850 = vadd.f32 %v710, %v5842
        %v5851 = vadd.f32 %v711, %v5843
        %v5852 = vadd.f32 %v712, %v5844
        %v5853 = vadd.f32 %v713, %v5845
        %v5854 = vmax.f32 %v5846, 0.0
        %v5855 = vmax.f32 %v5847, 0.0
        %v5856 = vmax.f32 %v5848, 0.0
        %v5857 = vmax.f32 %v5849, 0.0
        %v5858 = vmax.f32 %v5850, 0.0
        %v5859 = vmax.f32 %v5851, 0.0
        %v5860 = vmax.f32 %v5852, 0.0
        %v5861 = vmax.f32 %v5853, 0.0
        %5862 = vmatpush.msra.mxu0 0.0
        %5863 = vmatpush.msra.mxu0 0.0
        %5864 = vmatpush.msra.mxu0 0.0
        %5865 = vmatpush.msra.mxu0 0.0
        %5866 = vmatpush.msra.mxu0 0.0
        %5867 = vmatpush.msra.mxu0 0.0
        %5868 = vmatpush.msra.mxu0 0.0
        %5869 = vmatpush.msra.mxu0 0.0
        %5870 = vmatpush.msra.mxu0 0.0
        %5871 = vmatpush.msra.mxu0 0.0
        %5872 = vmatpush.msra.mxu0 0.0
        %5873 = vmatpush.msra.mxu0 0.0
        %5874 = vmatpush.msra.mxu0 %v5860
        %5875 = vmatpush.msra.mxu0 %v5858
        %5876 = vmatpush.msra.mxu0 %v5856
        %5877 = vmatpush.msra.mxu0 %v5854
        %5878 = vmatmul.f32.gmra.mxu0 %v922
        %v5879 = vpop.f32.mrf.mxu0
        %v5880 = vadd.f32 %v914, %v5879
        %5881 = vmatmul.f32.gmra.mxu0 %v924
        %v5882 = vpop.f32.mrf.mxu0
        %v5883 = vadd.f32 %v919, %v5882
        %5884 = vdwg.mxu0
        %5885 = vmatpush.msra.mxu0 0.0
        %5886 = vmatpush.msra.mxu0 0.0
        %5887 = vmatpush.msra.mxu0 0.0
        %5888 = vmatpush.msra.mxu0 0.0
        %5889 = vmatpush.msra.mxu0 0.0
        %5890 = vmatpush.msra.mxu0 0.0
        %5891 = vmatpush.msra.mxu0 0.0
        %5892 = vmatpush.msra.mxu0 0.0
        %5893 = vmatpush.msra.mxu0 0.0
        %5894 = vmatpush.msra.mxu0 0.0
        %5895 = vmatpush.msra.mxu0 0.0
        %5896 = vmatpush.msra.mxu0 0.0
        %5897 = vmatpush.msra.mxu0 %v5861
        %5898 = vmatpush.msra.mxu0 %v5859
        %5899 = vmatpush.msra.mxu0 %v5857
        %5900 = vmatpush.msra.mxu0 %v5855
        %5901 = vmatmul.f32.gmra.mxu0 %v922
        %v5902 = vpop.f32.mrf.mxu0
        %v5903 = vadd.f32 %v914, %v5902
        %5904 = vmatmul.f32.gmra.mxu0 %v924
        %v5905 = vpop.f32.mrf.mxu0
        %v5906 = vadd.f32 %v919, %v5905
        %5907 = vdwg.mxu0
        %5908 = vmatpush.msra.mxu0 0.0
        %5909 = vmatpush.msra.mxu0 0.0
        %5910 = vmatpush.msra.mxu0 0.0
        %5911 = vmatpush.msra.mxu0 0.0
        %5912 = vmatpush.msra.mxu0 0.0
        %5913 = vmatpush.msra.mxu0 0.0
        %5914 = vmatpush.msra.mxu0 0.0
        %5915 = vmatpush.msra.mxu0 0.0
        %5916 = vmatpush.msra.mxu0 0.0
        %5917 = vmatpush.msra.mxu0 0.0
        %5918 = vmatpush.msra.mxu0 0.0
        %5919 = vmatpush.msra.mxu0 0.0
        %5920 = vmatpush.msra.mxu0 0.0
        %5921 = vmatpush.msra.mxu0 0.0
        %5922 = vmatpush.msra.mxu0 %v5883
        %5923 = vmatpush.msra.mxu0 %v5880
        %5924 = vmatmul.f32.gmra.mxu0 %v974
        %v5925 = vpop.f32.mrf.mxu0
        %v5926 = vadd.f32 0.0, %v5925
        %5927 = vmatmul.f32.gmra.mxu0 %v977
        %v5928 = vpop.f32.mrf.mxu0
        %v5929 = vadd.f32 0.0, %v5928
        %5930 = vmatmul.f32.gmra.mxu0 %v980
        %v5931 = vpop.f32.mrf.mxu0
        %v5932 = vadd.f32 0.0, %v5931
        %5933 = vmatmul.f32.gmra.mxu0 %v983
        %v5934 = vpop.f32.mrf.mxu0
        %v5935 = vadd.f32 0.0, %v5934
        %5936 = vmatmul.f32.gmra.mxu0 %v986
        %v5937 = vpop.f32.mrf.mxu0
        %v5938 = vadd.f32 0.0, %v5937
        %5939 = vmatmul.f32.gmra.mxu0 %v989
        %v5940 = vpop.f32.mrf.mxu0
        %v5941 = vadd.f32 0.0, %v5940
        %5942 = vmatmul.f32.gmra.mxu0 %v992
        %v5943 = vpop.f32.mrf.mxu0
        %v5944 = vadd.f32 0.0, %v5943
        %5945 = vmatmul.f32.gmra.mxu0 %v995
        %v5946 = vpop.f32.mrf.mxu0
        %v5947 = vadd.f32 0.0, %v5946
        %5948 = vmatmul.f32.gmra.mxu0 %v998
        %v5949 = vpop.f32.mrf.mxu0
        %v5950 = vadd.f32 0.0, %v5949
        %5951 = vmatmul.f32.gmra.mxu0 %v1001
        %v5952 = vpop.f32.mrf.mxu0
        %v5953 = vadd.f32 0.0, %v5952
        %5954 = vmatmul.f32.gmra.mxu0 %v1004
        %v5955 = vpop.f32.mrf.mxu0
        %v5956 = vadd.f32 0.0, %v5955
        %5957 = vmatmul.f32.gmra.mxu0 %v1007
        %v5958 = vpop.f32.mrf.mxu0
        %v5959 = vadd.f32 0.0, %v5958
        %5960 = vmatmul.f32.gmra.mxu0 %v1010
        %v5961 = vpop.f32.mrf.mxu0
        %v5962 = vadd.f32 0.0, %v5961
        %5963 = vmatmul.f32.gmra.mxu0 %v1013
        %v5964 = vpop.f32.mrf.mxu0
        %v5965 = vadd.f32 0.0, %v5964
        %5966 = vmatmul.f32.gmra.mxu0 %v1016
        %v5967 = vpop.f32.mrf.mxu0
        %v5968 = vadd.f32 0.0, %v5967
        %5969 = vmatmul.f32.gmra.mxu0 %v1019
        %v5970 = vpop.f32.mrf.mxu0
        %v5971 = vadd.f32 0.0, %v5970
        %5972 = vdwg.mxu0
        %5973 = vmatpush.msra.mxu0 0.0
        %5974 = vmatpush.msra.mxu0 0.0
        %5975 = vmatpush.msra.mxu0 0.0
        %5976 = vmatpush.msra.mxu0 0.0
        %5977 = vmatpush.msra.mxu0 0.0
        %5978 = vmatpush.msra.mxu0 0.0
        %5979 = vmatpush.msra.mxu0 0.0
        %5980 = vmatpush.msra.mxu0 0.0
        %5981 = vmatpush.msra.mxu0 0.0
        %5982 = vmatpush.msra.mxu0 0.0
        %5983 = vmatpush.msra.mxu0 0.0
        %5984 = vmatpush.msra.mxu0 0.0
        %5985 = vmatpush.msra.mxu0 0.0
        %5986 = vmatpush.msra.mxu0 0.0
        %5987 = vmatpush.msra.mxu0 %v5906
        %5988 = vmatpush.msra.mxu0 %v5903
        %5989 = vmatmul.f32.gmra.mxu0 %v974
        %v5990 = vpop.f32.mrf.mxu0
        %v5991 = vadd.f32 0.0, %v5990
        %5992 = vmatmul.f32.gmra.mxu0 %v977
        %v5993 = vpop.f32.mrf.mxu0
        %v5994 = vadd.f32 0.0, %v5993
        %5995 = vmatmul.f32.gmra.mxu0 %v980
        %v5996 = vpop.f32.mrf.mxu0
        %v5997 = vadd.f32 0.0, %v5996
        %5998 = vmatmul.f32.gmra.mxu0 %v983
        %v5999 = vpop.f32.mrf.mxu0
        %v6000 = vadd.f32 0.0, %v5999
        %6001 = vmatmul.f32.gmra.mxu0 %v986
        %v6002 = vpop.f32.mrf.mxu0
        %v6003 = vadd.f32 0.0, %v6002
        %6004 = vmatmul.f32.gmra.mxu0 %v989
        %v6005 = vpop.f32.mrf.mxu0
        %v6006 = vadd.f32 0.0, %v6005
        %6007 = vmatmul.f32.gmra.mxu0 %v992
        %v6008 = vpop.f32.mrf.mxu0
        %v6009 = vadd.f32 0.0, %v6008
        %6010 = vmatmul.f32.gmra.mxu0 %v995
        %v6011 = vpop.f32.mrf.mxu0
        %v6012 = vadd.f32 0.0, %v6011
        %6013 = vmatmul.f32.gmra.mxu0 %v998
        %v6014 = vpop.f32.mrf.mxu0
        %v6015 = vadd.f32 0.0, %v6014
        %6016 = vmatmul.f32.gmra.mxu0 %v1001
        %v6017 = vpop.f32.mrf.mxu0
        %v6018 = vadd.f32 0.0, %v6017
        %6019 = vmatmul.f32.gmra.mxu0 %v1004
        %v6020 = vpop.f32.mrf.mxu0
        %v6021 = vadd.f32 0.0, %v6020
        %6022 = vmatmul.f32.gmra.mxu0 %v1007
        %v6023 = vpop.f32.mrf.mxu0
        %v6024 = vadd.f32 0.0, %v6023
        %6025 = vmatmul.f32.gmra.mxu0 %v1010
        %v6026 = vpop.f32.mrf.mxu0
        %v6027 = vadd.f32 0.0, %v6026
        %6028 = vmatmul.f32.gmra.mxu0 %v1013
        %v6029 = vpop.f32.mrf.mxu0
        %v6030 = vadd.f32 0.0, %v6029
        %6031 = vmatmul.f32.gmra.mxu0 %v1016
        %v6032 = vpop.f32.mrf.mxu0
        %v6033 = vadd.f32 0.0, %v6032
        %6034 = vmatmul.f32.gmra.mxu0 %v1019
        %v6035 = vpop.f32.mrf.mxu0
        %v6036 = vadd.f32 0.0, %v6035
        %6037 = vdwg.mxu0
        %v6038 = vmul.f32 %v5926, 2.0
        %v6039 = vmul.f32 %v5991, 2.0
        %v6040 = vmul.f32 %v5929, 2.0
        %v6041 = vmul.f32 %v5994, 2.0
        %v6042 = vmul.f32 %v5932, 2.0
        %v6043 = vmul.f32 %v5997, 2.0
        %v6044 = vmul.f32 %v5935, 2.0
        %v6045 = vmul.f32 %v6000, 2.0
        %v6046 = vmul.f32 %v5938, 2.0
        %v6047 = vmul.f32 %v6003, 2.0
        %v6048 = vmul.f32 %v5941, 2.0
        %v6049 = vmul.f32 %v6006, 2.0
        %v6050 = vmul.f32 %v5944, 2.0
        %v6051 = vmul.f32 %v6009, 2.0
        %v6052 = vmul.f32 %v5947, 2.0
        %v6053 = vmul.f32 %v6012, 2.0
        %v6054 = vmul.f32 %v5950, 2.0
        %v6055 = vmul.f32 %v6015, 2.0
        %v6056 = vmul.f32 %v5953, 2.0
        %v6057 = vmul.f32 %v6018, 2.0
        %v6058 = vmul.f32 %v5956, 2.0
        %v6059 = vmul.f32 %v6021, 2.0
        %v6060 = vmul.f32 %v5959, 2.0
        %v6061 = vmul.f32 %v6024, 2.0
        %v6062 = vmul.f32 %v5962, 2.0
        %v6063 = vmul.f32 %v6027, 2.0
        %v6064 = vmul.f32 %v5965, 2.0
        %v6065 = vmul.f32 %v6030, 2.0
        %v6066 = vmul.f32 %v5968, 2.0
        %v6067 = vmul.f32 %v6033, 2.0
        %v6068 = vmul.f32 %v5971, 2.0
        %v6069 = vmul.f32 %v6036, 2.0
        %v6070 = vsub.f32 %v1185, %v6038
        %v6071 = vsub.f32 %v1185, %v6039
        %v6072 = vsub.f32 %v1189, %v6040
        %v6073 = vsub.f32 %v1189, %v6041
        %v6074 = vsub.f32 %v1193, %v6042
        %v6075 = vsub.f32 %v1193, %v6043
        %v6076 = vsub.f32 %v1197, %v6044
        %v6077 = vsub.f32 %v1197, %v6045
        %v6078 = vsub.f32 %v1201, %v6046
        %v6079 = vsub.f32 %v1201, %v6047
        %v6080 = vsub.f32 %v1205, %v6048
        %v6081 = vsub.f32 %v1205, %v6049
        %v6082 = vsub.f32 %v1209, %v6050
        %v6083 = vsub.f32 %v1209, %v6051
        %v6084 = vsub.f32 %v1213, %v6052
        %v6085 = vsub.f32 %v1213, %v6053
        %v6086 = vsub.f32 %v1217, %v6054
        %v6087 = vsub.f32 %v1217, %v6055
        %v6088 = vsub.f32 %v1221, %v6056
        %v6089 = vsub.f32 %v1221, %v6057
        %v6090 = vsub.f32 %v1225, %v6058
        %v6091 = vsub.f32 %v1225, %v6059
        %v6092 = vsub.f32 %v1229, %v6060
        %v6093 = vsub.f32 %v1229, %v6061
        %v6094 = vsub.f32 %v1233, %v6062
        %v6095 = vsub.f32 %v1233, %v6063
        %v6096 = vsub.f32 %v1237, %v6064
        %v6097 = vsub.f32 %v1237, %v6065
        %v6098 = vsub.f32 %v1241, %v6066
        %v6099 = vsub.f32 %v1241, %v6067
        %v6100 = vsub.f32 %v1245, %v6068
        %v6101 = vsub.f32 %v1245, %v6069
        %v6102 = vmin.f32 %v6070, %v6074
        %v6103 = vmin.f32 %v6072, %v6076
        %v6104 = vmin.f32 %v6102, %v6078
        %v6105 = vmin.f32 %v6103, %v6080
        %v6106 = vmin.f32 %v6104, %v6082
        %v6107 = vmin.f32 %v6105, %v6084
        %v6108 = vmin.f32 %v6106, %v6086
        %v6109 = vmin.f32 %v6107, %v6088
        %v6110 = vmin.f32 %v6108, %v6090
        %v6111 = vmin.f32 %v6109, %v6092
        %v6112 = vmin.f32 %v6110, %v6094
        %v6113 = vmin.f32 %v6111, %v6096
        %v6114 = vmin.f32 %v6112, %v6098
        %v6115 = vmin.f32 %v6113, %v6100
        %v6116 = vmin.f32 %v6114, %v6115
        %v6117 = vrot.slane %v6116, 4
        %v6118 = vmin.f32 %v6116, %v6117
        %v6119 = vrot.slane %v6118, 2
        %v6120 = vmin.f32 %v6118, %v6119
        %v6121 = vrot.slane %v6120, 1
        %v6122 = vmin.f32 %v6120, %v6121
        %v6123 = vmin.f32 %v6071, %v6075
        %v6124 = vmin.f32 %v6073, %v6077
        %v6125 = vmin.f32 %v6123, %v6079
        %v6126 = vmin.f32 %v6124, %v6081
        %v6127 = vmin.f32 %v6125, %v6083
        %v6128 = vmin.f32 %v6126, %v6085
        %v6129 = vmin.f32 %v6127, %v6087
        %v6130 = vmin.f32 %v6128, %v6089
        %v6131 = vmin.f32 %v6129, %v6091
        %v6132 = vmin.f32 %v6130, %v6093
        %v6133 = vmin.f32 %v6131, %v6095
        %v6134 = vmin.f32 %v6132, %v6097
        %v6135 = vmin.f32 %v6133, %v6099
        %v6136 = vmin.f32 %v6134, %v6101
        %v6137 = vmin.f32 %v6135, %v6136
        %v6138 = vrot.slane %v6137, 4
        %v6139 = vmin.f32 %v6137, %v6138
        %v6140 = vrot.slane %v6139, 2
        %v6141 = vmin.f32 %v6139, %v6140
        %v6142 = vrot.slane %v6141, 1
        %v6143 = vmin.f32 %v6141, %v6142
        %vm6144 = vcmp.eq.f32.partialorder %v6070, %v6122
        %vm6145 = vcmp.eq.f32.partialorder %v6071, %v6143
        %vm6146 = vcmp.eq.f32.partialorder %v6072, %v6122
        %vm6147 = vcmp.eq.f32.partialorder %v6073, %v6143
        %vm6148 = vcmp.eq.f32.partialorder %v6074, %v6122
        %vm6149 = vcmp.eq.f32.partialorder %v6075, %v6143
        %vm6150 = vcmp.eq.f32.partialorder %v6076, %v6122
        %vm6151 = vcmp.eq.f32.partialorder %v6077, %v6143
        %vm6152 = vcmp.eq.f32.partialorder %v6078, %v6122
        %vm6153 = vcmp.eq.f32.partialorder %v6079, %v6143
        %vm6154 = vcmp.eq.f32.partialorder %v6080, %v6122
        %vm6155 = vcmp.eq.f32.partialorder %v6081, %v6143
        %vm6156 = vcmp.eq.f32.partialorder %v6082, %v6122
        %vm6157 = vcmp.eq.f32.partialorder %v6083, %v6143
        %vm6158 = vcmp.eq.f32.partialorder %v6084, %v6122
        %vm6159 = vcmp.eq.f32.partialorder %v6085, %v6143
        %vm6160 = vcmp.eq.f32.partialorder %v6086, %v6122
        %vm6161 = vcmp.eq.f32.partialorder %v6087, %v6143
        %vm6162 = vcmp.eq.f32.partialorder %v6088, %v6122
        %vm6163 = vcmp.eq.f32.partialorder %v6089, %v6143
        %vm6164 = vcmp.eq.f32.partialorder %v6090, %v6122
        %vm6165 = vcmp.eq.f32.partialorder %v6091, %v6143
        %vm6166 = vcmp.eq.f32.partialorder %v6092, %v6122
        %vm6167 = vcmp.eq.f32.partialorder %v6093, %v6143
        %vm6168 = vcmp.eq.f32.partialorder %v6094, %v6122
        %vm6169 = vcmp.eq.f32.partialorder %v6095, %v6143
        %vm6170 = vcmp.eq.f32.partialorder %v6096, %v6122
        %vm6171 = vcmp.eq.f32.partialorder %v6097, %v6143
        %vm6172 = vcmp.eq.f32.partialorder %v6098, %v6122
        %vm6173 = vcmp.eq.f32.partialorder %v6099, %v6143
        %vm6174 = vcmp.eq.f32.partialorder %v6100, %v6122
        %vm6175 = vcmp.eq.f32.partialorder %v6101, %v6143
        %v6176 = vsel %vm6144, 1, 0
        %v6177 = vsel %vm6145, 1, 0
        %v6178 = vsel %vm6146, 1, 0
        %v6179 = vsel %vm6147, 1, 0
        %v6180 = vsel %vm6148, 1, 0
        %v6181 = vsel %vm6149, 1, 0
        %v6182 = vsel %vm6150, 1, 0
        %v6183 = vsel %vm6151, 1, 0
        %v6184 = vsel %vm6152, 1, 0
        %v6185 = vsel %vm6153, 1, 0
        %v6186 = vsel %vm6154, 1, 0
        %v6187 = vsel %vm6155, 1, 0
        %v6188 = vsel %vm6156, 1, 0
        %v6189 = vsel %vm6157, 1, 0
        %v6190 = vsel %vm6158, 1, 0
        %v6191 = vsel %vm6159, 1, 0
        %v6192 = vsel %vm6160, 1, 0
        %v6193 = vsel %vm6161, 1, 0
        %v6194 = vsel %vm6162, 1, 0
        %v6195 = vsel %vm6163, 1, 0
        %v6196 = vsel %vm6164, 1, 0
        %v6197 = vsel %vm6165, 1, 0
        %v6198 = vsel %vm6166, 1, 0
        %v6199 = vsel %vm6167, 1, 0
        %v6200 = vsel %vm6168, 1, 0
        %v6201 = vsel %vm6169, 1, 0
        %v6202 = vsel %vm6170, 1, 0
        %v6203 = vsel %vm6171, 1, 0
        %v6204 = vsel %vm6172, 1, 0
        %v6205 = vsel %vm6173, 1, 0
        %v6206 = vsel %vm6174, 1, 0
        %v6207 = vsel %vm6175, 1, 0
        %v6208 = vcvt.s32.f32 %v6176
        %v6209 = vcvt.s32.f32 %v6177
        %v6210 = vcvt.s32.f32 %v6178
        %v6211 = vcvt.s32.f32 %v6179
        %v6212 = vcvt.s32.f32 %v6180
        %v6213 = vcvt.s32.f32 %v6181
        %v6214 = vcvt.s32.f32 %v6182
        %v6215 = vcvt.s32.f32 %v6183
        %v6216 = vcvt.s32.f32 %v6184
        %v6217 = vcvt.s32.f32 %v6185
        %v6218 = vcvt.s32.f32 %v6186
        %v6219 = vcvt.s32.f32 %v6187
        %v6220 = vcvt.s32.f32 %v6188
        %v6221 = vcvt.s32.f32 %v6189
        %v6222 = vcvt.s32.f32 %v6190
        %v6223 = vcvt.s32.f32 %v6191
        %v6224 = vcvt.s32.f32 %v6192
        %v6225 = vcvt.s32.f32 %v6193
        %v6226 = vcvt.s32.f32 %v6194
        %v6227 = vcvt.s32.f32 %v6195
        %v6228 = vcvt.s32.f32 %v6196
        %v6229 = vcvt.s32.f32 %v6197
        %v6230 = vcvt.s32.f32 %v6198
        %v6231 = vcvt.s32.f32 %v6199
        %v6232 = vcvt.s32.f32 %v6200
        %v6233 = vcvt.s32.f32 %v6201
        %v6234 = vcvt.s32.f32 %v6202
        %v6235 = vcvt.s32.f32 %v6203
        %v6236 = vcvt.s32.f32 %v6204
        %v6237 = vcvt.s32.f32 %v6205
        %v6238 = vcvt.s32.f32 %v6206
        %v6239 = vcvt.s32.f32 %v6207
        %6240 = vmatpush.msra.mxu0 %v6238
        %6241 = vmatpush.msra.mxu0 %v6236
        %6242 = vmatpush.msra.mxu0 %v6234
        %6243 = vmatpush.msra.mxu0 %v6232
        %6244 = vmatpush.msra.mxu0 %v6230
        %6245 = vmatpush.msra.mxu0 %v6228
        %6246 = vmatpush.msra.mxu0 %v6226
        %6247 = vmatpush.msra.mxu0 %v6224
        %6248 = vmatpush.msra.mxu0 %v6222
        %6249 = vmatpush.msra.mxu0 %v6220
        %6250 = vmatpush.msra.mxu0 %v6218
        %6251 = vmatpush.msra.mxu0 %v6216
        %6252 = vmatpush.msra.mxu0 %v6214
        %6253 = vmatpush.msra.mxu0 %v6212
        %6254 = vmatpush.msra.mxu0 %v6210
        %6255 = vmatpush.msra.mxu0 %v6208
        %6256 = vmatmul.f32.gmra.mxu0 %v456
        %v6257 = vpop.f32.mrf.mxu0
        %v6258 = vadd.f32 0.0, %v6257
        %6259 = vmatmul.f32.gmra.mxu0 %v457
        %v6260 = vpop.f32.mrf.mxu0
        %v6261 = vadd.f32 0.0, %v6260
        %6262 = vdwg.mxu0
        %6263 = vmatpush.msra.mxu0 %v6239
        %6264 = vmatpush.msra.mxu0 %v6237
        %6265 = vmatpush.msra.mxu0 %v6235
        %6266 = vmatpush.msra.mxu0 %v6233
        %6267 = vmatpush.msra.mxu0 %v6231
        %6268 = vmatpush.msra.mxu0 %v6229
        %6269 = vmatpush.msra.mxu0 %v6227
        %6270 = vmatpush.msra.mxu0 %v6225
        %6271 = vmatpush.msra.mxu0 %v6223
        %6272 = vmatpush.msra.mxu0 %v6221
        %6273 = vmatpush.msra.mxu0 %v6219
        %6274 = vmatpush.msra.mxu0 %v6217
        %6275 = vmatpush.msra.mxu0 %v6215
        %6276 = vmatpush.msra.mxu0 %v6213
        %6277 = vmatpush.msra.mxu0 %v6211
        %6278 = vmatpush.msra.mxu0 %v6209
        %6279 = vmatmul.f32.gmra.mxu0 %v456
        %v6280 = vpop.f32.mrf.mxu0
        %v6281 = vadd.f32 0.0, %v6280
        %6282 = vmatmul.f32.gmra.mxu0 %v457
        %v6283 = vpop.f32.mrf.mxu0
        %v6284 = vadd.f32 0.0, %v6283
        %6285 = vdwg.mxu0
        %v6286 = vsub.f32 %v6258, %v5880
        %v6287 = vsub.f32 %v6281, %v5903
        %v6288 = vsub.f32 %v6261, %v5883
        %v6289 = vsub.f32 %v6284, %v5906
        %v6290 = vmul.f32 %v6286, %v6286
        %v6291 = vmul.f32 %v6287, %v6287
        %v6292 = vmul.f32 %v6288, %v6288
        %v6293 = vmul.f32 %v6289, %v6289
        %v6294 = vadd.f32 %v6290, %v6292
        %v6295 = vrot.slane %v6294, 4
        %v6296 = vadd.f32 %v6294, %v6295
        %v6297 = vrot.slane %v6296, 2
        %v6298 = vadd.f32 %v6296, %v6297
        %v6299 = vrot.slane %v6298, 1
        %v6300 = vadd.f32 %v6298, %v6299
        %v6301 = vadd.f32 %v6291, %v6293
        %v6302 = vrot.slane %v6301, 4
        %v6303 = vadd.f32 %v6301, %v6302
        %v6304 = vrot.slane %v6303, 2
        %v6305 = vadd.f32 %v6303, %v6304
        %v6306 = vrot.slane %v6305, 1
        %v6307 = vadd.f32 %v6305, %v6306
        %v6308 = vadd.f32 %v5720, %v6300
        %v6309 = vadd.f32 %v5721, %v6307
        %6310 = vmatpush.msra.mxu0 0.0
        %6311 = vmatpush.msra.mxu0 0.0
        %6312 = vmatpush.msra.mxu0 0.0
        %6313 = vmatpush.msra.mxu0 0.0
        %6314 = vmatpush.msra.mxu0 0.0
        %6315 = vmatpush.msra.mxu0 0.0
        %6316 = vmatpush.msra.mxu0 0.0
        %6317 = vmatpush.msra.mxu0 0.0
        %6318 = vmatpush.msra.mxu0 0.0
        %6319 = vmatpush.msra.mxu0 0.0
        %6320 = vmatpush.msra.mxu0 0.0
        %6321 = vmatpush.msra.mxu0 0.0
        %6322 = vmatpush.msra.mxu0 0.0
        %6323 = vmatpush.msra.mxu0 0.0
        %6324 = vmatpush.msra.mxu0 %v6261
        %6325 = vmatpush.msra.mxu0 %v6258
        %6326 = vmatmul.f32.gmra.mxu0 %v1507
        %v6327 = vpop.f32.mrf.mxu0
        %v6328 = vadd.f32 %v1490, %v6327
        %6329 = vmatmul.f32.gmra.mxu0 %v1509
        %v6330 = vpop.f32.mrf.mxu0
        %v6331 = vadd.f32 %v1495, %v6330
        %6332 = vmatmul.f32.gmra.mxu0 %v1511
        %v6333 = vpop.f32.mrf.mxu0
        %v6334 = vadd.f32 %v1500, %v6333
        %6335 = vmatmul.f32.gmra.mxu0 %v1513
        %v6336 = vpop.f32.mrf.mxu0
        %v6337 = vadd.f32 %v1505, %v6336
        %6338 = vdwg.mxu0
        %6339 = vmatpush.msra.mxu0 0.0
        %6340 = vmatpush.msra.mxu0 0.0
        %6341 = vmatpush.msra.mxu0 0.0
        %6342 = vmatpush.msra.mxu0 0.0
        %6343 = vmatpush.msra.mxu0 0.0
        %6344 = vmatpush.msra.mxu0 0.0
        %6345 = vmatpush.msra.mxu0 0.0
        %6346 = vmatpush.msra.mxu0 0.0
        %6347 = vmatpush.msra.mxu0 0.0
        %6348 = vmatpush.msra.mxu0 0.0
        %6349 = vmatpush.msra.mxu0 0.0
        %6350 = vmatpush.msra.mxu0 0.0
        %6351 = vmatpush.msra.mxu0 0.0
        %6352 = vmatpush.msra.mxu0 0.0
        %6353 = vmatpush.msra.mxu0 %v6284
        %6354 = vmatpush.msra.mxu0 %v6281
        %6355 = vmatmul.f32.gmra.mxu0 %v1507
        %v6356 = vpop.f32.mrf.mxu0
        %v6357 = vadd.f32 %v1490, %v6356
        %6358 = vmatmul.f32.gmra.mxu0 %v1509
        %v6359 = vpop.f32.mrf.mxu0
        %v6360 = vadd.f32 %v1495, %v6359
        %6361 = vmatmul.f32.gmra.mxu0 %v1511
        %v6362 = vpop.f32.mrf.mxu0
        %v6363 = vadd.f32 %v1500, %v6362
        %6364 = vmatmul.f32.gmra.mxu0 %v1513
        %v6365 = vpop.f32.mrf.mxu0
        %v6366 = vadd.f32 %v1505, %v6365
        %6367 = vdwg.mxu0
        %v6368 = vmax.f32 %v6328, 0.0
        %v6369 = vmax.f32 %v6357, 0.0
        %v6370 = vmax.f32 %v6331, 0.0
        %v6371 = vmax.f32 %v6360, 0.0
        %v6372 = vmax.f32 %v6334, 0.0
        %v6373 = vmax.f32 %v6363, 0.0
        %v6374 = vmax.f32 %v6337, 0.0
        %v6375 = vmax.f32 %v6366, 0.0
        %6376 = vmatpush.msra.mxu0 0.0
        %6377 = vmatpush.msra.mxu0 0.0
        %6378 = vmatpush.msra.mxu0 0.0
        %6379 = vmatpush.msra.mxu0 0.0
        %6380 = vmatpush.msra.mxu0 0.0
        %6381 = vmatpush.msra.mxu0 0.0
        %6382 = vmatpush.msra.mxu0 0.0
        %6383 = vmatpush.msra.mxu0 0.0
        %6384 = vmatpush.msra.mxu0 0.0
        %6385 = vmatpush.msra.mxu0 0.0
        %6386 = vmatpush.msra.mxu0 0.0
        %6387 = vmatpush.msra.mxu0 0.0
        %6388 = vmatpush.msra.mxu0 %v6374
        %6389 = vmatpush.msra.mxu0 %v6372
        %6390 = vmatpush.msra.mxu0 %v6370
        %6391 = vmatpush.msra.mxu0 %v6368
        %6392 = vmatmul.f32.gmra.mxu0 %v1586
        %v6393 = vpop.f32.mrf.mxu0
        %v6394 = vadd.f32 %v1584, %v6393
        %6395 = vdwg.mxu0
        %6396 = vmatpush.msra.mxu0 0.0
        %6397 = vmatpush.msra.mxu0 0.0
        %6398 = vmatpush.msra.mxu0 0.0
        %6399 = vmatpush.msra.mxu0 0.0
        %6400 = vmatpush.msra.mxu0 0.0
        %6401 = vmatpush.msra.mxu0 0.0
        %6402 = vmatpush.msra.mxu0 0.0
        %6403 = vmatpush.msra.mxu0 0.0
        %6404 = vmatpush.msra.mxu0 0.0
        %6405 = vmatpush.msra.mxu0 0.0
        %6406 = vmatpush.msra.mxu0 0.0
        %6407 = vmatpush.msra.mxu0 0.0
        %6408 = vmatpush.msra.mxu0 %v6375
        %6409 = vmatpush.msra.mxu0 %v6373
        %6410 = vmatpush.msra.mxu0 %v6371
        %6411 = vmatpush.msra.mxu0 %v6369
        %6412 = vmatmul.f32.gmra.mxu0 %v1586
        %v6413 = vpop.f32.mrf.mxu0
        %v6414 = vadd.f32 %v1584, %v6413
        %6415 = vdwg.mxu0
        %v6418 = vrot.slane %v6394, 4
        %v6419 = vrot.slane %v6414, 4
        %6422 = vst [vmem:[%s398 + $0x30] sm:$0xf0] %v6418
        %6423 = vst [vmem:[%s398 + $0x38] sm:$0xf0] %v6419
        %v6426 = vrot.slane %v6309, 7
        %v6427 = vsel %vm848, %v6308, %v6426
        %6429 = vst.msk [vmem:[%s426] sm:$0x3] %vm863, %v6427
        %s6430 = smul.u32 2, %s23
        %p6431 = scmp.lt.s32.totalorder %s6430, 3
        %s6432 = scalar_select %p6431, %s6430, 3
        %s6433 = smul.addr %s6432, 8
        %s6434 = scalar_lea.vmem %s9, %s6433
        %s6435 = sand.u32 %s256, 1
        %s6436 = sand.u32 %s256, 1
        %s6437 = smul.addr %s6436, 64
        %s6438 = scalar_lea.vmem [#allocation2], %s6437
        %s6439 = smul.u32 2, %s23
        %p6440 = scmp.lt.s32.totalorder %s6439, 3
        %s6441 = scalar_select %p6440, %s6439, 3
        %s6442 = scalar_lea.vmem %s11, %s6441
        // Predicated region
        $region57: #{monet_forward.1} parent=55 // pred_check
          %p6443 = pneg %p240
        $region58: #{monet_forward.1} parent=55 // pred_check_branch
          %6445 = sbr.rel (%p6443) target = $region60
        $region59: #{monet_forward.1} parent=55 // pred_region
          %s6446 = smul.u32 2, %s23
        $region60: #{monet_forward.1} parent=55 // pred_fallthru
          _
        // Predicated region
        $region61: #{monet_forward.1} parent=55 // pred_check
          %p6447 = pneg %p266
        $region62: #{monet_forward.1} parent=55 // pred_check_branch
          %6449 = sbr.rel (%p6447) target = $region64
        $region63: #{monet_forward.1} parent=55 // pred_region
          %s6450 = smul.u32 2, %s23
          %s6451 = smul.addr %s6450, 8
          %s6452 = scalar_lea.vmem %s10, %s6451
          // Predicated region
          $region65: #{monet_forward.1} parent=63 // pred_check
            _
          $region66: #{monet_forward.1} parent=63 // pred_check_branch
            %6454 = sbr.rel (0) target = $region68
          $region67: #{monet_forward.1} parent=63 // pred_region
            // Predicated region
            $region69: #{monet_forward.1} parent=67 // pred_check
              _
            $region70: #{monet_forward.1} parent=67 // pred_check_branch
              %6456 = sbr.rel (0) target = $region72
            $region71: #{monet_forward.1} parent=67 // pred_region
              loop: start=0, step=1, limit=1
              $region73: #{monet_forward.1} parent=71 // loop_pre_header
                _
              $region74: #{monet_forward.1} parent=71 // loop_header
                %s6458 = sphi 0, %s6462
                %p6459 = scmp.ge.s32.totalorder %s6458, 1
                %s6463 = sphi %s6438, %s6438
                %s6464 = sphi %s6452, %s6452
              $region75: #{monet_forward.1} parent=71 // loop_header_branch
                %6461 = sbr.rel (%p6459) target = $region79
              $region76: #{monet_forward.1} parent=71 // loop_body
                %v6465 = vld [vmem:[%s6463] sm:$0xff]
                %6466 = vst [vmem:[%s6464] sm:$0xff] %v6465
                %v6467 = vld [vmem:[%s6463 + $0x8] sm:$0xff]
                %6468 = vst [vmem:[%s6464 + $0x8] sm:$0xff] %v6467
                %v6469 = vld [vmem:[%s6463 + $0x10] sm:$0xff]
                %6470 = vst [vmem:[%s6464 + $0x20] sm:$0xff] %v6469
                %v6471 = vld [vmem:[%s6463 + $0x18] sm:$0xff]
                %6472 = vst [vmem:[%s6464 + $0x28] sm:$0xff] %v6471
                %v6473 = vld [vmem:[%s6463 + $0x20] sm:$0xff]
                %6474 = vst [vmem:[%s6464 + $0x40] sm:$0xff] %v6473
                %v6475 = vld [vmem:[%s6463 + $0x28] sm:$0xff]
                %6476 = vst [vmem:[%s6464 + $0x48] sm:$0xff] %v6475
                %v6477 = vld [vmem:[%s6463 + $0x30] sm:$0xff]
                %6478 = vst [vmem:[%s6464 + $0x60] sm:$0xff] %v6477
                %v6479 = vld [vmem:[%s6463 + $0x38] sm:$0xff]
                %6480 = vst [vmem:[%s6464 + $0x68] sm:$0xff] %v6479
              $region77: #{monet_forward.1} parent=71 // loop_footer
                %s6462 = sadd.s32 1, %s6458
              $region78: #{monet_forward.1} parent=71 // loop_footer_branch
                %6457 = sbr.rel target = $region74
              $region79: #{monet_forward.1} parent=71 // loop_exit
                _
            $region72: #{monet_forward.1} parent=67 // pred_fallthru
              _
            // Predicated region
            $region80: #{monet_forward.1} parent=67 // pred_check
              _
            $region81: #{monet_forward.1} parent=67 // pred_check_branch
              %6482 = sbr.rel target = $region83
            $region82: #{monet_forward.1} parent=67 // pred_region
              _
            $region83: #{monet_forward.1} parent=67 // pred_fallthru
              _
          $region68: #{monet_forward.1} parent=63 // pred_fallthru
            _
          %6483 = vnop
        $region64: #{monet_forward.1} parent=55 // pred_fallthru
          _
        // Predicated region
        $region84: #{monet_forward.1} parent=55 // pred_check
          %p6484 = pneg %p292
        $region85: #{monet_forward.1} parent=55 // pred_check_branch
          %6486 = sbr.rel (%p6484) target = $region87
        $region86: #{monet_forward.1} parent=55 // pred_region
          %s6487 = smul.u32 2, %s23
        $region87: #{monet_forward.1} parent=55 // pred_fallthru
          _
      $region56: #{monet_forward.1} parent=5 // pred_fallthru
        _
      %p6488 = scmp.le.s32.totalorder 2, %s18
      // Predicated region
      $region88: #{monet_forward.1} parent=5 // pred_check
        %p6489 = pneg %p6488
      $region89: #{monet_forward.1} parent=5 // pred_check_branch
        %6491 = sbr.rel (%p6489) target = $region91
      $region90: #{monet_forward.1} parent=5 // pred_region
        %s6492 = ssub.s32 %s18, 2
        // Predicated region
        $region92: #{monet_forward.1} parent=90 // pred_check
          %p6493 = pneg %p246
        $region93: #{monet_forward.1} parent=90 // pred_check_branch
          %6495 = sbr.rel (%p6493) target = $region95
        $region94: #{monet_forward.1} parent=90 // pred_region
          %s6496 = smul.u32 2, %s24
          %p6497 = scmp.lt.s32.totalorder %s6496, 3
          %s6498 = scalar_select %p6497, %s6496, 3
          %s6499 = smul.addr %s6498, 8
          %s6500 = scalar_lea.vmem %s9, %s6499
        $region95: #{monet_forward.1} parent=90 // pred_fallthru
          _
        // Predicated region
        $region96: #{monet_forward.1} parent=90 // pred_check
          %p6501 = pneg %p272
        $region97: #{monet_forward.1} parent=90 // pred_check_branch
          %6503 = sbr.rel (%p6501) target = $region99
        $region98: #{monet_forward.1} parent=90 // pred_region
          %s6504 = sand.u32 %s257, 1
          %s6505 = sand.u32 %s257, 1
          %s6506 = smul.addr %s6505, 64
          %s6507 = scalar_lea.vmem [#allocation2], %s6506
        $region99: #{monet_forward.1} parent=90 // pred_fallthru
          _
        // Predicated region
        $region100: #{monet_forward.1} parent=90 // pred_check
          %p6508 = pneg %p298
        $region101: #{monet_forward.1} parent=90 // pred_check_branch
          %6510 = sbr.rel (%p6508) target = $region103
        $region102: #{monet_forward.1} parent=90 // pred_region
          %s6511 = smul.u32 2, %s24
          %p6512 = scmp.lt.s32.totalorder %s6511, 3
          %s6513 = scalar_select %p6512, %s6511, 3
          %s6514 = scalar_lea.vmem %s11, %s6513
        $region103: #{monet_forward.1} parent=90 // pred_fallthru
          _
      $region91: #{monet_forward.1} parent=5 // pred_fallthru
        _
    $region6: #{monet_forward.1} parent=1 // loop_footer
      %s22 = sadd.s32 1, %s18
    $region7: #{monet_forward.1} parent=1 // loop_footer_branch
      %17 = sbr.rel target = $region3
    $region8: #{monet_forward.1} parent=1 // loop_exit
      _

</llo_original>
